<compile_context>
chip_gen: v5e
topology: v5e:2x2
jax: 0.10.0
libtpu: 0.0.40
codegen_flags: <defaults>
</compile_context>

<pallas_src>
import math

import jax
import jax.numpy as jnp
from jax.experimental import pallas as pl
from jax.experimental.pallas import tpu as pltpu


# ---------------------------------------------------------------------------
# Small, TPU-friendly versions of the CaptionNet hyper-parameters
# (n_tokens, emb_size, lstm_units, cnn_channels are __init__ arguments).
# ---------------------------------------------------------------------------
B = 2          # batch
C = 128        # cnn_channels
U = 128        # lstm_units
E = 128        # emb_size
V = 256        # n_tokens
N = 16         # width * height (spatial positions)
T = 8          # caption length


def _caption_kernel(values_ref,            # [B, N, C]      image features, channels last
                    emb_ref,               # [T, B, E]      caption embeddings (time major)
                    wcnn_ref, bcnn_ref,    # [C, 3U], [1, 3U]     fused cnn_to_{c0,h0,attn_key}
                    wlstm_ref, blstm_ref,  # [E+C+U, 4U], [1, 4U] fused LSTMCell (W_ih;W_hh), b_ih+b_hh
                    wlog_ref, blog_ref,    # [C+E+U, V], [1, V]   logits_mlp
                    logits_ref,            # out [T, B, V]
                    amap_ref):             # out [T, B, N]
    values = values_ref[...]                                        # [B, N, C]

    # ---- one-time init: c0, h0, attention keys from a single fused MXU matmul ----
    mean = jnp.mean(values, axis=1)                                  # [B, C]
    vflat = values.reshape(B * N, C)                                 # [B*N, C]
    lhs = jnp.concatenate([vflat, mean], axis=0)                     # [B*N + B, C]
    init = (jnp.dot(lhs, wcnn_ref[...], preferred_element_type=jnp.float32)
            + bcnn_ref[...])                                         # [B*N + B, 3U]
    keys = init[0:B * N, 2 * U:3 * U].reshape(B, N, U)               # [B, N, U]
    c = init[B * N:B * N + B, 0 * U:1 * U]                           # [B, U]  initial_cell
    h = init[B * N:B * N + B, 1 * U:2 * U]                           # [B, U]  initial_hid

    b_lstm = blstm_ref[...]                                          # [1, 4U]
    b_log = blog_ref[...]                                            # [1, V]
    inv_sqrt_u = 1.0 / math.sqrt(U)

    # Step 0 queries with initial_cell; subsequent steps query with the LSTM hidden state.
    query = c
    logits_steps = []
    amap_steps = []

    for t in range(T):                                               # statically unrolled
        emb_t = emb_ref[t]                                           # [B, E]

        # ---- scaled dot-product attention (scores & context on the MXU) ----
        scores = jnp.einsum('bqu,bnu->bqn', query[:, None, :], keys,
                            preferred_element_type=jnp.float32)[:, 0, :] * inv_sqrt_u  # [B, N]
        e = jnp.exp(scores - jnp.max(scores, axis=-1, keepdims=True))
        weights = e * pl.reciprocal(jnp.sum(e, axis=-1, keepdims=True), approx=True)   # [B, N]
        amap_steps.append(weights)
        attn = jnp.einsum('bqn,bnc->bqc', weights[:, None, :], values,
                          preferred_element_type=jnp.float32)[:, 0, :]                 # [B, C]

        # ---- fused LSTMCell: one matmul over concat([emb, attn, h_prev]) ----
        x = jnp.concatenate([emb_t, attn, h], axis=1)                # [B, E + C + U]
        gates = (jnp.dot(x, wlstm_ref[...], preferred_element_type=jnp.float32)
                 + b_lstm)                                           # [B, 4U]
        i_g = jax.nn.sigmoid(gates[:, 0 * U:1 * U])
        f_g = jax.nn.sigmoid(gates[:, 1 * U:2 * U])
        g_g = jnp.tanh(gates[:, 2 * U:3 * U])
        o_g = jax.nn.sigmoid(gates[:, 3 * U:4 * U])
        c = f_g * c + i_g * g_g
        h = o_g * jnp.tanh(c)

        # ---- logits_mlp over concat([attention, embedding, h]) ----
        z = jnp.concatenate([attn, emb_t, h], axis=1)                # [B, C + E + U]
        logits_steps.append(
            jnp.dot(z, wlog_ref[...], preferred_element_type=jnp.float32) + b_log)

        query = h

    # Single lane-dense writeback at the end (no per-step masked stores).
    logits_ref[...] = jnp.stack(logits_steps, axis=0)                # [T, B, V]
    amap_ref[...] = jnp.stack(amap_steps, axis=0)                    # [T, B, N]


def caption_net_pallas(params, image_features, captions_ix):
    """image_features: [B, C, N] float32, captions_ix: [B, T] int32."""
    values = jnp.transpose(image_features, (0, 2, 1)).astype(jnp.float32)   # [B, N, C]
    # TODO(synk): embedding lookup (gather) stays as XLA glue; the matmuls/recurrence are in-kernel.
    emb_seq = jnp.transpose(params["emb"][captions_ix], (1, 0, 2))          # [T, B, E]

    # Fuse weights/biases outside the kernel (one-time XLA concats).
    w_cnn = jnp.concatenate([params["wc0"], params["wh0"], params["wkey"]], axis=1)   # [C, 3U]
    b_cnn = jnp.concatenate([params["bc0"], params["bh0"], params["bkey"]], axis=1)   # [1, 3U]
    w_lstm = jnp.concatenate([params["wih"], params["whh"]], axis=0)                  # [E+C+U, 4U]
    b_lstm = params["bih"] + params["bhh"]                                            # [1, 4U]

    full = lambda shape: pl.BlockSpec(shape, lambda i, _s=shape: (0,) * len(_s))

    grid_spec = pltpu.PrefetchScalarGridSpec(
        num_scalar_prefetch=0,
        grid=(1,),                                   # single invocation; time loop is in-kernel
        in_specs=[
            full((B, N, C)),                         # values
            full((T, B, E)),                         # embeddings (time major)
            full((C, 3 * U)), full((1, 3 * U)),      # fused cnn_to_{c0,h0,key}
            full((E + C + U, 4 * U)), full((1, 4 * U)),   # fused LSTM
            full((C + E + U, V)), full((1, V)),      # logits_mlp
        ],
        out_specs=[
            full((T, B, V)),                         # logits (time major)
            full((T, B, N)),                         # attention maps (time major)
        ],
    )

    logits_tm, amap_tm = pl.pallas_call(
        _caption_kernel,
        grid_spec=grid_spec,
        out_shape=(jax.ShapeDtypeStruct((T, B, V), jnp.float32),
                   jax.ShapeDtypeStruct((T, B, N), jnp.float32)),
        compiler_params=pltpu.CompilerParams(dimension_semantics=("arbitrary",)),
    )(values, emb_seq, w_cnn, b_cnn, w_lstm, b_lstm, params["wlog"], params["blog"])

    logits = jnp.transpose(logits_tm, (1, 0, 2))     # [B, T, V]
    amaps = jnp.transpose(amap_tm, (1, 0, 2))        # [B, T, N]
    # TODO(synk): attention_map "detach" has no autodiff meaning here (forward only).
    return logits, amaps


# ---------------------------------------------------------------------------
# Pure-JAX reference (mirrors the PyTorch forward, unfused weights) for checking.
# ---------------------------------------------------------------------------
def caption_net_ref(params, image_features, captions_ix):
    mean = image_features.mean(axis=2)
    c = mean @ params["wc0"] + params["bc0"][0]
    h = mean @ params["wh0"] + params["bh0"][0]
    values = jnp.transpose(image_features, (0, 2, 1))
    keys = values @ params["wkey"] + params["bkey"][0]
    emb = params["emb"][captions_ix]
    query, h_prev, c_prev = c, h, c
    logits_steps, amap_steps = [], []
    for t in range(captions_ix.shape[1]):
        scores = jnp.einsum("bu,bnu->bn", query, keys) / math.sqrt(U)
        w = jnp.exp(scores - jnp.log(jnp.sum(jnp.exp(scores), axis=-1, keepdims=True)))
        amap_steps.append(w)
        attn = jnp.einsum("bn,bnc->bc", w, values)
        x = jnp.concatenate([emb[:, t], attn], axis=1)
        gates = (x @ params["wih"] + params["bih"][0]
                 + h_prev @ params["whh"] + params["bhh"][0])
        i_g = jax.nn.sigmoid(gates[:, 0 * U:1 * U])
        f_g = jax.nn.sigmoid(gates[:, 1 * U:2 * U])
        g_g = jnp.tanh(gates[:, 2 * U:3 * U])
        o_g = jax.nn.sigmoid(gates[:, 3 * U:4 * U])
        c_new = f_g * c_prev + i_g * g_g
        h_new = o_g * jnp.tanh(c_new)
        z = jnp.concatenate([attn, emb[:, t], h_new], axis=1)
        logits_steps.append(z @ params["wlog"] + params["blog"][0])
        query, h_prev, c_prev = h_new, h_new, c_new
    return jnp.stack(logits_steps, axis=1), jnp.stack(amap_steps, axis=1)


def init_params(key):
    ks = jax.random.split(key, 13)
    scale = 0.05
    nrm = lambda k, shape: jax.random.normal(k, shape, jnp.float32) * scale
    return {
        "emb":  nrm(ks[0], (V, E)),
        "wc0":  nrm(ks[1], (C, U)),           "bc0":  nrm(ks[2], (1, U)),
        "wh0":  nrm(ks[3], (C, U)),           "bh0":  nrm(ks[4], (1, U)),
        "wkey": nrm(ks[5], (C, U)),           "bkey": nrm(ks[6], (1, U)),
        "wih":  nrm(ks[7], (E + C, 4 * U)),   "bih":  nrm(ks[8], (1, 4 * U)),
        "whh":  nrm(ks[9], (U, 4 * U)),       "bhh":  nrm(ks[10], (1, 4 * U)),
        "wlog": nrm(ks[11], (C + E + U, V)),  "blog": nrm(ks[12], (1, V)),
    }


if __name__ == "__main__":
    key = jax.random.PRNGKey(0)
    kp, kf, kc = jax.random.split(key, 3)
    params = init_params(kp)
    image_features = jax.random.normal(kf, (B, C, N), jnp.float32)
    captions_ix = jax.random.randint(kc, (B, T), 0, V, dtype=jnp.int32)

    logits, amaps = caption_net_pallas(params, image_features, captions_ix)
    logits = jax.block_until_ready(logits)
    amaps = jax.block_until_ready(amaps)
    assert logits.shape == (B, T, V) and amaps.shape == (B, T, N)

    ref_logits, ref_amaps = caption_net_ref(params, image_features, captions_ix)
    assert jnp.allclose(logits, ref_logits, atol=2e-2, rtol=2e-2)
    assert jnp.allclose(amaps, ref_amaps, atol=2e-2, rtol=2e-2)

    print("KERNEL_OK")
</pallas_src>

<mosaic_0001>
module attributes {stable_mosaic.version = 11 : i64} {
  func.func @_caption_kernel(%arg0: i32, %arg1: memref<2x16x128xf32, #tpu.memory_space<vmem>>, %arg2: memref<8x2x128xf32, #tpu.memory_space<vmem>>, %arg3: memref<128x384xf32, #tpu.memory_space<vmem>>, %arg4: memref<1x384xf32, #tpu.memory_space<vmem>>, %arg5: memref<384x512xf32, #tpu.memory_space<vmem>>, %arg6: memref<1x512xf32, #tpu.memory_space<vmem>>, %arg7: memref<384x256xf32, #tpu.memory_space<vmem>>, %arg8: memref<1x256xf32, #tpu.memory_space<vmem>>, %arg9: memref<8x2x256xf32, #tpu.memory_space<vmem>>, %arg10: memref<8x2x16xf32, #tpu.memory_space<vmem>>) attributes {dimension_semantics = [#tpu.dimension_semantics<arbitrary>], iteration_bounds = array<i64: 1>, scalar_prefetch = 0 : i64, scratch_operands = 0 : i64, tpu.core_type = #tpu.core_type<tc>, window_params = [{pipeline_mode = #tpu.pipeline_mode<synchronous>, transform_indices = @transform_0, window_bounds = array<i64: 2, 16, 128>}, {pipeline_mode = #tpu.pipeline_mode<synchronous>, transform_indices = @transform_1, window_bounds = array<i64: 8, 2, 128>}, {pipeline_mode = #tpu.pipeline_mode<synchronous>, transform_indices = @transform_2, window_bounds = array<i64: 128, 384>}, {pipeline_mode = #tpu.pipeline_mode<synchronous>, transform_indices = @transform_3, window_bounds = array<i64: 1, 384>}, {pipeline_mode = #tpu.pipeline_mode<synchronous>, transform_indices = @transform_4, window_bounds = array<i64: 384, 512>}, {pipeline_mode = #tpu.pipeline_mode<synchronous>, transform_indices = @transform_5, window_bounds = array<i64: 1, 512>}, {pipeline_mode = #tpu.pipeline_mode<synchronous>, transform_indices = @transform_6, window_bounds = array<i64: 384, 256>}, {pipeline_mode = #tpu.pipeline_mode<synchronous>, transform_indices = @transform_7, window_bounds = array<i64: 1, 256>}, {pipeline_mode = #tpu.pipeline_mode<synchronous>, transform_indices = @transform_8, window_bounds = array<i64: 8, 2, 256>}, {pipeline_mode = #tpu.pipeline_mode<synchronous>, transform_indices = @transform_9, window_bounds = array<i64: 8, 2, 16>}]} {
    %c0 = arith.constant 0 : index
    %c0_0 = arith.constant 0 : index
    %c0_1 = arith.constant 0 : index
    %0 = vector.load %arg1[%c0, %c0_0, %c0_1] : memref<2x16x128xf32, #tpu.memory_space<vmem>>, vector<2x16x128xf32>
    %cst = arith.constant dense<0.000000e+00> : vector<2x128xf32>
    %1 = vector.multi_reduction <add>, %0, %cst [1] : vector<2x16x128xf32> to vector<2x128xf32>
    %cst_2 = arith.constant 1.600000e+01 : f32
    %2 = vector.broadcast %cst_2 : f32 to vector<2x128xf32>
    %3 = arith.divf %1, %2 : vector<2x128xf32>
    %4 = vector.shape_cast %0 : vector<2x16x128xf32> to vector<32x128xf32>
    %5 = tpu.concatenate %4, %3 in 0 : vector<32x128xf32>, vector<2x128xf32> -> vector<34x128xf32>
    %c0_3 = arith.constant 0 : index
    %c0_4 = arith.constant 0 : index
    %6 = vector.load %arg3[%c0_3, %c0_4] : memref<128x384xf32, #tpu.memory_space<vmem>>, vector<128x384xf32>
    %cst_5 = arith.constant dense<0.000000e+00> : vector<34x384xf32>
    %7 = tpu.matmul %5, %6, %cst_5 {dimension_numbers = #tpu.dot_dimension_numbers<[1], [0], [0], [1], [0, 0, 1, 1], [], []>} : vector<34x128xf32>, vector<128x384xf32>, vector<34x384xf32> -> vector<34x384xf32>
    %c0_6 = arith.constant 0 : index
    %c0_7 = arith.constant 0 : index
    %8 = vector.load %arg4[%c0_6, %c0_7] : memref<1x384xf32, #tpu.memory_space<vmem>>, vector<1x384xf32>
    %9 = vector.broadcast %8 : vector<1x384xf32> to vector<34x384xf32>
    %10 = arith.addf %7, %9 : vector<34x384xf32>
    %11 = vector.extract_strided_slice %10 {offsets = [0, 256], sizes = [32, 128], strides = [1, 1]} : vector<34x384xf32> to vector<32x128xf32>
    %12 = vector.shape_cast %11 : vector<32x128xf32> to vector<2x16x128xf32>
    %13 = vector.extract_strided_slice %10 {offsets = [32, 0], sizes = [2, 128], strides = [1, 1]} : vector<34x384xf32> to vector<2x128xf32>
    %14 = vector.extract_strided_slice %10 {offsets = [32, 128], sizes = [2, 128], strides = [1, 1]} : vector<34x384xf32> to vector<2x128xf32>
    %c0_8 = arith.constant 0 : index
    %c0_9 = arith.constant 0 : index
    %15 = vector.load %arg6[%c0_8, %c0_9] : memref<1x512xf32, #tpu.memory_space<vmem>>, vector<1x512xf32>
    %c0_10 = arith.constant 0 : index
    %c0_11 = arith.constant 0 : index
    %16 = vector.load %arg8[%c0_10, %c0_11] : memref<1x256xf32, #tpu.memory_space<vmem>>, vector<1x256xf32>
    %c0_12 = arith.constant 0 : index
    %c0_13 = arith.constant 0 : index
    %c0_14 = arith.constant 0 : index
    %17 = vector.load %arg2[%c0_12, %c0_13, %c0_14] : memref<8x2x128xf32, #tpu.memory_space<vmem>>, vector<1x2x128xf32>
    %18 = vector.shape_cast %17 : vector<1x2x128xf32> to vector<2x128xf32>
    %19 = vector.shape_cast %13 : vector<2x128xf32> to vector<2x1x128xf32>
    "tpu.trace_start"() <{level = 10 : i32, message = "bqu,bnu->bqn"}> : () -> ()
    %cst_15 = arith.constant dense<0.000000e+00> : vector<2x1x16xf32>
    %20 = tpu.matmul %19, %12, %cst_15 {dimension_numbers = #tpu.dot_dimension_numbers<[2], [2], [1], [1], [0, 0, 0, 1, 1, 1], [0], [0]>} : vector<2x1x128xf32>, vector<2x16x128xf32>, vector<2x1x16xf32> -> vector<2x1x16xf32>
    "tpu.trace_stop"() : () -> ()
    %21 = vector.shape_cast %20 : vector<2x1x16xf32> to vector<2x16xf32>
    %cst_16 = arith.constant 0.0883883461 : f32
    %22 = vector.broadcast %cst_16 : f32 to vector<2x16xf32>
    %23 = arith.mulf %21, %22 : vector<2x16xf32>
    %cst_17 = arith.constant dense<0xFF800000> : vector<2xf32>
    %24 = vector.multi_reduction <maximumf>, %23, %cst_17 [1] : vector<2x16xf32> to vector<2xf32>
    %25 = vector.shape_cast %24 : vector<2xf32> to vector<2x1xf32>
    %26 = vector.broadcast %25 : vector<2x1xf32> to vector<2x16xf32>
    %27 = arith.subf %23, %26 : vector<2x16xf32>
    %28 = math.exp %27 : vector<2x16xf32>
    %cst_18 = arith.constant dense<0.000000e+00> : vector<2xf32>
    %29 = vector.multi_reduction <add>, %28, %cst_18 [1] : vector<2x16xf32> to vector<2xf32>
    %30 = vector.shape_cast %29 : vector<2xf32> to vector<2x1xf32>
    %31 = tpu.reciprocal %30 {approx = true} : vector<2x1xf32> -> vector<2x1xf32>
    %32 = vector.broadcast %31 : vector<2x1xf32> to vector<2x16xf32>
    %33 = arith.mulf %28, %32 : vector<2x16xf32>
    %34 = vector.shape_cast %33 : vector<2x16xf32> to vector<2x1x16xf32>
    "tpu.trace_start"() <{level = 10 : i32, message = "bqn,bnc->bqc"}> : () -> ()
    %cst_19 = arith.constant dense<0.000000e+00> : vector<2x1x128xf32>
    %35 = tpu.matmul %34, %0, %cst_19 {dimension_numbers = #tpu.dot_dimension_numbers<[2], [1], [1], [2], [0, 0, 0, 1, 1, 2], [0], [0]>} : vector<2x1x16xf32>, vector<2x16x128xf32>, vector<2x1x128xf32> -> vector<2x1x128xf32>
    "tpu.trace_stop"() : () -> ()
    %36 = vector.shape_cast %35 : vector<2x1x128xf32> to vector<2x128xf32>
    %37 = tpu.concatenate %18, %36, %14 in 1 : vector<2x128xf32>, vector<2x128xf32>, vector<2x128xf32> -> vector<2x384xf32>
    %c0_20 = arith.constant 0 : index
    %c0_21 = arith.constant 0 : index
    %38 = vector.load %arg5[%c0_20, %c0_21] : memref<384x512xf32, #tpu.memory_space<vmem>>, vector<384x512xf32>
    %cst_22 = arith.constant dense<0.000000e+00> : vector<2x512xf32>
    %39 = tpu.matmul %37, %38, %cst_22 {dimension_numbers = #tpu.dot_dimension_numbers<[1], [0], [0], [1], [0, 0, 1, 1], [], []>} : vector<2x384xf32>, vector<384x512xf32>, vector<2x512xf32> -> vector<2x512xf32>
    %40 = vector.broadcast %15 : vector<1x512xf32> to vector<2x512xf32>
    %41 = arith.addf %39, %40 : vector<2x512xf32>
    %42 = vector.extract_strided_slice %41 {offsets = [0, 0], sizes = [2, 128], strides = [1, 1]} : vector<2x512xf32> to vector<2x128xf32>
    %43 = arith.negf %42 : vector<2x128xf32>
    %44 = math.exp %43 : vector<2x128xf32>
    %cst_23 = arith.constant 1.000000e+00 : f32
    %45 = vector.broadcast %cst_23 : f32 to vector<2x128xf32>
    %46 = arith.addf %45, %44 : vector<2x128xf32>
    %47 = arith.divf %45, %46 : vector<2x128xf32>
    %48 = vector.extract_strided_slice %41 {offsets = [0, 128], sizes = [2, 128], strides = [1, 1]} : vector<2x512xf32> to vector<2x128xf32>
    %49 = arith.negf %48 : vector<2x128xf32>
    %50 = math.exp %49 : vector<2x128xf32>
    %cst_24 = arith.constant 1.000000e+00 : f32
    %51 = vector.broadcast %cst_24 : f32 to vector<2x128xf32>
    %52 = arith.addf %51, %50 : vector<2x128xf32>
    %53 = arith.divf %51, %52 : vector<2x128xf32>
    %54 = vector.extract_strided_slice %41 {offsets = [0, 256], sizes = [2, 128], strides = [1, 1]} : vector<2x512xf32> to vector<2x128xf32>
    %55 = math.tanh %54 : vector<2x128xf32>
    %56 = vector.extract_strided_slice %41 {offsets = [0, 384], sizes = [2, 128], strides = [1, 1]} : vector<2x512xf32> to vector<2x128xf32>
    %57 = arith.negf %56 : vector<2x128xf32>
    %58 = math.exp %57 : vector<2x128xf32>
    %cst_25 = arith.constant 1.000000e+00 : f32
    %59 = vector.broadcast %cst_25 : f32 to vector<2x128xf32>
    %60 = arith.addf %59, %58 : vector<2x128xf32>
    %61 = arith.divf %59, %60 : vector<2x128xf32>
    %62 = arith.mulf %53, %13 : vector<2x128xf32>
    %63 = arith.mulf %47, %55 : vector<2x128xf32>
    %64 = arith.addf %62, %63 : vector<2x128xf32>
    %65 = math.tanh %64 : vector<2x128xf32>
    %66 = arith.mulf %61, %65 : vector<2x128xf32>
    %67 = tpu.concatenate %36, %18, %66 in 1 : vector<2x128xf32>, vector<2x128xf32>, vector<2x128xf32> -> vector<2x384xf32>
    %c0_26 = arith.constant 0 : index
    %c0_27 = arith.constant 0 : index
    %68 = vector.load %arg7[%c0_26, %c0_27] : memref<384x256xf32, #tpu.memory_space<vmem>>, vector<384x256xf32>
    %cst_28 = arith.constant dense<0.000000e+00> : vector<2x256xf32>
    %69 = tpu.matmul %67, %68, %cst_28 {dimension_numbers = #tpu.dot_dimension_numbers<[1], [0], [0], [1], [0, 0, 1, 1], [], []>} : vector<2x384xf32>, vector<384x256xf32>, vector<2x256xf32> -> vector<2x256xf32>
    %70 = vector.broadcast %16 : vector<1x256xf32> to vector<2x256xf32>
    %71 = arith.addf %69, %70 : vector<2x256xf32>
    %c1 = arith.constant 1 : index
    %c0_29 = arith.constant 0 : index
    %c0_30 = arith.constant 0 : index
    %72 = vector.load %arg2[%c1, %c0_29, %c0_30] : memref<8x2x128xf32, #tpu.memory_space<vmem>>, vector<1x2x128xf32>
    %73 = vector.shape_cast %72 : vector<1x2x128xf32> to vector<2x128xf32>
    %74 = vector.shape_cast %66 : vector<2x128xf32> to vector<2x1x128xf32>
    "tpu.trace_start"() <{level = 10 : i32, message = "bqu,bnu->bqn"}> : () -> ()
    %cst_31 = arith.constant dense<0.000000e+00> : vector<2x1x16xf32>
    %75 = tpu.matmul %74, %12, %cst_31 {dimension_numbers = #tpu.dot_dimension_numbers<[2], [2], [1], [1], [0, 0, 0, 1, 1, 1], [0], [0]>} : vector<2x1x128xf32>, vector<2x16x128xf32>, vector<2x1x16xf32> -> vector<2x1x16xf32>
    "tpu.trace_stop"() : () -> ()
    %76 = vector.shape_cast %75 : vector<2x1x16xf32> to vector<2x16xf32>
    %cst_32 = arith.constant 0.0883883461 : f32
    %77 = vector.broadcast %cst_32 : f32 to vector<2x16xf32>
    %78 = arith.mulf %76, %77 : vector<2x16xf32>
    %cst_33 = arith.constant dense<0xFF800000> : vector<2xf32>
    %79 = vector.multi_reduction <maximumf>, %78, %cst_33 [1] : vector<2x16xf32> to vector<2xf32>
    %80 = vector.shape_cast %79 : vector<2xf32> to vector<2x1xf32>
    %81 = vector.broadcast %80 : vector<2x1xf32> to vector<2x16xf32>
    %82 = arith.subf %78, %81 : vector<2x16xf32>
    %83 = math.exp %82 : vector<2x16xf32>
    %cst_34 = arith.constant dense<0.000000e+00> : vector<2xf32>
    %84 = vector.multi_reduction <add>, %83, %cst_34 [1] : vector<2x16xf32> to vector<2xf32>
    %85 = vector.shape_cast %84 : vector<2xf32> to vector<2x1xf32>
    %86 = tpu.reciprocal %85 {approx = true} : vector<2x1xf32> -> vector<2x1xf32>
    %87 = vector.broadcast %86 : vector<2x1xf32> to vector<2x16xf32>
    %88 = arith.mulf %83, %87 : vector<2x16xf32>
    %89 = vector.shape_cast %88 : vector<2x16xf32> to vector<2x1x16xf32>
    "tpu.trace_start"() <{level = 10 : i32, message = "bqn,bnc->bqc"}> : () -> ()
    %cst_35 = arith.constant dense<0.000000e+00> : vector<2x1x128xf32>
    %90 = tpu.matmul %89, %0, %cst_35 {dimension_numbers = #tpu.dot_dimension_numbers<[2], [1], [1], [2], [0, 0, 0, 1, 1, 2], [0], [0]>} : vector<2x1x16xf32>, vector<2x16x128xf32>, vector<2x1x128xf32> -> vector<2x1x128xf32>
    "tpu.trace_stop"() : () -> ()
    %91 = vector.shape_cast %90 : vector<2x1x128xf32> to vector<2x128xf32>
    %92 = tpu.concatenate %73, %91, %66 in 1 : vector<2x128xf32>, vector<2x128xf32>, vector<2x128xf32> -> vector<2x384xf32>
    %c0_36 = arith.constant 0 : index
    %c0_37 = arith.constant 0 : index
    %93 = vector.load %arg5[%c0_36, %c0_37] : memref<384x512xf32, #tpu.memory_space<vmem>>, vector<384x512xf32>
    %cst_38 = arith.constant dense<0.000000e+00> : vector<2x512xf32>
    %94 = tpu.matmul %92, %93, %cst_38 {dimension_numbers = #tpu.dot_dimension_numbers<[1], [0], [0], [1], [0, 0, 1, 1], [], []>} : vector<2x384xf32>, vector<384x512xf32>, vector<2x512xf32> -> vector<2x512xf32>
    %95 = vector.broadcast %15 : vector<1x512xf32> to vector<2x512xf32>
    %96 = arith.addf %94, %95 : vector<2x512xf32>
    %97 = vector.extract_strided_slice %96 {offsets = [0, 0], sizes = [2, 128], strides = [1, 1]} : vector<2x512xf32> to vector<2x128xf32>
    %98 = arith.negf %97 : vector<2x128xf32>
    %99 = math.exp %98 : vector<2x128xf32>
    %cst_39 = arith.constant 1.000000e+00 : f32
    %100 = vector.broadcast %cst_39 : f32 to vector<2x128xf32>
    %101 = arith.addf %100, %99 : vector<2x128xf32>
    %102 = arith.divf %100, %101 : vector<2x128xf32>
    %103 = vector.extract_strided_slice %96 {offsets = [0, 128], sizes = [2, 128], strides = [1, 1]} : vector<2x512xf32> to vector<2x128xf32>
    %104 = arith.negf %103 : vector<2x128xf32>
    %105 = math.exp %104 : vector<2x128xf32>
    %cst_40 = arith.constant 1.000000e+00 : f32
    %106 = vector.broadcast %cst_40 : f32 to vector<2x128xf32>
    %107 = arith.addf %106, %105 : vector<2x128xf32>
    %108 = arith.divf %106, %107 : vector<2x128xf32>
    %109 = vector.extract_strided_slice %96 {offsets = [0, 256], sizes = [2, 128], strides = [1, 1]} : vector<2x512xf32> to vector<2x128xf32>
    %110 = math.tanh %109 : vector<2x128xf32>
    %111 = vector.extract_strided_slice %96 {offsets = [0, 384], sizes = [2, 128], strides = [1, 1]} : vector<2x512xf32> to vector<2x128xf32>
    %112 = arith.negf %111 : vector<2x128xf32>
    %113 = math.exp %112 : vector<2x128xf32>
    %cst_41 = arith.constant 1.000000e+00 : f32
    %114 = vector.broadcast %cst_41 : f32 to vector<2x128xf32>
    %115 = arith.addf %114, %113 : vector<2x128xf32>
    %116 = arith.divf %114, %115 : vector<2x128xf32>
    %117 = arith.mulf %108, %64 : vector<2x128xf32>
    %118 = arith.mulf %102, %110 : vector<2x128xf32>
    %119 = arith.addf %117, %118 : vector<2x128xf32>
    %120 = math.tanh %119 : vector<2x128xf32>
    %121 = arith.mulf %116, %120 : vector<2x128xf32>
    %122 = tpu.concatenate %91, %73, %121 in 1 : vector<2x128xf32>, vector<2x128xf32>, vector<2x128xf32> -> vector<2x384xf32>
    %c0_42 = arith.constant 0 : index
    %c0_43 = arith.constant 0 : index
    %123 = vector.load %arg7[%c0_42, %c0_43] : memref<384x256xf32, #tpu.memory_space<vmem>>, vector<384x256xf32>
    %cst_44 = arith.constant dense<0.000000e+00> : vector<2x256xf32>
    %124 = tpu.matmul %122, %123, %cst_44 {dimension_numbers = #tpu.dot_dimension_numbers<[1], [0], [0], [1], [0, 0, 1, 1], [], []>} : vector<2x384xf32>, vector<384x256xf32>, vector<2x256xf32> -> vector<2x256xf32>
    %125 = vector.broadcast %16 : vector<1x256xf32> to vector<2x256xf32>
    %126 = arith.addf %124, %125 : vector<2x256xf32>
    %c2 = arith.constant 2 : index
    %c0_45 = arith.constant 0 : index
    %c0_46 = arith.constant 0 : index
    %127 = vector.load %arg2[%c2, %c0_45, %c0_46] : memref<8x2x128xf32, #tpu.memory_space<vmem>>, vector<1x2x128xf32>
    %128 = vector.shape_cast %127 : vector<1x2x128xf32> to vector<2x128xf32>
    %129 = vector.shape_cast %121 : vector<2x128xf32> to vector<2x1x128xf32>
    "tpu.trace_start"() <{level = 10 : i32, message = "bqu,bnu->bqn"}> : () -> ()
    %cst_47 = arith.constant dense<0.000000e+00> : vector<2x1x16xf32>
    %130 = tpu.matmul %129, %12, %cst_47 {dimension_numbers = #tpu.dot_dimension_numbers<[2], [2], [1], [1], [0, 0, 0, 1, 1, 1], [0], [0]>} : vector<2x1x128xf32>, vector<2x16x128xf32>, vector<2x1x16xf32> -> vector<2x1x16xf32>
    "tpu.trace_stop"() : () -> ()
    %131 = vector.shape_cast %130 : vector<2x1x16xf32> to vector<2x16xf32>
    %cst_48 = arith.constant 0.0883883461 : f32
    %132 = vector.broadcast %cst_48 : f32 to vector<2x16xf32>
    %133 = arith.mulf %131, %132 : vector<2x16xf32>
    %cst_49 = arith.constant dense<0xFF800000> : vector<2xf32>
    %134 = vector.multi_reduction <maximumf>, %133, %cst_49 [1] : vector<2x16xf32> to vector<2xf32>
    %135 = vector.shape_cast %134 : vector<2xf32> to vector<2x1xf32>
    %136 = vector.broadcast %135 : vector<2x1xf32> to vector<2x16xf32>
    %137 = arith.subf %133, %136 : vector<2x16xf32>
    %138 = math.exp %137 : vector<2x16xf32>
    %cst_50 = arith.constant dense<0.000000e+00> : vector<2xf32>
    %139 = vector.multi_reduction <add>, %138, %cst_50 [1] : vector<2x16xf32> to vector<2xf32>
    %140 = vector.shape_cast %139 : vector<2xf32> to vector<2x1xf32>
    %141 = tpu.reciprocal %140 {approx = true} : vector<2x1xf32> -> vector<2x1xf32>
    %142 = vector.broadcast %141 : vector<2x1xf32> to vector<2x16xf32>
    %143 = arith.mulf %138, %142 : vector<2x16xf32>
    %144 = vector.shape_cast %143 : vector<2x16xf32> to vector<2x1x16xf32>
    "tpu.trace_start"() <{level = 10 : i32, message = "bqn,bnc->bqc"}> : () -> ()
    %cst_51 = arith.constant dense<0.000000e+00> : vector<2x1x128xf32>
    %145 = tpu.matmul %144, %0, %cst_51 {dimension_numbers = #tpu.dot_dimension_numbers<[2], [1], [1], [2], [0, 0, 0, 1, 1, 2], [0], [0]>} : vector<2x1x16xf32>, vector<2x16x128xf32>, vector<2x1x128xf32> -> vector<2x1x128xf32>
    "tpu.trace_stop"() : () -> ()
    %146 = vector.shape_cast %145 : vector<2x1x128xf32> to vector<2x128xf32>
    %147 = tpu.concatenate %128, %146, %121 in 1 : vector<2x128xf32>, vector<2x128xf32>, vector<2x128xf32> -> vector<2x384xf32>
    %c0_52 = arith.constant 0 : index
    %c0_53 = arith.constant 0 : index
    %148 = vector.load %arg5[%c0_52, %c0_53] : memref<384x512xf32, #tpu.memory_space<vmem>>, vector<384x512xf32>
    %cst_54 = arith.constant dense<0.000000e+00> : vector<2x512xf32>
    %149 = tpu.matmul %147, %148, %cst_54 {dimension_numbers = #tpu.dot_dimension_numbers<[1], [0], [0], [1], [0, 0, 1, 1], [], []>} : vector<2x384xf32>, vector<384x512xf32>, vector<2x512xf32> -> vector<2x512xf32>
    %150 = vector.broadcast %15 : vector<1x512xf32> to vector<2x512xf32>
    %151 = arith.addf %149, %150 : vector<2x512xf32>
    %152 = vector.extract_strided_slice %151 {offsets = [0, 0], sizes = [2, 128], strides = [1, 1]} : vector<2x512xf32> to vector<2x128xf32>
    %153 = arith.negf %152 : vector<2x128xf32>
    %154 = math.exp %153 : vector<2x128xf32>
    %cst_55 = arith.constant 1.000000e+00 : f32
    %155 = vector.broadcast %cst_55 : f32 to vector<2x128xf32>
    %156 = arith.addf %155, %154 : vector<2x128xf32>
    %157 = arith.divf %155, %156 : vector<2x128xf32>
    %158 = vector.extract_strided_slice %151 {offsets = [0, 128], sizes = [2, 128], strides = [1, 1]} : vector<2x512xf32> to vector<2x128xf32>
    %159 = arith.negf %158 : vector<2x128xf32>
    %160 = math.exp %159 : vector<2x128xf32>
    %cst_56 = arith.constant 1.000000e+00 : f32
    %161 = vector.broadcast %cst_56 : f32 to vector<2x128xf32>
    %162 = arith.addf %161, %160 : vector<2x128xf32>
    %163 = arith.divf %161, %162 : vector<2x128xf32>
    %164 = vector.extract_strided_slice %151 {offsets = [0, 256], sizes = [2, 128], strides = [1, 1]} : vector<2x512xf32> to vector<2x128xf32>
    %165 = math.tanh %164 : vector<2x128xf32>
    %166 = vector.extract_strided_slice %151 {offsets = [0, 384], sizes = [2, 128], strides = [1, 1]} : vector<2x512xf32> to vector<2x128xf32>
    %167 = arith.negf %166 : vector<2x128xf32>
    %168 = math.exp %167 : vector<2x128xf32>
    %cst_57 = arith.constant 1.000000e+00 : f32
    %169 = vector.broadcast %cst_57 : f32 to vector<2x128xf32>
    %170 = arith.addf %169, %168 : vector<2x128xf32>
    %171 = arith.divf %169, %170 : vector<2x128xf32>
    %172 = arith.mulf %163, %119 : vector<2x128xf32>
    %173 = arith.mulf %157, %165 : vector<2x128xf32>
    %174 = arith.addf %172, %173 : vector<2x128xf32>
    %175 = math.tanh %174 : vector<2x128xf32>
    %176 = arith.mulf %171, %175 : vector<2x128xf32>
    %177 = tpu.concatenate %146, %128, %176 in 1 : vector<2x128xf32>, vector<2x128xf32>, vector<2x128xf32> -> vector<2x384xf32>
    %c0_58 = arith.constant 0 : index
    %c0_59 = arith.constant 0 : index
    %178 = vector.load %arg7[%c0_58, %c0_59] : memref<384x256xf32, #tpu.memory_space<vmem>>, vector<384x256xf32>
    %cst_60 = arith.constant dense<0.000000e+00> : vector<2x256xf32>
    %179 = tpu.matmul %177, %178, %cst_60 {dimension_numbers = #tpu.dot_dimension_numbers<[1], [0], [0], [1], [0, 0, 1, 1], [], []>} : vector<2x384xf32>, vector<384x256xf32>, vector<2x256xf32> -> vector<2x256xf32>
    %180 = vector.broadcast %16 : vector<1x256xf32> to vector<2x256xf32>
    %181 = arith.addf %179, %180 : vector<2x256xf32>
    %c3 = arith.constant 3 : index
    %c0_61 = arith.constant 0 : index
    %c0_62 = arith.constant 0 : index
    %182 = vector.load %arg2[%c3, %c0_61, %c0_62] : memref<8x2x128xf32, #tpu.memory_space<vmem>>, vector<1x2x128xf32>
    %183 = vector.shape_cast %182 : vector<1x2x128xf32> to vector<2x128xf32>
    %184 = vector.shape_cast %176 : vector<2x128xf32> to vector<2x1x128xf32>
    "tpu.trace_start"() <{level = 10 : i32, message = "bqu,bnu->bqn"}> : () -> ()
    %cst_63 = arith.constant dense<0.000000e+00> : vector<2x1x16xf32>
    %185 = tpu.matmul %184, %12, %cst_63 {dimension_numbers = #tpu.dot_dimension_numbers<[2], [2], [1], [1], [0, 0, 0, 1, 1, 1], [0], [0]>} : vector<2x1x128xf32>, vector<2x16x128xf32>, vector<2x1x16xf32> -> vector<2x1x16xf32>
    "tpu.trace_stop"() : () -> ()
    %186 = vector.shape_cast %185 : vector<2x1x16xf32> to vector<2x16xf32>
    %cst_64 = arith.constant 0.0883883461 : f32
    %187 = vector.broadcast %cst_64 : f32 to vector<2x16xf32>
    %188 = arith.mulf %186, %187 : vector<2x16xf32>
    %cst_65 = arith.constant dense<0xFF800000> : vector<2xf32>
    %189 = vector.multi_reduction <maximumf>, %188, %cst_65 [1] : vector<2x16xf32> to vector<2xf32>
    %190 = vector.shape_cast %189 : vector<2xf32> to vector<2x1xf32>
    %191 = vector.broadcast %190 : vector<2x1xf32> to vector<2x16xf32>
    %192 = arith.subf %188, %191 : vector<2x16xf32>
    %193 = math.exp %192 : vector<2x16xf32>
    %cst_66 = arith.constant dense<0.000000e+00> : vector<2xf32>
    %194 = vector.multi_reduction <add>, %193, %cst_66 [1] : vector<2x16xf32> to vector<2xf32>
    %195 = vector.shape_cast %194 : vector<2xf32> to vector<2x1xf32>
    %196 = tpu.reciprocal %195 {approx = true} : vector<2x1xf32> -> vector<2x1xf32>
    %197 = vector.broadcast %196 : vector<2x1xf32> to vector<2x16xf32>
    %198 = arith.mulf %193, %197 : vector<2x16xf32>
    %199 = vector.shape_cast %198 : vector<2x16xf32> to vector<2x1x16xf32>
    "tpu.trace_start"() <{level = 10 : i32, message = "bqn,bnc->bqc"}> : () -> ()
    %cst_67 = arith.constant dense<0.000000e+00> : vector<2x1x128xf32>
    %200 = tpu.matmul %199, %0, %cst_67 {dimension_numbers = #tpu.dot_dimension_numbers<[2], [1], [1], [2], [0, 0, 0, 1, 1, 2], [0], [0]>} : vector<2x1x16xf32>, vector<2x16x128xf32>, vector<2x1x128xf32> -> vector<2x1x128xf32>
    "tpu.trace_stop"() : () -> ()
    %201 = vector.shape_cast %200 : vector<2x1x128xf32> to vector<2x128xf32>
    %202 = tpu.concatenate %183, %201, %176 in 1 : vector<2x128xf32>, vector<2x128xf32>, vector<2x128xf32> -> vector<2x384xf32>
    %c0_68 = arith.constant 0 : index
    %c0_69 = arith.constant 0 : index
    %203 = vector.load %arg5[%c0_68, %c0_69] : memref<384x512xf32, #tpu.memory_space<vmem>>, vector<384x512xf32>
    %cst_70 = arith.constant dense<0.000000e+00> : vector<2x512xf32>
    %204 = tpu.matmul %202, %203, %cst_70 {dimension_numbers = #tpu.dot_dimension_numbers<[1], [0], [0], [1], [0, 0, 1, 1], [], []>} : vector<2x384xf32>, vector<384x512xf32>, vector<2x512xf32> -> vector<2x512xf32>
    %205 = vector.broadcast %15 : vector<1x512xf32> to vector<2x512xf32>
    %206 = arith.addf %204, %205 : vector<2x512xf32>
    %207 = vector.extract_strided_slice %206 {offsets = [0, 0], sizes = [2, 128], strides = [1, 1]} : vector<2x512xf32> to vector<2x128xf32>
    %208 = arith.negf %207 : vector<2x128xf32>
    %209 = math.exp %208 : vector<2x128xf32>
    %cst_71 = arith.constant 1.000000e+00 : f32
    %210 = vector.broadcast %cst_71 : f32 to vector<2x128xf32>
    %211 = arith.addf %210, %209 : vector<2x128xf32>
    %212 = arith.divf %210, %211 : vector<2x128xf32>
    %213 = vector.extract_strided_slice %206 {offsets = [0, 128], sizes = [2, 128], strides = [1, 1]} : vector<2x512xf32> to vector<2x128xf32>
    %214 = arith.negf %213 : vector<2x128xf32>
    %215 = math.exp %214 : vector<2x128xf32>
    %cst_72 = arith.constant 1.000000e+00 : f32
    %216 = vector.broadcast %cst_72 : f32 to vector<2x128xf32>
    %217 = arith.addf %216, %215 : vector<2x128xf32>
    %218 = arith.divf %216, %217 : vector<2x128xf32>
    %219 = vector.extract_strided_slice %206 {offsets = [0, 256], sizes = [2, 128], strides = [1, 1]} : vector<2x512xf32> to vector<2x128xf32>
    %220 = math.tanh %219 : vector<2x128xf32>
    %221 = vector.extract_strided_slice %206 {offsets = [0, 384], sizes = [2, 128], strides = [1, 1]} : vector<2x512xf32> to vector<2x128xf32>
    %222 = arith.negf %221 : vector<2x128xf32>
    %223 = math.exp %222 : vector<2x128xf32>
    %cst_73 = arith.constant 1.000000e+00 : f32
    %224 = vector.broadcast %cst_73 : f32 to vector<2x128xf32>
    %225 = arith.addf %224, %223 : vector<2x128xf32>
    %226 = arith.divf %224, %225 : vector<2x128xf32>
    %227 = arith.mulf %218, %174 : vector<2x128xf32>
    %228 = arith.mulf %212, %220 : vector<2x128xf32>
    %229 = arith.addf %227, %228 : vector<2x128xf32>
    %230 = math.tanh %229 : vector<2x128xf32>
    %231 = arith.mulf %226, %230 : vector<2x128xf32>
    %232 = tpu.concatenate %201, %183, %231 in 1 : vector<2x128xf32>, vector<2x128xf32>, vector<2x128xf32> -> vector<2x384xf32>
    %c0_74 = arith.constant 0 : index
    %c0_75 = arith.constant 0 : index
    %233 = vector.load %arg7[%c0_74, %c0_75] : memref<384x256xf32, #tpu.memory_space<vmem>>, vector<384x256xf32>
    %cst_76 = arith.constant dense<0.000000e+00> : vector<2x256xf32>
    %234 = tpu.matmul %232, %233, %cst_76 {dimension_numbers = #tpu.dot_dimension_numbers<[1], [0], [0], [1], [0, 0, 1, 1], [], []>} : vector<2x384xf32>, vector<384x256xf32>, vector<2x256xf32> -> vector<2x256xf32>
    %235 = vector.broadcast %16 : vector<1x256xf32> to vector<2x256xf32>
    %236 = arith.addf %234, %235 : vector<2x256xf32>
    %c4 = arith.constant 4 : index
    %c0_77 = arith.constant 0 : index
    %c0_78 = arith.constant 0 : index
    %237 = vector.load %arg2[%c4, %c0_77, %c0_78] : memref<8x2x128xf32, #tpu.memory_space<vmem>>, vector<1x2x128xf32>
    %238 = vector.shape_cast %237 : vector<1x2x128xf32> to vector<2x128xf32>
    %239 = vector.shape_cast %231 : vector<2x128xf32> to vector<2x1x128xf32>
    "tpu.trace_start"() <{level = 10 : i32, message = "bqu,bnu->bqn"}> : () -> ()
    %cst_79 = arith.constant dense<0.000000e+00> : vector<2x1x16xf32>
    %240 = tpu.matmul %239, %12, %cst_79 {dimension_numbers = #tpu.dot_dimension_numbers<[2], [2], [1], [1], [0, 0, 0, 1, 1, 1], [0], [0]>} : vector<2x1x128xf32>, vector<2x16x128xf32>, vector<2x1x16xf32> -> vector<2x1x16xf32>
    "tpu.trace_stop"() : () -> ()
    %241 = vector.shape_cast %240 : vector<2x1x16xf32> to vector<2x16xf32>
    %cst_80 = arith.constant 0.0883883461 : f32
    %242 = vector.broadcast %cst_80 : f32 to vector<2x16xf32>
    %243 = arith.mulf %241, %242 : vector<2x16xf32>
    %cst_81 = arith.constant dense<0xFF800000> : vector<2xf32>
    %244 = vector.multi_reduction <maximumf>, %243, %cst_81 [1] : vector<2x16xf32> to vector<2xf32>
    %245 = vector.shape_cast %244 : vector<2xf32> to vector<2x1xf32>
    %246 = vector.broadcast %245 : vector<2x1xf32> to vector<2x16xf32>
    %247 = arith.subf %243, %246 : vector<2x16xf32>
    %248 = math.exp %247 : vector<2x16xf32>
    %cst_82 = arith.constant dense<0.000000e+00> : vector<2xf32>
    %249 = vector.multi_reduction <add>, %248, %cst_82 [1] : vector<2x16xf32> to vector<2xf32>
    %250 = vector.shape_cast %249 : vector<2xf32> to vector<2x1xf32>
    %251 = tpu.reciprocal %250 {approx = true} : vector<2x1xf32> -> vector<2x1xf32>
    %252 = vector.broadcast %251 : vector<2x1xf32> to vector<2x16xf32>
    %253 = arith.mulf %248, %252 : vector<2x16xf32>
    %254 = vector.shape_cast %253 : vector<2x16xf32> to vector<2x1x16xf32>
    "tpu.trace_start"() <{level = 10 : i32, message = "bqn,bnc->bqc"}> : () -> ()
    %cst_83 = arith.constant dense<0.000000e+00> : vector<2x1x128xf32>
    %255 = tpu.matmul %254, %0, %cst_83 {dimension_numbers = #tpu.dot_dimension_numbers<[2], [1], [1], [2], [0, 0, 0, 1, 1, 2], [0], [0]>} : vector<2x1x16xf32>, vector<2x16x128xf32>, vector<2x1x128xf32> -> vector<2x1x128xf32>
    "tpu.trace_stop"() : () -> ()
    %256 = vector.shape_cast %255 : vector<2x1x128xf32> to vector<2x128xf32>
    %257 = tpu.concatenate %238, %256, %231 in 1 : vector<2x128xf32>, vector<2x128xf32>, vector<2x128xf32> -> vector<2x384xf32>
    %c0_84 = arith.constant 0 : index
    %c0_85 = arith.constant 0 : index
    %258 = vector.load %arg5[%c0_84, %c0_85] : memref<384x512xf32, #tpu.memory_space<vmem>>, vector<384x512xf32>
    %cst_86 = arith.constant dense<0.000000e+00> : vector<2x512xf32>
    %259 = tpu.matmul %257, %258, %cst_86 {dimension_numbers = #tpu.dot_dimension_numbers<[1], [0], [0], [1], [0, 0, 1, 1], [], []>} : vector<2x384xf32>, vector<384x512xf32>, vector<2x512xf32> -> vector<2x512xf32>
    %260 = vector.broadcast %15 : vector<1x512xf32> to vector<2x512xf32>
    %261 = arith.addf %259, %260 : vector<2x512xf32>
    %262 = vector.extract_strided_slice %261 {offsets = [0, 0], sizes = [2, 128], strides = [1, 1]} : vector<2x512xf32> to vector<2x128xf32>
    %263 = arith.negf %262 : vector<2x128xf32>
    %264 = math.exp %263 : vector<2x128xf32>
    %cst_87 = arith.constant 1.000000e+00 : f32
    %265 = vector.broadcast %cst_87 : f32 to vector<2x128xf32>
    %266 = arith.addf %265, %264 : vector<2x128xf32>
    %267 = arith.divf %265, %266 : vector<2x128xf32>
    %268 = vector.extract_strided_slice %261 {offsets = [0, 128], sizes = [2, 128], strides = [1, 1]} : vector<2x512xf32> to vector<2x128xf32>
    %269 = arith.negf %268 : vector<2x128xf32>
    %270 = math.exp %269 : vector<2x128xf32>
    %cst_88 = arith.constant 1.000000e+00 : f32
    %271 = vector.broadcast %cst_88 : f32 to vector<2x128xf32>
    %272 = arith.addf %271, %270 : vector<2x128xf32>
    %273 = arith.divf %271, %272 : vector<2x128xf32>
    %274 = vector.extract_strided_slice %261 {offsets = [0, 256], sizes = [2, 128], strides = [1, 1]} : vector<2x512xf32> to vector<2x128xf32>
    %275 = math.tanh %274 : vector<2x128xf32>
    %276 = vector.extract_strided_slice %261 {offsets = [0, 384], sizes = [2, 128], strides = [1, 1]} : vector<2x512xf32> to vector<2x128xf32>
    %277 = arith.negf %276 : vector<2x128xf32>
    %278 = math.exp %277 : vector<2x128xf32>
    %cst_89 = arith.constant 1.000000e+00 : f32
    %279 = vector.broadcast %cst_89 : f32 to vector<2x128xf32>
    %280 = arith.addf %279, %278 : vector<2x128xf32>
    %281 = arith.divf %279, %280 : vector<2x128xf32>
    %282 = arith.mulf %273, %229 : vector<2x128xf32>
    %283 = arith.mulf %267, %275 : vector<2x128xf32>
    %284 = arith.addf %282, %283 : vector<2x128xf32>
    %285 = math.tanh %284 : vector<2x128xf32>
    %286 = arith.mulf %281, %285 : vector<2x128xf32>
    %287 = tpu.concatenate %256, %238, %286 in 1 : vector<2x128xf32>, vector<2x128xf32>, vector<2x128xf32> -> vector<2x384xf32>
    %c0_90 = arith.constant 0 : index
    %c0_91 = arith.constant 0 : index
    %288 = vector.load %arg7[%c0_90, %c0_91] : memref<384x256xf32, #tpu.memory_space<vmem>>, vector<384x256xf32>
    %cst_92 = arith.constant dense<0.000000e+00> : vector<2x256xf32>
    %289 = tpu.matmul %287, %288, %cst_92 {dimension_numbers = #tpu.dot_dimension_numbers<[1], [0], [0], [1], [0, 0, 1, 1], [], []>} : vector<2x384xf32>, vector<384x256xf32>, vector<2x256xf32> -> vector<2x256xf32>
    %290 = vector.broadcast %16 : vector<1x256xf32> to vector<2x256xf32>
    %291 = arith.addf %289, %290 : vector<2x256xf32>
    %c5 = arith.constant 5 : index
    %c0_93 = arith.constant 0 : index
    %c0_94 = arith.constant 0 : index
    %292 = vector.load %arg2[%c5, %c0_93, %c0_94] : memref<8x2x128xf32, #tpu.memory_space<vmem>>, vector<1x2x128xf32>
    %293 = vector.shape_cast %292 : vector<1x2x128xf32> to vector<2x128xf32>
    %294 = vector.shape_cast %286 : vector<2x128xf32> to vector<2x1x128xf32>
    "tpu.trace_start"() <{level = 10 : i32, message = "bqu,bnu->bqn"}> : () -> ()
    %cst_95 = arith.constant dense<0.000000e+00> : vector<2x1x16xf32>
    %295 = tpu.matmul %294, %12, %cst_95 {dimension_numbers = #tpu.dot_dimension_numbers<[2], [2], [1], [1], [0, 0, 0, 1, 1, 1], [0], [0]>} : vector<2x1x128xf32>, vector<2x16x128xf32>, vector<2x1x16xf32> -> vector<2x1x16xf32>
    "tpu.trace_stop"() : () -> ()
    %296 = vector.shape_cast %295 : vector<2x1x16xf32> to vector<2x16xf32>
    %cst_96 = arith.constant 0.0883883461 : f32
    %297 = vector.broadcast %cst_96 : f32 to vector<2x16xf32>
    %298 = arith.mulf %296, %297 : vector<2x16xf32>
    %cst_97 = arith.constant dense<0xFF800000> : vector<2xf32>
    %299 = vector.multi_reduction <maximumf>, %298, %cst_97 [1] : vector<2x16xf32> to vector<2xf32>
    %300 = vector.shape_cast %299 : vector<2xf32> to vector<2x1xf32>
    %301 = vector.broadcast %300 : vector<2x1xf32> to vector<2x16xf32>
    %302 = arith.subf %298, %301 : vector<2x16xf32>
    %303 = math.exp %302 : vector<2x16xf32>
    %cst_98 = arith.constant dense<0.000000e+00> : vector<2xf32>
    %304 = vector.multi_reduction <add>, %303, %cst_98 [1] : vector<2x16xf32> to vector<2xf32>
    %305 = vector.shape_cast %304 : vector<2xf32> to vector<2x1xf32>
    %306 = tpu.reciprocal %305 {approx = true} : vector<2x1xf32> -> vector<2x1xf32>
    %307 = vector.broadcast %306 : vector<2x1xf32> to vector<2x16xf32>
    %308 = arith.mulf %303, %307 : vector<2x16xf32>
    %309 = vector.shape_cast %308 : vector<2x16xf32> to vector<2x1x16xf32>
    "tpu.trace_start"() <{level = 10 : i32, message = "bqn,bnc->bqc"}> : () -> ()
    %cst_99 = arith.constant dense<0.000000e+00> : vector<2x1x128xf32>
    %310 = tpu.matmul %309, %0, %cst_99 {dimension_numbers = #tpu.dot_dimension_numbers<[2], [1], [1], [2], [0, 0, 0, 1, 1, 2], [0], [0]>} : vector<2x1x16xf32>, vector<2x16x128xf32>, vector<2x1x128xf32> -> vector<2x1x128xf32>
    "tpu.trace_stop"() : () -> ()
    %311 = vector.shape_cast %310 : vector<2x1x128xf32> to vector<2x128xf32>
    %312 = tpu.concatenate %293, %311, %286 in 1 : vector<2x128xf32>, vector<2x128xf32>, vector<2x128xf32> -> vector<2x384xf32>
    %c0_100 = arith.constant 0 : index
    %c0_101 = arith.constant 0 : index
    %313 = vector.load %arg5[%c0_100, %c0_101] : memref<384x512xf32, #tpu.memory_space<vmem>>, vector<384x512xf32>
    %cst_102 = arith.constant dense<0.000000e+00> : vector<2x512xf32>
    %314 = tpu.matmul %312, %313, %cst_102 {dimension_numbers = #tpu.dot_dimension_numbers<[1], [0], [0], [1], [0, 0, 1, 1], [], []>} : vector<2x384xf32>, vector<384x512xf32>, vector<2x512xf32> -> vector<2x512xf32>
    %315 = vector.broadcast %15 : vector<1x512xf32> to vector<2x512xf32>
    %316 = arith.addf %314, %315 : vector<2x512xf32>
    %317 = vector.extract_strided_slice %316 {offsets = [0, 0], sizes = [2, 128], strides = [1, 1]} : vector<2x512xf32> to vector<2x128xf32>
    %318 = arith.negf %317 : vector<2x128xf32>
    %319 = math.exp %318 : vector<2x128xf32>
    %cst_103 = arith.constant 1.000000e+00 : f32
    %320 = vector.broadcast %cst_103 : f32 to vector<2x128xf32>
    %321 = arith.addf %320, %319 : vector<2x128xf32>
    %322 = arith.divf %320, %321 : vector<2x128xf32>
    %323 = vector.extract_strided_slice %316 {offsets = [0, 128], sizes = [2, 128], strides = [1, 1]} : vector<2x512xf32> to vector<2x128xf32>
    %324 = arith.negf %323 : vector<2x128xf32>
    %325 = math.exp %324 : vector<2x128xf32>
    %cst_104 = arith.constant 1.000000e+00 : f32
    %326 = vector.broadcast %cst_104 : f32 to vector<2x128xf32>
    %327 = arith.addf %326, %325 : vector<2x128xf32>
    %328 = arith.divf %326, %327 : vector<2x128xf32>
    %329 = vector.extract_strided_slice %316 {offsets = [0, 256], sizes = [2, 128], strides = [1, 1]} : vector<2x512xf32> to vector<2x128xf32>
    %330 = math.tanh %329 : vector<2x128xf32>
    %331 = vector.extract_strided_slice %316 {offsets = [0, 384], sizes = [2, 128], strides = [1, 1]} : vector<2x512xf32> to vector<2x128xf32>
    %332 = arith.negf %331 : vector<2x128xf32>
    %333 = math.exp %332 : vector<2x128xf32>
    %cst_105 = arith.constant 1.000000e+00 : f32
    %334 = vector.broadcast %cst_105 : f32 to vector<2x128xf32>
    %335 = arith.addf %334, %333 : vector<2x128xf32>
    %336 = arith.divf %334, %335 : vector<2x128xf32>
    %337 = arith.mulf %328, %284 : vector<2x128xf32>
    %338 = arith.mulf %322, %330 : vector<2x128xf32>
    %339 = arith.addf %337, %338 : vector<2x128xf32>
    %340 = math.tanh %339 : vector<2x128xf32>
    %341 = arith.mulf %336, %340 : vector<2x128xf32>
    %342 = tpu.concatenate %311, %293, %341 in 1 : vector<2x128xf32>, vector<2x128xf32>, vector<2x128xf32> -> vector<2x384xf32>
    %c0_106 = arith.constant 0 : index
    %c0_107 = arith.constant 0 : index
    %343 = vector.load %arg7[%c0_106, %c0_107] : memref<384x256xf32, #tpu.memory_space<vmem>>, vector<384x256xf32>
    %cst_108 = arith.constant dense<0.000000e+00> : vector<2x256xf32>
    %344 = tpu.matmul %342, %343, %cst_108 {dimension_numbers = #tpu.dot_dimension_numbers<[1], [0], [0], [1], [0, 0, 1, 1], [], []>} : vector<2x384xf32>, vector<384x256xf32>, vector<2x256xf32> -> vector<2x256xf32>
    %345 = vector.broadcast %16 : vector<1x256xf32> to vector<2x256xf32>
    %346 = arith.addf %344, %345 : vector<2x256xf32>
    %c6 = arith.constant 6 : index
    %c0_109 = arith.constant 0 : index
    %c0_110 = arith.constant 0 : index
    %347 = vector.load %arg2[%c6, %c0_109, %c0_110] : memref<8x2x128xf32, #tpu.memory_space<vmem>>, vector<1x2x128xf32>
    %348 = vector.shape_cast %347 : vector<1x2x128xf32> to vector<2x128xf32>
    %349 = vector.shape_cast %341 : vector<2x128xf32> to vector<2x1x128xf32>
    "tpu.trace_start"() <{level = 10 : i32, message = "bqu,bnu->bqn"}> : () -> ()
    %cst_111 = arith.constant dense<0.000000e+00> : vector<2x1x16xf32>
    %350 = tpu.matmul %349, %12, %cst_111 {dimension_numbers = #tpu.dot_dimension_numbers<[2], [2], [1], [1], [0, 0, 0, 1, 1, 1], [0], [0]>} : vector<2x1x128xf32>, vector<2x16x128xf32>, vector<2x1x16xf32> -> vector<2x1x16xf32>
    "tpu.trace_stop"() : () -> ()
    %351 = vector.shape_cast %350 : vector<2x1x16xf32> to vector<2x16xf32>
    %cst_112 = arith.constant 0.0883883461 : f32
    %352 = vector.broadcast %cst_112 : f32 to vector<2x16xf32>
    %353 = arith.mulf %351, %352 : vector<2x16xf32>
    %cst_113 = arith.constant dense<0xFF800000> : vector<2xf32>
    %354 = vector.multi_reduction <maximumf>, %353, %cst_113 [1] : vector<2x16xf32> to vector<2xf32>
    %355 = vector.shape_cast %354 : vector<2xf32> to vector<2x1xf32>
    %356 = vector.broadcast %355 : vector<2x1xf32> to vector<2x16xf32>
    %357 = arith.subf %353, %356 : vector<2x16xf32>
    %358 = math.exp %357 : vector<2x16xf32>
    %cst_114 = arith.constant dense<0.000000e+00> : vector<2xf32>
    %359 = vector.multi_reduction <add>, %358, %cst_114 [1] : vector<2x16xf32> to vector<2xf32>
    %360 = vector.shape_cast %359 : vector<2xf32> to vector<2x1xf32>
    %361 = tpu.reciprocal %360 {approx = true} : vector<2x1xf32> -> vector<2x1xf32>
    %362 = vector.broadcast %361 : vector<2x1xf32> to vector<2x16xf32>
    %363 = arith.mulf %358, %362 : vector<2x16xf32>
    %364 = vector.shape_cast %363 : vector<2x16xf32> to vector<2x1x16xf32>
    "tpu.trace_start"() <{level = 10 : i32, message = "bqn,bnc->bqc"}> : () -> ()
    %cst_115 = arith.constant dense<0.000000e+00> : vector<2x1x128xf32>
    %365 = tpu.matmul %364, %0, %cst_115 {dimension_numbers = #tpu.dot_dimension_numbers<[2], [1], [1], [2], [0, 0, 0, 1, 1, 2], [0], [0]>} : vector<2x1x16xf32>, vector<2x16x128xf32>, vector<2x1x128xf32> -> vector<2x1x128xf32>
    "tpu.trace_stop"() : () -> ()
    %366 = vector.shape_cast %365 : vector<2x1x128xf32> to vector<2x128xf32>
    %367 = tpu.concatenate %348, %366, %341 in 1 : vector<2x128xf32>, vector<2x128xf32>, vector<2x128xf32> -> vector<2x384xf32>
    %c0_116 = arith.constant 0 : index
    %c0_117 = arith.constant 0 : index
    %368 = vector.load %arg5[%c0_116, %c0_117] : memref<384x512xf32, #tpu.memory_space<vmem>>, vector<384x512xf32>
    %cst_118 = arith.constant dense<0.000000e+00> : vector<2x512xf32>
    %369 = tpu.matmul %367, %368, %cst_118 {dimension_numbers = #tpu.dot_dimension_numbers<[1], [0], [0], [1], [0, 0, 1, 1], [], []>} : vector<2x384xf32>, vector<384x512xf32>, vector<2x512xf32> -> vector<2x512xf32>
    %370 = vector.broadcast %15 : vector<1x512xf32> to vector<2x512xf32>
    %371 = arith.addf %369, %370 : vector<2x512xf32>
    %372 = vector.extract_strided_slice %371 {offsets = [0, 0], sizes = [2, 128], strides = [1, 1]} : vector<2x512xf32> to vector<2x128xf32>
    %373 = arith.negf %372 : vector<2x128xf32>
    %374 = math.exp %373 : vector<2x128xf32>
    %cst_119 = arith.constant 1.000000e+00 : f32
    %375 = vector.broadcast %cst_119 : f32 to vector<2x128xf32>
    %376 = arith.addf %375, %374 : vector<2x128xf32>
    %377 = arith.divf %375, %376 : vector<2x128xf32>
    %378 = vector.extract_strided_slice %371 {offsets = [0, 128], sizes = [2, 128], strides = [1, 1]} : vector<2x512xf32> to vector<2x128xf32>
    %379 = arith.negf %378 : vector<2x128xf32>
    %380 = math.exp %379 : vector<2x128xf32>
    %cst_120 = arith.constant 1.000000e+00 : f32
    %381 = vector.broadcast %cst_120 : f32 to vector<2x128xf32>
    %382 = arith.addf %381, %380 : vector<2x128xf32>
    %383 = arith.divf %381, %382 : vector<2x128xf32>
    %384 = vector.extract_strided_slice %371 {offsets = [0, 256], sizes = [2, 128], strides = [1, 1]} : vector<2x512xf32> to vector<2x128xf32>
    %385 = math.tanh %384 : vector<2x128xf32>
    %386 = vector.extract_strided_slice %371 {offsets = [0, 384], sizes = [2, 128], strides = [1, 1]} : vector<2x512xf32> to vector<2x128xf32>
    %387 = arith.negf %386 : vector<2x128xf32>
    %388 = math.exp %387 : vector<2x128xf32>
    %cst_121 = arith.constant 1.000000e+00 : f32
    %389 = vector.broadcast %cst_121 : f32 to vector<2x128xf32>
    %390 = arith.addf %389, %388 : vector<2x128xf32>
    %391 = arith.divf %389, %390 : vector<2x128xf32>
    %392 = arith.mulf %383, %339 : vector<2x128xf32>
    %393 = arith.mulf %377, %385 : vector<2x128xf32>
    %394 = arith.addf %392, %393 : vector<2x128xf32>
    %395 = math.tanh %394 : vector<2x128xf32>
    %396 = arith.mulf %391, %395 : vector<2x128xf32>
    %397 = tpu.concatenate %366, %348, %396 in 1 : vector<2x128xf32>, vector<2x128xf32>, vector<2x128xf32> -> vector<2x384xf32>
    %c0_122 = arith.constant 0 : index
    %c0_123 = arith.constant 0 : index
    %398 = vector.load %arg7[%c0_122, %c0_123] : memref<384x256xf32, #tpu.memory_space<vmem>>, vector<384x256xf32>
    %cst_124 = arith.constant dense<0.000000e+00> : vector<2x256xf32>
    %399 = tpu.matmul %397, %398, %cst_124 {dimension_numbers = #tpu.dot_dimension_numbers<[1], [0], [0], [1], [0, 0, 1, 1], [], []>} : vector<2x384xf32>, vector<384x256xf32>, vector<2x256xf32> -> vector<2x256xf32>
    %400 = vector.broadcast %16 : vector<1x256xf32> to vector<2x256xf32>
    %401 = arith.addf %399, %400 : vector<2x256xf32>
    %c7 = arith.constant 7 : index
    %c0_125 = arith.constant 0 : index
    %c0_126 = arith.constant 0 : index
    %402 = vector.load %arg2[%c7, %c0_125, %c0_126] : memref<8x2x128xf32, #tpu.memory_space<vmem>>, vector<1x2x128xf32>
    %403 = vector.shape_cast %402 : vector<1x2x128xf32> to vector<2x128xf32>
    %404 = vector.shape_cast %396 : vector<2x128xf32> to vector<2x1x128xf32>
    "tpu.trace_start"() <{level = 10 : i32, message = "bqu,bnu->bqn"}> : () -> ()
    %cst_127 = arith.constant dense<0.000000e+00> : vector<2x1x16xf32>
    %405 = tpu.matmul %404, %12, %cst_127 {dimension_numbers = #tpu.dot_dimension_numbers<[2], [2], [1], [1], [0, 0, 0, 1, 1, 1], [0], [0]>} : vector<2x1x128xf32>, vector<2x16x128xf32>, vector<2x1x16xf32> -> vector<2x1x16xf32>
    "tpu.trace_stop"() : () -> ()
    %406 = vector.shape_cast %405 : vector<2x1x16xf32> to vector<2x16xf32>
    %cst_128 = arith.constant 0.0883883461 : f32
    %407 = vector.broadcast %cst_128 : f32 to vector<2x16xf32>
    %408 = arith.mulf %406, %407 : vector<2x16xf32>
    %cst_129 = arith.constant dense<0xFF800000> : vector<2xf32>
    %409 = vector.multi_reduction <maximumf>, %408, %cst_129 [1] : vector<2x16xf32> to vector<2xf32>
    %410 = vector.shape_cast %409 : vector<2xf32> to vector<2x1xf32>
    %411 = vector.broadcast %410 : vector<2x1xf32> to vector<2x16xf32>
    %412 = arith.subf %408, %411 : vector<2x16xf32>
    %413 = math.exp %412 : vector<2x16xf32>
    %cst_130 = arith.constant dense<0.000000e+00> : vector<2xf32>
    %414 = vector.multi_reduction <add>, %413, %cst_130 [1] : vector<2x16xf32> to vector<2xf32>
    %415 = vector.shape_cast %414 : vector<2xf32> to vector<2x1xf32>
    %416 = tpu.reciprocal %415 {approx = true} : vector<2x1xf32> -> vector<2x1xf32>
    %417 = vector.broadcast %416 : vector<2x1xf32> to vector<2x16xf32>
    %418 = arith.mulf %413, %417 : vector<2x16xf32>
    %419 = vector.shape_cast %418 : vector<2x16xf32> to vector<2x1x16xf32>
    "tpu.trace_start"() <{level = 10 : i32, message = "bqn,bnc->bqc"}> : () -> ()
    %cst_131 = arith.constant dense<0.000000e+00> : vector<2x1x128xf32>
    %420 = tpu.matmul %419, %0, %cst_131 {dimension_numbers = #tpu.dot_dimension_numbers<[2], [1], [1], [2], [0, 0, 0, 1, 1, 2], [0], [0]>} : vector<2x1x16xf32>, vector<2x16x128xf32>, vector<2x1x128xf32> -> vector<2x1x128xf32>
    "tpu.trace_stop"() : () -> ()
    %421 = vector.shape_cast %420 : vector<2x1x128xf32> to vector<2x128xf32>
    %422 = tpu.concatenate %403, %421, %396 in 1 : vector<2x128xf32>, vector<2x128xf32>, vector<2x128xf32> -> vector<2x384xf32>
    %c0_132 = arith.constant 0 : index
    %c0_133 = arith.constant 0 : index
    %423 = vector.load %arg5[%c0_132, %c0_133] : memref<384x512xf32, #tpu.memory_space<vmem>>, vector<384x512xf32>
    %cst_134 = arith.constant dense<0.000000e+00> : vector<2x512xf32>
    %424 = tpu.matmul %422, %423, %cst_134 {dimension_numbers = #tpu.dot_dimension_numbers<[1], [0], [0], [1], [0, 0, 1, 1], [], []>} : vector<2x384xf32>, vector<384x512xf32>, vector<2x512xf32> -> vector<2x512xf32>
    %425 = vector.broadcast %15 : vector<1x512xf32> to vector<2x512xf32>
    %426 = arith.addf %424, %425 : vector<2x512xf32>
    %427 = vector.extract_strided_slice %426 {offsets = [0, 0], sizes = [2, 128], strides = [1, 1]} : vector<2x512xf32> to vector<2x128xf32>
    %428 = arith.negf %427 : vector<2x128xf32>
    %429 = math.exp %428 : vector<2x128xf32>
    %cst_135 = arith.constant 1.000000e+00 : f32
    %430 = vector.broadcast %cst_135 : f32 to vector<2x128xf32>
    %431 = arith.addf %430, %429 : vector<2x128xf32>
    %432 = arith.divf %430, %431 : vector<2x128xf32>
    %433 = vector.extract_strided_slice %426 {offsets = [0, 128], sizes = [2, 128], strides = [1, 1]} : vector<2x512xf32> to vector<2x128xf32>
    %434 = arith.negf %433 : vector<2x128xf32>
    %435 = math.exp %434 : vector<2x128xf32>
    %cst_136 = arith.constant 1.000000e+00 : f32
    %436 = vector.broadcast %cst_136 : f32 to vector<2x128xf32>
    %437 = arith.addf %436, %435 : vector<2x128xf32>
    %438 = arith.divf %436, %437 : vector<2x128xf32>
    %439 = vector.extract_strided_slice %426 {offsets = [0, 256], sizes = [2, 128], strides = [1, 1]} : vector<2x512xf32> to vector<2x128xf32>
    %440 = math.tanh %439 : vector<2x128xf32>
    %441 = vector.extract_strided_slice %426 {offsets = [0, 384], sizes = [2, 128], strides = [1, 1]} : vector<2x512xf32> to vector<2x128xf32>
    %442 = arith.negf %441 : vector<2x128xf32>
    %443 = math.exp %442 : vector<2x128xf32>
    %cst_137 = arith.constant 1.000000e+00 : f32
    %444 = vector.broadcast %cst_137 : f32 to vector<2x128xf32>
    %445 = arith.addf %444, %443 : vector<2x128xf32>
    %446 = arith.divf %444, %445 : vector<2x128xf32>
    %447 = arith.mulf %438, %394 : vector<2x128xf32>
    %448 = arith.mulf %432, %440 : vector<2x128xf32>
    %449 = arith.addf %447, %448 : vector<2x128xf32>
    %450 = math.tanh %449 : vector<2x128xf32>
    %451 = arith.mulf %446, %450 : vector<2x128xf32>
    %452 = tpu.concatenate %421, %403, %451 in 1 : vector<2x128xf32>, vector<2x128xf32>, vector<2x128xf32> -> vector<2x384xf32>
    %c0_138 = arith.constant 0 : index
    %c0_139 = arith.constant 0 : index
    %453 = vector.load %arg7[%c0_138, %c0_139] : memref<384x256xf32, #tpu.memory_space<vmem>>, vector<384x256xf32>
    %cst_140 = arith.constant dense<0.000000e+00> : vector<2x256xf32>
    %454 = tpu.matmul %452, %453, %cst_140 {dimension_numbers = #tpu.dot_dimension_numbers<[1], [0], [0], [1], [0, 0, 1, 1], [], []>} : vector<2x384xf32>, vector<384x256xf32>, vector<2x256xf32> -> vector<2x256xf32>
    %455 = vector.broadcast %16 : vector<1x256xf32> to vector<2x256xf32>
    %456 = arith.addf %454, %455 : vector<2x256xf32>
    %457 = vector.shape_cast %71 : vector<2x256xf32> to vector<1x2x256xf32>
    %458 = vector.shape_cast %126 : vector<2x256xf32> to vector<1x2x256xf32>
    %459 = vector.shape_cast %181 : vector<2x256xf32> to vector<1x2x256xf32>
    %460 = vector.shape_cast %236 : vector<2x256xf32> to vector<1x2x256xf32>
    %461 = vector.shape_cast %291 : vector<2x256xf32> to vector<1x2x256xf32>
    %462 = vector.shape_cast %346 : vector<2x256xf32> to vector<1x2x256xf32>
    %463 = vector.shape_cast %401 : vector<2x256xf32> to vector<1x2x256xf32>
    %464 = vector.shape_cast %456 : vector<2x256xf32> to vector<1x2x256xf32>
    %465 = tpu.concatenate %457, %458, %459, %460, %461, %462, %463, %464 in 0 : vector<1x2x256xf32>, vector<1x2x256xf32>, vector<1x2x256xf32>, vector<1x2x256xf32>, vector<1x2x256xf32>, vector<1x2x256xf32>, vector<1x2x256xf32>, vector<1x2x256xf32> -> vector<8x2x256xf32>
    %c0_141 = arith.constant 0 : index
    %c0_142 = arith.constant 0 : index
    %c0_143 = arith.constant 0 : index
    %466 = vector.load %arg9[%c0_141, %c0_142, %c0_143] : memref<8x2x256xf32, #tpu.memory_space<vmem>>, vector<8x2x256xf32>
    tpu.vector_store %arg9[%c0_141, %c0_142, %c0_143], %465 {strides = array<i32>} : memref<8x2x256xf32, #tpu.memory_space<vmem>>, vector<8x2x256xf32>,
    %467 = vector.shape_cast %33 : vector<2x16xf32> to vector<1x2x16xf32>
    %468 = vector.shape_cast %88 : vector<2x16xf32> to vector<1x2x16xf32>
    %469 = vector.shape_cast %143 : vector<2x16xf32> to vector<1x2x16xf32>
    %470 = vector.shape_cast %198 : vector<2x16xf32> to vector<1x2x16xf32>
    %471 = vector.shape_cast %253 : vector<2x16xf32> to vector<1x2x16xf32>
    %472 = vector.shape_cast %308 : vector<2x16xf32> to vector<1x2x16xf32>
    %473 = vector.shape_cast %363 : vector<2x16xf32> to vector<1x2x16xf32>
    %474 = vector.shape_cast %418 : vector<2x16xf32> to vector<1x2x16xf32>
    %475 = tpu.concatenate %467, %468, %469, %470, %471, %472, %473, %474 in 0 : vector<1x2x16xf32>, vector<1x2x16xf32>, vector<1x2x16xf32>, vector<1x2x16xf32>, vector<1x2x16xf32>, vector<1x2x16xf32>, vector<1x2x16xf32>, vector<1x2x16xf32> -> vector<8x2x16xf32>
    %c0_144 = arith.constant 0 : index
    %c0_145 = arith.constant 0 : index
    %c0_146 = arith.constant 0 : index
    %476 = vector.load %arg10[%c0_144, %c0_145, %c0_146] : memref<8x2x16xf32, #tpu.memory_space<vmem>>, vector<8x2x16xf32>
    tpu.vector_store %arg10[%c0_144, %c0_145, %c0_146], %475 {strides = array<i32>} : memref<8x2x16xf32, #tpu.memory_space<vmem>>, vector<8x2x16xf32>,
    return
  }
  func.func @transform_0(%arg0: i32) -> (i32, i32, i32) {
    %c0_i32 = arith.constant 0 : i32
    %c0_i32_0 = arith.constant 0 : i32
    %c0_i32_1 = arith.constant 0 : i32
    %c0_i32_2 = arith.constant 0 : i32
    return %c0_i32, %c0_i32_0, %c0_i32_1 : i32, i32, i32
  }
  func.func @transform_1(%arg0: i32) -> (i32, i32, i32) {
    %c0_i32 = arith.constant 0 : i32
    %c0_i32_0 = arith.constant 0 : i32
    %c0_i32_1 = arith.constant 0 : i32
    %c0_i32_2 = arith.constant 0 : i32
    return %c0_i32, %c0_i32_0, %c0_i32_1 : i32, i32, i32
  }
  func.func @transform_2(%arg0: i32) -> (i32, i32) {
    %c0_i32 = arith.constant 0 : i32
    %c0_i32_0 = arith.constant 0 : i32
    %c0_i32_1 = arith.constant 0 : i32
    return %c0_i32, %c0_i32_0 : i32, i32
  }
  func.func @transform_3(%arg0: i32) -> (i32, i32) {
    %c0_i32 = arith.constant 0 : i32
    %c0_i32_0 = arith.constant 0 : i32
    %c0_i32_1 = arith.constant 0 : i32
    return %c0_i32, %c0_i32_0 : i32, i32
  }
  func.func @transform_4(%arg0: i32) -> (i32, i32) {
    %c0_i32 = arith.constant 0 : i32
    %c0_i32_0 = arith.constant 0 : i32
    %c0_i32_1 = arith.constant 0 : i32
    return %c0_i32, %c0_i32_0 : i32, i32
  }
  func.func @transform_5(%arg0: i32) -> (i32, i32) {
    %c0_i32 = arith.constant 0 : i32
    %c0_i32_0 = arith.constant 0 : i32
    %c0_i32_1 = arith.constant 0 : i32
    return %c0_i32, %c0_i32_0 : i32, i32
  }
  func.func @transform_6(%arg0: i32) -> (i32, i32) {
    %c0_i32 = arith.constant 0 : i32
    %c0_i32_0 = arith.constant 0 : i32
    %c0_i32_1 = arith.constant 0 : i32
    return %c0_i32, %c0_i32_0 : i32, i32
  }
  func.func @transform_7(%arg0: i32) -> (i32, i32) {
    %c0_i32 = arith.constant 0 : i32
    %c0_i32_0 = arith.constant 0 : i32
    %c0_i32_1 = arith.constant 0 : i32
    return %c0_i32, %c0_i32_0 : i32, i32
  }
  func.func @transform_8(%arg0: i32) -> (i32, i32, i32) {
    %c0_i32 = arith.constant 0 : i32
    %c0_i32_0 = arith.constant 0 : i32
    %c0_i32_1 = arith.constant 0 : i32
    %c0_i32_2 = arith.constant 0 : i32
    return %c0_i32, %c0_i32_0, %c0_i32_1 : i32, i32, i32
  }
  func.func @transform_9(%arg0: i32) -> (i32, i32, i32) {
    %c0_i32 = arith.constant 0 : i32
    %c0_i32_0 = arith.constant 0 : i32
    %c0_i32_1 = arith.constant 0 : i32
    %c0_i32_2 = arith.constant 0 : i32
    return %c0_i32, %c0_i32_0, %c0_i32_1 : i32, i32, i32
  }
}

</mosaic_0001>

<llo_original>
// kernel: tpu_custom_call.1
$region0: #{tpu_custom_call.1}
  #allocation0 [shape = 'u32[]', space=smem, size = 0x4, offset = 0x4, fixed_abs, tag = 'smem constant byte address 0x4 - core index']
  #allocation1 [shape = 'u32[72,128]{1,0:T(1,128)}', space=vmem, size = 0x9000, scoped, tag = 'internal scratch']
  %s0 = inlined_call_operand.hbm [shape: f32[2,16,128], index: 0, kind: input, shape index: {}]
  %s1 = inlined_call_operand.hbm [shape: f32[8,2,128], index: 1, kind: input, shape index: {}]
  %s2 = inlined_call_operand.hbm [shape: f32[128,384], index: 2, kind: input, shape index: {}]
  %s3 = inlined_call_operand.hbm [shape: f32[1,384], index: 3, kind: input, shape index: {}]
  %s4 = inlined_call_operand.hbm [shape: f32[384,512], index: 4, kind: input, shape index: {}]
  %s5 = inlined_call_operand.vmem [shape: f32[1,512], index: 5, kind: input, shape index: {}]
  %s6 = inlined_call_operand.hbm [shape: f32[384,256], index: 6, kind: input, shape index: {}]
  %s7 = inlined_call_operand.vmem [shape: f32[1,256], index: 7, kind: input, shape index: {}]
  %s8 = inlined_call_operand.hbm [shape: f32[8,2,256], index: 8, kind: output, shape index: {0}]
  %s9 = inlined_call_operand.hbm [shape: f32[8,2,16], index: 9, kind: output, shape index: {1}]
  %10 = xla_tuple %s8, %s9
  %s11 = sld [smem:[#allocation0]]
  $region74: #{tpu_custom_call.1} parent=0
    _
  %s13 = ssub.s32 1, %s11
  %s14 = scalar_select 0, %s13, %s11
  $region1: #{tpu_custom_call.1} parent=0
    #allocation2 [shape = 'u8[16384]{0}', space=vmem, size = 0x4000, scoped, tag = 'input window, operand 0, single buffered']
    #allocation3 [shape = 's32[1]{0}', space=sflag, size = 0x4, scoped, tag = 'scoped memory for tpu_custom_call.1']
    #allocation4 [shape = 's32[1]{0}', space=sflag, size = 0x4, scoped, tag = 'scoped memory for tpu_custom_call.1']
    #allocation5 [shape = 'u8[8192]{0}', space=vmem, size = 0x2000, scoped, tag = 'input window, operand 1, single buffered']
    #allocation6 [shape = 's32[1]{0}', space=sflag, size = 0x4, scoped, tag = 'scoped memory for tpu_custom_call.1']
    #allocation7 [shape = 'u8[196608]{0}', space=vmem, size = 0x30000, scoped, tag = 'input window, operand 2, single buffered']
    #allocation8 [shape = 'u8[1536]{0}', space=vmem, size = 0x800, scoped, tag = 'input window, operand 3, single buffered']
    #allocation9 [shape = 's32[1]{0}', space=sflag, size = 0x4, scoped, tag = 'scoped memory for tpu_custom_call.1']
    #allocation10 [shape = 'u8[786432]{0}', space=vmem, size = 0xc0000, scoped, tag = 'input window, operand 4, single buffered']
    #allocation11 [shape = 'u8[393216]{0}', space=vmem, size = 0x60000, scoped, tag = 'input window, operand 6, single buffered']
    #allocation12 [shape = 's32[1]{0}', space=sflag, size = 0x4, scoped, tag = 'scoped memory for tpu_custom_call.1']
    #allocation13 [shape = 'u8[16384]{0}', space=vmem, size = 0x4000, scoped, tag = 'output window, operand 0, single buffered']
    #allocation14 [shape = 'u8[8192]{0}', space=vmem, size = 0x2000, scoped, tag = 'output window, operand 1, single buffered']
    #allocation15 [shape = 's32[1]{0}', space=sflag, size = 0x4, scoped, tag = 'scoped memory for tpu_custom_call.1']
    %15 = vsyncpa [#allocation3], 0
    %16 = vsyncpa [#allocation6], 0
    %17 = vsyncpa [#allocation9], 0
    %18 = vsyncpa [#allocation12], 0
    %19 = vsyncpa [#allocation4], 0
    %20 = vsyncpa [#allocation15], 0
    // Predicated region
    $region2: #{tpu_custom_call.1} parent=1 // pred_check
      _
    $region3: #{tpu_custom_call.1} parent=1 // pred_check_branch
      %22 = sbr.rel (0) target = $region5
    $region4: #{tpu_custom_call.1} parent=1 // pred_region
      %24 = vsyncadd [#allocation3], 0
      %s25 = sshll.u32 %s0, 4
      %s26 = int_to_ptr.hbm [resolvable:$true] %s25
      %s27 = sshll.u32 [#allocation2], 4
      %s28 = int_to_ptr.vmem [resolvable:$true] %s27
      %33 = dma.hbm_to_vmem [thread:$0]  %s26, 512, %s28, [#allocation3], 128, 128, 8
    $region5: #{tpu_custom_call.1} parent=1 // pred_fallthru
      _
    // Predicated region
    $region6: #{tpu_custom_call.1} parent=1 // pred_check
      _
    $region7: #{tpu_custom_call.1} parent=1 // pred_check_branch
      %35 = sbr.rel (0) target = $region9
    $region8: #{tpu_custom_call.1} parent=1 // pred_region
      %37 = vsyncadd [#allocation6], 0
      %s38 = sshll.u32 %s1, 4
      %s39 = int_to_ptr.hbm [resolvable:$true] %s38
      %s40 = sshll.u32 [#allocation5], 4
      %s41 = int_to_ptr.vmem [resolvable:$true] %s40
      %46 = dma.hbm_to_vmem [thread:$0]  %s39, 256, %s41, [#allocation6], 32, 32, 2
    $region9: #{tpu_custom_call.1} parent=1 // pred_fallthru
      _
    // Predicated region
    $region10: #{tpu_custom_call.1} parent=1 // pred_check
      _
    $region11: #{tpu_custom_call.1} parent=1 // pred_check_branch
      %48 = sbr.rel (0) target = $region13
    $region12: #{tpu_custom_call.1} parent=1 // pred_region
      %50 = vsyncadd [#allocation6], 0
      %s51 = sshll.u32 %s2, 4
      %s52 = int_to_ptr.hbm [resolvable:$true] %s51
      %s53 = sshll.u32 [#allocation7], 4
      %s54 = int_to_ptr.vmem [resolvable:$true] %s53
      %59 = dma.hbm_to_vmem [thread:$0]  %s52, 6144, %s54, [#allocation6], 384, 384, 24
    $region13: #{tpu_custom_call.1} parent=1 // pred_fallthru
      _
    // Predicated region
    $region14: #{tpu_custom_call.1} parent=1 // pred_check
      _
    $region15: #{tpu_custom_call.1} parent=1 // pred_check_branch
      %61 = sbr.rel (0) target = $region17
    $region16: #{tpu_custom_call.1} parent=1 // pred_region
      %63 = vsyncadd [#allocation9], 0
      %s65 = sshll.u32 %s3, 4
      %s66 = int_to_ptr.hbm [resolvable:$true] %s65
      %s67 = sshll.u32 [#allocation8], 4
      %s68 = int_to_ptr.vmem [resolvable:$true] %s67
      %70 = dma.hbm_to_vmem [thread:$0]  %s66, 48, %s68, [#allocation9]
    $region17: #{tpu_custom_call.1} parent=1 // pred_fallthru
      _
    // Predicated region
    $region18: #{tpu_custom_call.1} parent=1 // pred_check
      _
    $region19: #{tpu_custom_call.1} parent=1 // pred_check_branch
      %72 = sbr.rel (0) target = $region21
    $region20: #{tpu_custom_call.1} parent=1 // pred_region
      %74 = vsyncadd [#allocation9], 0
      %s75 = sshll.u32 %s4, 4
      %s76 = int_to_ptr.hbm [resolvable:$true] %s75
      %s77 = sshll.u32 [#allocation10], 4
      %s78 = int_to_ptr.vmem [resolvable:$true] %s77
      %83 = dma.hbm_to_vmem [thread:$0]  %s76, 24576, %s78, [#allocation9], 512, 512, 32
    $region21: #{tpu_custom_call.1} parent=1 // pred_fallthru
      _
    // Predicated region
    $region22: #{tpu_custom_call.1} parent=1 // pred_check
      _
    $region23: #{tpu_custom_call.1} parent=1 // pred_check_branch
      %85 = sbr.rel (0) target = $region25
    $region24: #{tpu_custom_call.1} parent=1 // pred_region
      _
    $region25: #{tpu_custom_call.1} parent=1 // pred_fallthru
      _
    // Predicated region
    $region26: #{tpu_custom_call.1} parent=1 // pred_check
      _
    $region27: #{tpu_custom_call.1} parent=1 // pred_check_branch
      %87 = sbr.rel (0) target = $region29
    $region28: #{tpu_custom_call.1} parent=1 // pred_region
      %89 = vsyncadd [#allocation12], 0
      %s90 = sshll.u32 %s6, 4
      %s91 = int_to_ptr.hbm [resolvable:$true] %s90
      %s92 = sshll.u32 [#allocation11], 4
      %s93 = int_to_ptr.vmem [resolvable:$true] %s92
      %98 = dma.hbm_to_vmem [thread:$0]  %s91, 12288, %s93, [#allocation12], 256, 256, 16
    $region29: #{tpu_custom_call.1} parent=1 // pred_fallthru
      _
    // Predicated region
    $region30: #{tpu_custom_call.1} parent=1 // pred_check
      _
    $region31: #{tpu_custom_call.1} parent=1 // pred_check_branch
      %100 = sbr.rel (0) target = $region33
    $region32: #{tpu_custom_call.1} parent=1 // pred_region
      _
    $region33: #{tpu_custom_call.1} parent=1 // pred_fallthru
      _
    // Predicated region
    $region34: #{tpu_custom_call.1} parent=1 // pred_check
      _
    $region35: #{tpu_custom_call.1} parent=1 // pred_check_branch
      %102 = sbr.rel (0) target = $region37
    $region36: #{tpu_custom_call.1} parent=1 // pred_region
      %104 = dma.done [#allocation3], 512
    $region37: #{tpu_custom_call.1} parent=1 // pred_fallthru
      _
    // Predicated region
    $region38: #{tpu_custom_call.1} parent=1 // pred_check
      _
    $region39: #{tpu_custom_call.1} parent=1 // pred_check_branch
      %106 = sbr.rel (0) target = $region41
    $region40: #{tpu_custom_call.1} parent=1 // pred_region
      %108 = dma.done [#allocation6], 256
    $region41: #{tpu_custom_call.1} parent=1 // pred_fallthru
      _
    // Predicated region
    $region42: #{tpu_custom_call.1} parent=1 // pred_check
      _
    $region43: #{tpu_custom_call.1} parent=1 // pred_check_branch
      %110 = sbr.rel (0) target = $region45
    $region44: #{tpu_custom_call.1} parent=1 // pred_region
      %112 = dma.done [#allocation6], 6144
    $region45: #{tpu_custom_call.1} parent=1 // pred_fallthru
      _
    // Predicated region
    $region46: #{tpu_custom_call.1} parent=1 // pred_check
      _
    $region47: #{tpu_custom_call.1} parent=1 // pred_check_branch
      %114 = sbr.rel (0) target = $region49
    $region48: #{tpu_custom_call.1} parent=1 // pred_region
      %116 = dma.done [#allocation9], 48
    $region49: #{tpu_custom_call.1} parent=1 // pred_fallthru
      _
    // Predicated region
    $region50: #{tpu_custom_call.1} parent=1 // pred_check
      _
    $region51: #{tpu_custom_call.1} parent=1 // pred_check_branch
      %118 = sbr.rel (0) target = $region53
    $region52: #{tpu_custom_call.1} parent=1 // pred_region
      %120 = dma.done [#allocation9], 24576
    $region53: #{tpu_custom_call.1} parent=1 // pred_fallthru
      _
    // Predicated region
    $region54: #{tpu_custom_call.1} parent=1 // pred_check
      _
    $region55: #{tpu_custom_call.1} parent=1 // pred_check_branch
      %122 = sbr.rel (0) target = $region57
    $region56: #{tpu_custom_call.1} parent=1 // pred_region
      %124 = dma.done [#allocation12], 12288
    $region57: #{tpu_custom_call.1} parent=1 // pred_fallthru
      _
    %v125 = vld [vmem:[#allocation2] sm:$0xff]
    %v126 = vld [vmem:[#allocation2 + $0x8] sm:$0xff]
    %v127 = vld [vmem:[#allocation2 + $0x10] sm:$0xff]
    %v128 = vld [vmem:[#allocation2 + $0x18] sm:$0xff]
    %v129 = vadd.f32 %v125, %v126
    %v130 = vrot.slane %v129, 4
    %v131 = vadd.f32 %v129, %v130
    %v132 = vrot.slane %v131, 2
    %v133 = vadd.f32 %v131, %v132
    %v134 = vrot.slane %v133, 1
    %v135 = vadd.f32 %v133, %v134
    %v136 = vadd.f32 %v127, %v128
    %v137 = vrot.slane %v136, 4
    %v138 = vadd.f32 %v136, %v137
    %v139 = vrot.slane %v138, 2
    %v140 = vadd.f32 %v138, %v139
    %v141 = vrot.slane %v140, 1
    %v142 = vadd.f32 %v140, %v141
    %v143 = vrcp.pop 16.0
    %v144 = vmul.f32 16.0, %v143
    %v145 = vsub.f32 1.0, %v144
    %v146 = vmul.f32 %v143, %v145
    %v147 = vadd.f32 %v143, %v146
    %vm148 = vweird.f32 %v143
    %v149 = vsel %vm148, %v143, %v147
    %v150 = vmul.f32 %v135, %v149
    %v151 = vmul.f32 %v142, %v149
    %vm154 = vcmask 1041409
    %v155 = vsel %vm154, %v151, %v150
    %v157 = vld [vmem:[#allocation7] sm:$0xff]
    %v158 = vld [vmem:[#allocation7 + $0x8] sm:$0xff]
    %v159 = vld [vmem:[#allocation7 + $0x10] sm:$0xff]
    %v160 = vld [vmem:[#allocation7 + $0x18] sm:$0xff]
    %v161 = vld [vmem:[#allocation7 + $0x20] sm:$0xff]
    %v162 = vld [vmem:[#allocation7 + $0x28] sm:$0xff]
    %v163 = vld [vmem:[#allocation7 + $0x30] sm:$0xff]
    %v164 = vld [vmem:[#allocation7 + $0x38] sm:$0xff]
    %v165 = vld [vmem:[#allocation7 + $0x40] sm:$0xff]
    %v166 = vld [vmem:[#allocation7 + $0x48] sm:$0xff]
    %v167 = vld [vmem:[#allocation7 + $0x50] sm:$0xff]
    %v168 = vld [vmem:[#allocation7 + $0x58] sm:$0xff]
    %v169 = vld [vmem:[#allocation7 + $0x60] sm:$0xff]
    %v170 = vld [vmem:[#allocation7 + $0x68] sm:$0xff]
    %v171 = vld [vmem:[#allocation7 + $0x70] sm:$0xff]
    %v172 = vld [vmem:[#allocation7 + $0x78] sm:$0xff]
    %v173 = vld [vmem:[#allocation7 + $0x80] sm:$0xff]
    %v174 = vld [vmem:[#allocation7 + $0x88] sm:$0xff]
    %v175 = vld [vmem:[#allocation7 + $0x90] sm:$0xff]
    %v176 = vld [vmem:[#allocation7 + $0x98] sm:$0xff]
    %v177 = vld [vmem:[#allocation7 + $0xa0] sm:$0xff]
    %v178 = vld [vmem:[#allocation7 + $0xa8] sm:$0xff]
    %v179 = vld [vmem:[#allocation7 + $0xb0] sm:$0xff]
    %v180 = vld [vmem:[#allocation7 + $0xb8] sm:$0xff]
    %v181 = vld [vmem:[#allocation7 + $0xc0] sm:$0xff]
    %v182 = vld [vmem:[#allocation7 + $0xc8] sm:$0xff]
    %v183 = vld [vmem:[#allocation7 + $0xd0] sm:$0xff]
    %v184 = vld [vmem:[#allocation7 + $0xd8] sm:$0xff]
    %v185 = vld [vmem:[#allocation7 + $0xe0] sm:$0xff]
    %v186 = vld [vmem:[#allocation7 + $0xe8] sm:$0xff]
    %v187 = vld [vmem:[#allocation7 + $0xf0] sm:$0xff]
    %v188 = vld [vmem:[#allocation7 + $0xf8] sm:$0xff]
    %v189 = vld [vmem:[#allocation7 + $0x100] sm:$0xff]
    %v190 = vld [vmem:[#allocation7 + $0x108] sm:$0xff]
    %v191 = vld [vmem:[#allocation7 + $0x110] sm:$0xff]
    %v192 = vld [vmem:[#allocation7 + $0x118] sm:$0xff]
    %v193 = vld [vmem:[#allocation7 + $0x120] sm:$0xff]
    %v194 = vld [vmem:[#allocation7 + $0x128] sm:$0xff]
    %v195 = vld [vmem:[#allocation7 + $0x130] sm:$0xff]
    %v196 = vld [vmem:[#allocation7 + $0x138] sm:$0xff]
    %v197 = vld [vmem:[#allocation7 + $0x140] sm:$0xff]
    %v198 = vld [vmem:[#allocation7 + $0x148] sm:$0xff]
    %v199 = vld [vmem:[#allocation7 + $0x150] sm:$0xff]
    %v200 = vld [vmem:[#allocation7 + $0x158] sm:$0xff]
    %v201 = vld [vmem:[#allocation7 + $0x160] sm:$0xff]
    %v202 = vld [vmem:[#allocation7 + $0x168] sm:$0xff]
    %v203 = vld [vmem:[#allocation7 + $0x170] sm:$0xff]
    %v204 = vld [vmem:[#allocation7 + $0x178] sm:$0xff]
    %v205 = vld [vmem:[#allocation8] sm:$0x7]
    %v207 = vperm.slane %v205, 0
    %v208 = vperm.slane %v205, 1
    %v209 = vperm.slane %v205, 2
    %213 = vmatpush.msra.mxu0 %v202
    %214 = vmatpush.msra.mxu0 %v199
    %215 = vmatpush.msra.mxu0 %v196
    %216 = vmatpush.msra.mxu0 %v193
    %217 = vmatpush.msra.mxu0 %v190
    %218 = vmatpush.msra.mxu0 %v187
    %219 = vmatpush.msra.mxu0 %v184
    %220 = vmatpush.msra.mxu0 %v181
    %221 = vmatpush.msra.mxu0 %v178
    %222 = vmatpush.msra.mxu0 %v175
    %223 = vmatpush.msra.mxu0 %v172
    %224 = vmatpush.msra.mxu0 %v169
    %225 = vmatpush.msra.mxu0 %v166
    %226 = vmatpush.msra.mxu0 %v163
    %227 = vmatpush.msra.mxu0 %v160
    %228 = vmatpush.msra.mxu0 %v157
    %229 = vmatmul.f32.gmra.mxu0 %v125
    %v230 = vpop.f32.mrf.mxu0
    %231 = vmatmul.f32.gmra.mxu0 %v126
    %v232 = vpop.f32.mrf.mxu0
    %233 = vmatmul.f32.gmra.mxu0 %v127
    %v234 = vpop.f32.mrf.mxu0
    %235 = vmatmul.f32.gmra.mxu0 %v128
    %v236 = vpop.f32.mrf.mxu0
    %237 = vmatmul.f32.gmra.mxu0 %v155
    %v238 = vpop.f32.mrf.mxu0
    %v239 = vadd.f32 %v207, %v238
    %240 = vdwg.mxu0
    %241 = vmatpush.msra.mxu0 %v203
    %242 = vmatpush.msra.mxu0 %v200
    %243 = vmatpush.msra.mxu0 %v197
    %244 = vmatpush.msra.mxu0 %v194
    %245 = vmatpush.msra.mxu0 %v191
    %246 = vmatpush.msra.mxu0 %v188
    %247 = vmatpush.msra.mxu0 %v185
    %248 = vmatpush.msra.mxu0 %v182
    %249 = vmatpush.msra.mxu0 %v179
    %250 = vmatpush.msra.mxu0 %v176
    %251 = vmatpush.msra.mxu0 %v173
    %252 = vmatpush.msra.mxu0 %v170
    %253 = vmatpush.msra.mxu0 %v167
    %254 = vmatpush.msra.mxu0 %v164
    %255 = vmatpush.msra.mxu0 %v161
    %256 = vmatpush.msra.mxu0 %v158
    %257 = vmatmul.f32.gmra.mxu0 %v125
    %v258 = vpop.f32.mrf.mxu0
    %259 = vmatmul.f32.gmra.mxu0 %v126
    %v260 = vpop.f32.mrf.mxu0
    %261 = vmatmul.f32.gmra.mxu0 %v127
    %v262 = vpop.f32.mrf.mxu0
    %263 = vmatmul.f32.gmra.mxu0 %v128
    %v264 = vpop.f32.mrf.mxu0
    %265 = vmatmul.f32.gmra.mxu0 %v155
    %v266 = vpop.f32.mrf.mxu0
    %v267 = vadd.f32 %v208, %v266
    %268 = vdwg.mxu0
    %269 = vmatpush.msra.mxu0 %v204
    %270 = vmatpush.msra.mxu0 %v201
    %271 = vmatpush.msra.mxu0 %v198
    %272 = vmatpush.msra.mxu0 %v195
    %273 = vmatpush.msra.mxu0 %v192
    %274 = vmatpush.msra.mxu0 %v189
    %275 = vmatpush.msra.mxu0 %v186
    %276 = vmatpush.msra.mxu0 %v183
    %277 = vmatpush.msra.mxu0 %v180
    %278 = vmatpush.msra.mxu0 %v177
    %279 = vmatpush.msra.mxu0 %v174
    %280 = vmatpush.msra.mxu0 %v171
    %281 = vmatpush.msra.mxu0 %v168
    %282 = vmatpush.msra.mxu0 %v165
    %283 = vmatpush.msra.mxu0 %v162
    %284 = vmatpush.msra.mxu0 %v159
    %285 = vmatmul.f32.gmra.mxu0 %v125
    %v286 = vpop.f32.mrf.mxu0
    %v287 = vadd.f32 %v209, %v286
    %288 = vmatmul.f32.gmra.mxu0 %v126
    %v289 = vpop.f32.mrf.mxu0
    %v290 = vadd.f32 %v209, %v289
    %291 = vmatmul.f32.gmra.mxu0 %v127
    %v292 = vpop.f32.mrf.mxu0
    %v293 = vadd.f32 %v209, %v292
    %294 = vmatmul.f32.gmra.mxu0 %v128
    %v295 = vpop.f32.mrf.mxu0
    %v296 = vadd.f32 %v209, %v295
    %297 = vmatmul.f32.gmra.mxu0 %v155
    %v298 = vpop.f32.mrf.mxu0
    %299 = vdwg.mxu0
    %v300 = vld [vmem:[%s5] sm:$0xf]
    %v301 = vld [vmem:[%s7] sm:$0x3]
    %v302 = vld [vmem:[#allocation5] sm:$0x3]
    %v304 = vrot.slane %v239, 1
    %306 = vmatpush.xpose.msra.mxu0 0.0
    %307 = vmatpush.xpose.msra.mxu0 0.0
    %308 = vmatpush.xpose.msra.mxu0 0.0
    %309 = vmatpush.xpose.msra.mxu0 0.0
    %310 = vmatpush.xpose.msra.mxu0 0.0
    %311 = vmatpush.xpose.msra.mxu0 0.0
    %312 = vmatpush.xpose.msra.mxu0 0.0
    %313 = vmatpush.xpose.msra.mxu0 0.0
    %314 = vmatpush.xpose.msra.mxu0 0.0
    %315 = vmatpush.xpose.msra.mxu0 0.0
    %316 = vmatpush.xpose.msra.mxu0 0.0
    %317 = vmatpush.xpose.msra.mxu0 0.0
    %318 = vmatpush.xpose.msra.mxu0 0.0
    %319 = vmatpush.xpose.msra.mxu0 0.0
    %320 = vmatpush.xpose.msra.mxu0 %v290
    %321 = vmatpush.xpose.msra.mxu0 %v287
    %322 = vmatmul.f32.gmra.mxu0 %v239
    %v323 = vpop.f32.mrf.mxu0
    %v324 = vadd.f32 0.0, %v323
    %325 = vdwg.mxu0
    %326 = vmatpush.xpose.msra.mxu0 0.0
    %327 = vmatpush.xpose.msra.mxu0 0.0
    %328 = vmatpush.xpose.msra.mxu0 0.0
    %329 = vmatpush.xpose.msra.mxu0 0.0
    %330 = vmatpush.xpose.msra.mxu0 0.0
    %331 = vmatpush.xpose.msra.mxu0 0.0
    %332 = vmatpush.xpose.msra.mxu0 0.0
    %333 = vmatpush.xpose.msra.mxu0 0.0
    %334 = vmatpush.xpose.msra.mxu0 0.0
    %335 = vmatpush.xpose.msra.mxu0 0.0
    %336 = vmatpush.xpose.msra.mxu0 0.0
    %337 = vmatpush.xpose.msra.mxu0 0.0
    %338 = vmatpush.xpose.msra.mxu0 0.0
    %339 = vmatpush.xpose.msra.mxu0 0.0
    %340 = vmatpush.xpose.msra.mxu0 %v296
    %341 = vmatpush.xpose.msra.mxu0 %v293
    %342 = vmatmul.f32.gmra.mxu0 %v304
    %v343 = vpop.f32.mrf.mxu0
    %v344 = vadd.f32 0.0, %v343
    %345 = vdwg.mxu0
    %v346 = vmul.f32 %v324, 0.088388346
    %v347 = vmul.f32 %v344, 0.088388346
    %v350 = vrot.slane %v347, 7
    %v351 = vsel %vm154, %v350, %v346
    %vm353 = vcmask 123904
    %v354 = vsel %vm353, %v351, -inf
    %355 = vmax.xlane.f32.xlu0 %v354
    %v356 = vpop.xlane.xlu0 %355
    %v358 = vrot.slane %v356, 1
    %v361 = vsub.f32 %v346, %v356
    %v362 = vsub.f32 %v347, %v358
    %v363 = vmul.f32 %v361, 1.442695
    %v364 = vpow.pop %v363
    %v365 = vmul.f32 %v362, 1.442695
    %v366 = vpow.pop %v365
    %v369 = vrot.slane %v366, 7
    %v370 = vsel %vm154, %v369, %v364
    %v372 = vsel %vm353, %v370, 0.0
    %373 = vadd.xlane.f32.xlu0 %v372
    %v374 = vpop.xlane.xlu0 %373
    %v375 = vrcp.pop %v374
    %v377 = vrot.slane %v375, 1
    %v380 = vmul.f32 %v364, %v375
    %v381 = vmul.f32 %v366, %v377
    %vm382 = vcmask 130048
    %v384 = vsel %vm382, %v380, 0
    %386 = vmatpush.msra.mxu0 0.0
    %387 = vmatpush.msra.mxu0 0.0
    %388 = vmatpush.msra.mxu0 0.0
    %389 = vmatpush.msra.mxu0 0.0
    %390 = vmatpush.msra.mxu0 0.0
    %391 = vmatpush.msra.mxu0 0.0
    %392 = vmatpush.msra.mxu0 0.0
    %393 = vmatpush.msra.mxu0 0.0
    %394 = vmatpush.msra.mxu0 0.0
    %395 = vmatpush.msra.mxu0 0.0
    %396 = vmatpush.msra.mxu0 0.0
    %397 = vmatpush.msra.mxu0 0.0
    %398 = vmatpush.msra.mxu0 0.0
    %399 = vmatpush.msra.mxu0 0.0
    %400 = vmatpush.msra.mxu0 %v126
    %401 = vmatpush.msra.mxu0 %v125
    %402 = vmatmul.f32.gmra.mxu0 %v384
    %v403 = vpop.f32.mrf.mxu0
    %v404 = vadd.f32 0.0, %v403
    %405 = vdwg.mxu0
    %v407 = vsel %vm382, %v381, 0
    %409 = vmatpush.msra.mxu0 0.0
    %410 = vmatpush.msra.mxu0 0.0
    %411 = vmatpush.msra.mxu0 0.0
    %412 = vmatpush.msra.mxu0 0.0
    %413 = vmatpush.msra.mxu0 0.0
    %414 = vmatpush.msra.mxu0 0.0
    %415 = vmatpush.msra.mxu0 0.0
    %416 = vmatpush.msra.mxu0 0.0
    %417 = vmatpush.msra.mxu0 0.0
    %418 = vmatpush.msra.mxu0 0.0
    %419 = vmatpush.msra.mxu0 0.0
    %420 = vmatpush.msra.mxu0 0.0
    %421 = vmatpush.msra.mxu0 0.0
    %422 = vmatpush.msra.mxu0 0.0
    %423 = vmatpush.msra.mxu0 %v128
    %424 = vmatpush.msra.mxu0 %v127
    %425 = vmatmul.f32.gmra.mxu0 %v407
    %v426 = vpop.f32.mrf.mxu0
    %v427 = vadd.f32 0.0, %v426
    %428 = vdwg.mxu0
    %v431 = vrot.slane %v427, 7
    %v432 = vsel %vm154, %v431, %v404
    %v434 = vld [vmem:[#allocation10] sm:$0xff]
    %v435 = vld [vmem:[#allocation10 + $0x8] sm:$0xff]
    %v436 = vld [vmem:[#allocation10 + $0x10] sm:$0xff]
    %v437 = vld [vmem:[#allocation10 + $0x18] sm:$0xff]
    %v438 = vld [vmem:[#allocation10 + $0x20] sm:$0xff]
    %v439 = vld [vmem:[#allocation10 + $0x28] sm:$0xff]
    %v440 = vld [vmem:[#allocation10 + $0x30] sm:$0xff]
    %v441 = vld [vmem:[#allocation10 + $0x38] sm:$0xff]
    %v442 = vld [vmem:[#allocation10 + $0x40] sm:$0xff]
    %v443 = vld [vmem:[#allocation10 + $0x48] sm:$0xff]
    %v444 = vld [vmem:[#allocation10 + $0x50] sm:$0xff]
    %v445 = vld [vmem:[#allocation10 + $0x58] sm:$0xff]
    %v446 = vld [vmem:[#allocation10 + $0x60] sm:$0xff]
    %v447 = vld [vmem:[#allocation10 + $0x68] sm:$0xff]
    %v448 = vld [vmem:[#allocation10 + $0x70] sm:$0xff]
    %v449 = vld [vmem:[#allocation10 + $0x78] sm:$0xff]
    %v450 = vld [vmem:[#allocation10 + $0x80] sm:$0xff]
    %v451 = vld [vmem:[#allocation10 + $0x88] sm:$0xff]
    %v452 = vld [vmem:[#allocation10 + $0x90] sm:$0xff]
    %v453 = vld [vmem:[#allocation10 + $0x98] sm:$0xff]
    %v454 = vld [vmem:[#allocation10 + $0xa0] sm:$0xff]
    %v455 = vld [vmem:[#allocation10 + $0xa8] sm:$0xff]
    %v456 = vld [vmem:[#allocation10 + $0xb0] sm:$0xff]
    %v457 = vld [vmem:[#allocation10 + $0xb8] sm:$0xff]
    %v458 = vld [vmem:[#allocation10 + $0xc0] sm:$0xff]
    %v459 = vld [vmem:[#allocation10 + $0xc8] sm:$0xff]
    %v460 = vld [vmem:[#allocation10 + $0xd0] sm:$0xff]
    %v461 = vld [vmem:[#allocation10 + $0xd8] sm:$0xff]
    %v462 = vld [vmem:[#allocation10 + $0xe0] sm:$0xff]
    %v463 = vld [vmem:[#allocation10 + $0xe8] sm:$0xff]
    %v464 = vld [vmem:[#allocation10 + $0xf0] sm:$0xff]
    %v465 = vld [vmem:[#allocation10 + $0xf8] sm:$0xff]
    %v466 = vld [vmem:[#allocation10 + $0x100] sm:$0xff]
    %v467 = vld [vmem:[#allocation10 + $0x108] sm:$0xff]
    %v468 = vld [vmem:[#allocation10 + $0x110] sm:$0xff]
    %v469 = vld [vmem:[#allocation10 + $0x118] sm:$0xff]
    %v470 = vld [vmem:[#allocation10 + $0x120] sm:$0xff]
    %v471 = vld [vmem:[#allocation10 + $0x128] sm:$0xff]
    %v472 = vld [vmem:[#allocation10 + $0x130] sm:$0xff]
    %v473 = vld [vmem:[#allocation10 + $0x138] sm:$0xff]
    %v474 = vld [vmem:[#allocation10 + $0x140] sm:$0xff]
    %v475 = vld [vmem:[#allocation10 + $0x148] sm:$0xff]
    %v476 = vld [vmem:[#allocation10 + $0x150] sm:$0xff]
    %v477 = vld [vmem:[#allocation10 + $0x158] sm:$0xff]
    %v478 = vld [vmem:[#allocation10 + $0x160] sm:$0xff]
    %v479 = vld [vmem:[#allocation10 + $0x168] sm:$0xff]
    %v480 = vld [vmem:[#allocation10 + $0x170] sm:$0xff]
    %v481 = vld [vmem:[#allocation10 + $0x178] sm:$0xff]
    %v482 = vld [vmem:[#allocation10 + $0x180] sm:$0xff]
    %v483 = vld [vmem:[#allocation10 + $0x188] sm:$0xff]
    %v484 = vld [vmem:[#allocation10 + $0x190] sm:$0xff]
    %v485 = vld [vmem:[#allocation10 + $0x198] sm:$0xff]
    %v486 = vld [vmem:[#allocation10 + $0x1a0] sm:$0xff]
    %v487 = vld [vmem:[#allocation10 + $0x1a8] sm:$0xff]
    %v488 = vld [vmem:[#allocation10 + $0x1b0] sm:$0xff]
    %v489 = vld [vmem:[#allocation10 + $0x1b8] sm:$0xff]
    %v490 = vld [vmem:[#allocation10 + $0x1c0] sm:$0xff]
    %v491 = vld [vmem:[#allocation10 + $0x1c8] sm:$0xff]
    %v492 = vld [vmem:[#allocation10 + $0x1d0] sm:$0xff]
    %v493 = vld [vmem:[#allocation10 + $0x1d8] sm:$0xff]
    %v494 = vld [vmem:[#allocation10 + $0x1e0] sm:$0xff]
    %v495 = vld [vmem:[#allocation10 + $0x1e8] sm:$0xff]
    %v496 = vld [vmem:[#allocation10 + $0x1f0] sm:$0xff]
    %v497 = vld [vmem:[#allocation10 + $0x1f8] sm:$0xff]
    %v498 = vld [vmem:[#allocation10 + $0x200] sm:$0xff]
    %v499 = vld [vmem:[#allocation10 + $0x208] sm:$0xff]
    %v500 = vld [vmem:[#allocation10 + $0x210] sm:$0xff]
    %v501 = vld [vmem:[#allocation10 + $0x218] sm:$0xff]
    %v502 = vld [vmem:[#allocation10 + $0x220] sm:$0xff]
    %v503 = vld [vmem:[#allocation10 + $0x228] sm:$0xff]
    %v504 = vld [vmem:[#allocation10 + $0x230] sm:$0xff]
    %v505 = vld [vmem:[#allocation10 + $0x238] sm:$0xff]
    %v506 = vld [vmem:[#allocation10 + $0x240] sm:$0xff]
    %v507 = vld [vmem:[#allocation10 + $0x248] sm:$0xff]
    %v508 = vld [vmem:[#allocation10 + $0x250] sm:$0xff]
    %v509 = vld [vmem:[#allocation10 + $0x258] sm:$0xff]
    %v510 = vld [vmem:[#allocation10 + $0x260] sm:$0xff]
    %v511 = vld [vmem:[#allocation10 + $0x268] sm:$0xff]
    %v512 = vld [vmem:[#allocation10 + $0x270] sm:$0xff]
    %v513 = vld [vmem:[#allocation10 + $0x278] sm:$0xff]
    %v514 = vld [vmem:[#allocation10 + $0x280] sm:$0xff]
    %v515 = vld [vmem:[#allocation10 + $0x288] sm:$0xff]
    %v516 = vld [vmem:[#allocation10 + $0x290] sm:$0xff]
    %v517 = vld [vmem:[#allocation10 + $0x298] sm:$0xff]
    %v518 = vld [vmem:[#allocation10 + $0x2a0] sm:$0xff]
    %v519 = vld [vmem:[#allocation10 + $0x2a8] sm:$0xff]
    %v520 = vld [vmem:[#allocation10 + $0x2b0] sm:$0xff]
    %v521 = vld [vmem:[#allocation10 + $0x2b8] sm:$0xff]
    %v522 = vld [vmem:[#allocation10 + $0x2c0] sm:$0xff]
    %v523 = vld [vmem:[#allocation10 + $0x2c8] sm:$0xff]
    %v524 = vld [vmem:[#allocation10 + $0x2d0] sm:$0xff]
    %v525 = vld [vmem:[#allocation10 + $0x2d8] sm:$0xff]
    %v526 = vld [vmem:[#allocation10 + $0x2e0] sm:$0xff]
    %v527 = vld [vmem:[#allocation10 + $0x2e8] sm:$0xff]
    %v528 = vld [vmem:[#allocation10 + $0x2f0] sm:$0xff]
    %v529 = vld [vmem:[#allocation10 + $0x2f8] sm:$0xff]
    %v530 = vld [vmem:[#allocation10 + $0x300] sm:$0xff]
    %v531 = vld [vmem:[#allocation10 + $0x308] sm:$0xff]
    %v532 = vld [vmem:[#allocation10 + $0x310] sm:$0xff]
    %v533 = vld [vmem:[#allocation10 + $0x318] sm:$0xff]
    %v534 = vld [vmem:[#allocation10 + $0x320] sm:$0xff]
    %v535 = vld [vmem:[#allocation10 + $0x328] sm:$0xff]
    %v536 = vld [vmem:[#allocation10 + $0x330] sm:$0xff]
    %v537 = vld [vmem:[#allocation10 + $0x338] sm:$0xff]
    %v538 = vld [vmem:[#allocation10 + $0x340] sm:$0xff]
    %v539 = vld [vmem:[#allocation10 + $0x348] sm:$0xff]
    %v540 = vld [vmem:[#allocation10 + $0x350] sm:$0xff]
    %v541 = vld [vmem:[#allocation10 + $0x358] sm:$0xff]
    %v542 = vld [vmem:[#allocation10 + $0x360] sm:$0xff]
    %v543 = vld [vmem:[#allocation10 + $0x368] sm:$0xff]
    %v544 = vld [vmem:[#allocation10 + $0x370] sm:$0xff]
    %v545 = vld [vmem:[#allocation10 + $0x378] sm:$0xff]
    %v546 = vld [vmem:[#allocation10 + $0x380] sm:$0xff]
    %v547 = vld [vmem:[#allocation10 + $0x388] sm:$0xff]
    %v548 = vld [vmem:[#allocation10 + $0x390] sm:$0xff]
    %v549 = vld [vmem:[#allocation10 + $0x398] sm:$0xff]
    %v550 = vld [vmem:[#allocation10 + $0x3a0] sm:$0xff]
    %v551 = vld [vmem:[#allocation10 + $0x3a8] sm:$0xff]
    %v552 = vld [vmem:[#allocation10 + $0x3b0] sm:$0xff]
    %v553 = vld [vmem:[#allocation10 + $0x3b8] sm:$0xff]
    %v554 = vld [vmem:[#allocation10 + $0x3c0] sm:$0xff]
    %v555 = vld [vmem:[#allocation10 + $0x3c8] sm:$0xff]
    %v556 = vld [vmem:[#allocation10 + $0x3d0] sm:$0xff]
    %v557 = vld [vmem:[#allocation10 + $0x3d8] sm:$0xff]
    %v558 = vld [vmem:[#allocation10 + $0x3e0] sm:$0xff]
    %v559 = vld [vmem:[#allocation10 + $0x3e8] sm:$0xff]
    %v560 = vld [vmem:[#allocation10 + $0x3f0] sm:$0xff]
    %v561 = vld [vmem:[#allocation10 + $0x3f8] sm:$0xff]
    %v562 = vld [vmem:[#allocation10 + $0x400] sm:$0xff]
    %v563 = vld [vmem:[#allocation10 + $0x408] sm:$0xff]
    %v564 = vld [vmem:[#allocation10 + $0x410] sm:$0xff]
    %v565 = vld [vmem:[#allocation10 + $0x418] sm:$0xff]
    %v566 = vld [vmem:[#allocation10 + $0x420] sm:$0xff]
    %v567 = vld [vmem:[#allocation10 + $0x428] sm:$0xff]
    %v568 = vld [vmem:[#allocation10 + $0x430] sm:$0xff]
    %v569 = vld [vmem:[#allocation10 + $0x438] sm:$0xff]
    %v570 = vld [vmem:[#allocation10 + $0x440] sm:$0xff]
    %v571 = vld [vmem:[#allocation10 + $0x448] sm:$0xff]
    %v572 = vld [vmem:[#allocation10 + $0x450] sm:$0xff]
    %v573 = vld [vmem:[#allocation10 + $0x458] sm:$0xff]
    %v574 = vld [vmem:[#allocation10 + $0x460] sm:$0xff]
    %v575 = vld [vmem:[#allocation10 + $0x468] sm:$0xff]
    %v576 = vld [vmem:[#allocation10 + $0x470] sm:$0xff]
    %v577 = vld [vmem:[#allocation10 + $0x478] sm:$0xff]
    %v578 = vld [vmem:[#allocation10 + $0x480] sm:$0xff]
    %v579 = vld [vmem:[#allocation10 + $0x488] sm:$0xff]
    %v580 = vld [vmem:[#allocation10 + $0x490] sm:$0xff]
    %v581 = vld [vmem:[#allocation10 + $0x498] sm:$0xff]
    %v582 = vld [vmem:[#allocation10 + $0x4a0] sm:$0xff]
    %v583 = vld [vmem:[#allocation10 + $0x4a8] sm:$0xff]
    %v584 = vld [vmem:[#allocation10 + $0x4b0] sm:$0xff]
    %v585 = vld [vmem:[#allocation10 + $0x4b8] sm:$0xff]
    %v586 = vld [vmem:[#allocation10 + $0x4c0] sm:$0xff]
    %v587 = vld [vmem:[#allocation10 + $0x4c8] sm:$0xff]
    %v588 = vld [vmem:[#allocation10 + $0x4d0] sm:$0xff]
    %v589 = vld [vmem:[#allocation10 + $0x4d8] sm:$0xff]
    %v590 = vld [vmem:[#allocation10 + $0x4e0] sm:$0xff]
    %v591 = vld [vmem:[#allocation10 + $0x4e8] sm:$0xff]
    %v592 = vld [vmem:[#allocation10 + $0x4f0] sm:$0xff]
    %v593 = vld [vmem:[#allocation10 + $0x4f8] sm:$0xff]
    %v594 = vld [vmem:[#allocation10 + $0x500] sm:$0xff]
    %v595 = vld [vmem:[#allocation10 + $0x508] sm:$0xff]
    %v596 = vld [vmem:[#allocation10 + $0x510] sm:$0xff]
    %v597 = vld [vmem:[#allocation10 + $0x518] sm:$0xff]
    %v598 = vld [vmem:[#allocation10 + $0x520] sm:$0xff]
    %v599 = vld [vmem:[#allocation10 + $0x528] sm:$0xff]
    %v600 = vld [vmem:[#allocation10 + $0x530] sm:$0xff]
    %v601 = vld [vmem:[#allocation10 + $0x538] sm:$0xff]
    %v602 = vld [vmem:[#allocation10 + $0x540] sm:$0xff]
    %v603 = vld [vmem:[#allocation10 + $0x548] sm:$0xff]
    %v604 = vld [vmem:[#allocation10 + $0x550] sm:$0xff]
    %v605 = vld [vmem:[#allocation10 + $0x558] sm:$0xff]
    %v606 = vld [vmem:[#allocation10 + $0x560] sm:$0xff]
    %v607 = vld [vmem:[#allocation10 + $0x568] sm:$0xff]
    %v608 = vld [vmem:[#allocation10 + $0x570] sm:$0xff]
    %v609 = vld [vmem:[#allocation10 + $0x578] sm:$0xff]
    %v610 = vld [vmem:[#allocation10 + $0x580] sm:$0xff]
    %v611 = vld [vmem:[#allocation10 + $0x588] sm:$0xff]
    %v612 = vld [vmem:[#allocation10 + $0x590] sm:$0xff]
    %v613 = vld [vmem:[#allocation10 + $0x598] sm:$0xff]
    %v614 = vld [vmem:[#allocation10 + $0x5a0] sm:$0xff]
    %v615 = vld [vmem:[#allocation10 + $0x5a8] sm:$0xff]
    %v616 = vld [vmem:[#allocation10 + $0x5b0] sm:$0xff]
    %v617 = vld [vmem:[#allocation10 + $0x5b8] sm:$0xff]
    %v618 = vld [vmem:[#allocation10 + $0x5c0] sm:$0xff]
    %v619 = vld [vmem:[#allocation10 + $0x5c8] sm:$0xff]
    %v620 = vld [vmem:[#allocation10 + $0x5d0] sm:$0xff]
    %v621 = vld [vmem:[#allocation10 + $0x5d8] sm:$0xff]
    %v622 = vld [vmem:[#allocation10 + $0x5e0] sm:$0xff]
    %v623 = vld [vmem:[#allocation10 + $0x5e8] sm:$0xff]
    %v624 = vld [vmem:[#allocation10 + $0x5f0] sm:$0xff]
    %v625 = vld [vmem:[#allocation10 + $0x5f8] sm:$0xff]
    %v627 = vperm.slane %v300, 0
    %v628 = vperm.slane %v300, 1
    %v629 = vperm.slane %v300, 2
    %v630 = vperm.slane %v300, 3
    %635 = vmatpush.msra.mxu0 %v494
    %636 = vmatpush.msra.mxu0 %v490
    %637 = vmatpush.msra.mxu0 %v486
    %638 = vmatpush.msra.mxu0 %v482
    %639 = vmatpush.msra.mxu0 %v478
    %640 = vmatpush.msra.mxu0 %v474
    %641 = vmatpush.msra.mxu0 %v470
    %642 = vmatpush.msra.mxu0 %v466
    %643 = vmatpush.msra.mxu0 %v462
    %644 = vmatpush.msra.mxu0 %v458
    %645 = vmatpush.msra.mxu0 %v454
    %646 = vmatpush.msra.mxu0 %v450
    %647 = vmatpush.msra.mxu0 %v446
    %648 = vmatpush.msra.mxu0 %v442
    %649 = vmatpush.msra.mxu0 %v438
    %650 = vmatpush.msra.mxu0 %v434
    %651 = vmatmul.f32.gmra.mxu0 %v302
    %v652 = vpop.f32.mrf.mxu0
    %v653 = vadd.f32 %v627, %v652
    %654 = vdwg.mxu0
    %655 = vmatpush.msra.mxu0 %v558
    %656 = vmatpush.msra.mxu0 %v554
    %657 = vmatpush.msra.mxu0 %v550
    %658 = vmatpush.msra.mxu0 %v546
    %659 = vmatpush.msra.mxu0 %v542
    %660 = vmatpush.msra.mxu0 %v538
    %661 = vmatpush.msra.mxu0 %v534
    %662 = vmatpush.msra.mxu0 %v530
    %663 = vmatpush.msra.mxu0 %v526
    %664 = vmatpush.msra.mxu0 %v522
    %665 = vmatpush.msra.mxu0 %v518
    %666 = vmatpush.msra.mxu0 %v514
    %667 = vmatpush.msra.mxu0 %v510
    %668 = vmatpush.msra.mxu0 %v506
    %669 = vmatpush.msra.mxu0 %v502
    %670 = vmatpush.msra.mxu0 %v498
    %671 = vmatmul.f32.gmra.mxu0 %v432
    %v672 = vpop.f32.mrf.mxu0
    %v673 = vadd.f32 %v653, %v672
    %674 = vdwg.mxu0
    %675 = vmatpush.msra.mxu0 %v622
    %676 = vmatpush.msra.mxu0 %v618
    %677 = vmatpush.msra.mxu0 %v614
    %678 = vmatpush.msra.mxu0 %v610
    %679 = vmatpush.msra.mxu0 %v606
    %680 = vmatpush.msra.mxu0 %v602
    %681 = vmatpush.msra.mxu0 %v598
    %682 = vmatpush.msra.mxu0 %v594
    %683 = vmatpush.msra.mxu0 %v590
    %684 = vmatpush.msra.mxu0 %v586
    %685 = vmatpush.msra.mxu0 %v582
    %686 = vmatpush.msra.mxu0 %v578
    %687 = vmatpush.msra.mxu0 %v574
    %688 = vmatpush.msra.mxu0 %v570
    %689 = vmatpush.msra.mxu0 %v566
    %690 = vmatpush.msra.mxu0 %v562
    %691 = vmatmul.f32.gmra.mxu0 %v267
    %v692 = vpop.f32.mrf.mxu0
    %v693 = vadd.f32 %v673, %v692
    %694 = vdwg.mxu0
    %695 = vmatpush.msra.mxu0 %v495
    %696 = vmatpush.msra.mxu0 %v491
    %697 = vmatpush.msra.mxu0 %v487
    %698 = vmatpush.msra.mxu0 %v483
    %699 = vmatpush.msra.mxu0 %v479
    %700 = vmatpush.msra.mxu0 %v475
    %701 = vmatpush.msra.mxu0 %v471
    %702 = vmatpush.msra.mxu0 %v467
    %703 = vmatpush.msra.mxu0 %v463
    %704 = vmatpush.msra.mxu0 %v459
    %705 = vmatpush.msra.mxu0 %v455
    %706 = vmatpush.msra.mxu0 %v451
    %707 = vmatpush.msra.mxu0 %v447
    %708 = vmatpush.msra.mxu0 %v443
    %709 = vmatpush.msra.mxu0 %v439
    %710 = vmatpush.msra.mxu0 %v435
    %711 = vmatmul.f32.gmra.mxu0 %v302
    %v712 = vpop.f32.mrf.mxu0
    %v713 = vadd.f32 %v628, %v712
    %714 = vdwg.mxu0
    %715 = vmatpush.msra.mxu0 %v559
    %716 = vmatpush.msra.mxu0 %v555
    %717 = vmatpush.msra.mxu0 %v551
    %718 = vmatpush.msra.mxu0 %v547
    %719 = vmatpush.msra.mxu0 %v543
    %720 = vmatpush.msra.mxu0 %v539
    %721 = vmatpush.msra.mxu0 %v535
    %722 = vmatpush.msra.mxu0 %v531
    %723 = vmatpush.msra.mxu0 %v527
    %724 = vmatpush.msra.mxu0 %v523
    %725 = vmatpush.msra.mxu0 %v519
    %726 = vmatpush.msra.mxu0 %v515
    %727 = vmatpush.msra.mxu0 %v511
    %728 = vmatpush.msra.mxu0 %v507
    %729 = vmatpush.msra.mxu0 %v503
    %730 = vmatpush.msra.mxu0 %v499
    %731 = vmatmul.f32.gmra.mxu0 %v432
    %v732 = vpop.f32.mrf.mxu0
    %v733 = vadd.f32 %v713, %v732
    %734 = vdwg.mxu0
    %735 = vmatpush.msra.mxu0 %v623
    %736 = vmatpush.msra.mxu0 %v619
    %737 = vmatpush.msra.mxu0 %v615
    %738 = vmatpush.msra.mxu0 %v611
    %739 = vmatpush.msra.mxu0 %v607
    %740 = vmatpush.msra.mxu0 %v603
    %741 = vmatpush.msra.mxu0 %v599
    %742 = vmatpush.msra.mxu0 %v595
    %743 = vmatpush.msra.mxu0 %v591
    %744 = vmatpush.msra.mxu0 %v587
    %745 = vmatpush.msra.mxu0 %v583
    %746 = vmatpush.msra.mxu0 %v579
    %747 = vmatpush.msra.mxu0 %v575
    %748 = vmatpush.msra.mxu0 %v571
    %749 = vmatpush.msra.mxu0 %v567
    %750 = vmatpush.msra.mxu0 %v563
    %751 = vmatmul.f32.gmra.mxu0 %v267
    %v752 = vpop.f32.mrf.mxu0
    %v753 = vadd.f32 %v733, %v752
    %754 = vdwg.mxu0
    %755 = vmatpush.msra.mxu0 %v496
    %756 = vmatpush.msra.mxu0 %v492
    %757 = vmatpush.msra.mxu0 %v488
    %758 = vmatpush.msra.mxu0 %v484
    %759 = vmatpush.msra.mxu0 %v480
    %760 = vmatpush.msra.mxu0 %v476
    %761 = vmatpush.msra.mxu0 %v472
    %762 = vmatpush.msra.mxu0 %v468
    %763 = vmatpush.msra.mxu0 %v464
    %764 = vmatpush.msra.mxu0 %v460
    %765 = vmatpush.msra.mxu0 %v456
    %766 = vmatpush.msra.mxu0 %v452
    %767 = vmatpush.msra.mxu0 %v448
    %768 = vmatpush.msra.mxu0 %v444
    %769 = vmatpush.msra.mxu0 %v440
    %770 = vmatpush.msra.mxu0 %v436
    %771 = vmatmul.f32.gmra.mxu0 %v302
    %v772 = vpop.f32.mrf.mxu0
    %v773 = vadd.f32 %v629, %v772
    %774 = vdwg.mxu0
    %775 = vmatpush.msra.mxu0 %v560
    %776 = vmatpush.msra.mxu0 %v556
    %777 = vmatpush.msra.mxu0 %v552
    %778 = vmatpush.msra.mxu0 %v548
    %779 = vmatpush.msra.mxu0 %v544
    %780 = vmatpush.msra.mxu0 %v540
    %781 = vmatpush.msra.mxu0 %v536
    %782 = vmatpush.msra.mxu0 %v532
    %783 = vmatpush.msra.mxu0 %v528
    %784 = vmatpush.msra.mxu0 %v524
    %785 = vmatpush.msra.mxu0 %v520
    %786 = vmatpush.msra.mxu0 %v516
    %787 = vmatpush.msra.mxu0 %v512
    %788 = vmatpush.msra.mxu0 %v508
    %789 = vmatpush.msra.mxu0 %v504
    %790 = vmatpush.msra.mxu0 %v500
    %791 = vmatmul.f32.gmra.mxu0 %v432
    %v792 = vpop.f32.mrf.mxu0
    %v793 = vadd.f32 %v773, %v792
    %794 = vdwg.mxu0
    %795 = vmatpush.msra.mxu0 %v624
    %796 = vmatpush.msra.mxu0 %v620
    %797 = vmatpush.msra.mxu0 %v616
    %798 = vmatpush.msra.mxu0 %v612
    %799 = vmatpush.msra.mxu0 %v608
    %800 = vmatpush.msra.mxu0 %v604
    %801 = vmatpush.msra.mxu0 %v600
    %802 = vmatpush.msra.mxu0 %v596
    %803 = vmatpush.msra.mxu0 %v592
    %804 = vmatpush.msra.mxu0 %v588
    %805 = vmatpush.msra.mxu0 %v584
    %806 = vmatpush.msra.mxu0 %v580
    %807 = vmatpush.msra.mxu0 %v576
    %808 = vmatpush.msra.mxu0 %v572
    %809 = vmatpush.msra.mxu0 %v568
    %810 = vmatpush.msra.mxu0 %v564
    %811 = vmatmul.f32.gmra.mxu0 %v267
    %v812 = vpop.f32.mrf.mxu0
    %v813 = vadd.f32 %v793, %v812
    %814 = vdwg.mxu0
    %815 = vmatpush.msra.mxu0 %v497
    %816 = vmatpush.msra.mxu0 %v493
    %817 = vmatpush.msra.mxu0 %v489
    %818 = vmatpush.msra.mxu0 %v485
    %819 = vmatpush.msra.mxu0 %v481
    %820 = vmatpush.msra.mxu0 %v477
    %821 = vmatpush.msra.mxu0 %v473
    %822 = vmatpush.msra.mxu0 %v469
    %823 = vmatpush.msra.mxu0 %v465
    %824 = vmatpush.msra.mxu0 %v461
    %825 = vmatpush.msra.mxu0 %v457
    %826 = vmatpush.msra.mxu0 %v453
    %827 = vmatpush.msra.mxu0 %v449
    %828 = vmatpush.msra.mxu0 %v445
    %829 = vmatpush.msra.mxu0 %v441
    %830 = vmatpush.msra.mxu0 %v437
    %831 = vmatmul.f32.gmra.mxu0 %v302
    %v832 = vpop.f32.mrf.mxu0
    %v833 = vadd.f32 %v630, %v832
    %834 = vdwg.mxu0
    %835 = vmatpush.msra.mxu0 %v561
    %836 = vmatpush.msra.mxu0 %v557
    %837 = vmatpush.msra.mxu0 %v553
    %838 = vmatpush.msra.mxu0 %v549
    %839 = vmatpush.msra.mxu0 %v545
    %840 = vmatpush.msra.mxu0 %v541
    %841 = vmatpush.msra.mxu0 %v537
    %842 = vmatpush.msra.mxu0 %v533
    %843 = vmatpush.msra.mxu0 %v529
    %844 = vmatpush.msra.mxu0 %v525
    %845 = vmatpush.msra.mxu0 %v521
    %846 = vmatpush.msra.mxu0 %v517
    %847 = vmatpush.msra.mxu0 %v513
    %848 = vmatpush.msra.mxu0 %v509
    %849 = vmatpush.msra.mxu0 %v505
    %850 = vmatpush.msra.mxu0 %v501
    %851 = vmatmul.f32.gmra.mxu0 %v432
    %v852 = vpop.f32.mrf.mxu0
    %v853 = vadd.f32 %v833, %v852
    %854 = vdwg.mxu0
    %855 = vmatpush.msra.mxu0 %v625
    %856 = vmatpush.msra.mxu0 %v621
    %857 = vmatpush.msra.mxu0 %v617
    %858 = vmatpush.msra.mxu0 %v613
    %859 = vmatpush.msra.mxu0 %v609
    %860 = vmatpush.msra.mxu0 %v605
    %861 = vmatpush.msra.mxu0 %v601
    %862 = vmatpush.msra.mxu0 %v597
    %863 = vmatpush.msra.mxu0 %v593
    %864 = vmatpush.msra.mxu0 %v589
    %865 = vmatpush.msra.mxu0 %v585
    %866 = vmatpush.msra.mxu0 %v581
    %867 = vmatpush.msra.mxu0 %v577
    %868 = vmatpush.msra.mxu0 %v573
    %869 = vmatpush.msra.mxu0 %v569
    %870 = vmatpush.msra.mxu0 %v565
    %871 = vmatmul.f32.gmra.mxu0 %v267
    %v872 = vpop.f32.mrf.mxu0
    %v873 = vadd.f32 %v853, %v872
    %874 = vdwg.mxu0
    %v875 = vxor.u32 %v693, 2147483648
    %v876 = vmul.f32 %v875, 1.442695
    %v877 = vpow.pop %v876
    %v878 = vadd.f32 %v877, 1.0
    %v879 = vrcp.pop %v878
    %v880 = vmul.f32 %v878, %v879
    %v881 = vsub.f32 1.0, %v880
    %v882 = vmul.f32 %v879, %v881
    %v883 = vadd.f32 %v879, %v882
    %vm884 = vweird.f32 %v878
    %vm885 = vweird.f32 %v879
    %vm886 = vmor %vm884, %vm885
    %v887 = vsel %vm886, %v879, %v883
    %v888 = vand.u32 2147483647, %v878
    %vm889 = vcmp.eq.f32.partialorder %v888, 8.507059e+37
    %v890 = vand.u32 %v878, 2147483648
    %v891 = vor.u32 1.1754944e-38, %v890
    %v892 = vsel %vm889, %v891, %v887
    %v893 = vmul.f32 1.0, %v892
    %v894 = vxor.u32 %v753, 2147483648
    %v895 = vmul.f32 %v894, 1.442695
    %v896 = vpow.pop %v895
    %v897 = vadd.f32 %v896, 1.0
    %v898 = vrcp.pop %v897
    %v899 = vmul.f32 %v897, %v898
    %v900 = vsub.f32 1.0, %v899
    %v901 = vmul.f32 %v898, %v900
    %v902 = vadd.f32 %v898, %v901
    %vm903 = vweird.f32 %v897
    %vm904 = vweird.f32 %v898
    %vm905 = vmor %vm903, %vm904
    %v906 = vsel %vm905, %v898, %v902
    %v907 = vand.u32 2147483647, %v897
    %vm908 = vcmp.eq.f32.partialorder %v907, 8.507059e+37
    %v909 = vand.u32 %v897, 2147483648
    %v910 = vor.u32 1.1754944e-38, %v909
    %v911 = vsel %vm908, %v910, %v906
    %v912 = vmul.f32 1.0, %v911
    %v913 = vtanh.pop %v813
    %v914 = vxor.u32 %v873, 2147483648
    %v915 = vmul.f32 %v914, 1.442695
    %v916 = vpow.pop %v915
    %v917 = vadd.f32 %v916, 1.0
    %v918 = vrcp.pop %v917
    %v919 = vmul.f32 %v917, %v918
    %v920 = vsub.f32 1.0, %v919
    %v921 = vmul.f32 %v918, %v920
    %v922 = vadd.f32 %v918, %v921
    %vm923 = vweird.f32 %v917
    %vm924 = vweird.f32 %v918
    %vm925 = vmor %vm923, %vm924
    %v926 = vsel %vm925, %v918, %v922
    %v927 = vand.u32 2147483647, %v917
    %vm928 = vcmp.eq.f32.partialorder %v927, 8.507059e+37
    %v929 = vand.u32 %v917, 2147483648
    %v930 = vor.u32 1.1754944e-38, %v929
    %v931 = vsel %vm928, %v930, %v926
    %v932 = vmul.f32 1.0, %v931
    %v933 = vmul.f32 %v912, %v239
    %v934 = vmul.f32 %v893, %v913
    %v935 = vadd.f32 %v933, %v934
    %v936 = vtanh.pop %v935
    %v937 = vmul.f32 %v932, %v936
    %v938 = vld [vmem:[#allocation11] sm:$0xff]
    %v939 = vld [vmem:[#allocation11 + $0x8] sm:$0xff]
    %v940 = vld [vmem:[#allocation11 + $0x10] sm:$0xff]
    %v941 = vld [vmem:[#allocation11 + $0x18] sm:$0xff]
    %v942 = vld [vmem:[#allocation11 + $0x20] sm:$0xff]
    %v943 = vld [vmem:[#allocation11 + $0x28] sm:$0xff]
    %v944 = vld [vmem:[#allocation11 + $0x30] sm:$0xff]
    %v945 = vld [vmem:[#allocation11 + $0x38] sm:$0xff]
    %v946 = vld [vmem:[#allocation11 + $0x40] sm:$0xff]
    %v947 = vld [vmem:[#allocation11 + $0x48] sm:$0xff]
    %v948 = vld [vmem:[#allocation11 + $0x50] sm:$0xff]
    %v949 = vld [vmem:[#allocation11 + $0x58] sm:$0xff]
    %v950 = vld [vmem:[#allocation11 + $0x60] sm:$0xff]
    %v951 = vld [vmem:[#allocation11 + $0x68] sm:$0xff]
    %v952 = vld [vmem:[#allocation11 + $0x70] sm:$0xff]
    %v953 = vld [vmem:[#allocation11 + $0x78] sm:$0xff]
    %v954 = vld [vmem:[#allocation11 + $0x80] sm:$0xff]
    %v955 = vld [vmem:[#allocation11 + $0x88] sm:$0xff]
    %v956 = vld [vmem:[#allocation11 + $0x90] sm:$0xff]
    %v957 = vld [vmem:[#allocation11 + $0x98] sm:$0xff]
    %v958 = vld [vmem:[#allocation11 + $0xa0] sm:$0xff]
    %v959 = vld [vmem:[#allocation11 + $0xa8] sm:$0xff]
    %v960 = vld [vmem:[#allocation11 + $0xb0] sm:$0xff]
    %v961 = vld [vmem:[#allocation11 + $0xb8] sm:$0xff]
    %v962 = vld [vmem:[#allocation11 + $0xc0] sm:$0xff]
    %v963 = vld [vmem:[#allocation11 + $0xc8] sm:$0xff]
    %v964 = vld [vmem:[#allocation11 + $0xd0] sm:$0xff]
    %v965 = vld [vmem:[#allocation11 + $0xd8] sm:$0xff]
    %v966 = vld [vmem:[#allocation11 + $0xe0] sm:$0xff]
    %v967 = vld [vmem:[#allocation11 + $0xe8] sm:$0xff]
    %v968 = vld [vmem:[#allocation11 + $0xf0] sm:$0xff]
    %v969 = vld [vmem:[#allocation11 + $0xf8] sm:$0xff]
    %v970 = vld [vmem:[#allocation11 + $0x100] sm:$0xff]
    %v971 = vld [vmem:[#allocation11 + $0x108] sm:$0xff]
    %v972 = vld [vmem:[#allocation11 + $0x110] sm:$0xff]
    %v973 = vld [vmem:[#allocation11 + $0x118] sm:$0xff]
    %v974 = vld [vmem:[#allocation11 + $0x120] sm:$0xff]
    %v975 = vld [vmem:[#allocation11 + $0x128] sm:$0xff]
    %v976 = vld [vmem:[#allocation11 + $0x130] sm:$0xff]
    %v977 = vld [vmem:[#allocation11 + $0x138] sm:$0xff]
    %v978 = vld [vmem:[#allocation11 + $0x140] sm:$0xff]
    %v979 = vld [vmem:[#allocation11 + $0x148] sm:$0xff]
    %v980 = vld [vmem:[#allocation11 + $0x150] sm:$0xff]
    %v981 = vld [vmem:[#allocation11 + $0x158] sm:$0xff]
    %v982 = vld [vmem:[#allocation11 + $0x160] sm:$0xff]
    %v983 = vld [vmem:[#allocation11 + $0x168] sm:$0xff]
    %v984 = vld [vmem:[#allocation11 + $0x170] sm:$0xff]
    %v985 = vld [vmem:[#allocation11 + $0x178] sm:$0xff]
    %v986 = vld [vmem:[#allocation11 + $0x180] sm:$0xff]
    %v987 = vld [vmem:[#allocation11 + $0x188] sm:$0xff]
    %v988 = vld [vmem:[#allocation11 + $0x190] sm:$0xff]
    %v989 = vld [vmem:[#allocation11 + $0x198] sm:$0xff]
    %v990 = vld [vmem:[#allocation11 + $0x1a0] sm:$0xff]
    %v991 = vld [vmem:[#allocation11 + $0x1a8] sm:$0xff]
    %v992 = vld [vmem:[#allocation11 + $0x1b0] sm:$0xff]
    %v993 = vld [vmem:[#allocation11 + $0x1b8] sm:$0xff]
    %v994 = vld [vmem:[#allocation11 + $0x1c0] sm:$0xff]
    %v995 = vld [vmem:[#allocation11 + $0x1c8] sm:$0xff]
    %v996 = vld [vmem:[#allocation11 + $0x1d0] sm:$0xff]
    %v997 = vld [vmem:[#allocation11 + $0x1d8] sm:$0xff]
    %v998 = vld [vmem:[#allocation11 + $0x1e0] sm:$0xff]
    %v999 = vld [vmem:[#allocation11 + $0x1e8] sm:$0xff]
    %v1000 = vld [vmem:[#allocation11 + $0x1f0] sm:$0xff]
    %v1001 = vld [vmem:[#allocation11 + $0x1f8] sm:$0xff]
    %v1002 = vld [vmem:[#allocation11 + $0x200] sm:$0xff]
    %v1003 = vld [vmem:[#allocation11 + $0x208] sm:$0xff]
    %v1004 = vld [vmem:[#allocation11 + $0x210] sm:$0xff]
    %v1005 = vld [vmem:[#allocation11 + $0x218] sm:$0xff]
    %v1006 = vld [vmem:[#allocation11 + $0x220] sm:$0xff]
    %v1007 = vld [vmem:[#allocation11 + $0x228] sm:$0xff]
    %v1008 = vld [vmem:[#allocation11 + $0x230] sm:$0xff]
    %v1009 = vld [vmem:[#allocation11 + $0x238] sm:$0xff]
    %v1010 = vld [vmem:[#allocation11 + $0x240] sm:$0xff]
    %v1011 = vld [vmem:[#allocation11 + $0x248] sm:$0xff]
    %v1012 = vld [vmem:[#allocation11 + $0x250] sm:$0xff]
    %v1013 = vld [vmem:[#allocation11 + $0x258] sm:$0xff]
    %v1014 = vld [vmem:[#allocation11 + $0x260] sm:$0xff]
    %v1015 = vld [vmem:[#allocation11 + $0x268] sm:$0xff]
    %v1016 = vld [vmem:[#allocation11 + $0x270] sm:$0xff]
    %v1017 = vld [vmem:[#allocation11 + $0x278] sm:$0xff]
    %v1018 = vld [vmem:[#allocation11 + $0x280] sm:$0xff]
    %v1019 = vld [vmem:[#allocation11 + $0x288] sm:$0xff]
    %v1020 = vld [vmem:[#allocation11 + $0x290] sm:$0xff]
    %v1021 = vld [vmem:[#allocation11 + $0x298] sm:$0xff]
    %v1022 = vld [vmem:[#allocation11 + $0x2a0] sm:$0xff]
    %v1023 = vld [vmem:[#allocation11 + $0x2a8] sm:$0xff]
    %v1024 = vld [vmem:[#allocation11 + $0x2b0] sm:$0xff]
    %v1025 = vld [vmem:[#allocation11 + $0x2b8] sm:$0xff]
    %v1026 = vld [vmem:[#allocation11 + $0x2c0] sm:$0xff]
    %v1027 = vld [vmem:[#allocation11 + $0x2c8] sm:$0xff]
    %v1028 = vld [vmem:[#allocation11 + $0x2d0] sm:$0xff]
    %v1029 = vld [vmem:[#allocation11 + $0x2d8] sm:$0xff]
    %v1030 = vld [vmem:[#allocation11 + $0x2e0] sm:$0xff]
    %v1031 = vld [vmem:[#allocation11 + $0x2e8] sm:$0xff]
    %v1032 = vld [vmem:[#allocation11 + $0x2f0] sm:$0xff]
    %v1033 = vld [vmem:[#allocation11 + $0x2f8] sm:$0xff]
    %v1035 = vperm.slane %v301, 0
    %v1036 = vperm.slane %v301, 1
    %1039 = vmatpush.msra.mxu0 %v968
    %1040 = vmatpush.msra.mxu0 %v966
    %1041 = vmatpush.msra.mxu0 %v964
    %1042 = vmatpush.msra.mxu0 %v962
    %1043 = vmatpush.msra.mxu0 %v960
    %1044 = vmatpush.msra.mxu0 %v958
    %1045 = vmatpush.msra.mxu0 %v956
    %1046 = vmatpush.msra.mxu0 %v954
    %1047 = vmatpush.msra.mxu0 %v952
    %1048 = vmatpush.msra.mxu0 %v950
    %1049 = vmatpush.msra.mxu0 %v948
    %1050 = vmatpush.msra.mxu0 %v946
    %1051 = vmatpush.msra.mxu0 %v944
    %1052 = vmatpush.msra.mxu0 %v942
    %1053 = vmatpush.msra.mxu0 %v940
    %1054 = vmatpush.msra.mxu0 %v938
    %1055 = vmatmul.f32.gmra.mxu0 %v432
    %v1056 = vpop.f32.mrf.mxu0
    %v1057 = vadd.f32 %v1035, %v1056
    %1058 = vdwg.mxu0
    %1059 = vmatpush.msra.mxu0 %v1000
    %1060 = vmatpush.msra.mxu0 %v998
    %1061 = vmatpush.msra.mxu0 %v996
    %1062 = vmatpush.msra.mxu0 %v994
    %1063 = vmatpush.msra.mxu0 %v992
    %1064 = vmatpush.msra.mxu0 %v990
    %1065 = vmatpush.msra.mxu0 %v988
    %1066 = vmatpush.msra.mxu0 %v986
    %1067 = vmatpush.msra.mxu0 %v984
    %1068 = vmatpush.msra.mxu0 %v982
    %1069 = vmatpush.msra.mxu0 %v980
    %1070 = vmatpush.msra.mxu0 %v978
    %1071 = vmatpush.msra.mxu0 %v976
    %1072 = vmatpush.msra.mxu0 %v974
    %1073 = vmatpush.msra.mxu0 %v972
    %1074 = vmatpush.msra.mxu0 %v970
    %1075 = vmatmul.f32.gmra.mxu0 %v302
    %v1076 = vpop.f32.mrf.mxu0
    %v1077 = vadd.f32 %v1057, %v1076
    %1078 = vdwg.mxu0
    %1079 = vmatpush.msra.mxu0 %v1032
    %1080 = vmatpush.msra.mxu0 %v1030
    %1081 = vmatpush.msra.mxu0 %v1028
    %1082 = vmatpush.msra.mxu0 %v1026
    %1083 = vmatpush.msra.mxu0 %v1024
    %1084 = vmatpush.msra.mxu0 %v1022
    %1085 = vmatpush.msra.mxu0 %v1020
    %1086 = vmatpush.msra.mxu0 %v1018
    %1087 = vmatpush.msra.mxu0 %v1016
    %1088 = vmatpush.msra.mxu0 %v1014
    %1089 = vmatpush.msra.mxu0 %v1012
    %1090 = vmatpush.msra.mxu0 %v1010
    %1091 = vmatpush.msra.mxu0 %v1008
    %1092 = vmatpush.msra.mxu0 %v1006
    %1093 = vmatpush.msra.mxu0 %v1004
    %1094 = vmatpush.msra.mxu0 %v1002
    %1095 = vmatmul.f32.gmra.mxu0 %v937
    %v1096 = vpop.f32.mrf.mxu0
    %v1097 = vadd.f32 %v1077, %v1096
    %1098 = vdwg.mxu0
    %1099 = vmatpush.msra.mxu0 %v969
    %1100 = vmatpush.msra.mxu0 %v967
    %1101 = vmatpush.msra.mxu0 %v965
    %1102 = vmatpush.msra.mxu0 %v963
    %1103 = vmatpush.msra.mxu0 %v961
    %1104 = vmatpush.msra.mxu0 %v959
    %1105 = vmatpush.msra.mxu0 %v957
    %1106 = vmatpush.msra.mxu0 %v955
    %1107 = vmatpush.msra.mxu0 %v953
    %1108 = vmatpush.msra.mxu0 %v951
    %1109 = vmatpush.msra.mxu0 %v949
    %1110 = vmatpush.msra.mxu0 %v947
    %1111 = vmatpush.msra.mxu0 %v945
    %1112 = vmatpush.msra.mxu0 %v943
    %1113 = vmatpush.msra.mxu0 %v941
    %1114 = vmatpush.msra.mxu0 %v939
    %1115 = vmatmul.f32.gmra.mxu0 %v432
    %v1116 = vpop.f32.mrf.mxu0
    %v1117 = vadd.f32 %v1036, %v1116
    %1118 = vdwg.mxu0
    %1119 = vmatpush.msra.mxu0 %v1001
    %1120 = vmatpush.msra.mxu0 %v999
    %1121 = vmatpush.msra.mxu0 %v997
    %1122 = vmatpush.msra.mxu0 %v995
    %1123 = vmatpush.msra.mxu0 %v993
    %1124 = vmatpush.msra.mxu0 %v991
    %1125 = vmatpush.msra.mxu0 %v989
    %1126 = vmatpush.msra.mxu0 %v987
    %1127 = vmatpush.msra.mxu0 %v985
    %1128 = vmatpush.msra.mxu0 %v983
    %1129 = vmatpush.msra.mxu0 %v981
    %1130 = vmatpush.msra.mxu0 %v979
    %1131 = vmatpush.msra.mxu0 %v977
    %1132 = vmatpush.msra.mxu0 %v975
    %1133 = vmatpush.msra.mxu0 %v973
    %1134 = vmatpush.msra.mxu0 %v971
    %1135 = vmatmul.f32.gmra.mxu0 %v302
    %v1136 = vpop.f32.mrf.mxu0
    %v1137 = vadd.f32 %v1117, %v1136
    %1138 = vdwg.mxu0
    %1139 = vmatpush.msra.mxu0 %v1033
    %1140 = vmatpush.msra.mxu0 %v1031
    %1141 = vmatpush.msra.mxu0 %v1029
    %1142 = vmatpush.msra.mxu0 %v1027
    %1143 = vmatpush.msra.mxu0 %v1025
    %1144 = vmatpush.msra.mxu0 %v1023
    %1145 = vmatpush.msra.mxu0 %v1021
    %1146 = vmatpush.msra.mxu0 %v1019
    %1147 = vmatpush.msra.mxu0 %v1017
    %1148 = vmatpush.msra.mxu0 %v1015
    %1149 = vmatpush.msra.mxu0 %v1013
    %1150 = vmatpush.msra.mxu0 %v1011
    %1151 = vmatpush.msra.mxu0 %v1009
    %1152 = vmatpush.msra.mxu0 %v1007
    %1153 = vmatpush.msra.mxu0 %v1005
    %1154 = vmatpush.msra.mxu0 %v1003
    %1155 = vmatmul.f32.gmra.mxu0 %v937
    %v1156 = vpop.f32.mrf.mxu0
    %v1157 = vadd.f32 %v1137, %v1156
    %1158 = vdwg.mxu0
    %s1159 = scalar_lea.vmem [#allocation5], 2
    %v1160 = vld [vmem:[%s1159] sm:$0x3]
    %v1162 = vrot.slane %v937, 1
    %1164 = vmatpush.xpose.msra.mxu0 0.0
    %1165 = vmatpush.xpose.msra.mxu0 0.0
    %1166 = vmatpush.xpose.msra.mxu0 0.0
    %1167 = vmatpush.xpose.msra.mxu0 0.0
    %1168 = vmatpush.xpose.msra.mxu0 0.0
    %1169 = vmatpush.xpose.msra.mxu0 0.0
    %1170 = vmatpush.xpose.msra.mxu0 0.0
    %1171 = vmatpush.xpose.msra.mxu0 0.0
    %1172 = vmatpush.xpose.msra.mxu0 0.0
    %1173 = vmatpush.xpose.msra.mxu0 0.0
    %1174 = vmatpush.xpose.msra.mxu0 0.0
    %1175 = vmatpush.xpose.msra.mxu0 0.0
    %1176 = vmatpush.xpose.msra.mxu0 0.0
    %1177 = vmatpush.xpose.msra.mxu0 0.0
    %1178 = vmatpush.xpose.msra.mxu0 %v290
    %1179 = vmatpush.xpose.msra.mxu0 %v287
    %1180 = vmatmul.f32.gmra.mxu0 %v937
    %v1181 = vpop.f32.mrf.mxu0
    %v1182 = vadd.f32 0.0, %v1181
    %1183 = vdwg.mxu0
    %1184 = vmatpush.xpose.msra.mxu0 0.0
    %1185 = vmatpush.xpose.msra.mxu0 0.0
    %1186 = vmatpush.xpose.msra.mxu0 0.0
    %1187 = vmatpush.xpose.msra.mxu0 0.0
    %1188 = vmatpush.xpose.msra.mxu0 0.0
    %1189 = vmatpush.xpose.msra.mxu0 0.0
    %1190 = vmatpush.xpose.msra.mxu0 0.0
    %1191 = vmatpush.xpose.msra.mxu0 0.0
    %1192 = vmatpush.xpose.msra.mxu0 0.0
    %1193 = vmatpush.xpose.msra.mxu0 0.0
    %1194 = vmatpush.xpose.msra.mxu0 0.0
    %1195 = vmatpush.xpose.msra.mxu0 0.0
    %1196 = vmatpush.xpose.msra.mxu0 0.0
    %1197 = vmatpush.xpose.msra.mxu0 0.0
    %1198 = vmatpush.xpose.msra.mxu0 %v296
    %1199 = vmatpush.xpose.msra.mxu0 %v293
    %1200 = vmatmul.f32.gmra.mxu0 %v1162
    %v1201 = vpop.f32.mrf.mxu0
    %v1202 = vadd.f32 0.0, %v1201
    %1203 = vdwg.mxu0
    %v1204 = vmul.f32 %v1182, 0.088388346
    %v1205 = vmul.f32 %v1202, 0.088388346
    %v1208 = vrot.slane %v1205, 7
    %v1209 = vsel %vm154, %v1208, %v1204
    %v1211 = vsel %vm353, %v1209, -inf
    %1212 = vmax.xlane.f32.xlu0 %v1211
    %v1213 = vpop.xlane.xlu0 %1212
    %v1215 = vrot.slane %v1213, 1
    %v1218 = vsub.f32 %v1204, %v1213
    %v1219 = vsub.f32 %v1205, %v1215
    %v1220 = vmul.f32 %v1218, 1.442695
    %v1221 = vpow.pop %v1220
    %v1222 = vmul.f32 %v1219, 1.442695
    %v1223 = vpow.pop %v1222
    %v1226 = vrot.slane %v1223, 7
    %v1227 = vsel %vm154, %v1226, %v1221
    %v1229 = vsel %vm353, %v1227, 0.0
    %1230 = vadd.xlane.f32.xlu0 %v1229
    %v1231 = vpop.xlane.xlu0 %1230
    %v1232 = vrcp.pop %v1231
    %v1234 = vrot.slane %v1232, 1
    %v1237 = vmul.f32 %v1221, %v1232
    %v1238 = vmul.f32 %v1223, %v1234
    %v1240 = vsel %vm382, %v1237, 0
    %1242 = vmatpush.msra.mxu0 0.0
    %1243 = vmatpush.msra.mxu0 0.0
    %1244 = vmatpush.msra.mxu0 0.0
    %1245 = vmatpush.msra.mxu0 0.0
    %1246 = vmatpush.msra.mxu0 0.0
    %1247 = vmatpush.msra.mxu0 0.0
    %1248 = vmatpush.msra.mxu0 0.0
    %1249 = vmatpush.msra.mxu0 0.0
    %1250 = vmatpush.msra.mxu0 0.0
    %1251 = vmatpush.msra.mxu0 0.0
    %1252 = vmatpush.msra.mxu0 0.0
    %1253 = vmatpush.msra.mxu0 0.0
    %1254 = vmatpush.msra.mxu0 0.0
    %1255 = vmatpush.msra.mxu0 0.0
    %1256 = vmatpush.msra.mxu0 %v126
    %1257 = vmatpush.msra.mxu0 %v125
    %1258 = vmatmul.f32.gmra.mxu0 %v1240
    %v1259 = vpop.f32.mrf.mxu0
    %v1260 = vadd.f32 0.0, %v1259
    %1261 = vdwg.mxu0
    %v1263 = vsel %vm382, %v1238, 0
    %1265 = vmatpush.msra.mxu0 0.0
    %1266 = vmatpush.msra.mxu0 0.0
    %1267 = vmatpush.msra.mxu0 0.0
    %1268 = vmatpush.msra.mxu0 0.0
    %1269 = vmatpush.msra.mxu0 0.0
    %1270 = vmatpush.msra.mxu0 0.0
    %1271 = vmatpush.msra.mxu0 0.0
    %1272 = vmatpush.msra.mxu0 0.0
    %1273 = vmatpush.msra.mxu0 0.0
    %1274 = vmatpush.msra.mxu0 0.0
    %1275 = vmatpush.msra.mxu0 0.0
    %1276 = vmatpush.msra.mxu0 0.0
    %1277 = vmatpush.msra.mxu0 0.0
    %1278 = vmatpush.msra.mxu0 0.0
    %1279 = vmatpush.msra.mxu0 %v128
    %1280 = vmatpush.msra.mxu0 %v127
    %1281 = vmatmul.f32.gmra.mxu0 %v1263
    %v1282 = vpop.f32.mrf.mxu0
    %v1283 = vadd.f32 0.0, %v1282
    %1284 = vdwg.mxu0
    %v1287 = vrot.slane %v1283, 7
    %v1288 = vsel %vm154, %v1287, %v1260
    %v1290 = vld [vmem:[#allocation10] sm:$0xff]
    %v1291 = vld [vmem:[#allocation10 + $0x8] sm:$0xff]
    %v1292 = vld [vmem:[#allocation10 + $0x10] sm:$0xff]
    %v1293 = vld [vmem:[#allocation10 + $0x18] sm:$0xff]
    %v1294 = vld [vmem:[#allocation10 + $0x20] sm:$0xff]
    %v1295 = vld [vmem:[#allocation10 + $0x28] sm:$0xff]
    %v1296 = vld [vmem:[#allocation10 + $0x30] sm:$0xff]
    %v1297 = vld [vmem:[#allocation10 + $0x38] sm:$0xff]
    %v1298 = vld [vmem:[#allocation10 + $0x40] sm:$0xff]
    %v1299 = vld [vmem:[#allocation10 + $0x48] sm:$0xff]
    %v1300 = vld [vmem:[#allocation10 + $0x50] sm:$0xff]
    %v1301 = vld [vmem:[#allocation10 + $0x58] sm:$0xff]
    %v1302 = vld [vmem:[#allocation10 + $0x60] sm:$0xff]
    %v1303 = vld [vmem:[#allocation10 + $0x68] sm:$0xff]
    %v1304 = vld [vmem:[#allocation10 + $0x70] sm:$0xff]
    %v1305 = vld [vmem:[#allocation10 + $0x78] sm:$0xff]
    %v1306 = vld [vmem:[#allocation10 + $0x80] sm:$0xff]
    %v1307 = vld [vmem:[#allocation10 + $0x88] sm:$0xff]
    %v1308 = vld [vmem:[#allocation10 + $0x90] sm:$0xff]
    %v1309 = vld [vmem:[#allocation10 + $0x98] sm:$0xff]
    %v1310 = vld [vmem:[#allocation10 + $0xa0] sm:$0xff]
    %v1311 = vld [vmem:[#allocation10 + $0xa8] sm:$0xff]
    %v1312 = vld [vmem:[#allocation10 + $0xb0] sm:$0xff]
    %v1313 = vld [vmem:[#allocation10 + $0xb8] sm:$0xff]
    %v1314 = vld [vmem:[#allocation10 + $0xc0] sm:$0xff]
    %v1315 = vld [vmem:[#allocation10 + $0xc8] sm:$0xff]
    %v1316 = vld [vmem:[#allocation10 + $0xd0] sm:$0xff]
    %v1317 = vld [vmem:[#allocation10 + $0xd8] sm:$0xff]
    %v1318 = vld [vmem:[#allocation10 + $0xe0] sm:$0xff]
    %v1319 = vld [vmem:[#allocation10 + $0xe8] sm:$0xff]
    %v1320 = vld [vmem:[#allocation10 + $0xf0] sm:$0xff]
    %v1321 = vld [vmem:[#allocation10 + $0xf8] sm:$0xff]
    %v1322 = vld [vmem:[#allocation10 + $0x100] sm:$0xff]
    %v1323 = vld [vmem:[#allocation10 + $0x108] sm:$0xff]
    %v1324 = vld [vmem:[#allocation10 + $0x110] sm:$0xff]
    %v1325 = vld [vmem:[#allocation10 + $0x118] sm:$0xff]
    %v1326 = vld [vmem:[#allocation10 + $0x120] sm:$0xff]
    %v1327 = vld [vmem:[#allocation10 + $0x128] sm:$0xff]
    %v1328 = vld [vmem:[#allocation10 + $0x130] sm:$0xff]
    %v1329 = vld [vmem:[#allocation10 + $0x138] sm:$0xff]
    %v1330 = vld [vmem:[#allocation10 + $0x140] sm:$0xff]
    %v1331 = vld [vmem:[#allocation10 + $0x148] sm:$0xff]
    %v1332 = vld [vmem:[#allocation10 + $0x150] sm:$0xff]
    %v1333 = vld [vmem:[#allocation10 + $0x158] sm:$0xff]
    %v1334 = vld [vmem:[#allocation10 + $0x160] sm:$0xff]
    %v1335 = vld [vmem:[#allocation10 + $0x168] sm:$0xff]
    %v1336 = vld [vmem:[#allocation10 + $0x170] sm:$0xff]
    %v1337 = vld [vmem:[#allocation10 + $0x178] sm:$0xff]
    %v1338 = vld [vmem:[#allocation10 + $0x180] sm:$0xff]
    %v1339 = vld [vmem:[#allocation10 + $0x188] sm:$0xff]
    %v1340 = vld [vmem:[#allocation10 + $0x190] sm:$0xff]
    %v1341 = vld [vmem:[#allocation10 + $0x198] sm:$0xff]
    %v1342 = vld [vmem:[#allocation10 + $0x1a0] sm:$0xff]
    %v1343 = vld [vmem:[#allocation10 + $0x1a8] sm:$0xff]
    %v1344 = vld [vmem:[#allocation10 + $0x1b0] sm:$0xff]
    %v1345 = vld [vmem:[#allocation10 + $0x1b8] sm:$0xff]
    %v1346 = vld [vmem:[#allocation10 + $0x1c0] sm:$0xff]
    %v1347 = vld [vmem:[#allocation10 + $0x1c8] sm:$0xff]
    %v1348 = vld [vmem:[#allocation10 + $0x1d0] sm:$0xff]
    %v1349 = vld [vmem:[#allocation10 + $0x1d8] sm:$0xff]
    %v1350 = vld [vmem:[#allocation10 + $0x1e0] sm:$0xff]
    %v1351 = vld [vmem:[#allocation10 + $0x1e8] sm:$0xff]
    %v1352 = vld [vmem:[#allocation10 + $0x1f0] sm:$0xff]
    %v1353 = vld [vmem:[#allocation10 + $0x1f8] sm:$0xff]
    %v1354 = vld [vmem:[#allocation10 + $0x200] sm:$0xff]
    %v1355 = vld [vmem:[#allocation10 + $0x208] sm:$0xff]
    %v1356 = vld [vmem:[#allocation10 + $0x210] sm:$0xff]
    %v1357 = vld [vmem:[#allocation10 + $0x218] sm:$0xff]
    %v1358 = vld [vmem:[#allocation10 + $0x220] sm:$0xff]
    %v1359 = vld [vmem:[#allocation10 + $0x228] sm:$0xff]
    %v1360 = vld [vmem:[#allocation10 + $0x230] sm:$0xff]
    %v1361 = vld [vmem:[#allocation10 + $0x238] sm:$0xff]
    %v1362 = vld [vmem:[#allocation10 + $0x240] sm:$0xff]
    %v1363 = vld [vmem:[#allocation10 + $0x248] sm:$0xff]
    %v1364 = vld [vmem:[#allocation10 + $0x250] sm:$0xff]
    %v1365 = vld [vmem:[#allocation10 + $0x258] sm:$0xff]
    %v1366 = vld [vmem:[#allocation10 + $0x260] sm:$0xff]
    %v1367 = vld [vmem:[#allocation10 + $0x268] sm:$0xff]
    %v1368 = vld [vmem:[#allocation10 + $0x270] sm:$0xff]
    %v1369 = vld [vmem:[#allocation10 + $0x278] sm:$0xff]
    %v1370 = vld [vmem:[#allocation10 + $0x280] sm:$0xff]
    %v1371 = vld [vmem:[#allocation10 + $0x288] sm:$0xff]
    %v1372 = vld [vmem:[#allocation10 + $0x290] sm:$0xff]
    %v1373 = vld [vmem:[#allocation10 + $0x298] sm:$0xff]
    %v1374 = vld [vmem:[#allocation10 + $0x2a0] sm:$0xff]
    %v1375 = vld [vmem:[#allocation10 + $0x2a8] sm:$0xff]
    %v1376 = vld [vmem:[#allocation10 + $0x2b0] sm:$0xff]
    %v1377 = vld [vmem:[#allocation10 + $0x2b8] sm:$0xff]
    %v1378 = vld [vmem:[#allocation10 + $0x2c0] sm:$0xff]
    %v1379 = vld [vmem:[#allocation10 + $0x2c8] sm:$0xff]
    %v1380 = vld [vmem:[#allocation10 + $0x2d0] sm:$0xff]
    %v1381 = vld [vmem:[#allocation10 + $0x2d8] sm:$0xff]
    %v1382 = vld [vmem:[#allocation10 + $0x2e0] sm:$0xff]
    %v1383 = vld [vmem:[#allocation10 + $0x2e8] sm:$0xff]
    %v1384 = vld [vmem:[#allocation10 + $0x2f0] sm:$0xff]
    %v1385 = vld [vmem:[#allocation10 + $0x2f8] sm:$0xff]
    %v1386 = vld [vmem:[#allocation10 + $0x300] sm:$0xff]
    %v1387 = vld [vmem:[#allocation10 + $0x308] sm:$0xff]
    %v1388 = vld [vmem:[#allocation10 + $0x310] sm:$0xff]
    %v1389 = vld [vmem:[#allocation10 + $0x318] sm:$0xff]
    %v1390 = vld [vmem:[#allocation10 + $0x320] sm:$0xff]
    %v1391 = vld [vmem:[#allocation10 + $0x328] sm:$0xff]
    %v1392 = vld [vmem:[#allocation10 + $0x330] sm:$0xff]
    %v1393 = vld [vmem:[#allocation10 + $0x338] sm:$0xff]
    %v1394 = vld [vmem:[#allocation10 + $0x340] sm:$0xff]
    %v1395 = vld [vmem:[#allocation10 + $0x348] sm:$0xff]
    %v1396 = vld [vmem:[#allocation10 + $0x350] sm:$0xff]
    %v1397 = vld [vmem:[#allocation10 + $0x358] sm:$0xff]
    %v1398 = vld [vmem:[#allocation10 + $0x360] sm:$0xff]
    %v1399 = vld [vmem:[#allocation10 + $0x368] sm:$0xff]
    %v1400 = vld [vmem:[#allocation10 + $0x370] sm:$0xff]
    %v1401 = vld [vmem:[#allocation10 + $0x378] sm:$0xff]
    %v1402 = vld [vmem:[#allocation10 + $0x380] sm:$0xff]
    %v1403 = vld [vmem:[#allocation10 + $0x388] sm:$0xff]
    %v1404 = vld [vmem:[#allocation10 + $0x390] sm:$0xff]
    %v1405 = vld [vmem:[#allocation10 + $0x398] sm:$0xff]
    %v1406 = vld [vmem:[#allocation10 + $0x3a0] sm:$0xff]
    %v1407 = vld [vmem:[#allocation10 + $0x3a8] sm:$0xff]
    %v1408 = vld [vmem:[#allocation10 + $0x3b0] sm:$0xff]
    %v1409 = vld [vmem:[#allocation10 + $0x3b8] sm:$0xff]
    %v1410 = vld [vmem:[#allocation10 + $0x3c0] sm:$0xff]
    %v1411 = vld [vmem:[#allocation10 + $0x3c8] sm:$0xff]
    %v1412 = vld [vmem:[#allocation10 + $0x3d0] sm:$0xff]
    %v1413 = vld [vmem:[#allocation10 + $0x3d8] sm:$0xff]
    %v1414 = vld [vmem:[#allocation10 + $0x3e0] sm:$0xff]
    %v1415 = vld [vmem:[#allocation10 + $0x3e8] sm:$0xff]
    %v1416 = vld [vmem:[#allocation10 + $0x3f0] sm:$0xff]
    %v1417 = vld [vmem:[#allocation10 + $0x3f8] sm:$0xff]
    %v1418 = vld [vmem:[#allocation10 + $0x400] sm:$0xff]
    %v1419 = vld [vmem:[#allocation10 + $0x408] sm:$0xff]
    %v1420 = vld [vmem:[#allocation10 + $0x410] sm:$0xff]
    %v1421 = vld [vmem:[#allocation10 + $0x418] sm:$0xff]
    %v1422 = vld [vmem:[#allocation10 + $0x420] sm:$0xff]
    %v1423 = vld [vmem:[#allocation10 + $0x428] sm:$0xff]
    %v1424 = vld [vmem:[#allocation10 + $0x430] sm:$0xff]
    %v1425 = vld [vmem:[#allocation10 + $0x438] sm:$0xff]
    %v1426 = vld [vmem:[#allocation10 + $0x440] sm:$0xff]
    %v1427 = vld [vmem:[#allocation10 + $0x448] sm:$0xff]
    %v1428 = vld [vmem:[#allocation10 + $0x450] sm:$0xff]
    %v1429 = vld [vmem:[#allocation10 + $0x458] sm:$0xff]
    %v1430 = vld [vmem:[#allocation10 + $0x460] sm:$0xff]
    %v1431 = vld [vmem:[#allocation10 + $0x468] sm:$0xff]
    %v1432 = vld [vmem:[#allocation10 + $0x470] sm:$0xff]
    %v1433 = vld [vmem:[#allocation10 + $0x478] sm:$0xff]
    %v1434 = vld [vmem:[#allocation10 + $0x480] sm:$0xff]
    %v1435 = vld [vmem:[#allocation10 + $0x488] sm:$0xff]
    %v1436 = vld [vmem:[#allocation10 + $0x490] sm:$0xff]
    %v1437 = vld [vmem:[#allocation10 + $0x498] sm:$0xff]
    %v1438 = vld [vmem:[#allocation10 + $0x4a0] sm:$0xff]
    %v1439 = vld [vmem:[#allocation10 + $0x4a8] sm:$0xff]
    %v1440 = vld [vmem:[#allocation10 + $0x4b0] sm:$0xff]
    %v1441 = vld [vmem:[#allocation10 + $0x4b8] sm:$0xff]
    %v1442 = vld [vmem:[#allocation10 + $0x4c0] sm:$0xff]
    %v1443 = vld [vmem:[#allocation10 + $0x4c8] sm:$0xff]
    %v1444 = vld [vmem:[#allocation10 + $0x4d0] sm:$0xff]
    %v1445 = vld [vmem:[#allocation10 + $0x4d8] sm:$0xff]
    %v1446 = vld [vmem:[#allocation10 + $0x4e0] sm:$0xff]
    %v1447 = vld [vmem:[#allocation10 + $0x4e8] sm:$0xff]
    %v1448 = vld [vmem:[#allocation10 + $0x4f0] sm:$0xff]
    %v1449 = vld [vmem:[#allocation10 + $0x4f8] sm:$0xff]
    %v1450 = vld [vmem:[#allocation10 + $0x500] sm:$0xff]
    %v1451 = vld [vmem:[#allocation10 + $0x508] sm:$0xff]
    %v1452 = vld [vmem:[#allocation10 + $0x510] sm:$0xff]
    %v1453 = vld [vmem:[#allocation10 + $0x518] sm:$0xff]
    %v1454 = vld [vmem:[#allocation10 + $0x520] sm:$0xff]
    %v1455 = vld [vmem:[#allocation10 + $0x528] sm:$0xff]
    %v1456 = vld [vmem:[#allocation10 + $0x530] sm:$0xff]
    %v1457 = vld [vmem:[#allocation10 + $0x538] sm:$0xff]
    %v1458 = vld [vmem:[#allocation10 + $0x540] sm:$0xff]
    %v1459 = vld [vmem:[#allocation10 + $0x548] sm:$0xff]
    %v1460 = vld [vmem:[#allocation10 + $0x550] sm:$0xff]
    %v1461 = vld [vmem:[#allocation10 + $0x558] sm:$0xff]
    %v1462 = vld [vmem:[#allocation10 + $0x560] sm:$0xff]
    %v1463 = vld [vmem:[#allocation10 + $0x568] sm:$0xff]
    %v1464 = vld [vmem:[#allocation10 + $0x570] sm:$0xff]
    %v1465 = vld [vmem:[#allocation10 + $0x578] sm:$0xff]
    %v1466 = vld [vmem:[#allocation10 + $0x580] sm:$0xff]
    %v1467 = vld [vmem:[#allocation10 + $0x588] sm:$0xff]
    %v1468 = vld [vmem:[#allocation10 + $0x590] sm:$0xff]
    %v1469 = vld [vmem:[#allocation10 + $0x598] sm:$0xff]
    %v1470 = vld [vmem:[#allocation10 + $0x5a0] sm:$0xff]
    %v1471 = vld [vmem:[#allocation10 + $0x5a8] sm:$0xff]
    %v1472 = vld [vmem:[#allocation10 + $0x5b0] sm:$0xff]
    %v1473 = vld [vmem:[#allocation10 + $0x5b8] sm:$0xff]
    %v1474 = vld [vmem:[#allocation10 + $0x5c0] sm:$0xff]
    %v1475 = vld [vmem:[#allocation10 + $0x5c8] sm:$0xff]
    %v1476 = vld [vmem:[#allocation10 + $0x5d0] sm:$0xff]
    %v1477 = vld [vmem:[#allocation10 + $0x5d8] sm:$0xff]
    %v1478 = vld [vmem:[#allocation10 + $0x5e0] sm:$0xff]
    %v1479 = vld [vmem:[#allocation10 + $0x5e8] sm:$0xff]
    %v1480 = vld [vmem:[#allocation10 + $0x5f0] sm:$0xff]
    %v1481 = vld [vmem:[#allocation10 + $0x5f8] sm:$0xff]
    %1482 = vmatpush.msra.mxu0 %v1350
    %1483 = vmatpush.msra.mxu0 %v1346
    %1484 = vmatpush.msra.mxu0 %v1342
    %1485 = vmatpush.msra.mxu0 %v1338
    %1486 = vmatpush.msra.mxu0 %v1334
    %1487 = vmatpush.msra.mxu0 %v1330
    %1488 = vmatpush.msra.mxu0 %v1326
    %1489 = vmatpush.msra.mxu0 %v1322
    %1490 = vmatpush.msra.mxu0 %v1318
    %1491 = vmatpush.msra.mxu0 %v1314
    %1492 = vmatpush.msra.mxu0 %v1310
    %1493 = vmatpush.msra.mxu0 %v1306
    %1494 = vmatpush.msra.mxu0 %v1302
    %1495 = vmatpush.msra.mxu0 %v1298
    %1496 = vmatpush.msra.mxu0 %v1294
    %1497 = vmatpush.msra.mxu0 %v1290
    %1498 = vmatmul.f32.gmra.mxu0 %v1160
    %v1499 = vpop.f32.mrf.mxu0
    %v1500 = vadd.f32 %v627, %v1499
    %1501 = vdwg.mxu0
    %1502 = vmatpush.msra.mxu0 %v1414
    %1503 = vmatpush.msra.mxu0 %v1410
    %1504 = vmatpush.msra.mxu0 %v1406
    %1505 = vmatpush.msra.mxu0 %v1402
    %1506 = vmatpush.msra.mxu0 %v1398
    %1507 = vmatpush.msra.mxu0 %v1394
    %1508 = vmatpush.msra.mxu0 %v1390
    %1509 = vmatpush.msra.mxu0 %v1386
    %1510 = vmatpush.msra.mxu0 %v1382
    %1511 = vmatpush.msra.mxu0 %v1378
    %1512 = vmatpush.msra.mxu0 %v1374
    %1513 = vmatpush.msra.mxu0 %v1370
    %1514 = vmatpush.msra.mxu0 %v1366
    %1515 = vmatpush.msra.mxu0 %v1362
    %1516 = vmatpush.msra.mxu0 %v1358
    %1517 = vmatpush.msra.mxu0 %v1354
    %1518 = vmatmul.f32.gmra.mxu0 %v1288
    %v1519 = vpop.f32.mrf.mxu0
    %v1520 = vadd.f32 %v1500, %v1519
    %1521 = vdwg.mxu0
    %1522 = vmatpush.msra.mxu0 %v1478
    %1523 = vmatpush.msra.mxu0 %v1474
    %1524 = vmatpush.msra.mxu0 %v1470
    %1525 = vmatpush.msra.mxu0 %v1466
    %1526 = vmatpush.msra.mxu0 %v1462
    %1527 = vmatpush.msra.mxu0 %v1458
    %1528 = vmatpush.msra.mxu0 %v1454
    %1529 = vmatpush.msra.mxu0 %v1450
    %1530 = vmatpush.msra.mxu0 %v1446
    %1531 = vmatpush.msra.mxu0 %v1442
    %1532 = vmatpush.msra.mxu0 %v1438
    %1533 = vmatpush.msra.mxu0 %v1434
    %1534 = vmatpush.msra.mxu0 %v1430
    %1535 = vmatpush.msra.mxu0 %v1426
    %1536 = vmatpush.msra.mxu0 %v1422
    %1537 = vmatpush.msra.mxu0 %v1418
    %1538 = vmatmul.f32.gmra.mxu0 %v937
    %v1539 = vpop.f32.mrf.mxu0
    %v1540 = vadd.f32 %v1520, %v1539
    %1541 = vdwg.mxu0
    %1542 = vmatpush.msra.mxu0 %v1351
    %1543 = vmatpush.msra.mxu0 %v1347
    %1544 = vmatpush.msra.mxu0 %v1343
    %1545 = vmatpush.msra.mxu0 %v1339
    %1546 = vmatpush.msra.mxu0 %v1335
    %1547 = vmatpush.msra.mxu0 %v1331
    %1548 = vmatpush.msra.mxu0 %v1327
    %1549 = vmatpush.msra.mxu0 %v1323
    %1550 = vmatpush.msra.mxu0 %v1319
    %1551 = vmatpush.msra.mxu0 %v1315
    %1552 = vmatpush.msra.mxu0 %v1311
    %1553 = vmatpush.msra.mxu0 %v1307
    %1554 = vmatpush.msra.mxu0 %v1303
    %1555 = vmatpush.msra.mxu0 %v1299
    %1556 = vmatpush.msra.mxu0 %v1295
    %1557 = vmatpush.msra.mxu0 %v1291
    %1558 = vmatmul.f32.gmra.mxu0 %v1160
    %v1559 = vpop.f32.mrf.mxu0
    %v1560 = vadd.f32 %v628, %v1559
    %1561 = vdwg.mxu0
    %1562 = vmatpush.msra.mxu0 %v1415
    %1563 = vmatpush.msra.mxu0 %v1411
    %1564 = vmatpush.msra.mxu0 %v1407
    %1565 = vmatpush.msra.mxu0 %v1403
    %1566 = vmatpush.msra.mxu0 %v1399
    %1567 = vmatpush.msra.mxu0 %v1395
    %1568 = vmatpush.msra.mxu0 %v1391
    %1569 = vmatpush.msra.mxu0 %v1387
    %1570 = vmatpush.msra.mxu0 %v1383
    %1571 = vmatpush.msra.mxu0 %v1379
    %1572 = vmatpush.msra.mxu0 %v1375
    %1573 = vmatpush.msra.mxu0 %v1371
    %1574 = vmatpush.msra.mxu0 %v1367
    %1575 = vmatpush.msra.mxu0 %v1363
    %1576 = vmatpush.msra.mxu0 %v1359
    %1577 = vmatpush.msra.mxu0 %v1355
    %1578 = vmatmul.f32.gmra.mxu0 %v1288
    %v1579 = vpop.f32.mrf.mxu0
    %v1580 = vadd.f32 %v1560, %v1579
    %1581 = vdwg.mxu0
    %1582 = vmatpush.msra.mxu0 %v1479
    %1583 = vmatpush.msra.mxu0 %v1475
    %1584 = vmatpush.msra.mxu0 %v1471
    %1585 = vmatpush.msra.mxu0 %v1467
    %1586 = vmatpush.msra.mxu0 %v1463
    %1587 = vmatpush.msra.mxu0 %v1459
    %1588 = vmatpush.msra.mxu0 %v1455
    %1589 = vmatpush.msra.mxu0 %v1451
    %1590 = vmatpush.msra.mxu0 %v1447
    %1591 = vmatpush.msra.mxu0 %v1443
    %1592 = vmatpush.msra.mxu0 %v1439
    %1593 = vmatpush.msra.mxu0 %v1435
    %1594 = vmatpush.msra.mxu0 %v1431
    %1595 = vmatpush.msra.mxu0 %v1427
    %1596 = vmatpush.msra.mxu0 %v1423
    %1597 = vmatpush.msra.mxu0 %v1419
    %1598 = vmatmul.f32.gmra.mxu0 %v937
    %v1599 = vpop.f32.mrf.mxu0
    %v1600 = vadd.f32 %v1580, %v1599
    %1601 = vdwg.mxu0
    %1602 = vmatpush.msra.mxu0 %v1352
    %1603 = vmatpush.msra.mxu0 %v1348
    %1604 = vmatpush.msra.mxu0 %v1344
    %1605 = vmatpush.msra.mxu0 %v1340
    %1606 = vmatpush.msra.mxu0 %v1336
    %1607 = vmatpush.msra.mxu0 %v1332
    %1608 = vmatpush.msra.mxu0 %v1328
    %1609 = vmatpush.msra.mxu0 %v1324
    %1610 = vmatpush.msra.mxu0 %v1320
    %1611 = vmatpush.msra.mxu0 %v1316
    %1612 = vmatpush.msra.mxu0 %v1312
    %1613 = vmatpush.msra.mxu0 %v1308
    %1614 = vmatpush.msra.mxu0 %v1304
    %1615 = vmatpush.msra.mxu0 %v1300
    %1616 = vmatpush.msra.mxu0 %v1296
    %1617 = vmatpush.msra.mxu0 %v1292
    %1618 = vmatmul.f32.gmra.mxu0 %v1160
    %v1619 = vpop.f32.mrf.mxu0
    %v1620 = vadd.f32 %v629, %v1619
    %1621 = vdwg.mxu0
    %1622 = vmatpush.msra.mxu0 %v1416
    %1623 = vmatpush.msra.mxu0 %v1412
    %1624 = vmatpush.msra.mxu0 %v1408
    %1625 = vmatpush.msra.mxu0 %v1404
    %1626 = vmatpush.msra.mxu0 %v1400
    %1627 = vmatpush.msra.mxu0 %v1396
    %1628 = vmatpush.msra.mxu0 %v1392
    %1629 = vmatpush.msra.mxu0 %v1388
    %1630 = vmatpush.msra.mxu0 %v1384
    %1631 = vmatpush.msra.mxu0 %v1380
    %1632 = vmatpush.msra.mxu0 %v1376
    %1633 = vmatpush.msra.mxu0 %v1372
    %1634 = vmatpush.msra.mxu0 %v1368
    %1635 = vmatpush.msra.mxu0 %v1364
    %1636 = vmatpush.msra.mxu0 %v1360
    %1637 = vmatpush.msra.mxu0 %v1356
    %1638 = vmatmul.f32.gmra.mxu0 %v1288
    %v1639 = vpop.f32.mrf.mxu0
    %v1640 = vadd.f32 %v1620, %v1639
    %1641 = vdwg.mxu0
    %1642 = vmatpush.msra.mxu0 %v1480
    %1643 = vmatpush.msra.mxu0 %v1476
    %1644 = vmatpush.msra.mxu0 %v1472
    %1645 = vmatpush.msra.mxu0 %v1468
    %1646 = vmatpush.msra.mxu0 %v1464
    %1647 = vmatpush.msra.mxu0 %v1460
    %1648 = vmatpush.msra.mxu0 %v1456
    %1649 = vmatpush.msra.mxu0 %v1452
    %1650 = vmatpush.msra.mxu0 %v1448
    %1651 = vmatpush.msra.mxu0 %v1444
    %1652 = vmatpush.msra.mxu0 %v1440
    %1653 = vmatpush.msra.mxu0 %v1436
    %1654 = vmatpush.msra.mxu0 %v1432
    %1655 = vmatpush.msra.mxu0 %v1428
    %1656 = vmatpush.msra.mxu0 %v1424
    %1657 = vmatpush.msra.mxu0 %v1420
    %1658 = vmatmul.f32.gmra.mxu0 %v937
    %v1659 = vpop.f32.mrf.mxu0
    %v1660 = vadd.f32 %v1640, %v1659
    %1661 = vdwg.mxu0
    %1662 = vmatpush.msra.mxu0 %v1353
    %1663 = vmatpush.msra.mxu0 %v1349
    %1664 = vmatpush.msra.mxu0 %v1345
    %1665 = vmatpush.msra.mxu0 %v1341
    %1666 = vmatpush.msra.mxu0 %v1337
    %1667 = vmatpush.msra.mxu0 %v1333
    %1668 = vmatpush.msra.mxu0 %v1329
    %1669 = vmatpush.msra.mxu0 %v1325
    %1670 = vmatpush.msra.mxu0 %v1321
    %1671 = vmatpush.msra.mxu0 %v1317
    %1672 = vmatpush.msra.mxu0 %v1313
    %1673 = vmatpush.msra.mxu0 %v1309
    %1674 = vmatpush.msra.mxu0 %v1305
    %1675 = vmatpush.msra.mxu0 %v1301
    %1676 = vmatpush.msra.mxu0 %v1297
    %1677 = vmatpush.msra.mxu0 %v1293
    %1678 = vmatmul.f32.gmra.mxu0 %v1160
    %v1679 = vpop.f32.mrf.mxu0
    %v1680 = vadd.f32 %v630, %v1679
    %1681 = vdwg.mxu0
    %1682 = vmatpush.msra.mxu0 %v1417
    %1683 = vmatpush.msra.mxu0 %v1413
    %1684 = vmatpush.msra.mxu0 %v1409
    %1685 = vmatpush.msra.mxu0 %v1405
    %1686 = vmatpush.msra.mxu0 %v1401
    %1687 = vmatpush.msra.mxu0 %v1397
    %1688 = vmatpush.msra.mxu0 %v1393
    %1689 = vmatpush.msra.mxu0 %v1389
    %1690 = vmatpush.msra.mxu0 %v1385
    %1691 = vmatpush.msra.mxu0 %v1381
    %1692 = vmatpush.msra.mxu0 %v1377
    %1693 = vmatpush.msra.mxu0 %v1373
    %1694 = vmatpush.msra.mxu0 %v1369
    %1695 = vmatpush.msra.mxu0 %v1365
    %1696 = vmatpush.msra.mxu0 %v1361
    %1697 = vmatpush.msra.mxu0 %v1357
    %1698 = vmatmul.f32.gmra.mxu0 %v1288
    %v1699 = vpop.f32.mrf.mxu0
    %v1700 = vadd.f32 %v1680, %v1699
    %1701 = vdwg.mxu0
    %1702 = vmatpush.msra.mxu0 %v1481
    %1703 = vmatpush.msra.mxu0 %v1477
    %1704 = vmatpush.msra.mxu0 %v1473
    %1705 = vmatpush.msra.mxu0 %v1469
    %1706 = vmatpush.msra.mxu0 %v1465
    %1707 = vmatpush.msra.mxu0 %v1461
    %1708 = vmatpush.msra.mxu0 %v1457
    %1709 = vmatpush.msra.mxu0 %v1453
    %1710 = vmatpush.msra.mxu0 %v1449
    %1711 = vmatpush.msra.mxu0 %v1445
    %1712 = vmatpush.msra.mxu0 %v1441
    %1713 = vmatpush.msra.mxu0 %v1437
    %1714 = vmatpush.msra.mxu0 %v1433
    %1715 = vmatpush.msra.mxu0 %v1429
    %1716 = vmatpush.msra.mxu0 %v1425
    %1717 = vmatpush.msra.mxu0 %v1421
    %1718 = vmatmul.f32.gmra.mxu0 %v937
    %v1719 = vpop.f32.mrf.mxu0
    %v1720 = vadd.f32 %v1700, %v1719
    %1721 = vdwg.mxu0
    %v1722 = vxor.u32 %v1540, 2147483648
    %v1723 = vmul.f32 %v1722, 1.442695
    %v1724 = vpow.pop %v1723
    %v1725 = vadd.f32 %v1724, 1.0
    %v1726 = vrcp.pop %v1725
    %v1727 = vmul.f32 %v1725, %v1726
    %v1728 = vsub.f32 1.0, %v1727
    %v1729 = vmul.f32 %v1726, %v1728
    %v1730 = vadd.f32 %v1726, %v1729
    %vm1731 = vweird.f32 %v1725
    %vm1732 = vweird.f32 %v1726
    %vm1733 = vmor %vm1731, %vm1732
    %v1734 = vsel %vm1733, %v1726, %v1730
    %v1735 = vand.u32 2147483647, %v1725
    %vm1736 = vcmp.eq.f32.partialorder %v1735, 8.507059e+37
    %v1737 = vand.u32 %v1725, 2147483648
    %v1738 = vor.u32 1.1754944e-38, %v1737
    %v1739 = vsel %vm1736, %v1738, %v1734
    %v1740 = vmul.f32 1.0, %v1739
    %v1741 = vxor.u32 %v1600, 2147483648
    %v1742 = vmul.f32 %v1741, 1.442695
    %v1743 = vpow.pop %v1742
    %v1744 = vadd.f32 %v1743, 1.0
    %v1745 = vrcp.pop %v1744
    %v1746 = vmul.f32 %v1744, %v1745
    %v1747 = vsub.f32 1.0, %v1746
    %v1748 = vmul.f32 %v1745, %v1747
    %v1749 = vadd.f32 %v1745, %v1748
    %vm1750 = vweird.f32 %v1744
    %vm1751 = vweird.f32 %v1745
    %vm1752 = vmor %vm1750, %vm1751
    %v1753 = vsel %vm1752, %v1745, %v1749
    %v1754 = vand.u32 2147483647, %v1744
    %vm1755 = vcmp.eq.f32.partialorder %v1754, 8.507059e+37
    %v1756 = vand.u32 %v1744, 2147483648
    %v1757 = vor.u32 1.1754944e-38, %v1756
    %v1758 = vsel %vm1755, %v1757, %v1753
    %v1759 = vmul.f32 1.0, %v1758
    %v1760 = vtanh.pop %v1660
    %v1761 = vxor.u32 %v1720, 2147483648
    %v1762 = vmul.f32 %v1761, 1.442695
    %v1763 = vpow.pop %v1762
    %v1764 = vadd.f32 %v1763, 1.0
    %v1765 = vrcp.pop %v1764
    %v1766 = vmul.f32 %v1764, %v1765
    %v1767 = vsub.f32 1.0, %v1766
    %v1768 = vmul.f32 %v1765, %v1767
    %v1769 = vadd.f32 %v1765, %v1768
    %vm1770 = vweird.f32 %v1764
    %vm1771 = vweird.f32 %v1765
    %vm1772 = vmor %vm1770, %vm1771
    %v1773 = vsel %vm1772, %v1765, %v1769
    %v1774 = vand.u32 2147483647, %v1764
    %vm1775 = vcmp.eq.f32.partialorder %v1774, 8.507059e+37
    %v1776 = vand.u32 %v1764, 2147483648
    %v1777 = vor.u32 1.1754944e-38, %v1776
    %v1778 = vsel %vm1775, %v1777, %v1773
    %v1779 = vmul.f32 1.0, %v1778
    %v1780 = vmul.f32 %v1759, %v935
    %v1781 = vmul.f32 %v1740, %v1760
    %v1782 = vadd.f32 %v1780, %v1781
    %v1783 = vtanh.pop %v1782
    %v1784 = vmul.f32 %v1779, %v1783
    %v1785 = vld [vmem:[#allocation11] sm:$0xff]
    %v1786 = vld [vmem:[#allocation11 + $0x8] sm:$0xff]
    %v1787 = vld [vmem:[#allocation11 + $0x10] sm:$0xff]
    %v1788 = vld [vmem:[#allocation11 + $0x18] sm:$0xff]
    %v1789 = vld [vmem:[#allocation11 + $0x20] sm:$0xff]
    %v1790 = vld [vmem:[#allocation11 + $0x28] sm:$0xff]
    %v1791 = vld [vmem:[#allocation11 + $0x30] sm:$0xff]
    %v1792 = vld [vmem:[#allocation11 + $0x38] sm:$0xff]
    %v1793 = vld [vmem:[#allocation11 + $0x40] sm:$0xff]
    %v1794 = vld [vmem:[#allocation11 + $0x48] sm:$0xff]
    %v1795 = vld [vmem:[#allocation11 + $0x50] sm:$0xff]
    %v1796 = vld [vmem:[#allocation11 + $0x58] sm:$0xff]
    %v1797 = vld [vmem:[#allocation11 + $0x60] sm:$0xff]
    %v1798 = vld [vmem:[#allocation11 + $0x68] sm:$0xff]
    %v1799 = vld [vmem:[#allocation11 + $0x70] sm:$0xff]
    %v1800 = vld [vmem:[#allocation11 + $0x78] sm:$0xff]
    %v1801 = vld [vmem:[#allocation11 + $0x80] sm:$0xff]
    %v1802 = vld [vmem:[#allocation11 + $0x88] sm:$0xff]
    %v1803 = vld [vmem:[#allocation11 + $0x90] sm:$0xff]
    %v1804 = vld [vmem:[#allocation11 + $0x98] sm:$0xff]
    %v1805 = vld [vmem:[#allocation11 + $0xa0] sm:$0xff]
    %v1806 = vld [vmem:[#allocation11 + $0xa8] sm:$0xff]
    %v1807 = vld [vmem:[#allocation11 + $0xb0] sm:$0xff]
    %v1808 = vld [vmem:[#allocation11 + $0xb8] sm:$0xff]
    %v1809 = vld [vmem:[#allocation11 + $0xc0] sm:$0xff]
    %v1810 = vld [vmem:[#allocation11 + $0xc8] sm:$0xff]
    %v1811 = vld [vmem:[#allocation11 + $0xd0] sm:$0xff]
    %v1812 = vld [vmem:[#allocation11 + $0xd8] sm:$0xff]
    %v1813 = vld [vmem:[#allocation11 + $0xe0] sm:$0xff]
    %v1814 = vld [vmem:[#allocation11 + $0xe8] sm:$0xff]
    %v1815 = vld [vmem:[#allocation11 + $0xf0] sm:$0xff]
    %v1816 = vld [vmem:[#allocation11 + $0xf8] sm:$0xff]
    %v1817 = vld [vmem:[#allocation11 + $0x100] sm:$0xff]
    %v1818 = vld [vmem:[#allocation11 + $0x108] sm:$0xff]
    %v1819 = vld [vmem:[#allocation11 + $0x110] sm:$0xff]
    %v1820 = vld [vmem:[#allocation11 + $0x118] sm:$0xff]
    %v1821 = vld [vmem:[#allocation11 + $0x120] sm:$0xff]
    %v1822 = vld [vmem:[#allocation11 + $0x128] sm:$0xff]
    %v1823 = vld [vmem:[#allocation11 + $0x130] sm:$0xff]
    %v1824 = vld [vmem:[#allocation11 + $0x138] sm:$0xff]
    %v1825 = vld [vmem:[#allocation11 + $0x140] sm:$0xff]
    %v1826 = vld [vmem:[#allocation11 + $0x148] sm:$0xff]
    %v1827 = vld [vmem:[#allocation11 + $0x150] sm:$0xff]
    %v1828 = vld [vmem:[#allocation11 + $0x158] sm:$0xff]
    %v1829 = vld [vmem:[#allocation11 + $0x160] sm:$0xff]
    %v1830 = vld [vmem:[#allocation11 + $0x168] sm:$0xff]
    %v1831 = vld [vmem:[#allocation11 + $0x170] sm:$0xff]
    %v1832 = vld [vmem:[#allocation11 + $0x178] sm:$0xff]
    %v1833 = vld [vmem:[#allocation11 + $0x180] sm:$0xff]
    %v1834 = vld [vmem:[#allocation11 + $0x188] sm:$0xff]
    %v1835 = vld [vmem:[#allocation11 + $0x190] sm:$0xff]
    %v1836 = vld [vmem:[#allocation11 + $0x198] sm:$0xff]
    %v1837 = vld [vmem:[#allocation11 + $0x1a0] sm:$0xff]
    %v1838 = vld [vmem:[#allocation11 + $0x1a8] sm:$0xff]
    %v1839 = vld [vmem:[#allocation11 + $0x1b0] sm:$0xff]
    %v1840 = vld [vmem:[#allocation11 + $0x1b8] sm:$0xff]
    %v1841 = vld [vmem:[#allocation11 + $0x1c0] sm:$0xff]
    %v1842 = vld [vmem:[#allocation11 + $0x1c8] sm:$0xff]
    %v1843 = vld [vmem:[#allocation11 + $0x1d0] sm:$0xff]
    %v1844 = vld [vmem:[#allocation11 + $0x1d8] sm:$0xff]
    %v1845 = vld [vmem:[#allocation11 + $0x1e0] sm:$0xff]
    %v1846 = vld [vmem:[#allocation11 + $0x1e8] sm:$0xff]
    %v1847 = vld [vmem:[#allocation11 + $0x1f0] sm:$0xff]
    %v1848 = vld [vmem:[#allocation11 + $0x1f8] sm:$0xff]
    %v1849 = vld [vmem:[#allocation11 + $0x200] sm:$0xff]
    %v1850 = vld [vmem:[#allocation11 + $0x208] sm:$0xff]
    %v1851 = vld [vmem:[#allocation11 + $0x210] sm:$0xff]
    %v1852 = vld [vmem:[#allocation11 + $0x218] sm:$0xff]
    %v1853 = vld [vmem:[#allocation11 + $0x220] sm:$0xff]
    %v1854 = vld [vmem:[#allocation11 + $0x228] sm:$0xff]
    %v1855 = vld [vmem:[#allocation11 + $0x230] sm:$0xff]
    %v1856 = vld [vmem:[#allocation11 + $0x238] sm:$0xff]
    %v1857 = vld [vmem:[#allocation11 + $0x240] sm:$0xff]
    %v1858 = vld [vmem:[#allocation11 + $0x248] sm:$0xff]
    %v1859 = vld [vmem:[#allocation11 + $0x250] sm:$0xff]
    %v1860 = vld [vmem:[#allocation11 + $0x258] sm:$0xff]
    %v1861 = vld [vmem:[#allocation11 + $0x260] sm:$0xff]
    %v1862 = vld [vmem:[#allocation11 + $0x268] sm:$0xff]
    %v1863 = vld [vmem:[#allocation11 + $0x270] sm:$0xff]
    %v1864 = vld [vmem:[#allocation11 + $0x278] sm:$0xff]
    %v1865 = vld [vmem:[#allocation11 + $0x280] sm:$0xff]
    %v1866 = vld [vmem:[#allocation11 + $0x288] sm:$0xff]
    %v1867 = vld [vmem:[#allocation11 + $0x290] sm:$0xff]
    %v1868 = vld [vmem:[#allocation11 + $0x298] sm:$0xff]
    %v1869 = vld [vmem:[#allocation11 + $0x2a0] sm:$0xff]
    %v1870 = vld [vmem:[#allocation11 + $0x2a8] sm:$0xff]
    %v1871 = vld [vmem:[#allocation11 + $0x2b0] sm:$0xff]
    %v1872 = vld [vmem:[#allocation11 + $0x2b8] sm:$0xff]
    %v1873 = vld [vmem:[#allocation11 + $0x2c0] sm:$0xff]
    %v1874 = vld [vmem:[#allocation11 + $0x2c8] sm:$0xff]
    %v1875 = vld [vmem:[#allocation11 + $0x2d0] sm:$0xff]
    %v1876 = vld [vmem:[#allocation11 + $0x2d8] sm:$0xff]
    %v1877 = vld [vmem:[#allocation11 + $0x2e0] sm:$0xff]
    %v1878 = vld [vmem:[#allocation11 + $0x2e8] sm:$0xff]
    %v1879 = vld [vmem:[#allocation11 + $0x2f0] sm:$0xff]
    %v1880 = vld [vmem:[#allocation11 + $0x2f8] sm:$0xff]
    %1881 = vmatpush.msra.mxu0 %v1815
    %1882 = vmatpush.msra.mxu0 %v1813
    %1883 = vmatpush.msra.mxu0 %v1811
    %1884 = vmatpush.msra.mxu0 %v1809
    %1885 = vmatpush.msra.mxu0 %v1807
    %1886 = vmatpush.msra.mxu0 %v1805
    %1887 = vmatpush.msra.mxu0 %v1803
    %1888 = vmatpush.msra.mxu0 %v1801
    %1889 = vmatpush.msra.mxu0 %v1799
    %1890 = vmatpush.msra.mxu0 %v1797
    %1891 = vmatpush.msra.mxu0 %v1795
    %1892 = vmatpush.msra.mxu0 %v1793
    %1893 = vmatpush.msra.mxu0 %v1791
    %1894 = vmatpush.msra.mxu0 %v1789
    %1895 = vmatpush.msra.mxu0 %v1787
    %1896 = vmatpush.msra.mxu0 %v1785
    %1897 = vmatmul.f32.gmra.mxu0 %v1288
    %v1898 = vpop.f32.mrf.mxu0
    %v1899 = vadd.f32 %v1035, %v1898
    %1900 = vdwg.mxu0
    %1901 = vmatpush.msra.mxu0 %v1847
    %1902 = vmatpush.msra.mxu0 %v1845
    %1903 = vmatpush.msra.mxu0 %v1843
    %1904 = vmatpush.msra.mxu0 %v1841
    %1905 = vmatpush.msra.mxu0 %v1839
    %1906 = vmatpush.msra.mxu0 %v1837
    %1907 = vmatpush.msra.mxu0 %v1835
    %1908 = vmatpush.msra.mxu0 %v1833
    %1909 = vmatpush.msra.mxu0 %v1831
    %1910 = vmatpush.msra.mxu0 %v1829
    %1911 = vmatpush.msra.mxu0 %v1827
    %1912 = vmatpush.msra.mxu0 %v1825
    %1913 = vmatpush.msra.mxu0 %v1823
    %1914 = vmatpush.msra.mxu0 %v1821
    %1915 = vmatpush.msra.mxu0 %v1819
    %1916 = vmatpush.msra.mxu0 %v1817
    %1917 = vmatmul.f32.gmra.mxu0 %v1160
    %v1918 = vpop.f32.mrf.mxu0
    %v1919 = vadd.f32 %v1899, %v1918
    %1920 = vdwg.mxu0
    %1921 = vmatpush.msra.mxu0 %v1879
    %1922 = vmatpush.msra.mxu0 %v1877
    %1923 = vmatpush.msra.mxu0 %v1875
    %1924 = vmatpush.msra.mxu0 %v1873
    %1925 = vmatpush.msra.mxu0 %v1871
    %1926 = vmatpush.msra.mxu0 %v1869
    %1927 = vmatpush.msra.mxu0 %v1867
    %1928 = vmatpush.msra.mxu0 %v1865
    %1929 = vmatpush.msra.mxu0 %v1863
    %1930 = vmatpush.msra.mxu0 %v1861
    %1931 = vmatpush.msra.mxu0 %v1859
    %1932 = vmatpush.msra.mxu0 %v1857
    %1933 = vmatpush.msra.mxu0 %v1855
    %1934 = vmatpush.msra.mxu0 %v1853
    %1935 = vmatpush.msra.mxu0 %v1851
    %1936 = vmatpush.msra.mxu0 %v1849
    %1937 = vmatmul.f32.gmra.mxu0 %v1784
    %v1938 = vpop.f32.mrf.mxu0
    %v1939 = vadd.f32 %v1919, %v1938
    %1940 = vdwg.mxu0
    %1941 = vmatpush.msra.mxu0 %v1816
    %1942 = vmatpush.msra.mxu0 %v1814
    %1943 = vmatpush.msra.mxu0 %v1812
    %1944 = vmatpush.msra.mxu0 %v1810
    %1945 = vmatpush.msra.mxu0 %v1808
    %1946 = vmatpush.msra.mxu0 %v1806
    %1947 = vmatpush.msra.mxu0 %v1804
    %1948 = vmatpush.msra.mxu0 %v1802
    %1949 = vmatpush.msra.mxu0 %v1800
    %1950 = vmatpush.msra.mxu0 %v1798
    %1951 = vmatpush.msra.mxu0 %v1796
    %1952 = vmatpush.msra.mxu0 %v1794
    %1953 = vmatpush.msra.mxu0 %v1792
    %1954 = vmatpush.msra.mxu0 %v1790
    %1955 = vmatpush.msra.mxu0 %v1788
    %1956 = vmatpush.msra.mxu0 %v1786
    %1957 = vmatmul.f32.gmra.mxu0 %v1288
    %v1958 = vpop.f32.mrf.mxu0
    %v1959 = vadd.f32 %v1036, %v1958
    %1960 = vdwg.mxu0
    %1961 = vmatpush.msra.mxu0 %v1848
    %1962 = vmatpush.msra.mxu0 %v1846
    %1963 = vmatpush.msra.mxu0 %v1844
    %1964 = vmatpush.msra.mxu0 %v1842
    %1965 = vmatpush.msra.mxu0 %v1840
    %1966 = vmatpush.msra.mxu0 %v1838
    %1967 = vmatpush.msra.mxu0 %v1836
    %1968 = vmatpush.msra.mxu0 %v1834
    %1969 = vmatpush.msra.mxu0 %v1832
    %1970 = vmatpush.msra.mxu0 %v1830
    %1971 = vmatpush.msra.mxu0 %v1828
    %1972 = vmatpush.msra.mxu0 %v1826
    %1973 = vmatpush.msra.mxu0 %v1824
    %1974 = vmatpush.msra.mxu0 %v1822
    %1975 = vmatpush.msra.mxu0 %v1820
    %1976 = vmatpush.msra.mxu0 %v1818
    %1977 = vmatmul.f32.gmra.mxu0 %v1160
    %v1978 = vpop.f32.mrf.mxu0
    %v1979 = vadd.f32 %v1959, %v1978
    %1980 = vdwg.mxu0
    %1981 = vmatpush.msra.mxu0 %v1880
    %1982 = vmatpush.msra.mxu0 %v1878
    %1983 = vmatpush.msra.mxu0 %v1876
    %1984 = vmatpush.msra.mxu0 %v1874
    %1985 = vmatpush.msra.mxu0 %v1872
    %1986 = vmatpush.msra.mxu0 %v1870
    %1987 = vmatpush.msra.mxu0 %v1868
    %1988 = vmatpush.msra.mxu0 %v1866
    %1989 = vmatpush.msra.mxu0 %v1864
    %1990 = vmatpush.msra.mxu0 %v1862
    %1991 = vmatpush.msra.mxu0 %v1860
    %1992 = vmatpush.msra.mxu0 %v1858
    %1993 = vmatpush.msra.mxu0 %v1856
    %1994 = vmatpush.msra.mxu0 %v1854
    %1995 = vmatpush.msra.mxu0 %v1852
    %1996 = vmatpush.msra.mxu0 %v1850
    %1997 = vmatmul.f32.gmra.mxu0 %v1784
    %v1998 = vpop.f32.mrf.mxu0
    %v1999 = vadd.f32 %v1979, %v1998
    %2000 = vdwg.mxu0
    %s2001 = scalar_lea.vmem [#allocation5], 4
    %v2002 = vld [vmem:[%s2001] sm:$0x3]
    %v2004 = vrot.slane %v1784, 1
    %2006 = vmatpush.xpose.msra.mxu0 0.0
    %2007 = vmatpush.xpose.msra.mxu0 0.0
    %2008 = vmatpush.xpose.msra.mxu0 0.0
    %2009 = vmatpush.xpose.msra.mxu0 0.0
    %2010 = vmatpush.xpose.msra.mxu0 0.0
    %2011 = vmatpush.xpose.msra.mxu0 0.0
    %2012 = vmatpush.xpose.msra.mxu0 0.0
    %2013 = vmatpush.xpose.msra.mxu0 0.0
    %2014 = vmatpush.xpose.msra.mxu0 0.0
    %2015 = vmatpush.xpose.msra.mxu0 0.0
    %2016 = vmatpush.xpose.msra.mxu0 0.0
    %2017 = vmatpush.xpose.msra.mxu0 0.0
    %2018 = vmatpush.xpose.msra.mxu0 0.0
    %2019 = vmatpush.xpose.msra.mxu0 0.0
    %2020 = vmatpush.xpose.msra.mxu0 %v290
    %2021 = vmatpush.xpose.msra.mxu0 %v287
    %2022 = vmatmul.f32.gmra.mxu0 %v1784
    %v2023 = vpop.f32.mrf.mxu0
    %v2024 = vadd.f32 0.0, %v2023
    %2025 = vdwg.mxu0
    %2026 = vmatpush.xpose.msra.mxu0 0.0
    %2027 = vmatpush.xpose.msra.mxu0 0.0
    %2028 = vmatpush.xpose.msra.mxu0 0.0
    %2029 = vmatpush.xpose.msra.mxu0 0.0
    %2030 = vmatpush.xpose.msra.mxu0 0.0
    %2031 = vmatpush.xpose.msra.mxu0 0.0
    %2032 = vmatpush.xpose.msra.mxu0 0.0
    %2033 = vmatpush.xpose.msra.mxu0 0.0
    %2034 = vmatpush.xpose.msra.mxu0 0.0
    %2035 = vmatpush.xpose.msra.mxu0 0.0
    %2036 = vmatpush.xpose.msra.mxu0 0.0
    %2037 = vmatpush.xpose.msra.mxu0 0.0
    %2038 = vmatpush.xpose.msra.mxu0 0.0
    %2039 = vmatpush.xpose.msra.mxu0 0.0
    %2040 = vmatpush.xpose.msra.mxu0 %v296
    %2041 = vmatpush.xpose.msra.mxu0 %v293
    %2042 = vmatmul.f32.gmra.mxu0 %v2004
    %v2043 = vpop.f32.mrf.mxu0
    %v2044 = vadd.f32 0.0, %v2043
    %2045 = vdwg.mxu0
    %v2046 = vmul.f32 %v2024, 0.088388346
    %v2047 = vmul.f32 %v2044, 0.088388346
    %v2050 = vrot.slane %v2047, 7
    %v2051 = vsel %vm154, %v2050, %v2046
    %v2053 = vsel %vm353, %v2051, -inf
    %2054 = vmax.xlane.f32.xlu0 %v2053
    %v2055 = vpop.xlane.xlu0 %2054
    %v2057 = vrot.slane %v2055, 1
    %v2060 = vsub.f32 %v2046, %v2055
    %v2061 = vsub.f32 %v2047, %v2057
    %v2062 = vmul.f32 %v2060, 1.442695
    %v2063 = vpow.pop %v2062
    %v2064 = vmul.f32 %v2061, 1.442695
    %v2065 = vpow.pop %v2064
    %v2068 = vrot.slane %v2065, 7
    %v2069 = vsel %vm154, %v2068, %v2063
    %v2071 = vsel %vm353, %v2069, 0.0
    %2072 = vadd.xlane.f32.xlu0 %v2071
    %v2073 = vpop.xlane.xlu0 %2072
    %v2074 = vrcp.pop %v2073
    %v2076 = vrot.slane %v2074, 1
    %v2079 = vmul.f32 %v2063, %v2074
    %v2080 = vmul.f32 %v2065, %v2076
    %v2082 = vsel %vm382, %v2079, 0
    %2084 = vmatpush.msra.mxu0 0.0
    %2085 = vmatpush.msra.mxu0 0.0
    %2086 = vmatpush.msra.mxu0 0.0
    %2087 = vmatpush.msra.mxu0 0.0
    %2088 = vmatpush.msra.mxu0 0.0
    %2089 = vmatpush.msra.mxu0 0.0
    %2090 = vmatpush.msra.mxu0 0.0
    %2091 = vmatpush.msra.mxu0 0.0
    %2092 = vmatpush.msra.mxu0 0.0
    %2093 = vmatpush.msra.mxu0 0.0
    %2094 = vmatpush.msra.mxu0 0.0
    %2095 = vmatpush.msra.mxu0 0.0
    %2096 = vmatpush.msra.mxu0 0.0
    %2097 = vmatpush.msra.mxu0 0.0
    %2098 = vmatpush.msra.mxu0 %v126
    %2099 = vmatpush.msra.mxu0 %v125
    %2100 = vmatmul.f32.gmra.mxu0 %v2082
    %v2101 = vpop.f32.mrf.mxu0
    %v2102 = vadd.f32 0.0, %v2101
    %2103 = vdwg.mxu0
    %v2105 = vsel %vm382, %v2080, 0
    %2107 = vmatpush.msra.mxu0 0.0
    %2108 = vmatpush.msra.mxu0 0.0
    %2109 = vmatpush.msra.mxu0 0.0
    %2110 = vmatpush.msra.mxu0 0.0
    %2111 = vmatpush.msra.mxu0 0.0
    %2112 = vmatpush.msra.mxu0 0.0
    %2113 = vmatpush.msra.mxu0 0.0
    %2114 = vmatpush.msra.mxu0 0.0
    %2115 = vmatpush.msra.mxu0 0.0
    %2116 = vmatpush.msra.mxu0 0.0
    %2117 = vmatpush.msra.mxu0 0.0
    %2118 = vmatpush.msra.mxu0 0.0
    %2119 = vmatpush.msra.mxu0 0.0
    %2120 = vmatpush.msra.mxu0 0.0
    %2121 = vmatpush.msra.mxu0 %v128
    %2122 = vmatpush.msra.mxu0 %v127
    %2123 = vmatmul.f32.gmra.mxu0 %v2105
    %v2124 = vpop.f32.mrf.mxu0
    %v2125 = vadd.f32 0.0, %v2124
    %2126 = vdwg.mxu0
    %v2129 = vrot.slane %v2125, 7
    %v2130 = vsel %vm154, %v2129, %v2102
    %v2132 = vld [vmem:[#allocation10] sm:$0xff]
    %v2133 = vld [vmem:[#allocation10 + $0x8] sm:$0xff]
    %v2134 = vld [vmem:[#allocation10 + $0x10] sm:$0xff]
    %v2135 = vld [vmem:[#allocation10 + $0x18] sm:$0xff]
    %v2136 = vld [vmem:[#allocation10 + $0x20] sm:$0xff]
    %v2137 = vld [vmem:[#allocation10 + $0x28] sm:$0xff]
    %v2138 = vld [vmem:[#allocation10 + $0x30] sm:$0xff]
    %v2139 = vld [vmem:[#allocation10 + $0x38] sm:$0xff]
    %v2140 = vld [vmem:[#allocation10 + $0x40] sm:$0xff]
    %v2141 = vld [vmem:[#allocation10 + $0x48] sm:$0xff]
    %v2142 = vld [vmem:[#allocation10 + $0x50] sm:$0xff]
    %v2143 = vld [vmem:[#allocation10 + $0x58] sm:$0xff]
    %v2144 = vld [vmem:[#allocation10 + $0x60] sm:$0xff]
    %v2145 = vld [vmem:[#allocation10 + $0x68] sm:$0xff]
    %v2146 = vld [vmem:[#allocation10 + $0x70] sm:$0xff]
    %v2147 = vld [vmem:[#allocation10 + $0x78] sm:$0xff]
    %v2148 = vld [vmem:[#allocation10 + $0x80] sm:$0xff]
    %v2149 = vld [vmem:[#allocation10 + $0x88] sm:$0xff]
    %v2150 = vld [vmem:[#allocation10 + $0x90] sm:$0xff]
    %v2151 = vld [vmem:[#allocation10 + $0x98] sm:$0xff]
    %v2152 = vld [vmem:[#allocation10 + $0xa0] sm:$0xff]
    %v2153 = vld [vmem:[#allocation10 + $0xa8] sm:$0xff]
    %v2154 = vld [vmem:[#allocation10 + $0xb0] sm:$0xff]
    %v2155 = vld [vmem:[#allocation10 + $0xb8] sm:$0xff]
    %v2156 = vld [vmem:[#allocation10 + $0xc0] sm:$0xff]
    %v2157 = vld [vmem:[#allocation10 + $0xc8] sm:$0xff]
    %v2158 = vld [vmem:[#allocation10 + $0xd0] sm:$0xff]
    %v2159 = vld [vmem:[#allocation10 + $0xd8] sm:$0xff]
    %v2160 = vld [vmem:[#allocation10 + $0xe0] sm:$0xff]
    %v2161 = vld [vmem:[#allocation10 + $0xe8] sm:$0xff]
    %v2162 = vld [vmem:[#allocation10 + $0xf0] sm:$0xff]
    %v2163 = vld [vmem:[#allocation10 + $0xf8] sm:$0xff]
    %v2164 = vld [vmem:[#allocation10 + $0x100] sm:$0xff]
    %v2165 = vld [vmem:[#allocation10 + $0x108] sm:$0xff]
    %v2166 = vld [vmem:[#allocation10 + $0x110] sm:$0xff]
    %v2167 = vld [vmem:[#allocation10 + $0x118] sm:$0xff]
    %v2168 = vld [vmem:[#allocation10 + $0x120] sm:$0xff]
    %v2169 = vld [vmem:[#allocation10 + $0x128] sm:$0xff]
    %v2170 = vld [vmem:[#allocation10 + $0x130] sm:$0xff]
    %v2171 = vld [vmem:[#allocation10 + $0x138] sm:$0xff]
    %v2172 = vld [vmem:[#allocation10 + $0x140] sm:$0xff]
    %v2173 = vld [vmem:[#allocation10 + $0x148] sm:$0xff]
    %v2174 = vld [vmem:[#allocation10 + $0x150] sm:$0xff]
    %v2175 = vld [vmem:[#allocation10 + $0x158] sm:$0xff]
    %v2176 = vld [vmem:[#allocation10 + $0x160] sm:$0xff]
    %v2177 = vld [vmem:[#allocation10 + $0x168] sm:$0xff]
    %v2178 = vld [vmem:[#allocation10 + $0x170] sm:$0xff]
    %v2179 = vld [vmem:[#allocation10 + $0x178] sm:$0xff]
    %v2180 = vld [vmem:[#allocation10 + $0x180] sm:$0xff]
    %v2181 = vld [vmem:[#allocation10 + $0x188] sm:$0xff]
    %v2182 = vld [vmem:[#allocation10 + $0x190] sm:$0xff]
    %v2183 = vld [vmem:[#allocation10 + $0x198] sm:$0xff]
    %v2184 = vld [vmem:[#allocation10 + $0x1a0] sm:$0xff]
    %v2185 = vld [vmem:[#allocation10 + $0x1a8] sm:$0xff]
    %v2186 = vld [vmem:[#allocation10 + $0x1b0] sm:$0xff]
    %v2187 = vld [vmem:[#allocation10 + $0x1b8] sm:$0xff]
    %v2188 = vld [vmem:[#allocation10 + $0x1c0] sm:$0xff]
    %v2189 = vld [vmem:[#allocation10 + $0x1c8] sm:$0xff]
    %v2190 = vld [vmem:[#allocation10 + $0x1d0] sm:$0xff]
    %v2191 = vld [vmem:[#allocation10 + $0x1d8] sm:$0xff]
    %v2192 = vld [vmem:[#allocation10 + $0x1e0] sm:$0xff]
    %v2193 = vld [vmem:[#allocation10 + $0x1e8] sm:$0xff]
    %v2194 = vld [vmem:[#allocation10 + $0x1f0] sm:$0xff]
    %v2195 = vld [vmem:[#allocation10 + $0x1f8] sm:$0xff]
    %v2196 = vld [vmem:[#allocation10 + $0x200] sm:$0xff]
    %v2197 = vld [vmem:[#allocation10 + $0x208] sm:$0xff]
    %v2198 = vld [vmem:[#allocation10 + $0x210] sm:$0xff]
    %v2199 = vld [vmem:[#allocation10 + $0x218] sm:$0xff]
    %v2200 = vld [vmem:[#allocation10 + $0x220] sm:$0xff]
    %v2201 = vld [vmem:[#allocation10 + $0x228] sm:$0xff]
    %v2202 = vld [vmem:[#allocation10 + $0x230] sm:$0xff]
    %v2203 = vld [vmem:[#allocation10 + $0x238] sm:$0xff]
    %v2204 = vld [vmem:[#allocation10 + $0x240] sm:$0xff]
    %v2205 = vld [vmem:[#allocation10 + $0x248] sm:$0xff]
    %v2206 = vld [vmem:[#allocation10 + $0x250] sm:$0xff]
    %v2207 = vld [vmem:[#allocation10 + $0x258] sm:$0xff]
    %v2208 = vld [vmem:[#allocation10 + $0x260] sm:$0xff]
    %v2209 = vld [vmem:[#allocation10 + $0x268] sm:$0xff]
    %v2210 = vld [vmem:[#allocation10 + $0x270] sm:$0xff]
    %v2211 = vld [vmem:[#allocation10 + $0x278] sm:$0xff]
    %v2212 = vld [vmem:[#allocation10 + $0x280] sm:$0xff]
    %v2213 = vld [vmem:[#allocation10 + $0x288] sm:$0xff]
    %v2214 = vld [vmem:[#allocation10 + $0x290] sm:$0xff]
    %v2215 = vld [vmem:[#allocation10 + $0x298] sm:$0xff]
    %v2216 = vld [vmem:[#allocation10 + $0x2a0] sm:$0xff]
    %v2217 = vld [vmem:[#allocation10 + $0x2a8] sm:$0xff]
    %v2218 = vld [vmem:[#allocation10 + $0x2b0] sm:$0xff]
    %v2219 = vld [vmem:[#allocation10 + $0x2b8] sm:$0xff]
    %v2220 = vld [vmem:[#allocation10 + $0x2c0] sm:$0xff]
    %v2221 = vld [vmem:[#allocation10 + $0x2c8] sm:$0xff]
    %v2222 = vld [vmem:[#allocation10 + $0x2d0] sm:$0xff]
    %v2223 = vld [vmem:[#allocation10 + $0x2d8] sm:$0xff]
    %v2224 = vld [vmem:[#allocation10 + $0x2e0] sm:$0xff]
    %v2225 = vld [vmem:[#allocation10 + $0x2e8] sm:$0xff]
    %v2226 = vld [vmem:[#allocation10 + $0x2f0] sm:$0xff]
    %v2227 = vld [vmem:[#allocation10 + $0x2f8] sm:$0xff]
    %v2228 = vld [vmem:[#allocation10 + $0x300] sm:$0xff]
    %v2229 = vld [vmem:[#allocation10 + $0x308] sm:$0xff]
    %v2230 = vld [vmem:[#allocation10 + $0x310] sm:$0xff]
    %v2231 = vld [vmem:[#allocation10 + $0x318] sm:$0xff]
    %v2232 = vld [vmem:[#allocation10 + $0x320] sm:$0xff]
    %v2233 = vld [vmem:[#allocation10 + $0x328] sm:$0xff]
    %v2234 = vld [vmem:[#allocation10 + $0x330] sm:$0xff]
    %v2235 = vld [vmem:[#allocation10 + $0x338] sm:$0xff]
    %v2236 = vld [vmem:[#allocation10 + $0x340] sm:$0xff]
    %v2237 = vld [vmem:[#allocation10 + $0x348] sm:$0xff]
    %v2238 = vld [vmem:[#allocation10 + $0x350] sm:$0xff]
    %v2239 = vld [vmem:[#allocation10 + $0x358] sm:$0xff]
    %v2240 = vld [vmem:[#allocation10 + $0x360] sm:$0xff]
    %v2241 = vld [vmem:[#allocation10 + $0x368] sm:$0xff]
    %v2242 = vld [vmem:[#allocation10 + $0x370] sm:$0xff]
    %v2243 = vld [vmem:[#allocation10 + $0x378] sm:$0xff]
    %v2244 = vld [vmem:[#allocation10 + $0x380] sm:$0xff]
    %v2245 = vld [vmem:[#allocation10 + $0x388] sm:$0xff]
    %v2246 = vld [vmem:[#allocation10 + $0x390] sm:$0xff]
    %v2247 = vld [vmem:[#allocation10 + $0x398] sm:$0xff]
    %v2248 = vld [vmem:[#allocation10 + $0x3a0] sm:$0xff]
    %v2249 = vld [vmem:[#allocation10 + $0x3a8] sm:$0xff]
    %v2250 = vld [vmem:[#allocation10 + $0x3b0] sm:$0xff]
    %v2251 = vld [vmem:[#allocation10 + $0x3b8] sm:$0xff]
    %v2252 = vld [vmem:[#allocation10 + $0x3c0] sm:$0xff]
    %v2253 = vld [vmem:[#allocation10 + $0x3c8] sm:$0xff]
    %v2254 = vld [vmem:[#allocation10 + $0x3d0] sm:$0xff]
    %v2255 = vld [vmem:[#allocation10 + $0x3d8] sm:$0xff]
    %v2256 = vld [vmem:[#allocation10 + $0x3e0] sm:$0xff]
    %v2257 = vld [vmem:[#allocation10 + $0x3e8] sm:$0xff]
    %v2258 = vld [vmem:[#allocation10 + $0x3f0] sm:$0xff]
    %v2259 = vld [vmem:[#allocation10 + $0x3f8] sm:$0xff]
    %v2260 = vld [vmem:[#allocation10 + $0x400] sm:$0xff]
    %v2261 = vld [vmem:[#allocation10 + $0x408] sm:$0xff]
    %v2262 = vld [vmem:[#allocation10 + $0x410] sm:$0xff]
    %v2263 = vld [vmem:[#allocation10 + $0x418] sm:$0xff]
    %v2264 = vld [vmem:[#allocation10 + $0x420] sm:$0xff]
    %v2265 = vld [vmem:[#allocation10 + $0x428] sm:$0xff]
    %v2266 = vld [vmem:[#allocation10 + $0x430] sm:$0xff]
    %v2267 = vld [vmem:[#allocation10 + $0x438] sm:$0xff]
    %v2268 = vld [vmem:[#allocation10 + $0x440] sm:$0xff]
    %v2269 = vld [vmem:[#allocation10 + $0x448] sm:$0xff]
    %v2270 = vld [vmem:[#allocation10 + $0x450] sm:$0xff]
    %v2271 = vld [vmem:[#allocation10 + $0x458] sm:$0xff]
    %v2272 = vld [vmem:[#allocation10 + $0x460] sm:$0xff]
    %v2273 = vld [vmem:[#allocation10 + $0x468] sm:$0xff]
    %v2274 = vld [vmem:[#allocation10 + $0x470] sm:$0xff]
    %v2275 = vld [vmem:[#allocation10 + $0x478] sm:$0xff]
    %v2276 = vld [vmem:[#allocation10 + $0x480] sm:$0xff]
    %v2277 = vld [vmem:[#allocation10 + $0x488] sm:$0xff]
    %v2278 = vld [vmem:[#allocation10 + $0x490] sm:$0xff]
    %v2279 = vld [vmem:[#allocation10 + $0x498] sm:$0xff]
    %v2280 = vld [vmem:[#allocation10 + $0x4a0] sm:$0xff]
    %v2281 = vld [vmem:[#allocation10 + $0x4a8] sm:$0xff]
    %v2282 = vld [vmem:[#allocation10 + $0x4b0] sm:$0xff]
    %v2283 = vld [vmem:[#allocation10 + $0x4b8] sm:$0xff]
    %v2284 = vld [vmem:[#allocation10 + $0x4c0] sm:$0xff]
    %v2285 = vld [vmem:[#allocation10 + $0x4c8] sm:$0xff]
    %v2286 = vld [vmem:[#allocation10 + $0x4d0] sm:$0xff]
    %v2287 = vld [vmem:[#allocation10 + $0x4d8] sm:$0xff]
    %v2288 = vld [vmem:[#allocation10 + $0x4e0] sm:$0xff]
    %v2289 = vld [vmem:[#allocation10 + $0x4e8] sm:$0xff]
    %v2290 = vld [vmem:[#allocation10 + $0x4f0] sm:$0xff]
    %v2291 = vld [vmem:[#allocation10 + $0x4f8] sm:$0xff]
    %v2292 = vld [vmem:[#allocation10 + $0x500] sm:$0xff]
    %v2293 = vld [vmem:[#allocation10 + $0x508] sm:$0xff]
    %v2294 = vld [vmem:[#allocation10 + $0x510] sm:$0xff]
    %v2295 = vld [vmem:[#allocation10 + $0x518] sm:$0xff]
    %v2296 = vld [vmem:[#allocation10 + $0x520] sm:$0xff]
    %v2297 = vld [vmem:[#allocation10 + $0x528] sm:$0xff]
    %v2298 = vld [vmem:[#allocation10 + $0x530] sm:$0xff]
    %v2299 = vld [vmem:[#allocation10 + $0x538] sm:$0xff]
    %v2300 = vld [vmem:[#allocation10 + $0x540] sm:$0xff]
    %v2301 = vld [vmem:[#allocation10 + $0x548] sm:$0xff]
    %v2302 = vld [vmem:[#allocation10 + $0x550] sm:$0xff]
    %v2303 = vld [vmem:[#allocation10 + $0x558] sm:$0xff]
    %v2304 = vld [vmem:[#allocation10 + $0x560] sm:$0xff]
    %v2305 = vld [vmem:[#allocation10 + $0x568] sm:$0xff]
    %v2306 = vld [vmem:[#allocation10 + $0x570] sm:$0xff]
    %v2307 = vld [vmem:[#allocation10 + $0x578] sm:$0xff]
    %v2308 = vld [vmem:[#allocation10 + $0x580] sm:$0xff]
    %v2309 = vld [vmem:[#allocation10 + $0x588] sm:$0xff]
    %v2310 = vld [vmem:[#allocation10 + $0x590] sm:$0xff]
    %v2311 = vld [vmem:[#allocation10 + $0x598] sm:$0xff]
    %v2312 = vld [vmem:[#allocation10 + $0x5a0] sm:$0xff]
    %v2313 = vld [vmem:[#allocation10 + $0x5a8] sm:$0xff]
    %v2314 = vld [vmem:[#allocation10 + $0x5b0] sm:$0xff]
    %v2315 = vld [vmem:[#allocation10 + $0x5b8] sm:$0xff]
    %v2316 = vld [vmem:[#allocation10 + $0x5c0] sm:$0xff]
    %v2317 = vld [vmem:[#allocation10 + $0x5c8] sm:$0xff]
    %v2318 = vld [vmem:[#allocation10 + $0x5d0] sm:$0xff]
    %v2319 = vld [vmem:[#allocation10 + $0x5d8] sm:$0xff]
    %v2320 = vld [vmem:[#allocation10 + $0x5e0] sm:$0xff]
    %v2321 = vld [vmem:[#allocation10 + $0x5e8] sm:$0xff]
    %v2322 = vld [vmem:[#allocation10 + $0x5f0] sm:$0xff]
    %v2323 = vld [vmem:[#allocation10 + $0x5f8] sm:$0xff]
    %2324 = vmatpush.msra.mxu0 %v2192
    %2325 = vmatpush.msra.mxu0 %v2188
    %2326 = vmatpush.msra.mxu0 %v2184
    %2327 = vmatpush.msra.mxu0 %v2180
    %2328 = vmatpush.msra.mxu0 %v2176
    %2329 = vmatpush.msra.mxu0 %v2172
    %2330 = vmatpush.msra.mxu0 %v2168
    %2331 = vmatpush.msra.mxu0 %v2164
    %2332 = vmatpush.msra.mxu0 %v2160
    %2333 = vmatpush.msra.mxu0 %v2156
    %2334 = vmatpush.msra.mxu0 %v2152
    %2335 = vmatpush.msra.mxu0 %v2148
    %2336 = vmatpush.msra.mxu0 %v2144
    %2337 = vmatpush.msra.mxu0 %v2140
    %2338 = vmatpush.msra.mxu0 %v2136
    %2339 = vmatpush.msra.mxu0 %v2132
    %2340 = vmatmul.f32.gmra.mxu0 %v2002
    %v2341 = vpop.f32.mrf.mxu0
    %v2342 = vadd.f32 %v627, %v2341
    %2343 = vdwg.mxu0
    %2344 = vmatpush.msra.mxu0 %v2256
    %2345 = vmatpush.msra.mxu0 %v2252
    %2346 = vmatpush.msra.mxu0 %v2248
    %2347 = vmatpush.msra.mxu0 %v2244
    %2348 = vmatpush.msra.mxu0 %v2240
    %2349 = vmatpush.msra.mxu0 %v2236
    %2350 = vmatpush.msra.mxu0 %v2232
    %2351 = vmatpush.msra.mxu0 %v2228
    %2352 = vmatpush.msra.mxu0 %v2224
    %2353 = vmatpush.msra.mxu0 %v2220
    %2354 = vmatpush.msra.mxu0 %v2216
    %2355 = vmatpush.msra.mxu0 %v2212
    %2356 = vmatpush.msra.mxu0 %v2208
    %2357 = vmatpush.msra.mxu0 %v2204
    %2358 = vmatpush.msra.mxu0 %v2200
    %2359 = vmatpush.msra.mxu0 %v2196
    %2360 = vmatmul.f32.gmra.mxu0 %v2130
    %v2361 = vpop.f32.mrf.mxu0
    %v2362 = vadd.f32 %v2342, %v2361
    %2363 = vdwg.mxu0
    %2364 = vmatpush.msra.mxu0 %v2320
    %2365 = vmatpush.msra.mxu0 %v2316
    %2366 = vmatpush.msra.mxu0 %v2312
    %2367 = vmatpush.msra.mxu0 %v2308
    %2368 = vmatpush.msra.mxu0 %v2304
    %2369 = vmatpush.msra.mxu0 %v2300
    %2370 = vmatpush.msra.mxu0 %v2296
    %2371 = vmatpush.msra.mxu0 %v2292
    %2372 = vmatpush.msra.mxu0 %v2288
    %2373 = vmatpush.msra.mxu0 %v2284
    %2374 = vmatpush.msra.mxu0 %v2280
    %2375 = vmatpush.msra.mxu0 %v2276
    %2376 = vmatpush.msra.mxu0 %v2272
    %2377 = vmatpush.msra.mxu0 %v2268
    %2378 = vmatpush.msra.mxu0 %v2264
    %2379 = vmatpush.msra.mxu0 %v2260
    %2380 = vmatmul.f32.gmra.mxu0 %v1784
    %v2381 = vpop.f32.mrf.mxu0
    %v2382 = vadd.f32 %v2362, %v2381
    %2383 = vdwg.mxu0
    %2384 = vmatpush.msra.mxu0 %v2193
    %2385 = vmatpush.msra.mxu0 %v2189
    %2386 = vmatpush.msra.mxu0 %v2185
    %2387 = vmatpush.msra.mxu0 %v2181
    %2388 = vmatpush.msra.mxu0 %v2177
    %2389 = vmatpush.msra.mxu0 %v2173
    %2390 = vmatpush.msra.mxu0 %v2169
    %2391 = vmatpush.msra.mxu0 %v2165
    %2392 = vmatpush.msra.mxu0 %v2161
    %2393 = vmatpush.msra.mxu0 %v2157
    %2394 = vmatpush.msra.mxu0 %v2153
    %2395 = vmatpush.msra.mxu0 %v2149
    %2396 = vmatpush.msra.mxu0 %v2145
    %2397 = vmatpush.msra.mxu0 %v2141
    %2398 = vmatpush.msra.mxu0 %v2137
    %2399 = vmatpush.msra.mxu0 %v2133
    %2400 = vmatmul.f32.gmra.mxu0 %v2002
    %v2401 = vpop.f32.mrf.mxu0
    %v2402 = vadd.f32 %v628, %v2401
    %2403 = vdwg.mxu0
    %2404 = vmatpush.msra.mxu0 %v2257
    %2405 = vmatpush.msra.mxu0 %v2253
    %2406 = vmatpush.msra.mxu0 %v2249
    %2407 = vmatpush.msra.mxu0 %v2245
    %2408 = vmatpush.msra.mxu0 %v2241
    %2409 = vmatpush.msra.mxu0 %v2237
    %2410 = vmatpush.msra.mxu0 %v2233
    %2411 = vmatpush.msra.mxu0 %v2229
    %2412 = vmatpush.msra.mxu0 %v2225
    %2413 = vmatpush.msra.mxu0 %v2221
    %2414 = vmatpush.msra.mxu0 %v2217
    %2415 = vmatpush.msra.mxu0 %v2213
    %2416 = vmatpush.msra.mxu0 %v2209
    %2417 = vmatpush.msra.mxu0 %v2205
    %2418 = vmatpush.msra.mxu0 %v2201
    %2419 = vmatpush.msra.mxu0 %v2197
    %2420 = vmatmul.f32.gmra.mxu0 %v2130
    %v2421 = vpop.f32.mrf.mxu0
    %v2422 = vadd.f32 %v2402, %v2421
    %2423 = vdwg.mxu0
    %2424 = vmatpush.msra.mxu0 %v2321
    %2425 = vmatpush.msra.mxu0 %v2317
    %2426 = vmatpush.msra.mxu0 %v2313
    %2427 = vmatpush.msra.mxu0 %v2309
    %2428 = vmatpush.msra.mxu0 %v2305
    %2429 = vmatpush.msra.mxu0 %v2301
    %2430 = vmatpush.msra.mxu0 %v2297
    %2431 = vmatpush.msra.mxu0 %v2293
    %2432 = vmatpush.msra.mxu0 %v2289
    %2433 = vmatpush.msra.mxu0 %v2285
    %2434 = vmatpush.msra.mxu0 %v2281
    %2435 = vmatpush.msra.mxu0 %v2277
    %2436 = vmatpush.msra.mxu0 %v2273
    %2437 = vmatpush.msra.mxu0 %v2269
    %2438 = vmatpush.msra.mxu0 %v2265
    %2439 = vmatpush.msra.mxu0 %v2261
    %2440 = vmatmul.f32.gmra.mxu0 %v1784
    %v2441 = vpop.f32.mrf.mxu0
    %v2442 = vadd.f32 %v2422, %v2441
    %2443 = vdwg.mxu0
    %2444 = vmatpush.msra.mxu0 %v2194
    %2445 = vmatpush.msra.mxu0 %v2190
    %2446 = vmatpush.msra.mxu0 %v2186
    %2447 = vmatpush.msra.mxu0 %v2182
    %2448 = vmatpush.msra.mxu0 %v2178
    %2449 = vmatpush.msra.mxu0 %v2174
    %2450 = vmatpush.msra.mxu0 %v2170
    %2451 = vmatpush.msra.mxu0 %v2166
    %2452 = vmatpush.msra.mxu0 %v2162
    %2453 = vmatpush.msra.mxu0 %v2158
    %2454 = vmatpush.msra.mxu0 %v2154
    %2455 = vmatpush.msra.mxu0 %v2150
    %2456 = vmatpush.msra.mxu0 %v2146
    %2457 = vmatpush.msra.mxu0 %v2142
    %2458 = vmatpush.msra.mxu0 %v2138
    %2459 = vmatpush.msra.mxu0 %v2134
    %2460 = vmatmul.f32.gmra.mxu0 %v2002
    %v2461 = vpop.f32.mrf.mxu0
    %v2462 = vadd.f32 %v629, %v2461
    %2463 = vdwg.mxu0
    %2464 = vmatpush.msra.mxu0 %v2258
    %2465 = vmatpush.msra.mxu0 %v2254
    %2466 = vmatpush.msra.mxu0 %v2250
    %2467 = vmatpush.msra.mxu0 %v2246
    %2468 = vmatpush.msra.mxu0 %v2242
    %2469 = vmatpush.msra.mxu0 %v2238
    %2470 = vmatpush.msra.mxu0 %v2234
    %2471 = vmatpush.msra.mxu0 %v2230
    %2472 = vmatpush.msra.mxu0 %v2226
    %2473 = vmatpush.msra.mxu0 %v2222
    %2474 = vmatpush.msra.mxu0 %v2218
    %2475 = vmatpush.msra.mxu0 %v2214
    %2476 = vmatpush.msra.mxu0 %v2210
    %2477 = vmatpush.msra.mxu0 %v2206
    %2478 = vmatpush.msra.mxu0 %v2202
    %2479 = vmatpush.msra.mxu0 %v2198
    %2480 = vmatmul.f32.gmra.mxu0 %v2130
    %v2481 = vpop.f32.mrf.mxu0
    %v2482 = vadd.f32 %v2462, %v2481
    %2483 = vdwg.mxu0
    %2484 = vmatpush.msra.mxu0 %v2322
    %2485 = vmatpush.msra.mxu0 %v2318
    %2486 = vmatpush.msra.mxu0 %v2314
    %2487 = vmatpush.msra.mxu0 %v2310
    %2488 = vmatpush.msra.mxu0 %v2306
    %2489 = vmatpush.msra.mxu0 %v2302
    %2490 = vmatpush.msra.mxu0 %v2298
    %2491 = vmatpush.msra.mxu0 %v2294
    %2492 = vmatpush.msra.mxu0 %v2290
    %2493 = vmatpush.msra.mxu0 %v2286
    %2494 = vmatpush.msra.mxu0 %v2282
    %2495 = vmatpush.msra.mxu0 %v2278
    %2496 = vmatpush.msra.mxu0 %v2274
    %2497 = vmatpush.msra.mxu0 %v2270
    %2498 = vmatpush.msra.mxu0 %v2266
    %2499 = vmatpush.msra.mxu0 %v2262
    %2500 = vmatmul.f32.gmra.mxu0 %v1784
    %v2501 = vpop.f32.mrf.mxu0
    %v2502 = vadd.f32 %v2482, %v2501
    %2503 = vdwg.mxu0
    %2504 = vmatpush.msra.mxu0 %v2195
    %2505 = vmatpush.msra.mxu0 %v2191
    %2506 = vmatpush.msra.mxu0 %v2187
    %2507 = vmatpush.msra.mxu0 %v2183
    %2508 = vmatpush.msra.mxu0 %v2179
    %2509 = vmatpush.msra.mxu0 %v2175
    %2510 = vmatpush.msra.mxu0 %v2171
    %2511 = vmatpush.msra.mxu0 %v2167
    %2512 = vmatpush.msra.mxu0 %v2163
    %2513 = vmatpush.msra.mxu0 %v2159
    %2514 = vmatpush.msra.mxu0 %v2155
    %2515 = vmatpush.msra.mxu0 %v2151
    %2516 = vmatpush.msra.mxu0 %v2147
    %2517 = vmatpush.msra.mxu0 %v2143
    %2518 = vmatpush.msra.mxu0 %v2139
    %2519 = vmatpush.msra.mxu0 %v2135
    %2520 = vmatmul.f32.gmra.mxu0 %v2002
    %v2521 = vpop.f32.mrf.mxu0
    %v2522 = vadd.f32 %v630, %v2521
    %2523 = vdwg.mxu0
    %2524 = vmatpush.msra.mxu0 %v2259
    %2525 = vmatpush.msra.mxu0 %v2255
    %2526 = vmatpush.msra.mxu0 %v2251
    %2527 = vmatpush.msra.mxu0 %v2247
    %2528 = vmatpush.msra.mxu0 %v2243
    %2529 = vmatpush.msra.mxu0 %v2239
    %2530 = vmatpush.msra.mxu0 %v2235
    %2531 = vmatpush.msra.mxu0 %v2231
    %2532 = vmatpush.msra.mxu0 %v2227
    %2533 = vmatpush.msra.mxu0 %v2223
    %2534 = vmatpush.msra.mxu0 %v2219
    %2535 = vmatpush.msra.mxu0 %v2215
    %2536 = vmatpush.msra.mxu0 %v2211
    %2537 = vmatpush.msra.mxu0 %v2207
    %2538 = vmatpush.msra.mxu0 %v2203
    %2539 = vmatpush.msra.mxu0 %v2199
    %2540 = vmatmul.f32.gmra.mxu0 %v2130
    %v2541 = vpop.f32.mrf.mxu0
    %v2542 = vadd.f32 %v2522, %v2541
    %2543 = vdwg.mxu0
    %2544 = vmatpush.msra.mxu0 %v2323
    %2545 = vmatpush.msra.mxu0 %v2319
    %2546 = vmatpush.msra.mxu0 %v2315
    %2547 = vmatpush.msra.mxu0 %v2311
    %2548 = vmatpush.msra.mxu0 %v2307
    %2549 = vmatpush.msra.mxu0 %v2303
    %2550 = vmatpush.msra.mxu0 %v2299
    %2551 = vmatpush.msra.mxu0 %v2295
    %2552 = vmatpush.msra.mxu0 %v2291
    %2553 = vmatpush.msra.mxu0 %v2287
    %2554 = vmatpush.msra.mxu0 %v2283
    %2555 = vmatpush.msra.mxu0 %v2279
    %2556 = vmatpush.msra.mxu0 %v2275
    %2557 = vmatpush.msra.mxu0 %v2271
    %2558 = vmatpush.msra.mxu0 %v2267
    %2559 = vmatpush.msra.mxu0 %v2263
    %2560 = vmatmul.f32.gmra.mxu0 %v1784
    %v2561 = vpop.f32.mrf.mxu0
    %v2562 = vadd.f32 %v2542, %v2561
    %2563 = vdwg.mxu0
    %v2564 = vxor.u32 %v2382, 2147483648
    %v2565 = vmul.f32 %v2564, 1.442695
    %v2566 = vpow.pop %v2565
    %v2567 = vadd.f32 %v2566, 1.0
    %v2568 = vrcp.pop %v2567
    %v2569 = vmul.f32 %v2567, %v2568
    %v2570 = vsub.f32 1.0, %v2569
    %v2571 = vmul.f32 %v2568, %v2570
    %v2572 = vadd.f32 %v2568, %v2571
    %vm2573 = vweird.f32 %v2567
    %vm2574 = vweird.f32 %v2568
    %vm2575 = vmor %vm2573, %vm2574
    %v2576 = vsel %vm2575, %v2568, %v2572
    %v2577 = vand.u32 2147483647, %v2567
    %vm2578 = vcmp.eq.f32.partialorder %v2577, 8.507059e+37
    %v2579 = vand.u32 %v2567, 2147483648
    %v2580 = vor.u32 1.1754944e-38, %v2579
    %v2581 = vsel %vm2578, %v2580, %v2576
    %v2582 = vmul.f32 1.0, %v2581
    %v2583 = vxor.u32 %v2442, 2147483648
    %v2584 = vmul.f32 %v2583, 1.442695
    %v2585 = vpow.pop %v2584
    %v2586 = vadd.f32 %v2585, 1.0
    %v2587 = vrcp.pop %v2586
    %v2588 = vmul.f32 %v2586, %v2587
    %v2589 = vsub.f32 1.0, %v2588
    %v2590 = vmul.f32 %v2587, %v2589
    %v2591 = vadd.f32 %v2587, %v2590
    %vm2592 = vweird.f32 %v2586
    %vm2593 = vweird.f32 %v2587
    %vm2594 = vmor %vm2592, %vm2593
    %v2595 = vsel %vm2594, %v2587, %v2591
    %v2596 = vand.u32 2147483647, %v2586
    %vm2597 = vcmp.eq.f32.partialorder %v2596, 8.507059e+37
    %v2598 = vand.u32 %v2586, 2147483648
    %v2599 = vor.u32 1.1754944e-38, %v2598
    %v2600 = vsel %vm2597, %v2599, %v2595
    %v2601 = vmul.f32 1.0, %v2600
    %v2602 = vtanh.pop %v2502
    %v2603 = vxor.u32 %v2562, 2147483648
    %v2604 = vmul.f32 %v2603, 1.442695
    %v2605 = vpow.pop %v2604
    %v2606 = vadd.f32 %v2605, 1.0
    %v2607 = vrcp.pop %v2606
    %v2608 = vmul.f32 %v2606, %v2607
    %v2609 = vsub.f32 1.0, %v2608
    %v2610 = vmul.f32 %v2607, %v2609
    %v2611 = vadd.f32 %v2607, %v2610
    %vm2612 = vweird.f32 %v2606
    %vm2613 = vweird.f32 %v2607
    %vm2614 = vmor %vm2612, %vm2613
    %v2615 = vsel %vm2614, %v2607, %v2611
    %v2616 = vand.u32 2147483647, %v2606
    %vm2617 = vcmp.eq.f32.partialorder %v2616, 8.507059e+37
    %v2618 = vand.u32 %v2606, 2147483648
    %v2619 = vor.u32 1.1754944e-38, %v2618
    %v2620 = vsel %vm2617, %v2619, %v2615
    %v2621 = vmul.f32 1.0, %v2620
    %v2622 = vmul.f32 %v2601, %v1782
    %v2623 = vmul.f32 %v2582, %v2602
    %v2624 = vadd.f32 %v2622, %v2623
    %v2625 = vtanh.pop %v2624
    %v2626 = vmul.f32 %v2621, %v2625
    %v2627 = vld [vmem:[#allocation11] sm:$0xff]
    %v2628 = vld [vmem:[#allocation11 + $0x8] sm:$0xff]
    %v2629 = vld [vmem:[#allocation11 + $0x10] sm:$0xff]
    %v2630 = vld [vmem:[#allocation11 + $0x18] sm:$0xff]
    %v2631 = vld [vmem:[#allocation11 + $0x20] sm:$0xff]
    %v2632 = vld [vmem:[#allocation11 + $0x28] sm:$0xff]
    %v2633 = vld [vmem:[#allocation11 + $0x30] sm:$0xff]
    %v2634 = vld [vmem:[#allocation11 + $0x38] sm:$0xff]
    %v2635 = vld [vmem:[#allocation11 + $0x40] sm:$0xff]
    %v2636 = vld [vmem:[#allocation11 + $0x48] sm:$0xff]
    %v2637 = vld [vmem:[#allocation11 + $0x50] sm:$0xff]
    %v2638 = vld [vmem:[#allocation11 + $0x58] sm:$0xff]
    %v2639 = vld [vmem:[#allocation11 + $0x60] sm:$0xff]
    %v2640 = vld [vmem:[#allocation11 + $0x68] sm:$0xff]
    %v2641 = vld [vmem:[#allocation11 + $0x70] sm:$0xff]
    %v2642 = vld [vmem:[#allocation11 + $0x78] sm:$0xff]
    %v2643 = vld [vmem:[#allocation11 + $0x80] sm:$0xff]
    %v2644 = vld [vmem:[#allocation11 + $0x88] sm:$0xff]
    %v2645 = vld [vmem:[#allocation11 + $0x90] sm:$0xff]
    %v2646 = vld [vmem:[#allocation11 + $0x98] sm:$0xff]
    %v2647 = vld [vmem:[#allocation11 + $0xa0] sm:$0xff]
    %v2648 = vld [vmem:[#allocation11 + $0xa8] sm:$0xff]
    %v2649 = vld [vmem:[#allocation11 + $0xb0] sm:$0xff]
    %v2650 = vld [vmem:[#allocation11 + $0xb8] sm:$0xff]
    %v2651 = vld [vmem:[#allocation11 + $0xc0] sm:$0xff]
    %v2652 = vld [vmem:[#allocation11 + $0xc8] sm:$0xff]
    %v2653 = vld [vmem:[#allocation11 + $0xd0] sm:$0xff]
    %v2654 = vld [vmem:[#allocation11 + $0xd8] sm:$0xff]
    %v2655 = vld [vmem:[#allocation11 + $0xe0] sm:$0xff]
    %v2656 = vld [vmem:[#allocation11 + $0xe8] sm:$0xff]
    %v2657 = vld [vmem:[#allocation11 + $0xf0] sm:$0xff]
    %v2658 = vld [vmem:[#allocation11 + $0xf8] sm:$0xff]
    %v2659 = vld [vmem:[#allocation11 + $0x100] sm:$0xff]
    %v2660 = vld [vmem:[#allocation11 + $0x108] sm:$0xff]
    %v2661 = vld [vmem:[#allocation11 + $0x110] sm:$0xff]
    %v2662 = vld [vmem:[#allocation11 + $0x118] sm:$0xff]
    %v2663 = vld [vmem:[#allocation11 + $0x120] sm:$0xff]
    %v2664 = vld [vmem:[#allocation11 + $0x128] sm:$0xff]
    %v2665 = vld [vmem:[#allocation11 + $0x130] sm:$0xff]
    %v2666 = vld [vmem:[#allocation11 + $0x138] sm:$0xff]
    %v2667 = vld [vmem:[#allocation11 + $0x140] sm:$0xff]
    %v2668 = vld [vmem:[#allocation11 + $0x148] sm:$0xff]
    %v2669 = vld [vmem:[#allocation11 + $0x150] sm:$0xff]
    %v2670 = vld [vmem:[#allocation11 + $0x158] sm:$0xff]
    %v2671 = vld [vmem:[#allocation11 + $0x160] sm:$0xff]
    %v2672 = vld [vmem:[#allocation11 + $0x168] sm:$0xff]
    %v2673 = vld [vmem:[#allocation11 + $0x170] sm:$0xff]
    %v2674 = vld [vmem:[#allocation11 + $0x178] sm:$0xff]
    %v2675 = vld [vmem:[#allocation11 + $0x180] sm:$0xff]
    %v2676 = vld [vmem:[#allocation11 + $0x188] sm:$0xff]
    %v2677 = vld [vmem:[#allocation11 + $0x190] sm:$0xff]
    %v2678 = vld [vmem:[#allocation11 + $0x198] sm:$0xff]
    %v2679 = vld [vmem:[#allocation11 + $0x1a0] sm:$0xff]
    %v2680 = vld [vmem:[#allocation11 + $0x1a8] sm:$0xff]
    %v2681 = vld [vmem:[#allocation11 + $0x1b0] sm:$0xff]
    %v2682 = vld [vmem:[#allocation11 + $0x1b8] sm:$0xff]
    %v2683 = vld [vmem:[#allocation11 + $0x1c0] sm:$0xff]
    %v2684 = vld [vmem:[#allocation11 + $0x1c8] sm:$0xff]
    %v2685 = vld [vmem:[#allocation11 + $0x1d0] sm:$0xff]
    %v2686 = vld [vmem:[#allocation11 + $0x1d8] sm:$0xff]
    %v2687 = vld [vmem:[#allocation11 + $0x1e0] sm:$0xff]
    %v2688 = vld [vmem:[#allocation11 + $0x1e8] sm:$0xff]
    %v2689 = vld [vmem:[#allocation11 + $0x1f0] sm:$0xff]
    %v2690 = vld [vmem:[#allocation11 + $0x1f8] sm:$0xff]
    %v2691 = vld [vmem:[#allocation11 + $0x200] sm:$0xff]
    %v2692 = vld [vmem:[#allocation11 + $0x208] sm:$0xff]
    %v2693 = vld [vmem:[#allocation11 + $0x210] sm:$0xff]
    %v2694 = vld [vmem:[#allocation11 + $0x218] sm:$0xff]
    %v2695 = vld [vmem:[#allocation11 + $0x220] sm:$0xff]
    %v2696 = vld [vmem:[#allocation11 + $0x228] sm:$0xff]
    %v2697 = vld [vmem:[#allocation11 + $0x230] sm:$0xff]
    %v2698 = vld [vmem:[#allocation11 + $0x238] sm:$0xff]
    %v2699 = vld [vmem:[#allocation11 + $0x240] sm:$0xff]
    %v2700 = vld [vmem:[#allocation11 + $0x248] sm:$0xff]
    %v2701 = vld [vmem:[#allocation11 + $0x250] sm:$0xff]
    %v2702 = vld [vmem:[#allocation11 + $0x258] sm:$0xff]
    %v2703 = vld [vmem:[#allocation11 + $0x260] sm:$0xff]
    %v2704 = vld [vmem:[#allocation11 + $0x268] sm:$0xff]
    %v2705 = vld [vmem:[#allocation11 + $0x270] sm:$0xff]
    %v2706 = vld [vmem:[#allocation11 + $0x278] sm:$0xff]
    %v2707 = vld [vmem:[#allocation11 + $0x280] sm:$0xff]
    %v2708 = vld [vmem:[#allocation11 + $0x288] sm:$0xff]
    %v2709 = vld [vmem:[#allocation11 + $0x290] sm:$0xff]
    %v2710 = vld [vmem:[#allocation11 + $0x298] sm:$0xff]
    %v2711 = vld [vmem:[#allocation11 + $0x2a0] sm:$0xff]
    %v2712 = vld [vmem:[#allocation11 + $0x2a8] sm:$0xff]
    %v2713 = vld [vmem:[#allocation11 + $0x2b0] sm:$0xff]
    %v2714 = vld [vmem:[#allocation11 + $0x2b8] sm:$0xff]
    %v2715 = vld [vmem:[#allocation11 + $0x2c0] sm:$0xff]
    %v2716 = vld [vmem:[#allocation11 + $0x2c8] sm:$0xff]
    %v2717 = vld [vmem:[#allocation11 + $0x2d0] sm:$0xff]
    %v2718 = vld [vmem:[#allocation11 + $0x2d8] sm:$0xff]
    %v2719 = vld [vmem:[#allocation11 + $0x2e0] sm:$0xff]
    %v2720 = vld [vmem:[#allocation11 + $0x2e8] sm:$0xff]
    %v2721 = vld [vmem:[#allocation11 + $0x2f0] sm:$0xff]
    %v2722 = vld [vmem:[#allocation11 + $0x2f8] sm:$0xff]
    %2723 = vmatpush.msra.mxu0 %v2657
    %2724 = vmatpush.msra.mxu0 %v2655
    %2725 = vmatpush.msra.mxu0 %v2653
    %2726 = vmatpush.msra.mxu0 %v2651
    %2727 = vmatpush.msra.mxu0 %v2649
    %2728 = vmatpush.msra.mxu0 %v2647
    %2729 = vmatpush.msra.mxu0 %v2645
    %2730 = vmatpush.msra.mxu0 %v2643
    %2731 = vmatpush.msra.mxu0 %v2641
    %2732 = vmatpush.msra.mxu0 %v2639
    %2733 = vmatpush.msra.mxu0 %v2637
    %2734 = vmatpush.msra.mxu0 %v2635
    %2735 = vmatpush.msra.mxu0 %v2633
    %2736 = vmatpush.msra.mxu0 %v2631
    %2737 = vmatpush.msra.mxu0 %v2629
    %2738 = vmatpush.msra.mxu0 %v2627
    %2739 = vmatmul.f32.gmra.mxu0 %v2130
    %v2740 = vpop.f32.mrf.mxu0
    %v2741 = vadd.f32 %v1035, %v2740
    %2742 = vdwg.mxu0
    %2743 = vmatpush.msra.mxu0 %v2689
    %2744 = vmatpush.msra.mxu0 %v2687
    %2745 = vmatpush.msra.mxu0 %v2685
    %2746 = vmatpush.msra.mxu0 %v2683
    %2747 = vmatpush.msra.mxu0 %v2681
    %2748 = vmatpush.msra.mxu0 %v2679
    %2749 = vmatpush.msra.mxu0 %v2677
    %2750 = vmatpush.msra.mxu0 %v2675
    %2751 = vmatpush.msra.mxu0 %v2673
    %2752 = vmatpush.msra.mxu0 %v2671
    %2753 = vmatpush.msra.mxu0 %v2669
    %2754 = vmatpush.msra.mxu0 %v2667
    %2755 = vmatpush.msra.mxu0 %v2665
    %2756 = vmatpush.msra.mxu0 %v2663
    %2757 = vmatpush.msra.mxu0 %v2661
    %2758 = vmatpush.msra.mxu0 %v2659
    %2759 = vmatmul.f32.gmra.mxu0 %v2002
    %v2760 = vpop.f32.mrf.mxu0
    %v2761 = vadd.f32 %v2741, %v2760
    %2762 = vdwg.mxu0
    %2763 = vmatpush.msra.mxu0 %v2721
    %2764 = vmatpush.msra.mxu0 %v2719
    %2765 = vmatpush.msra.mxu0 %v2717
    %2766 = vmatpush.msra.mxu0 %v2715
    %2767 = vmatpush.msra.mxu0 %v2713
    %2768 = vmatpush.msra.mxu0 %v2711
    %2769 = vmatpush.msra.mxu0 %v2709
    %2770 = vmatpush.msra.mxu0 %v2707
    %2771 = vmatpush.msra.mxu0 %v2705
    %2772 = vmatpush.msra.mxu0 %v2703
    %2773 = vmatpush.msra.mxu0 %v2701
    %2774 = vmatpush.msra.mxu0 %v2699
    %2775 = vmatpush.msra.mxu0 %v2697
    %2776 = vmatpush.msra.mxu0 %v2695
    %2777 = vmatpush.msra.mxu0 %v2693
    %2778 = vmatpush.msra.mxu0 %v2691
    %2779 = vmatmul.f32.gmra.mxu0 %v2626
    %v2780 = vpop.f32.mrf.mxu0
    %v2781 = vadd.f32 %v2761, %v2780
    %2782 = vdwg.mxu0
    %2783 = vmatpush.msra.mxu0 %v2658
    %2784 = vmatpush.msra.mxu0 %v2656
    %2785 = vmatpush.msra.mxu0 %v2654
    %2786 = vmatpush.msra.mxu0 %v2652
    %2787 = vmatpush.msra.mxu0 %v2650
    %2788 = vmatpush.msra.mxu0 %v2648
    %2789 = vmatpush.msra.mxu0 %v2646
    %2790 = vmatpush.msra.mxu0 %v2644
    %2791 = vmatpush.msra.mxu0 %v2642
    %2792 = vmatpush.msra.mxu0 %v2640
    %2793 = vmatpush.msra.mxu0 %v2638
    %2794 = vmatpush.msra.mxu0 %v2636
    %2795 = vmatpush.msra.mxu0 %v2634
    %2796 = vmatpush.msra.mxu0 %v2632
    %2797 = vmatpush.msra.mxu0 %v2630
    %2798 = vmatpush.msra.mxu0 %v2628
    %2799 = vmatmul.f32.gmra.mxu0 %v2130
    %v2800 = vpop.f32.mrf.mxu0
    %v2801 = vadd.f32 %v1036, %v2800
    %2802 = vdwg.mxu0
    %2803 = vmatpush.msra.mxu0 %v2690
    %2804 = vmatpush.msra.mxu0 %v2688
    %2805 = vmatpush.msra.mxu0 %v2686
    %2806 = vmatpush.msra.mxu0 %v2684
    %2807 = vmatpush.msra.mxu0 %v2682
    %2808 = vmatpush.msra.mxu0 %v2680
    %2809 = vmatpush.msra.mxu0 %v2678
    %2810 = vmatpush.msra.mxu0 %v2676
    %2811 = vmatpush.msra.mxu0 %v2674
    %2812 = vmatpush.msra.mxu0 %v2672
    %2813 = vmatpush.msra.mxu0 %v2670
    %2814 = vmatpush.msra.mxu0 %v2668
    %2815 = vmatpush.msra.mxu0 %v2666
    %2816 = vmatpush.msra.mxu0 %v2664
    %2817 = vmatpush.msra.mxu0 %v2662
    %2818 = vmatpush.msra.mxu0 %v2660
    %2819 = vmatmul.f32.gmra.mxu0 %v2002
    %v2820 = vpop.f32.mrf.mxu0
    %v2821 = vadd.f32 %v2801, %v2820
    %2822 = vdwg.mxu0
    %2823 = vmatpush.msra.mxu0 %v2722
    %2824 = vmatpush.msra.mxu0 %v2720
    %2825 = vmatpush.msra.mxu0 %v2718
    %2826 = vmatpush.msra.mxu0 %v2716
    %2827 = vmatpush.msra.mxu0 %v2714
    %2828 = vmatpush.msra.mxu0 %v2712
    %2829 = vmatpush.msra.mxu0 %v2710
    %2830 = vmatpush.msra.mxu0 %v2708
    %2831 = vmatpush.msra.mxu0 %v2706
    %2832 = vmatpush.msra.mxu0 %v2704
    %2833 = vmatpush.msra.mxu0 %v2702
    %2834 = vmatpush.msra.mxu0 %v2700
    %2835 = vmatpush.msra.mxu0 %v2698
    %2836 = vmatpush.msra.mxu0 %v2696
    %2837 = vmatpush.msra.mxu0 %v2694
    %2838 = vmatpush.msra.mxu0 %v2692
    %2839 = vmatmul.f32.gmra.mxu0 %v2626
    %v2840 = vpop.f32.mrf.mxu0
    %v2841 = vadd.f32 %v2821, %v2840
    %2842 = vdwg.mxu0
    %s2843 = scalar_lea.vmem [#allocation5], 6
    %v2844 = vld [vmem:[%s2843] sm:$0x3]
    %v2846 = vrot.slane %v2626, 1
    %2848 = vmatpush.xpose.msra.mxu0 0.0
    %2849 = vmatpush.xpose.msra.mxu0 0.0
    %2850 = vmatpush.xpose.msra.mxu0 0.0
    %2851 = vmatpush.xpose.msra.mxu0 0.0
    %2852 = vmatpush.xpose.msra.mxu0 0.0
    %2853 = vmatpush.xpose.msra.mxu0 0.0
    %2854 = vmatpush.xpose.msra.mxu0 0.0
    %2855 = vmatpush.xpose.msra.mxu0 0.0
    %2856 = vmatpush.xpose.msra.mxu0 0.0
    %2857 = vmatpush.xpose.msra.mxu0 0.0
    %2858 = vmatpush.xpose.msra.mxu0 0.0
    %2859 = vmatpush.xpose.msra.mxu0 0.0
    %2860 = vmatpush.xpose.msra.mxu0 0.0
    %2861 = vmatpush.xpose.msra.mxu0 0.0
    %2862 = vmatpush.xpose.msra.mxu0 %v290
    %2863 = vmatpush.xpose.msra.mxu0 %v287
    %2864 = vmatmul.f32.gmra.mxu0 %v2626
    %v2865 = vpop.f32.mrf.mxu0
    %v2866 = vadd.f32 0.0, %v2865
    %2867 = vdwg.mxu0
    %2868 = vmatpush.xpose.msra.mxu0 0.0
    %2869 = vmatpush.xpose.msra.mxu0 0.0
    %2870 = vmatpush.xpose.msra.mxu0 0.0
    %2871 = vmatpush.xpose.msra.mxu0 0.0
    %2872 = vmatpush.xpose.msra.mxu0 0.0
    %2873 = vmatpush.xpose.msra.mxu0 0.0
    %2874 = vmatpush.xpose.msra.mxu0 0.0
    %2875 = vmatpush.xpose.msra.mxu0 0.0
    %2876 = vmatpush.xpose.msra.mxu0 0.0
    %2877 = vmatpush.xpose.msra.mxu0 0.0
    %2878 = vmatpush.xpose.msra.mxu0 0.0
    %2879 = vmatpush.xpose.msra.mxu0 0.0
    %2880 = vmatpush.xpose.msra.mxu0 0.0
    %2881 = vmatpush.xpose.msra.mxu0 0.0
    %2882 = vmatpush.xpose.msra.mxu0 %v296
    %2883 = vmatpush.xpose.msra.mxu0 %v293
    %2884 = vmatmul.f32.gmra.mxu0 %v2846
    %v2885 = vpop.f32.mrf.mxu0
    %v2886 = vadd.f32 0.0, %v2885
    %2887 = vdwg.mxu0
    %v2888 = vmul.f32 %v2866, 0.088388346
    %v2889 = vmul.f32 %v2886, 0.088388346
    %v2892 = vrot.slane %v2889, 7
    %v2893 = vsel %vm154, %v2892, %v2888
    %v2895 = vsel %vm353, %v2893, -inf
    %2896 = vmax.xlane.f32.xlu0 %v2895
    %v2897 = vpop.xlane.xlu0 %2896
    %v2899 = vrot.slane %v2897, 1
    %v2902 = vsub.f32 %v2888, %v2897
    %v2903 = vsub.f32 %v2889, %v2899
    %v2904 = vmul.f32 %v2902, 1.442695
    %v2905 = vpow.pop %v2904
    %v2906 = vmul.f32 %v2903, 1.442695
    %v2907 = vpow.pop %v2906
    %v2910 = vrot.slane %v2907, 7
    %v2911 = vsel %vm154, %v2910, %v2905
    %v2913 = vsel %vm353, %v2911, 0.0
    %2914 = vadd.xlane.f32.xlu0 %v2913
    %v2915 = vpop.xlane.xlu0 %2914
    %v2916 = vrcp.pop %v2915
    %v2918 = vrot.slane %v2916, 1
    %v2921 = vmul.f32 %v2905, %v2916
    %v2922 = vmul.f32 %v2907, %v2918
    %v2924 = vsel %vm382, %v2921, 0
    %2926 = vmatpush.msra.mxu0 0.0
    %2927 = vmatpush.msra.mxu0 0.0
    %2928 = vmatpush.msra.mxu0 0.0
    %2929 = vmatpush.msra.mxu0 0.0
    %2930 = vmatpush.msra.mxu0 0.0
    %2931 = vmatpush.msra.mxu0 0.0
    %2932 = vmatpush.msra.mxu0 0.0
    %2933 = vmatpush.msra.mxu0 0.0
    %2934 = vmatpush.msra.mxu0 0.0
    %2935 = vmatpush.msra.mxu0 0.0
    %2936 = vmatpush.msra.mxu0 0.0
    %2937 = vmatpush.msra.mxu0 0.0
    %2938 = vmatpush.msra.mxu0 0.0
    %2939 = vmatpush.msra.mxu0 0.0
    %2940 = vmatpush.msra.mxu0 %v126
    %2941 = vmatpush.msra.mxu0 %v125
    %2942 = vmatmul.f32.gmra.mxu0 %v2924
    %v2943 = vpop.f32.mrf.mxu0
    %v2944 = vadd.f32 0.0, %v2943
    %2945 = vdwg.mxu0
    %v2947 = vsel %vm382, %v2922, 0
    %2949 = vmatpush.msra.mxu0 0.0
    %2950 = vmatpush.msra.mxu0 0.0
    %2951 = vmatpush.msra.mxu0 0.0
    %2952 = vmatpush.msra.mxu0 0.0
    %2953 = vmatpush.msra.mxu0 0.0
    %2954 = vmatpush.msra.mxu0 0.0
    %2955 = vmatpush.msra.mxu0 0.0
    %2956 = vmatpush.msra.mxu0 0.0
    %2957 = vmatpush.msra.mxu0 0.0
    %2958 = vmatpush.msra.mxu0 0.0
    %2959 = vmatpush.msra.mxu0 0.0
    %2960 = vmatpush.msra.mxu0 0.0
    %2961 = vmatpush.msra.mxu0 0.0
    %2962 = vmatpush.msra.mxu0 0.0
    %2963 = vmatpush.msra.mxu0 %v128
    %2964 = vmatpush.msra.mxu0 %v127
    %2965 = vmatmul.f32.gmra.mxu0 %v2947
    %v2966 = vpop.f32.mrf.mxu0
    %v2967 = vadd.f32 0.0, %v2966
    %2968 = vdwg.mxu0
    %v2971 = vrot.slane %v2967, 7
    %v2972 = vsel %vm154, %v2971, %v2944
    %v2974 = vld [vmem:[#allocation10] sm:$0xff]
    %v2975 = vld [vmem:[#allocation10 + $0x8] sm:$0xff]
    %v2976 = vld [vmem:[#allocation10 + $0x10] sm:$0xff]
    %v2977 = vld [vmem:[#allocation10 + $0x18] sm:$0xff]
    %v2978 = vld [vmem:[#allocation10 + $0x20] sm:$0xff]
    %v2979 = vld [vmem:[#allocation10 + $0x28] sm:$0xff]
    %v2980 = vld [vmem:[#allocation10 + $0x30] sm:$0xff]
    %v2981 = vld [vmem:[#allocation10 + $0x38] sm:$0xff]
    %v2982 = vld [vmem:[#allocation10 + $0x40] sm:$0xff]
    %v2983 = vld [vmem:[#allocation10 + $0x48] sm:$0xff]
    %v2984 = vld [vmem:[#allocation10 + $0x50] sm:$0xff]
    %v2985 = vld [vmem:[#allocation10 + $0x58] sm:$0xff]
    %v2986 = vld [vmem:[#allocation10 + $0x60] sm:$0xff]
    %v2987 = vld [vmem:[#allocation10 + $0x68] sm:$0xff]
    %v2988 = vld [vmem:[#allocation10 + $0x70] sm:$0xff]
    %v2989 = vld [vmem:[#allocation10 + $0x78] sm:$0xff]
    %v2990 = vld [vmem:[#allocation10 + $0x80] sm:$0xff]
    %v2991 = vld [vmem:[#allocation10 + $0x88] sm:$0xff]
    %v2992 = vld [vmem:[#allocation10 + $0x90] sm:$0xff]
    %v2993 = vld [vmem:[#allocation10 + $0x98] sm:$0xff]
    %v2994 = vld [vmem:[#allocation10 + $0xa0] sm:$0xff]
    %v2995 = vld [vmem:[#allocation10 + $0xa8] sm:$0xff]
    %v2996 = vld [vmem:[#allocation10 + $0xb0] sm:$0xff]
    %v2997 = vld [vmem:[#allocation10 + $0xb8] sm:$0xff]
    %v2998 = vld [vmem:[#allocation10 + $0xc0] sm:$0xff]
    %v2999 = vld [vmem:[#allocation10 + $0xc8] sm:$0xff]
    %v3000 = vld [vmem:[#allocation10 + $0xd0] sm:$0xff]
    %v3001 = vld [vmem:[#allocation10 + $0xd8] sm:$0xff]
    %v3002 = vld [vmem:[#allocation10 + $0xe0] sm:$0xff]
    %v3003 = vld [vmem:[#allocation10 + $0xe8] sm:$0xff]
    %v3004 = vld [vmem:[#allocation10 + $0xf0] sm:$0xff]
    %v3005 = vld [vmem:[#allocation10 + $0xf8] sm:$0xff]
    %v3006 = vld [vmem:[#allocation10 + $0x100] sm:$0xff]
    %v3007 = vld [vmem:[#allocation10 + $0x108] sm:$0xff]
    %v3008 = vld [vmem:[#allocation10 + $0x110] sm:$0xff]
    %v3009 = vld [vmem:[#allocation10 + $0x118] sm:$0xff]
    %v3010 = vld [vmem:[#allocation10 + $0x120] sm:$0xff]
    %v3011 = vld [vmem:[#allocation10 + $0x128] sm:$0xff]
    %v3012 = vld [vmem:[#allocation10 + $0x130] sm:$0xff]
    %v3013 = vld [vmem:[#allocation10 + $0x138] sm:$0xff]
    %v3014 = vld [vmem:[#allocation10 + $0x140] sm:$0xff]
    %v3015 = vld [vmem:[#allocation10 + $0x148] sm:$0xff]
    %v3016 = vld [vmem:[#allocation10 + $0x150] sm:$0xff]
    %v3017 = vld [vmem:[#allocation10 + $0x158] sm:$0xff]
    %v3018 = vld [vmem:[#allocation10 + $0x160] sm:$0xff]
    %v3019 = vld [vmem:[#allocation10 + $0x168] sm:$0xff]
    %v3020 = vld [vmem:[#allocation10 + $0x170] sm:$0xff]
    %v3021 = vld [vmem:[#allocation10 + $0x178] sm:$0xff]
    %v3022 = vld [vmem:[#allocation10 + $0x180] sm:$0xff]
    %v3023 = vld [vmem:[#allocation10 + $0x188] sm:$0xff]
    %v3024 = vld [vmem:[#allocation10 + $0x190] sm:$0xff]
    %v3025 = vld [vmem:[#allocation10 + $0x198] sm:$0xff]
    %v3026 = vld [vmem:[#allocation10 + $0x1a0] sm:$0xff]
    %v3027 = vld [vmem:[#allocation10 + $0x1a8] sm:$0xff]
    %v3028 = vld [vmem:[#allocation10 + $0x1b0] sm:$0xff]
    %v3029 = vld [vmem:[#allocation10 + $0x1b8] sm:$0xff]
    %v3030 = vld [vmem:[#allocation10 + $0x1c0] sm:$0xff]
    %v3031 = vld [vmem:[#allocation10 + $0x1c8] sm:$0xff]
    %v3032 = vld [vmem:[#allocation10 + $0x1d0] sm:$0xff]
    %v3033 = vld [vmem:[#allocation10 + $0x1d8] sm:$0xff]
    %v3034 = vld [vmem:[#allocation10 + $0x1e0] sm:$0xff]
    %v3035 = vld [vmem:[#allocation10 + $0x1e8] sm:$0xff]
    %v3036 = vld [vmem:[#allocation10 + $0x1f0] sm:$0xff]
    %v3037 = vld [vmem:[#allocation10 + $0x1f8] sm:$0xff]
    %v3038 = vld [vmem:[#allocation10 + $0x200] sm:$0xff]
    %v3039 = vld [vmem:[#allocation10 + $0x208] sm:$0xff]
    %v3040 = vld [vmem:[#allocation10 + $0x210] sm:$0xff]
    %v3041 = vld [vmem:[#allocation10 + $0x218] sm:$0xff]
    %v3042 = vld [vmem:[#allocation10 + $0x220] sm:$0xff]
    %v3043 = vld [vmem:[#allocation10 + $0x228] sm:$0xff]
    %v3044 = vld [vmem:[#allocation10 + $0x230] sm:$0xff]
    %v3045 = vld [vmem:[#allocation10 + $0x238] sm:$0xff]
    %v3046 = vld [vmem:[#allocation10 + $0x240] sm:$0xff]
    %v3047 = vld [vmem:[#allocation10 + $0x248] sm:$0xff]
    %v3048 = vld [vmem:[#allocation10 + $0x250] sm:$0xff]
    %v3049 = vld [vmem:[#allocation10 + $0x258] sm:$0xff]
    %v3050 = vld [vmem:[#allocation10 + $0x260] sm:$0xff]
    %v3051 = vld [vmem:[#allocation10 + $0x268] sm:$0xff]
    %v3052 = vld [vmem:[#allocation10 + $0x270] sm:$0xff]
    %v3053 = vld [vmem:[#allocation10 + $0x278] sm:$0xff]
    %v3054 = vld [vmem:[#allocation10 + $0x280] sm:$0xff]
    %v3055 = vld [vmem:[#allocation10 + $0x288] sm:$0xff]
    %v3056 = vld [vmem:[#allocation10 + $0x290] sm:$0xff]
    %v3057 = vld [vmem:[#allocation10 + $0x298] sm:$0xff]
    %v3058 = vld [vmem:[#allocation10 + $0x2a0] sm:$0xff]
    %v3059 = vld [vmem:[#allocation10 + $0x2a8] sm:$0xff]
    %v3060 = vld [vmem:[#allocation10 + $0x2b0] sm:$0xff]
    %v3061 = vld [vmem:[#allocation10 + $0x2b8] sm:$0xff]
    %v3062 = vld [vmem:[#allocation10 + $0x2c0] sm:$0xff]
    %v3063 = vld [vmem:[#allocation10 + $0x2c8] sm:$0xff]
    %v3064 = vld [vmem:[#allocation10 + $0x2d0] sm:$0xff]
    %v3065 = vld [vmem:[#allocation10 + $0x2d8] sm:$0xff]
    %v3066 = vld [vmem:[#allocation10 + $0x2e0] sm:$0xff]
    %v3067 = vld [vmem:[#allocation10 + $0x2e8] sm:$0xff]
    %v3068 = vld [vmem:[#allocation10 + $0x2f0] sm:$0xff]
    %v3069 = vld [vmem:[#allocation10 + $0x2f8] sm:$0xff]
    %v3070 = vld [vmem:[#allocation10 + $0x300] sm:$0xff]
    %v3071 = vld [vmem:[#allocation10 + $0x308] sm:$0xff]
    %v3072 = vld [vmem:[#allocation10 + $0x310] sm:$0xff]
    %v3073 = vld [vmem:[#allocation10 + $0x318] sm:$0xff]
    %v3074 = vld [vmem:[#allocation10 + $0x320] sm:$0xff]
    %v3075 = vld [vmem:[#allocation10 + $0x328] sm:$0xff]
    %v3076 = vld [vmem:[#allocation10 + $0x330] sm:$0xff]
    %v3077 = vld [vmem:[#allocation10 + $0x338] sm:$0xff]
    %v3078 = vld [vmem:[#allocation10 + $0x340] sm:$0xff]
    %v3079 = vld [vmem:[#allocation10 + $0x348] sm:$0xff]
    %v3080 = vld [vmem:[#allocation10 + $0x350] sm:$0xff]
    %v3081 = vld [vmem:[#allocation10 + $0x358] sm:$0xff]
    %v3082 = vld [vmem:[#allocation10 + $0x360] sm:$0xff]
    %v3083 = vld [vmem:[#allocation10 + $0x368] sm:$0xff]
    %v3084 = vld [vmem:[#allocation10 + $0x370] sm:$0xff]
    %v3085 = vld [vmem:[#allocation10 + $0x378] sm:$0xff]
    %v3086 = vld [vmem:[#allocation10 + $0x380] sm:$0xff]
    %v3087 = vld [vmem:[#allocation10 + $0x388] sm:$0xff]
    %v3088 = vld [vmem:[#allocation10 + $0x390] sm:$0xff]
    %v3089 = vld [vmem:[#allocation10 + $0x398] sm:$0xff]
    %v3090 = vld [vmem:[#allocation10 + $0x3a0] sm:$0xff]
    %v3091 = vld [vmem:[#allocation10 + $0x3a8] sm:$0xff]
    %v3092 = vld [vmem:[#allocation10 + $0x3b0] sm:$0xff]
    %v3093 = vld [vmem:[#allocation10 + $0x3b8] sm:$0xff]
    %v3094 = vld [vmem:[#allocation10 + $0x3c0] sm:$0xff]
    %v3095 = vld [vmem:[#allocation10 + $0x3c8] sm:$0xff]
    %v3096 = vld [vmem:[#allocation10 + $0x3d0] sm:$0xff]
    %v3097 = vld [vmem:[#allocation10 + $0x3d8] sm:$0xff]
    %v3098 = vld [vmem:[#allocation10 + $0x3e0] sm:$0xff]
    %v3099 = vld [vmem:[#allocation10 + $0x3e8] sm:$0xff]
    %v3100 = vld [vmem:[#allocation10 + $0x3f0] sm:$0xff]
    %v3101 = vld [vmem:[#allocation10 + $0x3f8] sm:$0xff]
    %v3102 = vld [vmem:[#allocation10 + $0x400] sm:$0xff]
    %v3103 = vld [vmem:[#allocation10 + $0x408] sm:$0xff]
    %v3104 = vld [vmem:[#allocation10 + $0x410] sm:$0xff]
    %v3105 = vld [vmem:[#allocation10 + $0x418] sm:$0xff]
    %v3106 = vld [vmem:[#allocation10 + $0x420] sm:$0xff]
    %v3107 = vld [vmem:[#allocation10 + $0x428] sm:$0xff]
    %v3108 = vld [vmem:[#allocation10 + $0x430] sm:$0xff]
    %v3109 = vld [vmem:[#allocation10 + $0x438] sm:$0xff]
    %v3110 = vld [vmem:[#allocation10 + $0x440] sm:$0xff]
    %v3111 = vld [vmem:[#allocation10 + $0x448] sm:$0xff]
    %v3112 = vld [vmem:[#allocation10 + $0x450] sm:$0xff]
    %v3113 = vld [vmem:[#allocation10 + $0x458] sm:$0xff]
    %v3114 = vld [vmem:[#allocation10 + $0x460] sm:$0xff]
    %v3115 = vld [vmem:[#allocation10 + $0x468] sm:$0xff]
    %v3116 = vld [vmem:[#allocation10 + $0x470] sm:$0xff]
    %v3117 = vld [vmem:[#allocation10 + $0x478] sm:$0xff]
    %v3118 = vld [vmem:[#allocation10 + $0x480] sm:$0xff]
    %v3119 = vld [vmem:[#allocation10 + $0x488] sm:$0xff]
    %v3120 = vld [vmem:[#allocation10 + $0x490] sm:$0xff]
    %v3121 = vld [vmem:[#allocation10 + $0x498] sm:$0xff]
    %v3122 = vld [vmem:[#allocation10 + $0x4a0] sm:$0xff]
    %v3123 = vld [vmem:[#allocation10 + $0x4a8] sm:$0xff]
    %v3124 = vld [vmem:[#allocation10 + $0x4b0] sm:$0xff]
    %v3125 = vld [vmem:[#allocation10 + $0x4b8] sm:$0xff]
    %v3126 = vld [vmem:[#allocation10 + $0x4c0] sm:$0xff]
    %v3127 = vld [vmem:[#allocation10 + $0x4c8] sm:$0xff]
    %v3128 = vld [vmem:[#allocation10 + $0x4d0] sm:$0xff]
    %v3129 = vld [vmem:[#allocation10 + $0x4d8] sm:$0xff]
    %v3130 = vld [vmem:[#allocation10 + $0x4e0] sm:$0xff]
    %v3131 = vld [vmem:[#allocation10 + $0x4e8] sm:$0xff]
    %v3132 = vld [vmem:[#allocation10 + $0x4f0] sm:$0xff]
    %v3133 = vld [vmem:[#allocation10 + $0x4f8] sm:$0xff]
    %v3134 = vld [vmem:[#allocation10 + $0x500] sm:$0xff]
    %v3135 = vld [vmem:[#allocation10 + $0x508] sm:$0xff]
    %v3136 = vld [vmem:[#allocation10 + $0x510] sm:$0xff]
    %v3137 = vld [vmem:[#allocation10 + $0x518] sm:$0xff]
    %v3138 = vld [vmem:[#allocation10 + $0x520] sm:$0xff]
    %v3139 = vld [vmem:[#allocation10 + $0x528] sm:$0xff]
    %v3140 = vld [vmem:[#allocation10 + $0x530] sm:$0xff]
    %v3141 = vld [vmem:[#allocation10 + $0x538] sm:$0xff]
    %v3142 = vld [vmem:[#allocation10 + $0x540] sm:$0xff]
    %v3143 = vld [vmem:[#allocation10 + $0x548] sm:$0xff]
    %v3144 = vld [vmem:[#allocation10 + $0x550] sm:$0xff]
    %v3145 = vld [vmem:[#allocation10 + $0x558] sm:$0xff]
    %v3146 = vld [vmem:[#allocation10 + $0x560] sm:$0xff]
    %v3147 = vld [vmem:[#allocation10 + $0x568] sm:$0xff]
    %v3148 = vld [vmem:[#allocation10 + $0x570] sm:$0xff]
    %v3149 = vld [vmem:[#allocation10 + $0x578] sm:$0xff]
    %v3150 = vld [vmem:[#allocation10 + $0x580] sm:$0xff]
    %v3151 = vld [vmem:[#allocation10 + $0x588] sm:$0xff]
    %v3152 = vld [vmem:[#allocation10 + $0x590] sm:$0xff]
    %v3153 = vld [vmem:[#allocation10 + $0x598] sm:$0xff]
    %v3154 = vld [vmem:[#allocation10 + $0x5a0] sm:$0xff]
    %v3155 = vld [vmem:[#allocation10 + $0x5a8] sm:$0xff]
    %v3156 = vld [vmem:[#allocation10 + $0x5b0] sm:$0xff]
    %v3157 = vld [vmem:[#allocation10 + $0x5b8] sm:$0xff]
    %v3158 = vld [vmem:[#allocation10 + $0x5c0] sm:$0xff]
    %v3159 = vld [vmem:[#allocation10 + $0x5c8] sm:$0xff]
    %v3160 = vld [vmem:[#allocation10 + $0x5d0] sm:$0xff]
    %v3161 = vld [vmem:[#allocation10 + $0x5d8] sm:$0xff]
    %v3162 = vld [vmem:[#allocation10 + $0x5e0] sm:$0xff]
    %v3163 = vld [vmem:[#allocation10 + $0x5e8] sm:$0xff]
    %v3164 = vld [vmem:[#allocation10 + $0x5f0] sm:$0xff]
    %v3165 = vld [vmem:[#allocation10 + $0x5f8] sm:$0xff]
    %3166 = vmatpush.msra.mxu0 %v3034
    %3167 = vmatpush.msra.mxu0 %v3030
    %3168 = vmatpush.msra.mxu0 %v3026
    %3169 = vmatpush.msra.mxu0 %v3022
    %3170 = vmatpush.msra.mxu0 %v3018
    %3171 = vmatpush.msra.mxu0 %v3014
    %3172 = vmatpush.msra.mxu0 %v3010
    %3173 = vmatpush.msra.mxu0 %v3006
    %3174 = vmatpush.msra.mxu0 %v3002
    %3175 = vmatpush.msra.mxu0 %v2998
    %3176 = vmatpush.msra.mxu0 %v2994
    %3177 = vmatpush.msra.mxu0 %v2990
    %3178 = vmatpush.msra.mxu0 %v2986
    %3179 = vmatpush.msra.mxu0 %v2982
    %3180 = vmatpush.msra.mxu0 %v2978
    %3181 = vmatpush.msra.mxu0 %v2974
    %3182 = vmatmul.f32.gmra.mxu0 %v2844
    %v3183 = vpop.f32.mrf.mxu0
    %v3184 = vadd.f32 %v627, %v3183
    %3185 = vdwg.mxu0
    %3186 = vmatpush.msra.mxu0 %v3098
    %3187 = vmatpush.msra.mxu0 %v3094
    %3188 = vmatpush.msra.mxu0 %v3090
    %3189 = vmatpush.msra.mxu0 %v3086
    %3190 = vmatpush.msra.mxu0 %v3082
    %3191 = vmatpush.msra.mxu0 %v3078
    %3192 = vmatpush.msra.mxu0 %v3074
    %3193 = vmatpush.msra.mxu0 %v3070
    %3194 = vmatpush.msra.mxu0 %v3066
    %3195 = vmatpush.msra.mxu0 %v3062
    %3196 = vmatpush.msra.mxu0 %v3058
    %3197 = vmatpush.msra.mxu0 %v3054
    %3198 = vmatpush.msra.mxu0 %v3050
    %3199 = vmatpush.msra.mxu0 %v3046
    %3200 = vmatpush.msra.mxu0 %v3042
    %3201 = vmatpush.msra.mxu0 %v3038
    %3202 = vmatmul.f32.gmra.mxu0 %v2972
    %v3203 = vpop.f32.mrf.mxu0
    %v3204 = vadd.f32 %v3184, %v3203
    %3205 = vdwg.mxu0
    %3206 = vmatpush.msra.mxu0 %v3162
    %3207 = vmatpush.msra.mxu0 %v3158
    %3208 = vmatpush.msra.mxu0 %v3154
    %3209 = vmatpush.msra.mxu0 %v3150
    %3210 = vmatpush.msra.mxu0 %v3146
    %3211 = vmatpush.msra.mxu0 %v3142
    %3212 = vmatpush.msra.mxu0 %v3138
    %3213 = vmatpush.msra.mxu0 %v3134
    %3214 = vmatpush.msra.mxu0 %v3130
    %3215 = vmatpush.msra.mxu0 %v3126
    %3216 = vmatpush.msra.mxu0 %v3122
    %3217 = vmatpush.msra.mxu0 %v3118
    %3218 = vmatpush.msra.mxu0 %v3114
    %3219 = vmatpush.msra.mxu0 %v3110
    %3220 = vmatpush.msra.mxu0 %v3106
    %3221 = vmatpush.msra.mxu0 %v3102
    %3222 = vmatmul.f32.gmra.mxu0 %v2626
    %v3223 = vpop.f32.mrf.mxu0
    %v3224 = vadd.f32 %v3204, %v3223
    %3225 = vdwg.mxu0
    %3226 = vmatpush.msra.mxu0 %v3035
    %3227 = vmatpush.msra.mxu0 %v3031
    %3228 = vmatpush.msra.mxu0 %v3027
    %3229 = vmatpush.msra.mxu0 %v3023
    %3230 = vmatpush.msra.mxu0 %v3019
    %3231 = vmatpush.msra.mxu0 %v3015
    %3232 = vmatpush.msra.mxu0 %v3011
    %3233 = vmatpush.msra.mxu0 %v3007
    %3234 = vmatpush.msra.mxu0 %v3003
    %3235 = vmatpush.msra.mxu0 %v2999
    %3236 = vmatpush.msra.mxu0 %v2995
    %3237 = vmatpush.msra.mxu0 %v2991
    %3238 = vmatpush.msra.mxu0 %v2987
    %3239 = vmatpush.msra.mxu0 %v2983
    %3240 = vmatpush.msra.mxu0 %v2979
    %3241 = vmatpush.msra.mxu0 %v2975
    %3242 = vmatmul.f32.gmra.mxu0 %v2844
    %v3243 = vpop.f32.mrf.mxu0
    %v3244 = vadd.f32 %v628, %v3243
    %3245 = vdwg.mxu0
    %3246 = vmatpush.msra.mxu0 %v3099
    %3247 = vmatpush.msra.mxu0 %v3095
    %3248 = vmatpush.msra.mxu0 %v3091
    %3249 = vmatpush.msra.mxu0 %v3087
    %3250 = vmatpush.msra.mxu0 %v3083
    %3251 = vmatpush.msra.mxu0 %v3079
    %3252 = vmatpush.msra.mxu0 %v3075
    %3253 = vmatpush.msra.mxu0 %v3071
    %3254 = vmatpush.msra.mxu0 %v3067
    %3255 = vmatpush.msra.mxu0 %v3063
    %3256 = vmatpush.msra.mxu0 %v3059
    %3257 = vmatpush.msra.mxu0 %v3055
    %3258 = vmatpush.msra.mxu0 %v3051
    %3259 = vmatpush.msra.mxu0 %v3047
    %3260 = vmatpush.msra.mxu0 %v3043
    %3261 = vmatpush.msra.mxu0 %v3039
    %3262 = vmatmul.f32.gmra.mxu0 %v2972
    %v3263 = vpop.f32.mrf.mxu0
    %v3264 = vadd.f32 %v3244, %v3263
    %3265 = vdwg.mxu0
    %3266 = vmatpush.msra.mxu0 %v3163
    %3267 = vmatpush.msra.mxu0 %v3159
    %3268 = vmatpush.msra.mxu0 %v3155
    %3269 = vmatpush.msra.mxu0 %v3151
    %3270 = vmatpush.msra.mxu0 %v3147
    %3271 = vmatpush.msra.mxu0 %v3143
    %3272 = vmatpush.msra.mxu0 %v3139
    %3273 = vmatpush.msra.mxu0 %v3135
    %3274 = vmatpush.msra.mxu0 %v3131
    %3275 = vmatpush.msra.mxu0 %v3127
    %3276 = vmatpush.msra.mxu0 %v3123
    %3277 = vmatpush.msra.mxu0 %v3119
    %3278 = vmatpush.msra.mxu0 %v3115
    %3279 = vmatpush.msra.mxu0 %v3111
    %3280 = vmatpush.msra.mxu0 %v3107
    %3281 = vmatpush.msra.mxu0 %v3103
    %3282 = vmatmul.f32.gmra.mxu0 %v2626
    %v3283 = vpop.f32.mrf.mxu0
    %v3284 = vadd.f32 %v3264, %v3283
    %3285 = vdwg.mxu0
    %3286 = vmatpush.msra.mxu0 %v3036
    %3287 = vmatpush.msra.mxu0 %v3032
    %3288 = vmatpush.msra.mxu0 %v3028
    %3289 = vmatpush.msra.mxu0 %v3024
    %3290 = vmatpush.msra.mxu0 %v3020
    %3291 = vmatpush.msra.mxu0 %v3016
    %3292 = vmatpush.msra.mxu0 %v3012
    %3293 = vmatpush.msra.mxu0 %v3008
    %3294 = vmatpush.msra.mxu0 %v3004
    %3295 = vmatpush.msra.mxu0 %v3000
    %3296 = vmatpush.msra.mxu0 %v2996
    %3297 = vmatpush.msra.mxu0 %v2992
    %3298 = vmatpush.msra.mxu0 %v2988
    %3299 = vmatpush.msra.mxu0 %v2984
    %3300 = vmatpush.msra.mxu0 %v2980
    %3301 = vmatpush.msra.mxu0 %v2976
    %3302 = vmatmul.f32.gmra.mxu0 %v2844
    %v3303 = vpop.f32.mrf.mxu0
    %v3304 = vadd.f32 %v629, %v3303
    %3305 = vdwg.mxu0
    %3306 = vmatpush.msra.mxu0 %v3100
    %3307 = vmatpush.msra.mxu0 %v3096
    %3308 = vmatpush.msra.mxu0 %v3092
    %3309 = vmatpush.msra.mxu0 %v3088
    %3310 = vmatpush.msra.mxu0 %v3084
    %3311 = vmatpush.msra.mxu0 %v3080
    %3312 = vmatpush.msra.mxu0 %v3076
    %3313 = vmatpush.msra.mxu0 %v3072
    %3314 = vmatpush.msra.mxu0 %v3068
    %3315 = vmatpush.msra.mxu0 %v3064
    %3316 = vmatpush.msra.mxu0 %v3060
    %3317 = vmatpush.msra.mxu0 %v3056
    %3318 = vmatpush.msra.mxu0 %v3052
    %3319 = vmatpush.msra.mxu0 %v3048
    %3320 = vmatpush.msra.mxu0 %v3044
    %3321 = vmatpush.msra.mxu0 %v3040
    %3322 = vmatmul.f32.gmra.mxu0 %v2972
    %v3323 = vpop.f32.mrf.mxu0
    %v3324 = vadd.f32 %v3304, %v3323
    %3325 = vdwg.mxu0
    %3326 = vmatpush.msra.mxu0 %v3164
    %3327 = vmatpush.msra.mxu0 %v3160
    %3328 = vmatpush.msra.mxu0 %v3156
    %3329 = vmatpush.msra.mxu0 %v3152
    %3330 = vmatpush.msra.mxu0 %v3148
    %3331 = vmatpush.msra.mxu0 %v3144
    %3332 = vmatpush.msra.mxu0 %v3140
    %3333 = vmatpush.msra.mxu0 %v3136
    %3334 = vmatpush.msra.mxu0 %v3132
    %3335 = vmatpush.msra.mxu0 %v3128
    %3336 = vmatpush.msra.mxu0 %v3124
    %3337 = vmatpush.msra.mxu0 %v3120
    %3338 = vmatpush.msra.mxu0 %v3116
    %3339 = vmatpush.msra.mxu0 %v3112
    %3340 = vmatpush.msra.mxu0 %v3108
    %3341 = vmatpush.msra.mxu0 %v3104
    %3342 = vmatmul.f32.gmra.mxu0 %v2626
    %v3343 = vpop.f32.mrf.mxu0
    %v3344 = vadd.f32 %v3324, %v3343
    %3345 = vdwg.mxu0
    %3346 = vmatpush.msra.mxu0 %v3037
    %3347 = vmatpush.msra.mxu0 %v3033
    %3348 = vmatpush.msra.mxu0 %v3029
    %3349 = vmatpush.msra.mxu0 %v3025
    %3350 = vmatpush.msra.mxu0 %v3021
    %3351 = vmatpush.msra.mxu0 %v3017
    %3352 = vmatpush.msra.mxu0 %v3013
    %3353 = vmatpush.msra.mxu0 %v3009
    %3354 = vmatpush.msra.mxu0 %v3005
    %3355 = vmatpush.msra.mxu0 %v3001
    %3356 = vmatpush.msra.mxu0 %v2997
    %3357 = vmatpush.msra.mxu0 %v2993
    %3358 = vmatpush.msra.mxu0 %v2989
    %3359 = vmatpush.msra.mxu0 %v2985
    %3360 = vmatpush.msra.mxu0 %v2981
    %3361 = vmatpush.msra.mxu0 %v2977
    %3362 = vmatmul.f32.gmra.mxu0 %v2844
    %v3363 = vpop.f32.mrf.mxu0
    %v3364 = vadd.f32 %v630, %v3363
    %3365 = vdwg.mxu0
    %3366 = vmatpush.msra.mxu0 %v3101
    %3367 = vmatpush.msra.mxu0 %v3097
    %3368 = vmatpush.msra.mxu0 %v3093
    %3369 = vmatpush.msra.mxu0 %v3089
    %3370 = vmatpush.msra.mxu0 %v3085
    %3371 = vmatpush.msra.mxu0 %v3081
    %3372 = vmatpush.msra.mxu0 %v3077
    %3373 = vmatpush.msra.mxu0 %v3073
    %3374 = vmatpush.msra.mxu0 %v3069
    %3375 = vmatpush.msra.mxu0 %v3065
    %3376 = vmatpush.msra.mxu0 %v3061
    %3377 = vmatpush.msra.mxu0 %v3057
    %3378 = vmatpush.msra.mxu0 %v3053
    %3379 = vmatpush.msra.mxu0 %v3049
    %3380 = vmatpush.msra.mxu0 %v3045
    %3381 = vmatpush.msra.mxu0 %v3041
    %3382 = vmatmul.f32.gmra.mxu0 %v2972
    %v3383 = vpop.f32.mrf.mxu0
    %v3384 = vadd.f32 %v3364, %v3383
    %3385 = vdwg.mxu0
    %3386 = vmatpush.msra.mxu0 %v3165
    %3387 = vmatpush.msra.mxu0 %v3161
    %3388 = vmatpush.msra.mxu0 %v3157
    %3389 = vmatpush.msra.mxu0 %v3153
    %3390 = vmatpush.msra.mxu0 %v3149
    %3391 = vmatpush.msra.mxu0 %v3145
    %3392 = vmatpush.msra.mxu0 %v3141
    %3393 = vmatpush.msra.mxu0 %v3137
    %3394 = vmatpush.msra.mxu0 %v3133
    %3395 = vmatpush.msra.mxu0 %v3129
    %3396 = vmatpush.msra.mxu0 %v3125
    %3397 = vmatpush.msra.mxu0 %v3121
    %3398 = vmatpush.msra.mxu0 %v3117
    %3399 = vmatpush.msra.mxu0 %v3113
    %3400 = vmatpush.msra.mxu0 %v3109
    %3401 = vmatpush.msra.mxu0 %v3105
    %3402 = vmatmul.f32.gmra.mxu0 %v2626
    %v3403 = vpop.f32.mrf.mxu0
    %v3404 = vadd.f32 %v3384, %v3403
    %3405 = vdwg.mxu0
    %v3406 = vxor.u32 %v3224, 2147483648
    %v3407 = vmul.f32 %v3406, 1.442695
    %v3408 = vpow.pop %v3407
    %v3409 = vadd.f32 %v3408, 1.0
    %v3410 = vrcp.pop %v3409
    %v3411 = vmul.f32 %v3409, %v3410
    %v3412 = vsub.f32 1.0, %v3411
    %v3413 = vmul.f32 %v3410, %v3412
    %v3414 = vadd.f32 %v3410, %v3413
    %vm3415 = vweird.f32 %v3409
    %vm3416 = vweird.f32 %v3410
    %vm3417 = vmor %vm3415, %vm3416
    %v3418 = vsel %vm3417, %v3410, %v3414
    %v3419 = vand.u32 2147483647, %v3409
    %vm3420 = vcmp.eq.f32.partialorder %v3419, 8.507059e+37
    %v3421 = vand.u32 %v3409, 2147483648
    %v3422 = vor.u32 1.1754944e-38, %v3421
    %v3423 = vsel %vm3420, %v3422, %v3418
    %v3424 = vmul.f32 1.0, %v3423
    %v3425 = vxor.u32 %v3284, 2147483648
    %v3426 = vmul.f32 %v3425, 1.442695
    %v3427 = vpow.pop %v3426
    %v3428 = vadd.f32 %v3427, 1.0
    %v3429 = vrcp.pop %v3428
    %v3430 = vmul.f32 %v3428, %v3429
    %v3431 = vsub.f32 1.0, %v3430
    %v3432 = vmul.f32 %v3429, %v3431
    %v3433 = vadd.f32 %v3429, %v3432
    %vm3434 = vweird.f32 %v3428
    %vm3435 = vweird.f32 %v3429
    %vm3436 = vmor %vm3434, %vm3435
    %v3437 = vsel %vm3436, %v3429, %v3433
    %v3438 = vand.u32 2147483647, %v3428
    %vm3439 = vcmp.eq.f32.partialorder %v3438, 8.507059e+37
    %v3440 = vand.u32 %v3428, 2147483648
    %v3441 = vor.u32 1.1754944e-38, %v3440
    %v3442 = vsel %vm3439, %v3441, %v3437
    %v3443 = vmul.f32 1.0, %v3442
    %v3444 = vtanh.pop %v3344
    %v3445 = vxor.u32 %v3404, 2147483648
    %v3446 = vmul.f32 %v3445, 1.442695
    %v3447 = vpow.pop %v3446
    %v3448 = vadd.f32 %v3447, 1.0
    %v3449 = vrcp.pop %v3448
    %v3450 = vmul.f32 %v3448, %v3449
    %v3451 = vsub.f32 1.0, %v3450
    %v3452 = vmul.f32 %v3449, %v3451
    %v3453 = vadd.f32 %v3449, %v3452
    %vm3454 = vweird.f32 %v3448
    %vm3455 = vweird.f32 %v3449
    %vm3456 = vmor %vm3454, %vm3455
    %v3457 = vsel %vm3456, %v3449, %v3453
    %v3458 = vand.u32 2147483647, %v3448
    %vm3459 = vcmp.eq.f32.partialorder %v3458, 8.507059e+37
    %v3460 = vand.u32 %v3448, 2147483648
    %v3461 = vor.u32 1.1754944e-38, %v3460
    %v3462 = vsel %vm3459, %v3461, %v3457
    %v3463 = vmul.f32 1.0, %v3462
    %v3464 = vmul.f32 %v3443, %v2624
    %v3465 = vmul.f32 %v3424, %v3444
    %v3466 = vadd.f32 %v3464, %v3465
    %v3467 = vtanh.pop %v3466
    %v3468 = vmul.f32 %v3463, %v3467
    %v3469 = vld [vmem:[#allocation11] sm:$0xff]
    %v3470 = vld [vmem:[#allocation11 + $0x8] sm:$0xff]
    %v3471 = vld [vmem:[#allocation11 + $0x10] sm:$0xff]
    %v3472 = vld [vmem:[#allocation11 + $0x18] sm:$0xff]
    %v3473 = vld [vmem:[#allocation11 + $0x20] sm:$0xff]
    %v3474 = vld [vmem:[#allocation11 + $0x28] sm:$0xff]
    %v3475 = vld [vmem:[#allocation11 + $0x30] sm:$0xff]
    %v3476 = vld [vmem:[#allocation11 + $0x38] sm:$0xff]
    %v3477 = vld [vmem:[#allocation11 + $0x40] sm:$0xff]
    %v3478 = vld [vmem:[#allocation11 + $0x48] sm:$0xff]
    %v3479 = vld [vmem:[#allocation11 + $0x50] sm:$0xff]
    %v3480 = vld [vmem:[#allocation11 + $0x58] sm:$0xff]
    %v3481 = vld [vmem:[#allocation11 + $0x60] sm:$0xff]
    %v3482 = vld [vmem:[#allocation11 + $0x68] sm:$0xff]
    %v3483 = vld [vmem:[#allocation11 + $0x70] sm:$0xff]
    %v3484 = vld [vmem:[#allocation11 + $0x78] sm:$0xff]
    %v3485 = vld [vmem:[#allocation11 + $0x80] sm:$0xff]
    %v3486 = vld [vmem:[#allocation11 + $0x88] sm:$0xff]
    %v3487 = vld [vmem:[#allocation11 + $0x90] sm:$0xff]
    %v3488 = vld [vmem:[#allocation11 + $0x98] sm:$0xff]
    %v3489 = vld [vmem:[#allocation11 + $0xa0] sm:$0xff]
    %v3490 = vld [vmem:[#allocation11 + $0xa8] sm:$0xff]
    %v3491 = vld [vmem:[#allocation11 + $0xb0] sm:$0xff]
    %v3492 = vld [vmem:[#allocation11 + $0xb8] sm:$0xff]
    %v3493 = vld [vmem:[#allocation11 + $0xc0] sm:$0xff]
    %v3494 = vld [vmem:[#allocation11 + $0xc8] sm:$0xff]
    %v3495 = vld [vmem:[#allocation11 + $0xd0] sm:$0xff]
    %v3496 = vld [vmem:[#allocation11 + $0xd8] sm:$0xff]
    %v3497 = vld [vmem:[#allocation11 + $0xe0] sm:$0xff]
    %v3498 = vld [vmem:[#allocation11 + $0xe8] sm:$0xff]
    %v3499 = vld [vmem:[#allocation11 + $0xf0] sm:$0xff]
    %v3500 = vld [vmem:[#allocation11 + $0xf8] sm:$0xff]
    %v3501 = vld [vmem:[#allocation11 + $0x100] sm:$0xff]
    %v3502 = vld [vmem:[#allocation11 + $0x108] sm:$0xff]
    %v3503 = vld [vmem:[#allocation11 + $0x110] sm:$0xff]
    %v3504 = vld [vmem:[#allocation11 + $0x118] sm:$0xff]
    %v3505 = vld [vmem:[#allocation11 + $0x120] sm:$0xff]
    %v3506 = vld [vmem:[#allocation11 + $0x128] sm:$0xff]
    %v3507 = vld [vmem:[#allocation11 + $0x130] sm:$0xff]
    %v3508 = vld [vmem:[#allocation11 + $0x138] sm:$0xff]
    %v3509 = vld [vmem:[#allocation11 + $0x140] sm:$0xff]
    %v3510 = vld [vmem:[#allocation11 + $0x148] sm:$0xff]
    %v3511 = vld [vmem:[#allocation11 + $0x150] sm:$0xff]
    %v3512 = vld [vmem:[#allocation11 + $0x158] sm:$0xff]
    %v3513 = vld [vmem:[#allocation11 + $0x160] sm:$0xff]
    %v3514 = vld [vmem:[#allocation11 + $0x168] sm:$0xff]
    %v3515 = vld [vmem:[#allocation11 + $0x170] sm:$0xff]
    %v3516 = vld [vmem:[#allocation11 + $0x178] sm:$0xff]
    %v3517 = vld [vmem:[#allocation11 + $0x180] sm:$0xff]
    %v3518 = vld [vmem:[#allocation11 + $0x188] sm:$0xff]
    %v3519 = vld [vmem:[#allocation11 + $0x190] sm:$0xff]
    %v3520 = vld [vmem:[#allocation11 + $0x198] sm:$0xff]
    %v3521 = vld [vmem:[#allocation11 + $0x1a0] sm:$0xff]
    %v3522 = vld [vmem:[#allocation11 + $0x1a8] sm:$0xff]
    %v3523 = vld [vmem:[#allocation11 + $0x1b0] sm:$0xff]
    %v3524 = vld [vmem:[#allocation11 + $0x1b8] sm:$0xff]
    %v3525 = vld [vmem:[#allocation11 + $0x1c0] sm:$0xff]
    %v3526 = vld [vmem:[#allocation11 + $0x1c8] sm:$0xff]
    %v3527 = vld [vmem:[#allocation11 + $0x1d0] sm:$0xff]
    %v3528 = vld [vmem:[#allocation11 + $0x1d8] sm:$0xff]
    %v3529 = vld [vmem:[#allocation11 + $0x1e0] sm:$0xff]
    %v3530 = vld [vmem:[#allocation11 + $0x1e8] sm:$0xff]
    %v3531 = vld [vmem:[#allocation11 + $0x1f0] sm:$0xff]
    %v3532 = vld [vmem:[#allocation11 + $0x1f8] sm:$0xff]
    %v3533 = vld [vmem:[#allocation11 + $0x200] sm:$0xff]
    %v3534 = vld [vmem:[#allocation11 + $0x208] sm:$0xff]
    %v3535 = vld [vmem:[#allocation11 + $0x210] sm:$0xff]
    %v3536 = vld [vmem:[#allocation11 + $0x218] sm:$0xff]
    %v3537 = vld [vmem:[#allocation11 + $0x220] sm:$0xff]
    %v3538 = vld [vmem:[#allocation11 + $0x228] sm:$0xff]
    %v3539 = vld [vmem:[#allocation11 + $0x230] sm:$0xff]
    %v3540 = vld [vmem:[#allocation11 + $0x238] sm:$0xff]
    %v3541 = vld [vmem:[#allocation11 + $0x240] sm:$0xff]
    %v3542 = vld [vmem:[#allocation11 + $0x248] sm:$0xff]
    %v3543 = vld [vmem:[#allocation11 + $0x250] sm:$0xff]
    %v3544 = vld [vmem:[#allocation11 + $0x258] sm:$0xff]
    %v3545 = vld [vmem:[#allocation11 + $0x260] sm:$0xff]
    %v3546 = vld [vmem:[#allocation11 + $0x268] sm:$0xff]
    %v3547 = vld [vmem:[#allocation11 + $0x270] sm:$0xff]
    %v3548 = vld [vmem:[#allocation11 + $0x278] sm:$0xff]
    %v3549 = vld [vmem:[#allocation11 + $0x280] sm:$0xff]
    %v3550 = vld [vmem:[#allocation11 + $0x288] sm:$0xff]
    %v3551 = vld [vmem:[#allocation11 + $0x290] sm:$0xff]
    %v3552 = vld [vmem:[#allocation11 + $0x298] sm:$0xff]
    %v3553 = vld [vmem:[#allocation11 + $0x2a0] sm:$0xff]
    %v3554 = vld [vmem:[#allocation11 + $0x2a8] sm:$0xff]
    %v3555 = vld [vmem:[#allocation11 + $0x2b0] sm:$0xff]
    %v3556 = vld [vmem:[#allocation11 + $0x2b8] sm:$0xff]
    %v3557 = vld [vmem:[#allocation11 + $0x2c0] sm:$0xff]
    %v3558 = vld [vmem:[#allocation11 + $0x2c8] sm:$0xff]
    %v3559 = vld [vmem:[#allocation11 + $0x2d0] sm:$0xff]
    %v3560 = vld [vmem:[#allocation11 + $0x2d8] sm:$0xff]
    %v3561 = vld [vmem:[#allocation11 + $0x2e0] sm:$0xff]
    %v3562 = vld [vmem:[#allocation11 + $0x2e8] sm:$0xff]
    %v3563 = vld [vmem:[#allocation11 + $0x2f0] sm:$0xff]
    %v3564 = vld [vmem:[#allocation11 + $0x2f8] sm:$0xff]
    %3565 = vmatpush.msra.mxu0 %v3499
    %3566 = vmatpush.msra.mxu0 %v3497
    %3567 = vmatpush.msra.mxu0 %v3495
    %3568 = vmatpush.msra.mxu0 %v3493
    %3569 = vmatpush.msra.mxu0 %v3491
    %3570 = vmatpush.msra.mxu0 %v3489
    %3571 = vmatpush.msra.mxu0 %v3487
    %3572 = vmatpush.msra.mxu0 %v3485
    %3573 = vmatpush.msra.mxu0 %v3483
    %3574 = vmatpush.msra.mxu0 %v3481
    %3575 = vmatpush.msra.mxu0 %v3479
    %3576 = vmatpush.msra.mxu0 %v3477
    %3577 = vmatpush.msra.mxu0 %v3475
    %3578 = vmatpush.msra.mxu0 %v3473
    %3579 = vmatpush.msra.mxu0 %v3471
    %3580 = vmatpush.msra.mxu0 %v3469
    %3581 = vmatmul.f32.gmra.mxu0 %v2972
    %v3582 = vpop.f32.mrf.mxu0
    %v3583 = vadd.f32 %v1035, %v3582
    %3584 = vdwg.mxu0
    %3585 = vmatpush.msra.mxu0 %v3531
    %3586 = vmatpush.msra.mxu0 %v3529
    %3587 = vmatpush.msra.mxu0 %v3527
    %3588 = vmatpush.msra.mxu0 %v3525
    %3589 = vmatpush.msra.mxu0 %v3523
    %3590 = vmatpush.msra.mxu0 %v3521
    %3591 = vmatpush.msra.mxu0 %v3519
    %3592 = vmatpush.msra.mxu0 %v3517
    %3593 = vmatpush.msra.mxu0 %v3515
    %3594 = vmatpush.msra.mxu0 %v3513
    %3595 = vmatpush.msra.mxu0 %v3511
    %3596 = vmatpush.msra.mxu0 %v3509
    %3597 = vmatpush.msra.mxu0 %v3507
    %3598 = vmatpush.msra.mxu0 %v3505
    %3599 = vmatpush.msra.mxu0 %v3503
    %3600 = vmatpush.msra.mxu0 %v3501
    %3601 = vmatmul.f32.gmra.mxu0 %v2844
    %v3602 = vpop.f32.mrf.mxu0
    %v3603 = vadd.f32 %v3583, %v3602
    %3604 = vdwg.mxu0
    %3605 = vmatpush.msra.mxu0 %v3563
    %3606 = vmatpush.msra.mxu0 %v3561
    %3607 = vmatpush.msra.mxu0 %v3559
    %3608 = vmatpush.msra.mxu0 %v3557
    %3609 = vmatpush.msra.mxu0 %v3555
    %3610 = vmatpush.msra.mxu0 %v3553
    %3611 = vmatpush.msra.mxu0 %v3551
    %3612 = vmatpush.msra.mxu0 %v3549
    %3613 = vmatpush.msra.mxu0 %v3547
    %3614 = vmatpush.msra.mxu0 %v3545
    %3615 = vmatpush.msra.mxu0 %v3543
    %3616 = vmatpush.msra.mxu0 %v3541
    %3617 = vmatpush.msra.mxu0 %v3539
    %3618 = vmatpush.msra.mxu0 %v3537
    %3619 = vmatpush.msra.mxu0 %v3535
    %3620 = vmatpush.msra.mxu0 %v3533
    %3621 = vmatmul.f32.gmra.mxu0 %v3468
    %v3622 = vpop.f32.mrf.mxu0
    %v3623 = vadd.f32 %v3603, %v3622
    %3624 = vdwg.mxu0
    %3625 = vmatpush.msra.mxu0 %v3500
    %3626 = vmatpush.msra.mxu0 %v3498
    %3627 = vmatpush.msra.mxu0 %v3496
    %3628 = vmatpush.msra.mxu0 %v3494
    %3629 = vmatpush.msra.mxu0 %v3492
    %3630 = vmatpush.msra.mxu0 %v3490
    %3631 = vmatpush.msra.mxu0 %v3488
    %3632 = vmatpush.msra.mxu0 %v3486
    %3633 = vmatpush.msra.mxu0 %v3484
    %3634 = vmatpush.msra.mxu0 %v3482
    %3635 = vmatpush.msra.mxu0 %v3480
    %3636 = vmatpush.msra.mxu0 %v3478
    %3637 = vmatpush.msra.mxu0 %v3476
    %3638 = vmatpush.msra.mxu0 %v3474
    %3639 = vmatpush.msra.mxu0 %v3472
    %3640 = vmatpush.msra.mxu0 %v3470
    %3641 = vmatmul.f32.gmra.mxu0 %v2972
    %v3642 = vpop.f32.mrf.mxu0
    %v3643 = vadd.f32 %v1036, %v3642
    %3644 = vdwg.mxu0
    %3645 = vmatpush.msra.mxu0 %v3532
    %3646 = vmatpush.msra.mxu0 %v3530
    %3647 = vmatpush.msra.mxu0 %v3528
    %3648 = vmatpush.msra.mxu0 %v3526
    %3649 = vmatpush.msra.mxu0 %v3524
    %3650 = vmatpush.msra.mxu0 %v3522
    %3651 = vmatpush.msra.mxu0 %v3520
    %3652 = vmatpush.msra.mxu0 %v3518
    %3653 = vmatpush.msra.mxu0 %v3516
    %3654 = vmatpush.msra.mxu0 %v3514
    %3655 = vmatpush.msra.mxu0 %v3512
    %3656 = vmatpush.msra.mxu0 %v3510
    %3657 = vmatpush.msra.mxu0 %v3508
    %3658 = vmatpush.msra.mxu0 %v3506
    %3659 = vmatpush.msra.mxu0 %v3504
    %3660 = vmatpush.msra.mxu0 %v3502
    %3661 = vmatmul.f32.gmra.mxu0 %v2844
    %v3662 = vpop.f32.mrf.mxu0
    %v3663 = vadd.f32 %v3643, %v3662
    %3664 = vdwg.mxu0
    %3665 = vmatpush.msra.mxu0 %v3564
    %3666 = vmatpush.msra.mxu0 %v3562
    %3667 = vmatpush.msra.mxu0 %v3560
    %3668 = vmatpush.msra.mxu0 %v3558
    %3669 = vmatpush.msra.mxu0 %v3556
    %3670 = vmatpush.msra.mxu0 %v3554
    %3671 = vmatpush.msra.mxu0 %v3552
    %3672 = vmatpush.msra.mxu0 %v3550
    %3673 = vmatpush.msra.mxu0 %v3548
    %3674 = vmatpush.msra.mxu0 %v3546
    %3675 = vmatpush.msra.mxu0 %v3544
    %3676 = vmatpush.msra.mxu0 %v3542
    %3677 = vmatpush.msra.mxu0 %v3540
    %3678 = vmatpush.msra.mxu0 %v3538
    %3679 = vmatpush.msra.mxu0 %v3536
    %3680 = vmatpush.msra.mxu0 %v3534
    %3681 = vmatmul.f32.gmra.mxu0 %v3468
    %v3682 = vpop.f32.mrf.mxu0
    %v3683 = vadd.f32 %v3663, %v3682
    %3684 = vdwg.mxu0
    %s3685 = scalar_lea.vmem [#allocation5], 8
    %v3686 = vld [vmem:[%s3685] sm:$0x3]
    %v3688 = vrot.slane %v3468, 1
    %3690 = vmatpush.xpose.msra.mxu0 0.0
    %3691 = vmatpush.xpose.msra.mxu0 0.0
    %3692 = vmatpush.xpose.msra.mxu0 0.0
    %3693 = vmatpush.xpose.msra.mxu0 0.0
    %3694 = vmatpush.xpose.msra.mxu0 0.0
    %3695 = vmatpush.xpose.msra.mxu0 0.0
    %3696 = vmatpush.xpose.msra.mxu0 0.0
    %3697 = vmatpush.xpose.msra.mxu0 0.0
    %3698 = vmatpush.xpose.msra.mxu0 0.0
    %3699 = vmatpush.xpose.msra.mxu0 0.0
    %3700 = vmatpush.xpose.msra.mxu0 0.0
    %3701 = vmatpush.xpose.msra.mxu0 0.0
    %3702 = vmatpush.xpose.msra.mxu0 0.0
    %3703 = vmatpush.xpose.msra.mxu0 0.0
    %3704 = vmatpush.xpose.msra.mxu0 %v290
    %3705 = vmatpush.xpose.msra.mxu0 %v287
    %3706 = vmatmul.f32.gmra.mxu0 %v3468
    %v3707 = vpop.f32.mrf.mxu0
    %v3708 = vadd.f32 0.0, %v3707
    %3709 = vdwg.mxu0
    %3710 = vmatpush.xpose.msra.mxu0 0.0
    %3711 = vmatpush.xpose.msra.mxu0 0.0
    %3712 = vmatpush.xpose.msra.mxu0 0.0
    %3713 = vmatpush.xpose.msra.mxu0 0.0
    %3714 = vmatpush.xpose.msra.mxu0 0.0
    %3715 = vmatpush.xpose.msra.mxu0 0.0
    %3716 = vmatpush.xpose.msra.mxu0 0.0
    %3717 = vmatpush.xpose.msra.mxu0 0.0
    %3718 = vmatpush.xpose.msra.mxu0 0.0
    %3719 = vmatpush.xpose.msra.mxu0 0.0
    %3720 = vmatpush.xpose.msra.mxu0 0.0
    %3721 = vmatpush.xpose.msra.mxu0 0.0
    %3722 = vmatpush.xpose.msra.mxu0 0.0
    %3723 = vmatpush.xpose.msra.mxu0 0.0
    %3724 = vmatpush.xpose.msra.mxu0 %v296
    %3725 = vmatpush.xpose.msra.mxu0 %v293
    %3726 = vmatmul.f32.gmra.mxu0 %v3688
    %v3727 = vpop.f32.mrf.mxu0
    %v3728 = vadd.f32 0.0, %v3727
    %3729 = vdwg.mxu0
    %v3730 = vmul.f32 %v3708, 0.088388346
    %v3731 = vmul.f32 %v3728, 0.088388346
    %v3734 = vrot.slane %v3731, 7
    %v3735 = vsel %vm154, %v3734, %v3730
    %v3737 = vsel %vm353, %v3735, -inf
    %3738 = vmax.xlane.f32.xlu0 %v3737
    %v3739 = vpop.xlane.xlu0 %3738
    %v3741 = vrot.slane %v3739, 1
    %v3744 = vsub.f32 %v3730, %v3739
    %v3745 = vsub.f32 %v3731, %v3741
    %v3746 = vmul.f32 %v3744, 1.442695
    %v3747 = vpow.pop %v3746
    %v3748 = vmul.f32 %v3745, 1.442695
    %v3749 = vpow.pop %v3748
    %v3752 = vrot.slane %v3749, 7
    %v3753 = vsel %vm154, %v3752, %v3747
    %v3755 = vsel %vm353, %v3753, 0.0
    %3756 = vadd.xlane.f32.xlu0 %v3755
    %v3757 = vpop.xlane.xlu0 %3756
    %v3758 = vrcp.pop %v3757
    %v3760 = vrot.slane %v3758, 1
    %v3763 = vmul.f32 %v3747, %v3758
    %v3764 = vmul.f32 %v3749, %v3760
    %v3766 = vsel %vm382, %v3763, 0
    %3768 = vmatpush.msra.mxu0 0.0
    %3769 = vmatpush.msra.mxu0 0.0
    %3770 = vmatpush.msra.mxu0 0.0
    %3771 = vmatpush.msra.mxu0 0.0
    %3772 = vmatpush.msra.mxu0 0.0
    %3773 = vmatpush.msra.mxu0 0.0
    %3774 = vmatpush.msra.mxu0 0.0
    %3775 = vmatpush.msra.mxu0 0.0
    %3776 = vmatpush.msra.mxu0 0.0
    %3777 = vmatpush.msra.mxu0 0.0
    %3778 = vmatpush.msra.mxu0 0.0
    %3779 = vmatpush.msra.mxu0 0.0
    %3780 = vmatpush.msra.mxu0 0.0
    %3781 = vmatpush.msra.mxu0 0.0
    %3782 = vmatpush.msra.mxu0 %v126
    %3783 = vmatpush.msra.mxu0 %v125
    %3784 = vmatmul.f32.gmra.mxu0 %v3766
    %v3785 = vpop.f32.mrf.mxu0
    %v3786 = vadd.f32 0.0, %v3785
    %3787 = vdwg.mxu0
    %v3789 = vsel %vm382, %v3764, 0
    %3791 = vmatpush.msra.mxu0 0.0
    %3792 = vmatpush.msra.mxu0 0.0
    %3793 = vmatpush.msra.mxu0 0.0
    %3794 = vmatpush.msra.mxu0 0.0
    %3795 = vmatpush.msra.mxu0 0.0
    %3796 = vmatpush.msra.mxu0 0.0
    %3797 = vmatpush.msra.mxu0 0.0
    %3798 = vmatpush.msra.mxu0 0.0
    %3799 = vmatpush.msra.mxu0 0.0
    %3800 = vmatpush.msra.mxu0 0.0
    %3801 = vmatpush.msra.mxu0 0.0
    %3802 = vmatpush.msra.mxu0 0.0
    %3803 = vmatpush.msra.mxu0 0.0
    %3804 = vmatpush.msra.mxu0 0.0
    %3805 = vmatpush.msra.mxu0 %v128
    %3806 = vmatpush.msra.mxu0 %v127
    %3807 = vmatmul.f32.gmra.mxu0 %v3789
    %v3808 = vpop.f32.mrf.mxu0
    %v3809 = vadd.f32 0.0, %v3808
    %3810 = vdwg.mxu0
    %v3813 = vrot.slane %v3809, 7
    %v3814 = vsel %vm154, %v3813, %v3786
    %v3816 = vld [vmem:[#allocation10] sm:$0xff]
    %v3817 = vld [vmem:[#allocation10 + $0x8] sm:$0xff]
    %v3818 = vld [vmem:[#allocation10 + $0x10] sm:$0xff]
    %v3819 = vld [vmem:[#allocation10 + $0x18] sm:$0xff]
    %v3820 = vld [vmem:[#allocation10 + $0x20] sm:$0xff]
    %v3821 = vld [vmem:[#allocation10 + $0x28] sm:$0xff]
    %v3822 = vld [vmem:[#allocation10 + $0x30] sm:$0xff]
    %v3823 = vld [vmem:[#allocation10 + $0x38] sm:$0xff]
    %v3824 = vld [vmem:[#allocation10 + $0x40] sm:$0xff]
    %v3825 = vld [vmem:[#allocation10 + $0x48] sm:$0xff]
    %v3826 = vld [vmem:[#allocation10 + $0x50] sm:$0xff]
    %v3827 = vld [vmem:[#allocation10 + $0x58] sm:$0xff]
    %v3828 = vld [vmem:[#allocation10 + $0x60] sm:$0xff]
    %v3829 = vld [vmem:[#allocation10 + $0x68] sm:$0xff]
    %v3830 = vld [vmem:[#allocation10 + $0x70] sm:$0xff]
    %v3831 = vld [vmem:[#allocation10 + $0x78] sm:$0xff]
    %v3832 = vld [vmem:[#allocation10 + $0x80] sm:$0xff]
    %v3833 = vld [vmem:[#allocation10 + $0x88] sm:$0xff]
    %v3834 = vld [vmem:[#allocation10 + $0x90] sm:$0xff]
    %v3835 = vld [vmem:[#allocation10 + $0x98] sm:$0xff]
    %v3836 = vld [vmem:[#allocation10 + $0xa0] sm:$0xff]
    %v3837 = vld [vmem:[#allocation10 + $0xa8] sm:$0xff]
    %v3838 = vld [vmem:[#allocation10 + $0xb0] sm:$0xff]
    %v3839 = vld [vmem:[#allocation10 + $0xb8] sm:$0xff]
    %v3840 = vld [vmem:[#allocation10 + $0xc0] sm:$0xff]
    %v3841 = vld [vmem:[#allocation10 + $0xc8] sm:$0xff]
    %v3842 = vld [vmem:[#allocation10 + $0xd0] sm:$0xff]
    %v3843 = vld [vmem:[#allocation10 + $0xd8] sm:$0xff]
    %v3844 = vld [vmem:[#allocation10 + $0xe0] sm:$0xff]
    %v3845 = vld [vmem:[#allocation10 + $0xe8] sm:$0xff]
    %v3846 = vld [vmem:[#allocation10 + $0xf0] sm:$0xff]
    %v3847 = vld [vmem:[#allocation10 + $0xf8] sm:$0xff]
    %v3848 = vld [vmem:[#allocation10 + $0x100] sm:$0xff]
    %v3849 = vld [vmem:[#allocation10 + $0x108] sm:$0xff]
    %v3850 = vld [vmem:[#allocation10 + $0x110] sm:$0xff]
    %v3851 = vld [vmem:[#allocation10 + $0x118] sm:$0xff]
    %v3852 = vld [vmem:[#allocation10 + $0x120] sm:$0xff]
    %v3853 = vld [vmem:[#allocation10 + $0x128] sm:$0xff]
    %v3854 = vld [vmem:[#allocation10 + $0x130] sm:$0xff]
    %v3855 = vld [vmem:[#allocation10 + $0x138] sm:$0xff]
    %v3856 = vld [vmem:[#allocation10 + $0x140] sm:$0xff]
    %v3857 = vld [vmem:[#allocation10 + $0x148] sm:$0xff]
    %v3858 = vld [vmem:[#allocation10 + $0x150] sm:$0xff]
    %v3859 = vld [vmem:[#allocation10 + $0x158] sm:$0xff]
    %v3860 = vld [vmem:[#allocation10 + $0x160] sm:$0xff]
    %v3861 = vld [vmem:[#allocation10 + $0x168] sm:$0xff]
    %v3862 = vld [vmem:[#allocation10 + $0x170] sm:$0xff]
    %v3863 = vld [vmem:[#allocation10 + $0x178] sm:$0xff]
    %v3864 = vld [vmem:[#allocation10 + $0x180] sm:$0xff]
    %v3865 = vld [vmem:[#allocation10 + $0x188] sm:$0xff]
    %v3866 = vld [vmem:[#allocation10 + $0x190] sm:$0xff]
    %v3867 = vld [vmem:[#allocation10 + $0x198] sm:$0xff]
    %v3868 = vld [vmem:[#allocation10 + $0x1a0] sm:$0xff]
    %v3869 = vld [vmem:[#allocation10 + $0x1a8] sm:$0xff]
    %v3870 = vld [vmem:[#allocation10 + $0x1b0] sm:$0xff]
    %v3871 = vld [vmem:[#allocation10 + $0x1b8] sm:$0xff]
    %v3872 = vld [vmem:[#allocation10 + $0x1c0] sm:$0xff]
    %v3873 = vld [vmem:[#allocation10 + $0x1c8] sm:$0xff]
    %v3874 = vld [vmem:[#allocation10 + $0x1d0] sm:$0xff]
    %v3875 = vld [vmem:[#allocation10 + $0x1d8] sm:$0xff]
    %v3876 = vld [vmem:[#allocation10 + $0x1e0] sm:$0xff]
    %v3877 = vld [vmem:[#allocation10 + $0x1e8] sm:$0xff]
    %v3878 = vld [vmem:[#allocation10 + $0x1f0] sm:$0xff]
    %v3879 = vld [vmem:[#allocation10 + $0x1f8] sm:$0xff]
    %v3880 = vld [vmem:[#allocation10 + $0x200] sm:$0xff]
    %v3881 = vld [vmem:[#allocation10 + $0x208] sm:$0xff]
    %v3882 = vld [vmem:[#allocation10 + $0x210] sm:$0xff]
    %v3883 = vld [vmem:[#allocation10 + $0x218] sm:$0xff]
    %v3884 = vld [vmem:[#allocation10 + $0x220] sm:$0xff]
    %v3885 = vld [vmem:[#allocation10 + $0x228] sm:$0xff]
    %v3886 = vld [vmem:[#allocation10 + $0x230] sm:$0xff]
    %v3887 = vld [vmem:[#allocation10 + $0x238] sm:$0xff]
    %v3888 = vld [vmem:[#allocation10 + $0x240] sm:$0xff]
    %v3889 = vld [vmem:[#allocation10 + $0x248] sm:$0xff]
    %v3890 = vld [vmem:[#allocation10 + $0x250] sm:$0xff]
    %v3891 = vld [vmem:[#allocation10 + $0x258] sm:$0xff]
    %v3892 = vld [vmem:[#allocation10 + $0x260] sm:$0xff]
    %v3893 = vld [vmem:[#allocation10 + $0x268] sm:$0xff]
    %v3894 = vld [vmem:[#allocation10 + $0x270] sm:$0xff]
    %v3895 = vld [vmem:[#allocation10 + $0x278] sm:$0xff]
    %v3896 = vld [vmem:[#allocation10 + $0x280] sm:$0xff]
    %v3897 = vld [vmem:[#allocation10 + $0x288] sm:$0xff]
    %v3898 = vld [vmem:[#allocation10 + $0x290] sm:$0xff]
    %v3899 = vld [vmem:[#allocation10 + $0x298] sm:$0xff]
    %v3900 = vld [vmem:[#allocation10 + $0x2a0] sm:$0xff]
    %v3901 = vld [vmem:[#allocation10 + $0x2a8] sm:$0xff]
    %v3902 = vld [vmem:[#allocation10 + $0x2b0] sm:$0xff]
    %v3903 = vld [vmem:[#allocation10 + $0x2b8] sm:$0xff]
    %v3904 = vld [vmem:[#allocation10 + $0x2c0] sm:$0xff]
    %v3905 = vld [vmem:[#allocation10 + $0x2c8] sm:$0xff]
    %v3906 = vld [vmem:[#allocation10 + $0x2d0] sm:$0xff]
    %v3907 = vld [vmem:[#allocation10 + $0x2d8] sm:$0xff]
    %v3908 = vld [vmem:[#allocation10 + $0x2e0] sm:$0xff]
    %v3909 = vld [vmem:[#allocation10 + $0x2e8] sm:$0xff]
    %v3910 = vld [vmem:[#allocation10 + $0x2f0] sm:$0xff]
    %v3911 = vld [vmem:[#allocation10 + $0x2f8] sm:$0xff]
    %v3912 = vld [vmem:[#allocation10 + $0x300] sm:$0xff]
    %v3913 = vld [vmem:[#allocation10 + $0x308] sm:$0xff]
    %v3914 = vld [vmem:[#allocation10 + $0x310] sm:$0xff]
    %v3915 = vld [vmem:[#allocation10 + $0x318] sm:$0xff]
    %v3916 = vld [vmem:[#allocation10 + $0x320] sm:$0xff]
    %v3917 = vld [vmem:[#allocation10 + $0x328] sm:$0xff]
    %v3918 = vld [vmem:[#allocation10 + $0x330] sm:$0xff]
    %v3919 = vld [vmem:[#allocation10 + $0x338] sm:$0xff]
    %v3920 = vld [vmem:[#allocation10 + $0x340] sm:$0xff]
    %v3921 = vld [vmem:[#allocation10 + $0x348] sm:$0xff]
    %v3922 = vld [vmem:[#allocation10 + $0x350] sm:$0xff]
    %v3923 = vld [vmem:[#allocation10 + $0x358] sm:$0xff]
    %v3924 = vld [vmem:[#allocation10 + $0x360] sm:$0xff]
    %v3925 = vld [vmem:[#allocation10 + $0x368] sm:$0xff]
    %v3926 = vld [vmem:[#allocation10 + $0x370] sm:$0xff]
    %v3927 = vld [vmem:[#allocation10 + $0x378] sm:$0xff]
    %v3928 = vld [vmem:[#allocation10 + $0x380] sm:$0xff]
    %v3929 = vld [vmem:[#allocation10 + $0x388] sm:$0xff]
    %v3930 = vld [vmem:[#allocation10 + $0x390] sm:$0xff]
    %v3931 = vld [vmem:[#allocation10 + $0x398] sm:$0xff]
    %v3932 = vld [vmem:[#allocation10 + $0x3a0] sm:$0xff]
    %v3933 = vld [vmem:[#allocation10 + $0x3a8] sm:$0xff]
    %v3934 = vld [vmem:[#allocation10 + $0x3b0] sm:$0xff]
    %v3935 = vld [vmem:[#allocation10 + $0x3b8] sm:$0xff]
    %v3936 = vld [vmem:[#allocation10 + $0x3c0] sm:$0xff]
    %v3937 = vld [vmem:[#allocation10 + $0x3c8] sm:$0xff]
    %v3938 = vld [vmem:[#allocation10 + $0x3d0] sm:$0xff]
    %v3939 = vld [vmem:[#allocation10 + $0x3d8] sm:$0xff]
    %v3940 = vld [vmem:[#allocation10 + $0x3e0] sm:$0xff]
    %v3941 = vld [vmem:[#allocation10 + $0x3e8] sm:$0xff]
    %v3942 = vld [vmem:[#allocation10 + $0x3f0] sm:$0xff]
    %v3943 = vld [vmem:[#allocation10 + $0x3f8] sm:$0xff]
    %v3944 = vld [vmem:[#allocation10 + $0x400] sm:$0xff]
    %v3945 = vld [vmem:[#allocation10 + $0x408] sm:$0xff]
    %v3946 = vld [vmem:[#allocation10 + $0x410] sm:$0xff]
    %v3947 = vld [vmem:[#allocation10 + $0x418] sm:$0xff]
    %v3948 = vld [vmem:[#allocation10 + $0x420] sm:$0xff]
    %v3949 = vld [vmem:[#allocation10 + $0x428] sm:$0xff]
    %v3950 = vld [vmem:[#allocation10 + $0x430] sm:$0xff]
    %v3951 = vld [vmem:[#allocation10 + $0x438] sm:$0xff]
    %v3952 = vld [vmem:[#allocation10 + $0x440] sm:$0xff]
    %v3953 = vld [vmem:[#allocation10 + $0x448] sm:$0xff]
    %v3954 = vld [vmem:[#allocation10 + $0x450] sm:$0xff]
    %v3955 = vld [vmem:[#allocation10 + $0x458] sm:$0xff]
    %v3956 = vld [vmem:[#allocation10 + $0x460] sm:$0xff]
    %v3957 = vld [vmem:[#allocation10 + $0x468] sm:$0xff]
    %v3958 = vld [vmem:[#allocation10 + $0x470] sm:$0xff]
    %v3959 = vld [vmem:[#allocation10 + $0x478] sm:$0xff]
    %v3960 = vld [vmem:[#allocation10 + $0x480] sm:$0xff]
    %v3961 = vld [vmem:[#allocation10 + $0x488] sm:$0xff]
    %v3962 = vld [vmem:[#allocation10 + $0x490] sm:$0xff]
    %v3963 = vld [vmem:[#allocation10 + $0x498] sm:$0xff]
    %v3964 = vld [vmem:[#allocation10 + $0x4a0] sm:$0xff]
    %v3965 = vld [vmem:[#allocation10 + $0x4a8] sm:$0xff]
    %v3966 = vld [vmem:[#allocation10 + $0x4b0] sm:$0xff]
    %v3967 = vld [vmem:[#allocation10 + $0x4b8] sm:$0xff]
    %v3968 = vld [vmem:[#allocation10 + $0x4c0] sm:$0xff]
    %v3969 = vld [vmem:[#allocation10 + $0x4c8] sm:$0xff]
    %v3970 = vld [vmem:[#allocation10 + $0x4d0] sm:$0xff]
    %v3971 = vld [vmem:[#allocation10 + $0x4d8] sm:$0xff]
    %v3972 = vld [vmem:[#allocation10 + $0x4e0] sm:$0xff]
    %v3973 = vld [vmem:[#allocation10 + $0x4e8] sm:$0xff]
    %v3974 = vld [vmem:[#allocation10 + $0x4f0] sm:$0xff]
    %v3975 = vld [vmem:[#allocation10 + $0x4f8] sm:$0xff]
    %v3976 = vld [vmem:[#allocation10 + $0x500] sm:$0xff]
    %v3977 = vld [vmem:[#allocation10 + $0x508] sm:$0xff]
    %v3978 = vld [vmem:[#allocation10 + $0x510] sm:$0xff]
    %v3979 = vld [vmem:[#allocation10 + $0x518] sm:$0xff]
    %v3980 = vld [vmem:[#allocation10 + $0x520] sm:$0xff]
    %v3981 = vld [vmem:[#allocation10 + $0x528] sm:$0xff]
    %v3982 = vld [vmem:[#allocation10 + $0x530] sm:$0xff]
    %v3983 = vld [vmem:[#allocation10 + $0x538] sm:$0xff]
    %v3984 = vld [vmem:[#allocation10 + $0x540] sm:$0xff]
    %v3985 = vld [vmem:[#allocation10 + $0x548] sm:$0xff]
    %v3986 = vld [vmem:[#allocation10 + $0x550] sm:$0xff]
    %v3987 = vld [vmem:[#allocation10 + $0x558] sm:$0xff]
    %v3988 = vld [vmem:[#allocation10 + $0x560] sm:$0xff]
    %v3989 = vld [vmem:[#allocation10 + $0x568] sm:$0xff]
    %v3990 = vld [vmem:[#allocation10 + $0x570] sm:$0xff]
    %v3991 = vld [vmem:[#allocation10 + $0x578] sm:$0xff]
    %v3992 = vld [vmem:[#allocation10 + $0x580] sm:$0xff]
    %v3993 = vld [vmem:[#allocation10 + $0x588] sm:$0xff]
    %v3994 = vld [vmem:[#allocation10 + $0x590] sm:$0xff]
    %v3995 = vld [vmem:[#allocation10 + $0x598] sm:$0xff]
    %v3996 = vld [vmem:[#allocation10 + $0x5a0] sm:$0xff]
    %v3997 = vld [vmem:[#allocation10 + $0x5a8] sm:$0xff]
    %v3998 = vld [vmem:[#allocation10 + $0x5b0] sm:$0xff]
    %v3999 = vld [vmem:[#allocation10 + $0x5b8] sm:$0xff]
    %v4000 = vld [vmem:[#allocation10 + $0x5c0] sm:$0xff]
    %v4001 = vld [vmem:[#allocation10 + $0x5c8] sm:$0xff]
    %v4002 = vld [vmem:[#allocation10 + $0x5d0] sm:$0xff]
    %v4003 = vld [vmem:[#allocation10 + $0x5d8] sm:$0xff]
    %v4004 = vld [vmem:[#allocation10 + $0x5e0] sm:$0xff]
    %v4005 = vld [vmem:[#allocation10 + $0x5e8] sm:$0xff]
    %v4006 = vld [vmem:[#allocation10 + $0x5f0] sm:$0xff]
    %v4007 = vld [vmem:[#allocation10 + $0x5f8] sm:$0xff]
    %4008 = vmatpush.msra.mxu0 %v3876
    %4009 = vmatpush.msra.mxu0 %v3872
    %4010 = vmatpush.msra.mxu0 %v3868
    %4011 = vmatpush.msra.mxu0 %v3864
    %4012 = vmatpush.msra.mxu0 %v3860
    %4013 = vmatpush.msra.mxu0 %v3856
    %4014 = vmatpush.msra.mxu0 %v3852
    %4015 = vmatpush.msra.mxu0 %v3848
    %4016 = vmatpush.msra.mxu0 %v3844
    %4017 = vmatpush.msra.mxu0 %v3840
    %4018 = vmatpush.msra.mxu0 %v3836
    %4019 = vmatpush.msra.mxu0 %v3832
    %4020 = vmatpush.msra.mxu0 %v3828
    %4021 = vmatpush.msra.mxu0 %v3824
    %4022 = vmatpush.msra.mxu0 %v3820
    %4023 = vmatpush.msra.mxu0 %v3816
    %4024 = vmatmul.f32.gmra.mxu0 %v3686
    %v4025 = vpop.f32.mrf.mxu0
    %v4026 = vadd.f32 %v627, %v4025
    %4027 = vdwg.mxu0
    %4028 = vmatpush.msra.mxu0 %v3940
    %4029 = vmatpush.msra.mxu0 %v3936
    %4030 = vmatpush.msra.mxu0 %v3932
    %4031 = vmatpush.msra.mxu0 %v3928
    %4032 = vmatpush.msra.mxu0 %v3924
    %4033 = vmatpush.msra.mxu0 %v3920
    %4034 = vmatpush.msra.mxu0 %v3916
    %4035 = vmatpush.msra.mxu0 %v3912
    %4036 = vmatpush.msra.mxu0 %v3908
    %4037 = vmatpush.msra.mxu0 %v3904
    %4038 = vmatpush.msra.mxu0 %v3900
    %4039 = vmatpush.msra.mxu0 %v3896
    %4040 = vmatpush.msra.mxu0 %v3892
    %4041 = vmatpush.msra.mxu0 %v3888
    %4042 = vmatpush.msra.mxu0 %v3884
    %4043 = vmatpush.msra.mxu0 %v3880
    %4044 = vmatmul.f32.gmra.mxu0 %v3814
    %v4045 = vpop.f32.mrf.mxu0
    %v4046 = vadd.f32 %v4026, %v4045
    %4047 = vdwg.mxu0
    %4048 = vmatpush.msra.mxu0 %v4004
    %4049 = vmatpush.msra.mxu0 %v4000
    %4050 = vmatpush.msra.mxu0 %v3996
    %4051 = vmatpush.msra.mxu0 %v3992
    %4052 = vmatpush.msra.mxu0 %v3988
    %4053 = vmatpush.msra.mxu0 %v3984
    %4054 = vmatpush.msra.mxu0 %v3980
    %4055 = vmatpush.msra.mxu0 %v3976
    %4056 = vmatpush.msra.mxu0 %v3972
    %4057 = vmatpush.msra.mxu0 %v3968
    %4058 = vmatpush.msra.mxu0 %v3964
    %4059 = vmatpush.msra.mxu0 %v3960
    %4060 = vmatpush.msra.mxu0 %v3956
    %4061 = vmatpush.msra.mxu0 %v3952
    %4062 = vmatpush.msra.mxu0 %v3948
    %4063 = vmatpush.msra.mxu0 %v3944
    %4064 = vmatmul.f32.gmra.mxu0 %v3468
    %v4065 = vpop.f32.mrf.mxu0
    %v4066 = vadd.f32 %v4046, %v4065
    %4067 = vdwg.mxu0
    %4068 = vmatpush.msra.mxu0 %v3877
    %4069 = vmatpush.msra.mxu0 %v3873
    %4070 = vmatpush.msra.mxu0 %v3869
    %4071 = vmatpush.msra.mxu0 %v3865
    %4072 = vmatpush.msra.mxu0 %v3861
    %4073 = vmatpush.msra.mxu0 %v3857
    %4074 = vmatpush.msra.mxu0 %v3853
    %4075 = vmatpush.msra.mxu0 %v3849
    %4076 = vmatpush.msra.mxu0 %v3845
    %4077 = vmatpush.msra.mxu0 %v3841
    %4078 = vmatpush.msra.mxu0 %v3837
    %4079 = vmatpush.msra.mxu0 %v3833
    %4080 = vmatpush.msra.mxu0 %v3829
    %4081 = vmatpush.msra.mxu0 %v3825
    %4082 = vmatpush.msra.mxu0 %v3821
    %4083 = vmatpush.msra.mxu0 %v3817
    %4084 = vmatmul.f32.gmra.mxu0 %v3686
    %v4085 = vpop.f32.mrf.mxu0
    %v4086 = vadd.f32 %v628, %v4085
    %4087 = vdwg.mxu0
    %4088 = vmatpush.msra.mxu0 %v3941
    %4089 = vmatpush.msra.mxu0 %v3937
    %4090 = vmatpush.msra.mxu0 %v3933
    %4091 = vmatpush.msra.mxu0 %v3929
    %4092 = vmatpush.msra.mxu0 %v3925
    %4093 = vmatpush.msra.mxu0 %v3921
    %4094 = vmatpush.msra.mxu0 %v3917
    %4095 = vmatpush.msra.mxu0 %v3913
    %4096 = vmatpush.msra.mxu0 %v3909
    %4097 = vmatpush.msra.mxu0 %v3905
    %4098 = vmatpush.msra.mxu0 %v3901
    %4099 = vmatpush.msra.mxu0 %v3897
    %4100 = vmatpush.msra.mxu0 %v3893
    %4101 = vmatpush.msra.mxu0 %v3889
    %4102 = vmatpush.msra.mxu0 %v3885
    %4103 = vmatpush.msra.mxu0 %v3881
    %4104 = vmatmul.f32.gmra.mxu0 %v3814
    %v4105 = vpop.f32.mrf.mxu0
    %v4106 = vadd.f32 %v4086, %v4105
    %4107 = vdwg.mxu0
    %4108 = vmatpush.msra.mxu0 %v4005
    %4109 = vmatpush.msra.mxu0 %v4001
    %4110 = vmatpush.msra.mxu0 %v3997
    %4111 = vmatpush.msra.mxu0 %v3993
    %4112 = vmatpush.msra.mxu0 %v3989
    %4113 = vmatpush.msra.mxu0 %v3985
    %4114 = vmatpush.msra.mxu0 %v3981
    %4115 = vmatpush.msra.mxu0 %v3977
    %4116 = vmatpush.msra.mxu0 %v3973
    %4117 = vmatpush.msra.mxu0 %v3969
    %4118 = vmatpush.msra.mxu0 %v3965
    %4119 = vmatpush.msra.mxu0 %v3961
    %4120 = vmatpush.msra.mxu0 %v3957
    %4121 = vmatpush.msra.mxu0 %v3953
    %4122 = vmatpush.msra.mxu0 %v3949
    %4123 = vmatpush.msra.mxu0 %v3945
    %4124 = vmatmul.f32.gmra.mxu0 %v3468
    %v4125 = vpop.f32.mrf.mxu0
    %v4126 = vadd.f32 %v4106, %v4125
    %4127 = vdwg.mxu0
    %4128 = vmatpush.msra.mxu0 %v3878
    %4129 = vmatpush.msra.mxu0 %v3874
    %4130 = vmatpush.msra.mxu0 %v3870
    %4131 = vmatpush.msra.mxu0 %v3866
    %4132 = vmatpush.msra.mxu0 %v3862
    %4133 = vmatpush.msra.mxu0 %v3858
    %4134 = vmatpush.msra.mxu0 %v3854
    %4135 = vmatpush.msra.mxu0 %v3850
    %4136 = vmatpush.msra.mxu0 %v3846
    %4137 = vmatpush.msra.mxu0 %v3842
    %4138 = vmatpush.msra.mxu0 %v3838
    %4139 = vmatpush.msra.mxu0 %v3834
    %4140 = vmatpush.msra.mxu0 %v3830
    %4141 = vmatpush.msra.mxu0 %v3826
    %4142 = vmatpush.msra.mxu0 %v3822
    %4143 = vmatpush.msra.mxu0 %v3818
    %4144 = vmatmul.f32.gmra.mxu0 %v3686
    %v4145 = vpop.f32.mrf.mxu0
    %v4146 = vadd.f32 %v629, %v4145
    %4147 = vdwg.mxu0
    %4148 = vmatpush.msra.mxu0 %v3942
    %4149 = vmatpush.msra.mxu0 %v3938
    %4150 = vmatpush.msra.mxu0 %v3934
    %4151 = vmatpush.msra.mxu0 %v3930
    %4152 = vmatpush.msra.mxu0 %v3926
    %4153 = vmatpush.msra.mxu0 %v3922
    %4154 = vmatpush.msra.mxu0 %v3918
    %4155 = vmatpush.msra.mxu0 %v3914
    %4156 = vmatpush.msra.mxu0 %v3910
    %4157 = vmatpush.msra.mxu0 %v3906
    %4158 = vmatpush.msra.mxu0 %v3902
    %4159 = vmatpush.msra.mxu0 %v3898
    %4160 = vmatpush.msra.mxu0 %v3894
    %4161 = vmatpush.msra.mxu0 %v3890
    %4162 = vmatpush.msra.mxu0 %v3886
    %4163 = vmatpush.msra.mxu0 %v3882
    %4164 = vmatmul.f32.gmra.mxu0 %v3814
    %v4165 = vpop.f32.mrf.mxu0
    %v4166 = vadd.f32 %v4146, %v4165
    %4167 = vdwg.mxu0
    %4168 = vmatpush.msra.mxu0 %v4006
    %4169 = vmatpush.msra.mxu0 %v4002
    %4170 = vmatpush.msra.mxu0 %v3998
    %4171 = vmatpush.msra.mxu0 %v3994
    %4172 = vmatpush.msra.mxu0 %v3990
    %4173 = vmatpush.msra.mxu0 %v3986
    %4174 = vmatpush.msra.mxu0 %v3982
    %4175 = vmatpush.msra.mxu0 %v3978
    %4176 = vmatpush.msra.mxu0 %v3974
    %4177 = vmatpush.msra.mxu0 %v3970
    %4178 = vmatpush.msra.mxu0 %v3966
    %4179 = vmatpush.msra.mxu0 %v3962
    %4180 = vmatpush.msra.mxu0 %v3958
    %4181 = vmatpush.msra.mxu0 %v3954
    %4182 = vmatpush.msra.mxu0 %v3950
    %4183 = vmatpush.msra.mxu0 %v3946
    %4184 = vmatmul.f32.gmra.mxu0 %v3468
    %v4185 = vpop.f32.mrf.mxu0
    %v4186 = vadd.f32 %v4166, %v4185
    %4187 = vdwg.mxu0
    %4188 = vmatpush.msra.mxu0 %v3879
    %4189 = vmatpush.msra.mxu0 %v3875
    %4190 = vmatpush.msra.mxu0 %v3871
    %4191 = vmatpush.msra.mxu0 %v3867
    %4192 = vmatpush.msra.mxu0 %v3863
    %4193 = vmatpush.msra.mxu0 %v3859
    %4194 = vmatpush.msra.mxu0 %v3855
    %4195 = vmatpush.msra.mxu0 %v3851
    %4196 = vmatpush.msra.mxu0 %v3847
    %4197 = vmatpush.msra.mxu0 %v3843
    %4198 = vmatpush.msra.mxu0 %v3839
    %4199 = vmatpush.msra.mxu0 %v3835
    %4200 = vmatpush.msra.mxu0 %v3831
    %4201 = vmatpush.msra.mxu0 %v3827
    %4202 = vmatpush.msra.mxu0 %v3823
    %4203 = vmatpush.msra.mxu0 %v3819
    %4204 = vmatmul.f32.gmra.mxu0 %v3686
    %v4205 = vpop.f32.mrf.mxu0
    %v4206 = vadd.f32 %v630, %v4205
    %4207 = vdwg.mxu0
    %4208 = vmatpush.msra.mxu0 %v3943
    %4209 = vmatpush.msra.mxu0 %v3939
    %4210 = vmatpush.msra.mxu0 %v3935
    %4211 = vmatpush.msra.mxu0 %v3931
    %4212 = vmatpush.msra.mxu0 %v3927
    %4213 = vmatpush.msra.mxu0 %v3923
    %4214 = vmatpush.msra.mxu0 %v3919
    %4215 = vmatpush.msra.mxu0 %v3915
    %4216 = vmatpush.msra.mxu0 %v3911
    %4217 = vmatpush.msra.mxu0 %v3907
    %4218 = vmatpush.msra.mxu0 %v3903
    %4219 = vmatpush.msra.mxu0 %v3899
    %4220 = vmatpush.msra.mxu0 %v3895
    %4221 = vmatpush.msra.mxu0 %v3891
    %4222 = vmatpush.msra.mxu0 %v3887
    %4223 = vmatpush.msra.mxu0 %v3883
    %4224 = vmatmul.f32.gmra.mxu0 %v3814
    %v4225 = vpop.f32.mrf.mxu0
    %v4226 = vadd.f32 %v4206, %v4225
    %4227 = vdwg.mxu0
    %4228 = vmatpush.msra.mxu0 %v4007
    %4229 = vmatpush.msra.mxu0 %v4003
    %4230 = vmatpush.msra.mxu0 %v3999
    %4231 = vmatpush.msra.mxu0 %v3995
    %4232 = vmatpush.msra.mxu0 %v3991
    %4233 = vmatpush.msra.mxu0 %v3987
    %4234 = vmatpush.msra.mxu0 %v3983
    %4235 = vmatpush.msra.mxu0 %v3979
    %4236 = vmatpush.msra.mxu0 %v3975
    %4237 = vmatpush.msra.mxu0 %v3971
    %4238 = vmatpush.msra.mxu0 %v3967
    %4239 = vmatpush.msra.mxu0 %v3963
    %4240 = vmatpush.msra.mxu0 %v3959
    %4241 = vmatpush.msra.mxu0 %v3955
    %4242 = vmatpush.msra.mxu0 %v3951
    %4243 = vmatpush.msra.mxu0 %v3947
    %4244 = vmatmul.f32.gmra.mxu0 %v3468
    %v4245 = vpop.f32.mrf.mxu0
    %v4246 = vadd.f32 %v4226, %v4245
    %4247 = vdwg.mxu0
    %v4248 = vxor.u32 %v4066, 2147483648
    %v4249 = vmul.f32 %v4248, 1.442695
    %v4250 = vpow.pop %v4249
    %v4251 = vadd.f32 %v4250, 1.0
    %v4252 = vrcp.pop %v4251
    %v4253 = vmul.f32 %v4251, %v4252
    %v4254 = vsub.f32 1.0, %v4253
    %v4255 = vmul.f32 %v4252, %v4254
    %v4256 = vadd.f32 %v4252, %v4255
    %vm4257 = vweird.f32 %v4251
    %vm4258 = vweird.f32 %v4252
    %vm4259 = vmor %vm4257, %vm4258
    %v4260 = vsel %vm4259, %v4252, %v4256
    %v4261 = vand.u32 2147483647, %v4251
    %vm4262 = vcmp.eq.f32.partialorder %v4261, 8.507059e+37
    %v4263 = vand.u32 %v4251, 2147483648
    %v4264 = vor.u32 1.1754944e-38, %v4263
    %v4265 = vsel %vm4262, %v4264, %v4260
    %v4266 = vmul.f32 1.0, %v4265
    %v4267 = vxor.u32 %v4126, 2147483648
    %v4268 = vmul.f32 %v4267, 1.442695
    %v4269 = vpow.pop %v4268
    %v4270 = vadd.f32 %v4269, 1.0
    %v4271 = vrcp.pop %v4270
    %v4272 = vmul.f32 %v4270, %v4271
    %v4273 = vsub.f32 1.0, %v4272
    %v4274 = vmul.f32 %v4271, %v4273
    %v4275 = vadd.f32 %v4271, %v4274
    %vm4276 = vweird.f32 %v4270
    %vm4277 = vweird.f32 %v4271
    %vm4278 = vmor %vm4276, %vm4277
    %v4279 = vsel %vm4278, %v4271, %v4275
    %v4280 = vand.u32 2147483647, %v4270
    %vm4281 = vcmp.eq.f32.partialorder %v4280, 8.507059e+37
    %v4282 = vand.u32 %v4270, 2147483648
    %v4283 = vor.u32 1.1754944e-38, %v4282
    %v4284 = vsel %vm4281, %v4283, %v4279
    %v4285 = vmul.f32 1.0, %v4284
    %v4286 = vtanh.pop %v4186
    %v4287 = vxor.u32 %v4246, 2147483648
    %v4288 = vmul.f32 %v4287, 1.442695
    %v4289 = vpow.pop %v4288
    %v4290 = vadd.f32 %v4289, 1.0
    %v4291 = vrcp.pop %v4290
    %v4292 = vmul.f32 %v4290, %v4291
    %v4293 = vsub.f32 1.0, %v4292
    %v4294 = vmul.f32 %v4291, %v4293
    %v4295 = vadd.f32 %v4291, %v4294
    %vm4296 = vweird.f32 %v4290
    %vm4297 = vweird.f32 %v4291
    %vm4298 = vmor %vm4296, %vm4297
    %v4299 = vsel %vm4298, %v4291, %v4295
    %v4300 = vand.u32 2147483647, %v4290
    %vm4301 = vcmp.eq.f32.partialorder %v4300, 8.507059e+37
    %v4302 = vand.u32 %v4290, 2147483648
    %v4303 = vor.u32 1.1754944e-38, %v4302
    %v4304 = vsel %vm4301, %v4303, %v4299
    %v4305 = vmul.f32 1.0, %v4304
    %v4306 = vmul.f32 %v4285, %v3466
    %v4307 = vmul.f32 %v4266, %v4286
    %v4308 = vadd.f32 %v4306, %v4307
    %v4309 = vtanh.pop %v4308
    %v4310 = vmul.f32 %v4305, %v4309
    %v4311 = vld [vmem:[#allocation11] sm:$0xff]
    %v4312 = vld [vmem:[#allocation11 + $0x8] sm:$0xff]
    %v4313 = vld [vmem:[#allocation11 + $0x10] sm:$0xff]
    %v4314 = vld [vmem:[#allocation11 + $0x18] sm:$0xff]
    %v4315 = vld [vmem:[#allocation11 + $0x20] sm:$0xff]
    %v4316 = vld [vmem:[#allocation11 + $0x28] sm:$0xff]
    %v4317 = vld [vmem:[#allocation11 + $0x30] sm:$0xff]
    %v4318 = vld [vmem:[#allocation11 + $0x38] sm:$0xff]
    %v4319 = vld [vmem:[#allocation11 + $0x40] sm:$0xff]
    %v4320 = vld [vmem:[#allocation11 + $0x48] sm:$0xff]
    %v4321 = vld [vmem:[#allocation11 + $0x50] sm:$0xff]
    %v4322 = vld [vmem:[#allocation11 + $0x58] sm:$0xff]
    %v4323 = vld [vmem:[#allocation11 + $0x60] sm:$0xff]
    %v4324 = vld [vmem:[#allocation11 + $0x68] sm:$0xff]
    %v4325 = vld [vmem:[#allocation11 + $0x70] sm:$0xff]
    %v4326 = vld [vmem:[#allocation11 + $0x78] sm:$0xff]
    %v4327 = vld [vmem:[#allocation11 + $0x80] sm:$0xff]
    %v4328 = vld [vmem:[#allocation11 + $0x88] sm:$0xff]
    %v4329 = vld [vmem:[#allocation11 + $0x90] sm:$0xff]
    %v4330 = vld [vmem:[#allocation11 + $0x98] sm:$0xff]
    %v4331 = vld [vmem:[#allocation11 + $0xa0] sm:$0xff]
    %v4332 = vld [vmem:[#allocation11 + $0xa8] sm:$0xff]
    %v4333 = vld [vmem:[#allocation11 + $0xb0] sm:$0xff]
    %v4334 = vld [vmem:[#allocation11 + $0xb8] sm:$0xff]
    %v4335 = vld [vmem:[#allocation11 + $0xc0] sm:$0xff]
    %v4336 = vld [vmem:[#allocation11 + $0xc8] sm:$0xff]
    %v4337 = vld [vmem:[#allocation11 + $0xd0] sm:$0xff]
    %v4338 = vld [vmem:[#allocation11 + $0xd8] sm:$0xff]
    %v4339 = vld [vmem:[#allocation11 + $0xe0] sm:$0xff]
    %v4340 = vld [vmem:[#allocation11 + $0xe8] sm:$0xff]
    %v4341 = vld [vmem:[#allocation11 + $0xf0] sm:$0xff]
    %v4342 = vld [vmem:[#allocation11 + $0xf8] sm:$0xff]
    %v4343 = vld [vmem:[#allocation11 + $0x100] sm:$0xff]
    %v4344 = vld [vmem:[#allocation11 + $0x108] sm:$0xff]
    %v4345 = vld [vmem:[#allocation11 + $0x110] sm:$0xff]
    %v4346 = vld [vmem:[#allocation11 + $0x118] sm:$0xff]
    %v4347 = vld [vmem:[#allocation11 + $0x120] sm:$0xff]
    %v4348 = vld [vmem:[#allocation11 + $0x128] sm:$0xff]
    %v4349 = vld [vmem:[#allocation11 + $0x130] sm:$0xff]
    %v4350 = vld [vmem:[#allocation11 + $0x138] sm:$0xff]
    %v4351 = vld [vmem:[#allocation11 + $0x140] sm:$0xff]
    %v4352 = vld [vmem:[#allocation11 + $0x148] sm:$0xff]
    %v4353 = vld [vmem:[#allocation11 + $0x150] sm:$0xff]
    %v4354 = vld [vmem:[#allocation11 + $0x158] sm:$0xff]
    %v4355 = vld [vmem:[#allocation11 + $0x160] sm:$0xff]
    %v4356 = vld [vmem:[#allocation11 + $0x168] sm:$0xff]
    %v4357 = vld [vmem:[#allocation11 + $0x170] sm:$0xff]
    %v4358 = vld [vmem:[#allocation11 + $0x178] sm:$0xff]
    %v4359 = vld [vmem:[#allocation11 + $0x180] sm:$0xff]
    %v4360 = vld [vmem:[#allocation11 + $0x188] sm:$0xff]
    %v4361 = vld [vmem:[#allocation11 + $0x190] sm:$0xff]
    %v4362 = vld [vmem:[#allocation11 + $0x198] sm:$0xff]
    %v4363 = vld [vmem:[#allocation11 + $0x1a0] sm:$0xff]
    %v4364 = vld [vmem:[#allocation11 + $0x1a8] sm:$0xff]
    %v4365 = vld [vmem:[#allocation11 + $0x1b0] sm:$0xff]
    %v4366 = vld [vmem:[#allocation11 + $0x1b8] sm:$0xff]
    %v4367 = vld [vmem:[#allocation11 + $0x1c0] sm:$0xff]
    %v4368 = vld [vmem:[#allocation11 + $0x1c8] sm:$0xff]
    %v4369 = vld [vmem:[#allocation11 + $0x1d0] sm:$0xff]
    %v4370 = vld [vmem:[#allocation11 + $0x1d8] sm:$0xff]
    %v4371 = vld [vmem:[#allocation11 + $0x1e0] sm:$0xff]
    %v4372 = vld [vmem:[#allocation11 + $0x1e8] sm:$0xff]
    %v4373 = vld [vmem:[#allocation11 + $0x1f0] sm:$0xff]
    %v4374 = vld [vmem:[#allocation11 + $0x1f8] sm:$0xff]
    %v4375 = vld [vmem:[#allocation11 + $0x200] sm:$0xff]
    %v4376 = vld [vmem:[#allocation11 + $0x208] sm:$0xff]
    %v4377 = vld [vmem:[#allocation11 + $0x210] sm:$0xff]
    %v4378 = vld [vmem:[#allocation11 + $0x218] sm:$0xff]
    %v4379 = vld [vmem:[#allocation11 + $0x220] sm:$0xff]
    %v4380 = vld [vmem:[#allocation11 + $0x228] sm:$0xff]
    %v4381 = vld [vmem:[#allocation11 + $0x230] sm:$0xff]
    %v4382 = vld [vmem:[#allocation11 + $0x238] sm:$0xff]
    %v4383 = vld [vmem:[#allocation11 + $0x240] sm:$0xff]
    %v4384 = vld [vmem:[#allocation11 + $0x248] sm:$0xff]
    %v4385 = vld [vmem:[#allocation11 + $0x250] sm:$0xff]
    %v4386 = vld [vmem:[#allocation11 + $0x258] sm:$0xff]
    %v4387 = vld [vmem:[#allocation11 + $0x260] sm:$0xff]
    %v4388 = vld [vmem:[#allocation11 + $0x268] sm:$0xff]
    %v4389 = vld [vmem:[#allocation11 + $0x270] sm:$0xff]
    %v4390 = vld [vmem:[#allocation11 + $0x278] sm:$0xff]
    %v4391 = vld [vmem:[#allocation11 + $0x280] sm:$0xff]
    %v4392 = vld [vmem:[#allocation11 + $0x288] sm:$0xff]
    %v4393 = vld [vmem:[#allocation11 + $0x290] sm:$0xff]
    %v4394 = vld [vmem:[#allocation11 + $0x298] sm:$0xff]
    %v4395 = vld [vmem:[#allocation11 + $0x2a0] sm:$0xff]
    %v4396 = vld [vmem:[#allocation11 + $0x2a8] sm:$0xff]
    %v4397 = vld [vmem:[#allocation11 + $0x2b0] sm:$0xff]
    %v4398 = vld [vmem:[#allocation11 + $0x2b8] sm:$0xff]
    %v4399 = vld [vmem:[#allocation11 + $0x2c0] sm:$0xff]
    %v4400 = vld [vmem:[#allocation11 + $0x2c8] sm:$0xff]
    %v4401 = vld [vmem:[#allocation11 + $0x2d0] sm:$0xff]
    %v4402 = vld [vmem:[#allocation11 + $0x2d8] sm:$0xff]
    %v4403 = vld [vmem:[#allocation11 + $0x2e0] sm:$0xff]
    %v4404 = vld [vmem:[#allocation11 + $0x2e8] sm:$0xff]
    %v4405 = vld [vmem:[#allocation11 + $0x2f0] sm:$0xff]
    %v4406 = vld [vmem:[#allocation11 + $0x2f8] sm:$0xff]
    %4407 = vmatpush.msra.mxu0 %v4341
    %4408 = vmatpush.msra.mxu0 %v4339
    %4409 = vmatpush.msra.mxu0 %v4337
    %4410 = vmatpush.msra.mxu0 %v4335
    %4411 = vmatpush.msra.mxu0 %v4333
    %4412 = vmatpush.msra.mxu0 %v4331
    %4413 = vmatpush.msra.mxu0 %v4329
    %4414 = vmatpush.msra.mxu0 %v4327
    %4415 = vmatpush.msra.mxu0 %v4325
    %4416 = vmatpush.msra.mxu0 %v4323
    %4417 = vmatpush.msra.mxu0 %v4321
    %4418 = vmatpush.msra.mxu0 %v4319
    %4419 = vmatpush.msra.mxu0 %v4317
    %4420 = vmatpush.msra.mxu0 %v4315
    %4421 = vmatpush.msra.mxu0 %v4313
    %4422 = vmatpush.msra.mxu0 %v4311
    %4423 = vmatmul.f32.gmra.mxu0 %v3814
    %v4424 = vpop.f32.mrf.mxu0
    %v4425 = vadd.f32 %v1035, %v4424
    %4426 = vdwg.mxu0
    %4427 = vmatpush.msra.mxu0 %v4373
    %4428 = vmatpush.msra.mxu0 %v4371
    %4429 = vmatpush.msra.mxu0 %v4369
    %4430 = vmatpush.msra.mxu0 %v4367
    %4431 = vmatpush.msra.mxu0 %v4365
    %4432 = vmatpush.msra.mxu0 %v4363
    %4433 = vmatpush.msra.mxu0 %v4361
    %4434 = vmatpush.msra.mxu0 %v4359
    %4435 = vmatpush.msra.mxu0 %v4357
    %4436 = vmatpush.msra.mxu0 %v4355
    %4437 = vmatpush.msra.mxu0 %v4353
    %4438 = vmatpush.msra.mxu0 %v4351
    %4439 = vmatpush.msra.mxu0 %v4349
    %4440 = vmatpush.msra.mxu0 %v4347
    %4441 = vmatpush.msra.mxu0 %v4345
    %4442 = vmatpush.msra.mxu0 %v4343
    %4443 = vmatmul.f32.gmra.mxu0 %v3686
    %v4444 = vpop.f32.mrf.mxu0
    %v4445 = vadd.f32 %v4425, %v4444
    %4446 = vdwg.mxu0
    %4447 = vmatpush.msra.mxu0 %v4405
    %4448 = vmatpush.msra.mxu0 %v4403
    %4449 = vmatpush.msra.mxu0 %v4401
    %4450 = vmatpush.msra.mxu0 %v4399
    %4451 = vmatpush.msra.mxu0 %v4397
    %4452 = vmatpush.msra.mxu0 %v4395
    %4453 = vmatpush.msra.mxu0 %v4393
    %4454 = vmatpush.msra.mxu0 %v4391
    %4455 = vmatpush.msra.mxu0 %v4389
    %4456 = vmatpush.msra.mxu0 %v4387
    %4457 = vmatpush.msra.mxu0 %v4385
    %4458 = vmatpush.msra.mxu0 %v4383
    %4459 = vmatpush.msra.mxu0 %v4381
    %4460 = vmatpush.msra.mxu0 %v4379
    %4461 = vmatpush.msra.mxu0 %v4377
    %4462 = vmatpush.msra.mxu0 %v4375
    %4463 = vmatmul.f32.gmra.mxu0 %v4310
    %v4464 = vpop.f32.mrf.mxu0
    %v4465 = vadd.f32 %v4445, %v4464
    %4466 = vdwg.mxu0
    %4467 = vmatpush.msra.mxu0 %v4342
    %4468 = vmatpush.msra.mxu0 %v4340
    %4469 = vmatpush.msra.mxu0 %v4338
    %4470 = vmatpush.msra.mxu0 %v4336
    %4471 = vmatpush.msra.mxu0 %v4334
    %4472 = vmatpush.msra.mxu0 %v4332
    %4473 = vmatpush.msra.mxu0 %v4330
    %4474 = vmatpush.msra.mxu0 %v4328
    %4475 = vmatpush.msra.mxu0 %v4326
    %4476 = vmatpush.msra.mxu0 %v4324
    %4477 = vmatpush.msra.mxu0 %v4322
    %4478 = vmatpush.msra.mxu0 %v4320
    %4479 = vmatpush.msra.mxu0 %v4318
    %4480 = vmatpush.msra.mxu0 %v4316
    %4481 = vmatpush.msra.mxu0 %v4314
    %4482 = vmatpush.msra.mxu0 %v4312
    %4483 = vmatmul.f32.gmra.mxu0 %v3814
    %v4484 = vpop.f32.mrf.mxu0
    %v4485 = vadd.f32 %v1036, %v4484
    %4486 = vdwg.mxu0
    %4487 = vmatpush.msra.mxu0 %v4374
    %4488 = vmatpush.msra.mxu0 %v4372
    %4489 = vmatpush.msra.mxu0 %v4370
    %4490 = vmatpush.msra.mxu0 %v4368
    %4491 = vmatpush.msra.mxu0 %v4366
    %4492 = vmatpush.msra.mxu0 %v4364
    %4493 = vmatpush.msra.mxu0 %v4362
    %4494 = vmatpush.msra.mxu0 %v4360
    %4495 = vmatpush.msra.mxu0 %v4358
    %4496 = vmatpush.msra.mxu0 %v4356
    %4497 = vmatpush.msra.mxu0 %v4354
    %4498 = vmatpush.msra.mxu0 %v4352
    %4499 = vmatpush.msra.mxu0 %v4350
    %4500 = vmatpush.msra.mxu0 %v4348
    %4501 = vmatpush.msra.mxu0 %v4346
    %4502 = vmatpush.msra.mxu0 %v4344
    %4503 = vmatmul.f32.gmra.mxu0 %v3686
    %v4504 = vpop.f32.mrf.mxu0
    %v4505 = vadd.f32 %v4485, %v4504
    %4506 = vdwg.mxu0
    %4507 = vmatpush.msra.mxu0 %v4406
    %4508 = vmatpush.msra.mxu0 %v4404
    %4509 = vmatpush.msra.mxu0 %v4402
    %4510 = vmatpush.msra.mxu0 %v4400
    %4511 = vmatpush.msra.mxu0 %v4398
    %4512 = vmatpush.msra.mxu0 %v4396
    %4513 = vmatpush.msra.mxu0 %v4394
    %4514 = vmatpush.msra.mxu0 %v4392
    %4515 = vmatpush.msra.mxu0 %v4390
    %4516 = vmatpush.msra.mxu0 %v4388
    %4517 = vmatpush.msra.mxu0 %v4386
    %4518 = vmatpush.msra.mxu0 %v4384
    %4519 = vmatpush.msra.mxu0 %v4382
    %4520 = vmatpush.msra.mxu0 %v4380
    %4521 = vmatpush.msra.mxu0 %v4378
    %4522 = vmatpush.msra.mxu0 %v4376
    %4523 = vmatmul.f32.gmra.mxu0 %v4310
    %v4524 = vpop.f32.mrf.mxu0
    %v4525 = vadd.f32 %v4505, %v4524
    %4526 = vdwg.mxu0
    %s4527 = scalar_lea.vmem [#allocation5], 10
    %v4528 = vld [vmem:[%s4527] sm:$0x3]
    %v4530 = vrot.slane %v4310, 1
    %4532 = vmatpush.xpose.msra.mxu0 0.0
    %4533 = vmatpush.xpose.msra.mxu0 0.0
    %4534 = vmatpush.xpose.msra.mxu0 0.0
    %4535 = vmatpush.xpose.msra.mxu0 0.0
    %4536 = vmatpush.xpose.msra.mxu0 0.0
    %4537 = vmatpush.xpose.msra.mxu0 0.0
    %4538 = vmatpush.xpose.msra.mxu0 0.0
    %4539 = vmatpush.xpose.msra.mxu0 0.0
    %4540 = vmatpush.xpose.msra.mxu0 0.0
    %4541 = vmatpush.xpose.msra.mxu0 0.0
    %4542 = vmatpush.xpose.msra.mxu0 0.0
    %4543 = vmatpush.xpose.msra.mxu0 0.0
    %4544 = vmatpush.xpose.msra.mxu0 0.0
    %4545 = vmatpush.xpose.msra.mxu0 0.0
    %4546 = vmatpush.xpose.msra.mxu0 %v290
    %4547 = vmatpush.xpose.msra.mxu0 %v287
    %4548 = vmatmul.f32.gmra.mxu0 %v4310
    %v4549 = vpop.f32.mrf.mxu0
    %v4550 = vadd.f32 0.0, %v4549
    %4551 = vdwg.mxu0
    %4552 = vmatpush.xpose.msra.mxu0 0.0
    %4553 = vmatpush.xpose.msra.mxu0 0.0
    %4554 = vmatpush.xpose.msra.mxu0 0.0
    %4555 = vmatpush.xpose.msra.mxu0 0.0
    %4556 = vmatpush.xpose.msra.mxu0 0.0
    %4557 = vmatpush.xpose.msra.mxu0 0.0
    %4558 = vmatpush.xpose.msra.mxu0 0.0
    %4559 = vmatpush.xpose.msra.mxu0 0.0
    %4560 = vmatpush.xpose.msra.mxu0 0.0
    %4561 = vmatpush.xpose.msra.mxu0 0.0
    %4562 = vmatpush.xpose.msra.mxu0 0.0
    %4563 = vmatpush.xpose.msra.mxu0 0.0
    %4564 = vmatpush.xpose.msra.mxu0 0.0
    %4565 = vmatpush.xpose.msra.mxu0 0.0
    %4566 = vmatpush.xpose.msra.mxu0 %v296
    %4567 = vmatpush.xpose.msra.mxu0 %v293
    %4568 = vmatmul.f32.gmra.mxu0 %v4530
    %v4569 = vpop.f32.mrf.mxu0
    %v4570 = vadd.f32 0.0, %v4569
    %4571 = vdwg.mxu0
    %v4572 = vmul.f32 %v4550, 0.088388346
    %v4573 = vmul.f32 %v4570, 0.088388346
    %v4576 = vrot.slane %v4573, 7
    %v4577 = vsel %vm154, %v4576, %v4572
    %v4579 = vsel %vm353, %v4577, -inf
    %4580 = vmax.xlane.f32.xlu0 %v4579
    %v4581 = vpop.xlane.xlu0 %4580
    %v4583 = vrot.slane %v4581, 1
    %v4586 = vsub.f32 %v4572, %v4581
    %v4587 = vsub.f32 %v4573, %v4583
    %v4588 = vmul.f32 %v4586, 1.442695
    %v4589 = vpow.pop %v4588
    %v4590 = vmul.f32 %v4587, 1.442695
    %v4591 = vpow.pop %v4590
    %v4594 = vrot.slane %v4591, 7
    %v4595 = vsel %vm154, %v4594, %v4589
    %v4597 = vsel %vm353, %v4595, 0.0
    %4598 = vadd.xlane.f32.xlu0 %v4597
    %v4599 = vpop.xlane.xlu0 %4598
    %v4600 = vrcp.pop %v4599
    %v4602 = vrot.slane %v4600, 1
    %v4605 = vmul.f32 %v4589, %v4600
    %v4606 = vmul.f32 %v4591, %v4602
    %v4608 = vsel %vm382, %v4605, 0
    %4610 = vmatpush.msra.mxu0 0.0
    %4611 = vmatpush.msra.mxu0 0.0
    %4612 = vmatpush.msra.mxu0 0.0
    %4613 = vmatpush.msra.mxu0 0.0
    %4614 = vmatpush.msra.mxu0 0.0
    %4615 = vmatpush.msra.mxu0 0.0
    %4616 = vmatpush.msra.mxu0 0.0
    %4617 = vmatpush.msra.mxu0 0.0
    %4618 = vmatpush.msra.mxu0 0.0
    %4619 = vmatpush.msra.mxu0 0.0
    %4620 = vmatpush.msra.mxu0 0.0
    %4621 = vmatpush.msra.mxu0 0.0
    %4622 = vmatpush.msra.mxu0 0.0
    %4623 = vmatpush.msra.mxu0 0.0
    %4624 = vmatpush.msra.mxu0 %v126
    %4625 = vmatpush.msra.mxu0 %v125
    %4626 = vmatmul.f32.gmra.mxu0 %v4608
    %v4627 = vpop.f32.mrf.mxu0
    %v4628 = vadd.f32 0.0, %v4627
    %4629 = vdwg.mxu0
    %v4631 = vsel %vm382, %v4606, 0
    %4633 = vmatpush.msra.mxu0 0.0
    %4634 = vmatpush.msra.mxu0 0.0
    %4635 = vmatpush.msra.mxu0 0.0
    %4636 = vmatpush.msra.mxu0 0.0
    %4637 = vmatpush.msra.mxu0 0.0
    %4638 = vmatpush.msra.mxu0 0.0
    %4639 = vmatpush.msra.mxu0 0.0
    %4640 = vmatpush.msra.mxu0 0.0
    %4641 = vmatpush.msra.mxu0 0.0
    %4642 = vmatpush.msra.mxu0 0.0
    %4643 = vmatpush.msra.mxu0 0.0
    %4644 = vmatpush.msra.mxu0 0.0
    %4645 = vmatpush.msra.mxu0 0.0
    %4646 = vmatpush.msra.mxu0 0.0
    %4647 = vmatpush.msra.mxu0 %v128
    %4648 = vmatpush.msra.mxu0 %v127
    %4649 = vmatmul.f32.gmra.mxu0 %v4631
    %v4650 = vpop.f32.mrf.mxu0
    %v4651 = vadd.f32 0.0, %v4650
    %4652 = vdwg.mxu0
    %v4655 = vrot.slane %v4651, 7
    %v4656 = vsel %vm154, %v4655, %v4628
    %v4658 = vld [vmem:[#allocation10] sm:$0xff]
    %v4659 = vld [vmem:[#allocation10 + $0x8] sm:$0xff]
    %v4660 = vld [vmem:[#allocation10 + $0x10] sm:$0xff]
    %v4661 = vld [vmem:[#allocation10 + $0x18] sm:$0xff]
    %v4662 = vld [vmem:[#allocation10 + $0x20] sm:$0xff]
    %v4663 = vld [vmem:[#allocation10 + $0x28] sm:$0xff]
    %v4664 = vld [vmem:[#allocation10 + $0x30] sm:$0xff]
    %v4665 = vld [vmem:[#allocation10 + $0x38] sm:$0xff]
    %v4666 = vld [vmem:[#allocation10 + $0x40] sm:$0xff]
    %v4667 = vld [vmem:[#allocation10 + $0x48] sm:$0xff]
    %v4668 = vld [vmem:[#allocation10 + $0x50] sm:$0xff]
    %v4669 = vld [vmem:[#allocation10 + $0x58] sm:$0xff]
    %v4670 = vld [vmem:[#allocation10 + $0x60] sm:$0xff]
    %v4671 = vld [vmem:[#allocation10 + $0x68] sm:$0xff]
    %v4672 = vld [vmem:[#allocation10 + $0x70] sm:$0xff]
    %v4673 = vld [vmem:[#allocation10 + $0x78] sm:$0xff]
    %v4674 = vld [vmem:[#allocation10 + $0x80] sm:$0xff]
    %v4675 = vld [vmem:[#allocation10 + $0x88] sm:$0xff]
    %v4676 = vld [vmem:[#allocation10 + $0x90] sm:$0xff]
    %v4677 = vld [vmem:[#allocation10 + $0x98] sm:$0xff]
    %v4678 = vld [vmem:[#allocation10 + $0xa0] sm:$0xff]
    %v4679 = vld [vmem:[#allocation10 + $0xa8] sm:$0xff]
    %v4680 = vld [vmem:[#allocation10 + $0xb0] sm:$0xff]
    %v4681 = vld [vmem:[#allocation10 + $0xb8] sm:$0xff]
    %v4682 = vld [vmem:[#allocation10 + $0xc0] sm:$0xff]
    %v4683 = vld [vmem:[#allocation10 + $0xc8] sm:$0xff]
    %v4684 = vld [vmem:[#allocation10 + $0xd0] sm:$0xff]
    %v4685 = vld [vmem:[#allocation10 + $0xd8] sm:$0xff]
    %v4686 = vld [vmem:[#allocation10 + $0xe0] sm:$0xff]
    %v4687 = vld [vmem:[#allocation10 + $0xe8] sm:$0xff]
    %v4688 = vld [vmem:[#allocation10 + $0xf0] sm:$0xff]
    %v4689 = vld [vmem:[#allocation10 + $0xf8] sm:$0xff]
    %v4690 = vld [vmem:[#allocation10 + $0x100] sm:$0xff]
    %v4691 = vld [vmem:[#allocation10 + $0x108] sm:$0xff]
    %v4692 = vld [vmem:[#allocation10 + $0x110] sm:$0xff]
    %v4693 = vld [vmem:[#allocation10 + $0x118] sm:$0xff]
    %v4694 = vld [vmem:[#allocation10 + $0x120] sm:$0xff]
    %v4695 = vld [vmem:[#allocation10 + $0x128] sm:$0xff]
    %v4696 = vld [vmem:[#allocation10 + $0x130] sm:$0xff]
    %v4697 = vld [vmem:[#allocation10 + $0x138] sm:$0xff]
    %v4698 = vld [vmem:[#allocation10 + $0x140] sm:$0xff]
    %v4699 = vld [vmem:[#allocation10 + $0x148] sm:$0xff]
    %v4700 = vld [vmem:[#allocation10 + $0x150] sm:$0xff]
    %v4701 = vld [vmem:[#allocation10 + $0x158] sm:$0xff]
    %v4702 = vld [vmem:[#allocation10 + $0x160] sm:$0xff]
    %v4703 = vld [vmem:[#allocation10 + $0x168] sm:$0xff]
    %v4704 = vld [vmem:[#allocation10 + $0x170] sm:$0xff]
    %v4705 = vld [vmem:[#allocation10 + $0x178] sm:$0xff]
    %v4706 = vld [vmem:[#allocation10 + $0x180] sm:$0xff]
    %v4707 = vld [vmem:[#allocation10 + $0x188] sm:$0xff]
    %v4708 = vld [vmem:[#allocation10 + $0x190] sm:$0xff]
    %v4709 = vld [vmem:[#allocation10 + $0x198] sm:$0xff]
    %v4710 = vld [vmem:[#allocation10 + $0x1a0] sm:$0xff]
    %v4711 = vld [vmem:[#allocation10 + $0x1a8] sm:$0xff]
    %v4712 = vld [vmem:[#allocation10 + $0x1b0] sm:$0xff]
    %v4713 = vld [vmem:[#allocation10 + $0x1b8] sm:$0xff]
    %v4714 = vld [vmem:[#allocation10 + $0x1c0] sm:$0xff]
    %v4715 = vld [vmem:[#allocation10 + $0x1c8] sm:$0xff]
    %v4716 = vld [vmem:[#allocation10 + $0x1d0] sm:$0xff]
    %v4717 = vld [vmem:[#allocation10 + $0x1d8] sm:$0xff]
    %v4718 = vld [vmem:[#allocation10 + $0x1e0] sm:$0xff]
    %v4719 = vld [vmem:[#allocation10 + $0x1e8] sm:$0xff]
    %v4720 = vld [vmem:[#allocation10 + $0x1f0] sm:$0xff]
    %v4721 = vld [vmem:[#allocation10 + $0x1f8] sm:$0xff]
    %v4722 = vld [vmem:[#allocation10 + $0x200] sm:$0xff]
    %v4723 = vld [vmem:[#allocation10 + $0x208] sm:$0xff]
    %v4724 = vld [vmem:[#allocation10 + $0x210] sm:$0xff]
    %v4725 = vld [vmem:[#allocation10 + $0x218] sm:$0xff]
    %v4726 = vld [vmem:[#allocation10 + $0x220] sm:$0xff]
    %v4727 = vld [vmem:[#allocation10 + $0x228] sm:$0xff]
    %v4728 = vld [vmem:[#allocation10 + $0x230] sm:$0xff]
    %v4729 = vld [vmem:[#allocation10 + $0x238] sm:$0xff]
    %v4730 = vld [vmem:[#allocation10 + $0x240] sm:$0xff]
    %v4731 = vld [vmem:[#allocation10 + $0x248] sm:$0xff]
    %v4732 = vld [vmem:[#allocation10 + $0x250] sm:$0xff]
    %v4733 = vld [vmem:[#allocation10 + $0x258] sm:$0xff]
    %v4734 = vld [vmem:[#allocation10 + $0x260] sm:$0xff]
    %v4735 = vld [vmem:[#allocation10 + $0x268] sm:$0xff]
    %v4736 = vld [vmem:[#allocation10 + $0x270] sm:$0xff]
    %v4737 = vld [vmem:[#allocation10 + $0x278] sm:$0xff]
    %v4738 = vld [vmem:[#allocation10 + $0x280] sm:$0xff]
    %v4739 = vld [vmem:[#allocation10 + $0x288] sm:$0xff]
    %v4740 = vld [vmem:[#allocation10 + $0x290] sm:$0xff]
    %v4741 = vld [vmem:[#allocation10 + $0x298] sm:$0xff]
    %v4742 = vld [vmem:[#allocation10 + $0x2a0] sm:$0xff]
    %v4743 = vld [vmem:[#allocation10 + $0x2a8] sm:$0xff]
    %v4744 = vld [vmem:[#allocation10 + $0x2b0] sm:$0xff]
    %v4745 = vld [vmem:[#allocation10 + $0x2b8] sm:$0xff]
    %v4746 = vld [vmem:[#allocation10 + $0x2c0] sm:$0xff]
    %v4747 = vld [vmem:[#allocation10 + $0x2c8] sm:$0xff]
    %v4748 = vld [vmem:[#allocation10 + $0x2d0] sm:$0xff]
    %v4749 = vld [vmem:[#allocation10 + $0x2d8] sm:$0xff]
    %v4750 = vld [vmem:[#allocation10 + $0x2e0] sm:$0xff]
    %v4751 = vld [vmem:[#allocation10 + $0x2e8] sm:$0xff]
    %v4752 = vld [vmem:[#allocation10 + $0x2f0] sm:$0xff]
    %v4753 = vld [vmem:[#allocation10 + $0x2f8] sm:$0xff]
    %v4754 = vld [vmem:[#allocation10 + $0x300] sm:$0xff]
    %v4755 = vld [vmem:[#allocation10 + $0x308] sm:$0xff]
    %v4756 = vld [vmem:[#allocation10 + $0x310] sm:$0xff]
    %v4757 = vld [vmem:[#allocation10 + $0x318] sm:$0xff]
    %v4758 = vld [vmem:[#allocation10 + $0x320] sm:$0xff]
    %v4759 = vld [vmem:[#allocation10 + $0x328] sm:$0xff]
    %v4760 = vld [vmem:[#allocation10 + $0x330] sm:$0xff]
    %v4761 = vld [vmem:[#allocation10 + $0x338] sm:$0xff]
    %v4762 = vld [vmem:[#allocation10 + $0x340] sm:$0xff]
    %v4763 = vld [vmem:[#allocation10 + $0x348] sm:$0xff]
    %v4764 = vld [vmem:[#allocation10 + $0x350] sm:$0xff]
    %v4765 = vld [vmem:[#allocation10 + $0x358] sm:$0xff]
    %v4766 = vld [vmem:[#allocation10 + $0x360] sm:$0xff]
    %v4767 = vld [vmem:[#allocation10 + $0x368] sm:$0xff]
    %v4768 = vld [vmem:[#allocation10 + $0x370] sm:$0xff]
    %v4769 = vld [vmem:[#allocation10 + $0x378] sm:$0xff]
    %v4770 = vld [vmem:[#allocation10 + $0x380] sm:$0xff]
    %v4771 = vld [vmem:[#allocation10 + $0x388] sm:$0xff]
    %v4772 = vld [vmem:[#allocation10 + $0x390] sm:$0xff]
    %v4773 = vld [vmem:[#allocation10 + $0x398] sm:$0xff]
    %v4774 = vld [vmem:[#allocation10 + $0x3a0] sm:$0xff]
    %v4775 = vld [vmem:[#allocation10 + $0x3a8] sm:$0xff]
    %v4776 = vld [vmem:[#allocation10 + $0x3b0] sm:$0xff]
    %v4777 = vld [vmem:[#allocation10 + $0x3b8] sm:$0xff]
    %v4778 = vld [vmem:[#allocation10 + $0x3c0] sm:$0xff]
    %v4779 = vld [vmem:[#allocation10 + $0x3c8] sm:$0xff]
    %v4780 = vld [vmem:[#allocation10 + $0x3d0] sm:$0xff]
    %v4781 = vld [vmem:[#allocation10 + $0x3d8] sm:$0xff]
    %v4782 = vld [vmem:[#allocation10 + $0x3e0] sm:$0xff]
    %v4783 = vld [vmem:[#allocation10 + $0x3e8] sm:$0xff]
    %v4784 = vld [vmem:[#allocation10 + $0x3f0] sm:$0xff]
    %v4785 = vld [vmem:[#allocation10 + $0x3f8] sm:$0xff]
    %v4786 = vld [vmem:[#allocation10 + $0x400] sm:$0xff]
    %v4787 = vld [vmem:[#allocation10 + $0x408] sm:$0xff]
    %v4788 = vld [vmem:[#allocation10 + $0x410] sm:$0xff]
    %v4789 = vld [vmem:[#allocation10 + $0x418] sm:$0xff]
    %v4790 = vld [vmem:[#allocation10 + $0x420] sm:$0xff]
    %v4791 = vld [vmem:[#allocation10 + $0x428] sm:$0xff]
    %v4792 = vld [vmem:[#allocation10 + $0x430] sm:$0xff]
    %v4793 = vld [vmem:[#allocation10 + $0x438] sm:$0xff]
    %v4794 = vld [vmem:[#allocation10 + $0x440] sm:$0xff]
    %v4795 = vld [vmem:[#allocation10 + $0x448] sm:$0xff]
    %v4796 = vld [vmem:[#allocation10 + $0x450] sm:$0xff]
    %v4797 = vld [vmem:[#allocation10 + $0x458] sm:$0xff]
    %v4798 = vld [vmem:[#allocation10 + $0x460] sm:$0xff]
    %v4799 = vld [vmem:[#allocation10 + $0x468] sm:$0xff]
    %v4800 = vld [vmem:[#allocation10 + $0x470] sm:$0xff]
    %v4801 = vld [vmem:[#allocation10 + $0x478] sm:$0xff]
    %v4802 = vld [vmem:[#allocation10 + $0x480] sm:$0xff]
    %v4803 = vld [vmem:[#allocation10 + $0x488] sm:$0xff]
    %v4804 = vld [vmem:[#allocation10 + $0x490] sm:$0xff]
    %v4805 = vld [vmem:[#allocation10 + $0x498] sm:$0xff]
    %v4806 = vld [vmem:[#allocation10 + $0x4a0] sm:$0xff]
    %v4807 = vld [vmem:[#allocation10 + $0x4a8] sm:$0xff]
    %v4808 = vld [vmem:[#allocation10 + $0x4b0] sm:$0xff]
    %v4809 = vld [vmem:[#allocation10 + $0x4b8] sm:$0xff]
    %v4810 = vld [vmem:[#allocation10 + $0x4c0] sm:$0xff]
    %v4811 = vld [vmem:[#allocation10 + $0x4c8] sm:$0xff]
    %v4812 = vld [vmem:[#allocation10 + $0x4d0] sm:$0xff]
    %v4813 = vld [vmem:[#allocation10 + $0x4d8] sm:$0xff]
    %v4814 = vld [vmem:[#allocation10 + $0x4e0] sm:$0xff]
    %v4815 = vld [vmem:[#allocation10 + $0x4e8] sm:$0xff]
    %v4816 = vld [vmem:[#allocation10 + $0x4f0] sm:$0xff]
    %v4817 = vld [vmem:[#allocation10 + $0x4f8] sm:$0xff]
    %v4818 = vld [vmem:[#allocation10 + $0x500] sm:$0xff]
    %v4819 = vld [vmem:[#allocation10 + $0x508] sm:$0xff]
    %v4820 = vld [vmem:[#allocation10 + $0x510] sm:$0xff]
    %v4821 = vld [vmem:[#allocation10 + $0x518] sm:$0xff]
    %v4822 = vld [vmem:[#allocation10 + $0x520] sm:$0xff]
    %v4823 = vld [vmem:[#allocation10 + $0x528] sm:$0xff]
    %v4824 = vld [vmem:[#allocation10 + $0x530] sm:$0xff]
    %v4825 = vld [vmem:[#allocation10 + $0x538] sm:$0xff]
    %v4826 = vld [vmem:[#allocation10 + $0x540] sm:$0xff]
    %v4827 = vld [vmem:[#allocation10 + $0x548] sm:$0xff]
    %v4828 = vld [vmem:[#allocation10 + $0x550] sm:$0xff]
    %v4829 = vld [vmem:[#allocation10 + $0x558] sm:$0xff]
    %v4830 = vld [vmem:[#allocation10 + $0x560] sm:$0xff]
    %v4831 = vld [vmem:[#allocation10 + $0x568] sm:$0xff]
    %v4832 = vld [vmem:[#allocation10 + $0x570] sm:$0xff]
    %v4833 = vld [vmem:[#allocation10 + $0x578] sm:$0xff]
    %v4834 = vld [vmem:[#allocation10 + $0x580] sm:$0xff]
    %v4835 = vld [vmem:[#allocation10 + $0x588] sm:$0xff]
    %v4836 = vld [vmem:[#allocation10 + $0x590] sm:$0xff]
    %v4837 = vld [vmem:[#allocation10 + $0x598] sm:$0xff]
    %v4838 = vld [vmem:[#allocation10 + $0x5a0] sm:$0xff]
    %v4839 = vld [vmem:[#allocation10 + $0x5a8] sm:$0xff]
    %v4840 = vld [vmem:[#allocation10 + $0x5b0] sm:$0xff]
    %v4841 = vld [vmem:[#allocation10 + $0x5b8] sm:$0xff]
    %v4842 = vld [vmem:[#allocation10 + $0x5c0] sm:$0xff]
    %v4843 = vld [vmem:[#allocation10 + $0x5c8] sm:$0xff]
    %v4844 = vld [vmem:[#allocation10 + $0x5d0] sm:$0xff]
    %v4845 = vld [vmem:[#allocation10 + $0x5d8] sm:$0xff]
    %v4846 = vld [vmem:[#allocation10 + $0x5e0] sm:$0xff]
    %v4847 = vld [vmem:[#allocation10 + $0x5e8] sm:$0xff]
    %v4848 = vld [vmem:[#allocation10 + $0x5f0] sm:$0xff]
    %v4849 = vld [vmem:[#allocation10 + $0x5f8] sm:$0xff]
    %4850 = vmatpush.msra.mxu0 %v4718
    %4851 = vmatpush.msra.mxu0 %v4714
    %4852 = vmatpush.msra.mxu0 %v4710
    %4853 = vmatpush.msra.mxu0 %v4706
    %4854 = vmatpush.msra.mxu0 %v4702
    %4855 = vmatpush.msra.mxu0 %v4698
    %4856 = vmatpush.msra.mxu0 %v4694
    %4857 = vmatpush.msra.mxu0 %v4690
    %4858 = vmatpush.msra.mxu0 %v4686
    %4859 = vmatpush.msra.mxu0 %v4682
    %4860 = vmatpush.msra.mxu0 %v4678
    %4861 = vmatpush.msra.mxu0 %v4674
    %4862 = vmatpush.msra.mxu0 %v4670
    %4863 = vmatpush.msra.mxu0 %v4666
    %4864 = vmatpush.msra.mxu0 %v4662
    %4865 = vmatpush.msra.mxu0 %v4658
    %4866 = vmatmul.f32.gmra.mxu0 %v4528
    %v4867 = vpop.f32.mrf.mxu0
    %v4868 = vadd.f32 %v627, %v4867
    %4869 = vdwg.mxu0
    %4870 = vmatpush.msra.mxu0 %v4782
    %4871 = vmatpush.msra.mxu0 %v4778
    %4872 = vmatpush.msra.mxu0 %v4774
    %4873 = vmatpush.msra.mxu0 %v4770
    %4874 = vmatpush.msra.mxu0 %v4766
    %4875 = vmatpush.msra.mxu0 %v4762
    %4876 = vmatpush.msra.mxu0 %v4758
    %4877 = vmatpush.msra.mxu0 %v4754
    %4878 = vmatpush.msra.mxu0 %v4750
    %4879 = vmatpush.msra.mxu0 %v4746
    %4880 = vmatpush.msra.mxu0 %v4742
    %4881 = vmatpush.msra.mxu0 %v4738
    %4882 = vmatpush.msra.mxu0 %v4734
    %4883 = vmatpush.msra.mxu0 %v4730
    %4884 = vmatpush.msra.mxu0 %v4726
    %4885 = vmatpush.msra.mxu0 %v4722
    %4886 = vmatmul.f32.gmra.mxu0 %v4656
    %v4887 = vpop.f32.mrf.mxu0
    %v4888 = vadd.f32 %v4868, %v4887
    %4889 = vdwg.mxu0
    %4890 = vmatpush.msra.mxu0 %v4846
    %4891 = vmatpush.msra.mxu0 %v4842
    %4892 = vmatpush.msra.mxu0 %v4838
    %4893 = vmatpush.msra.mxu0 %v4834
    %4894 = vmatpush.msra.mxu0 %v4830
    %4895 = vmatpush.msra.mxu0 %v4826
    %4896 = vmatpush.msra.mxu0 %v4822
    %4897 = vmatpush.msra.mxu0 %v4818
    %4898 = vmatpush.msra.mxu0 %v4814
    %4899 = vmatpush.msra.mxu0 %v4810
    %4900 = vmatpush.msra.mxu0 %v4806
    %4901 = vmatpush.msra.mxu0 %v4802
    %4902 = vmatpush.msra.mxu0 %v4798
    %4903 = vmatpush.msra.mxu0 %v4794
    %4904 = vmatpush.msra.mxu0 %v4790
    %4905 = vmatpush.msra.mxu0 %v4786
    %4906 = vmatmul.f32.gmra.mxu0 %v4310
    %v4907 = vpop.f32.mrf.mxu0
    %v4908 = vadd.f32 %v4888, %v4907
    %4909 = vdwg.mxu0
    %4910 = vmatpush.msra.mxu0 %v4719
    %4911 = vmatpush.msra.mxu0 %v4715
    %4912 = vmatpush.msra.mxu0 %v4711
    %4913 = vmatpush.msra.mxu0 %v4707
    %4914 = vmatpush.msra.mxu0 %v4703
    %4915 = vmatpush.msra.mxu0 %v4699
    %4916 = vmatpush.msra.mxu0 %v4695
    %4917 = vmatpush.msra.mxu0 %v4691
    %4918 = vmatpush.msra.mxu0 %v4687
    %4919 = vmatpush.msra.mxu0 %v4683
    %4920 = vmatpush.msra.mxu0 %v4679
    %4921 = vmatpush.msra.mxu0 %v4675
    %4922 = vmatpush.msra.mxu0 %v4671
    %4923 = vmatpush.msra.mxu0 %v4667
    %4924 = vmatpush.msra.mxu0 %v4663
    %4925 = vmatpush.msra.mxu0 %v4659
    %4926 = vmatmul.f32.gmra.mxu0 %v4528
    %v4927 = vpop.f32.mrf.mxu0
    %v4928 = vadd.f32 %v628, %v4927
    %4929 = vdwg.mxu0
    %4930 = vmatpush.msra.mxu0 %v4783
    %4931 = vmatpush.msra.mxu0 %v4779
    %4932 = vmatpush.msra.mxu0 %v4775
    %4933 = vmatpush.msra.mxu0 %v4771
    %4934 = vmatpush.msra.mxu0 %v4767
    %4935 = vmatpush.msra.mxu0 %v4763
    %4936 = vmatpush.msra.mxu0 %v4759
    %4937 = vmatpush.msra.mxu0 %v4755
    %4938 = vmatpush.msra.mxu0 %v4751
    %4939 = vmatpush.msra.mxu0 %v4747
    %4940 = vmatpush.msra.mxu0 %v4743
    %4941 = vmatpush.msra.mxu0 %v4739
    %4942 = vmatpush.msra.mxu0 %v4735
    %4943 = vmatpush.msra.mxu0 %v4731
    %4944 = vmatpush.msra.mxu0 %v4727
    %4945 = vmatpush.msra.mxu0 %v4723
    %4946 = vmatmul.f32.gmra.mxu0 %v4656
    %v4947 = vpop.f32.mrf.mxu0
    %v4948 = vadd.f32 %v4928, %v4947
    %4949 = vdwg.mxu0
    %4950 = vmatpush.msra.mxu0 %v4847
    %4951 = vmatpush.msra.mxu0 %v4843
    %4952 = vmatpush.msra.mxu0 %v4839
    %4953 = vmatpush.msra.mxu0 %v4835
    %4954 = vmatpush.msra.mxu0 %v4831
    %4955 = vmatpush.msra.mxu0 %v4827
    %4956 = vmatpush.msra.mxu0 %v4823
    %4957 = vmatpush.msra.mxu0 %v4819
    %4958 = vmatpush.msra.mxu0 %v4815
    %4959 = vmatpush.msra.mxu0 %v4811
    %4960 = vmatpush.msra.mxu0 %v4807
    %4961 = vmatpush.msra.mxu0 %v4803
    %4962 = vmatpush.msra.mxu0 %v4799
    %4963 = vmatpush.msra.mxu0 %v4795
    %4964 = vmatpush.msra.mxu0 %v4791
    %4965 = vmatpush.msra.mxu0 %v4787
    %4966 = vmatmul.f32.gmra.mxu0 %v4310
    %v4967 = vpop.f32.mrf.mxu0
    %v4968 = vadd.f32 %v4948, %v4967
    %4969 = vdwg.mxu0
    %4970 = vmatpush.msra.mxu0 %v4720
    %4971 = vmatpush.msra.mxu0 %v4716
    %4972 = vmatpush.msra.mxu0 %v4712
    %4973 = vmatpush.msra.mxu0 %v4708
    %4974 = vmatpush.msra.mxu0 %v4704
    %4975 = vmatpush.msra.mxu0 %v4700
    %4976 = vmatpush.msra.mxu0 %v4696
    %4977 = vmatpush.msra.mxu0 %v4692
    %4978 = vmatpush.msra.mxu0 %v4688
    %4979 = vmatpush.msra.mxu0 %v4684
    %4980 = vmatpush.msra.mxu0 %v4680
    %4981 = vmatpush.msra.mxu0 %v4676
    %4982 = vmatpush.msra.mxu0 %v4672
    %4983 = vmatpush.msra.mxu0 %v4668
    %4984 = vmatpush.msra.mxu0 %v4664
    %4985 = vmatpush.msra.mxu0 %v4660
    %4986 = vmatmul.f32.gmra.mxu0 %v4528
    %v4987 = vpop.f32.mrf.mxu0
    %v4988 = vadd.f32 %v629, %v4987
    %4989 = vdwg.mxu0
    %4990 = vmatpush.msra.mxu0 %v4784
    %4991 = vmatpush.msra.mxu0 %v4780
    %4992 = vmatpush.msra.mxu0 %v4776
    %4993 = vmatpush.msra.mxu0 %v4772
    %4994 = vmatpush.msra.mxu0 %v4768
    %4995 = vmatpush.msra.mxu0 %v4764
    %4996 = vmatpush.msra.mxu0 %v4760
    %4997 = vmatpush.msra.mxu0 %v4756
    %4998 = vmatpush.msra.mxu0 %v4752
    %4999 = vmatpush.msra.mxu0 %v4748
    %5000 = vmatpush.msra.mxu0 %v4744
    %5001 = vmatpush.msra.mxu0 %v4740
    %5002 = vmatpush.msra.mxu0 %v4736
    %5003 = vmatpush.msra.mxu0 %v4732
    %5004 = vmatpush.msra.mxu0 %v4728
    %5005 = vmatpush.msra.mxu0 %v4724
    %5006 = vmatmul.f32.gmra.mxu0 %v4656
    %v5007 = vpop.f32.mrf.mxu0
    %v5008 = vadd.f32 %v4988, %v5007
    %5009 = vdwg.mxu0
    %5010 = vmatpush.msra.mxu0 %v4848
    %5011 = vmatpush.msra.mxu0 %v4844
    %5012 = vmatpush.msra.mxu0 %v4840
    %5013 = vmatpush.msra.mxu0 %v4836
    %5014 = vmatpush.msra.mxu0 %v4832
    %5015 = vmatpush.msra.mxu0 %v4828
    %5016 = vmatpush.msra.mxu0 %v4824
    %5017 = vmatpush.msra.mxu0 %v4820
    %5018 = vmatpush.msra.mxu0 %v4816
    %5019 = vmatpush.msra.mxu0 %v4812
    %5020 = vmatpush.msra.mxu0 %v4808
    %5021 = vmatpush.msra.mxu0 %v4804
    %5022 = vmatpush.msra.mxu0 %v4800
    %5023 = vmatpush.msra.mxu0 %v4796
    %5024 = vmatpush.msra.mxu0 %v4792
    %5025 = vmatpush.msra.mxu0 %v4788
    %5026 = vmatmul.f32.gmra.mxu0 %v4310
    %v5027 = vpop.f32.mrf.mxu0
    %v5028 = vadd.f32 %v5008, %v5027
    %5029 = vdwg.mxu0
    %5030 = vmatpush.msra.mxu0 %v4721
    %5031 = vmatpush.msra.mxu0 %v4717
    %5032 = vmatpush.msra.mxu0 %v4713
    %5033 = vmatpush.msra.mxu0 %v4709
    %5034 = vmatpush.msra.mxu0 %v4705
    %5035 = vmatpush.msra.mxu0 %v4701
    %5036 = vmatpush.msra.mxu0 %v4697
    %5037 = vmatpush.msra.mxu0 %v4693
    %5038 = vmatpush.msra.mxu0 %v4689
    %5039 = vmatpush.msra.mxu0 %v4685
    %5040 = vmatpush.msra.mxu0 %v4681
    %5041 = vmatpush.msra.mxu0 %v4677
    %5042 = vmatpush.msra.mxu0 %v4673
    %5043 = vmatpush.msra.mxu0 %v4669
    %5044 = vmatpush.msra.mxu0 %v4665
    %5045 = vmatpush.msra.mxu0 %v4661
    %5046 = vmatmul.f32.gmra.mxu0 %v4528
    %v5047 = vpop.f32.mrf.mxu0
    %v5048 = vadd.f32 %v630, %v5047
    %5049 = vdwg.mxu0
    %5050 = vmatpush.msra.mxu0 %v4785
    %5051 = vmatpush.msra.mxu0 %v4781
    %5052 = vmatpush.msra.mxu0 %v4777
    %5053 = vmatpush.msra.mxu0 %v4773
    %5054 = vmatpush.msra.mxu0 %v4769
    %5055 = vmatpush.msra.mxu0 %v4765
    %5056 = vmatpush.msra.mxu0 %v4761
    %5057 = vmatpush.msra.mxu0 %v4757
    %5058 = vmatpush.msra.mxu0 %v4753
    %5059 = vmatpush.msra.mxu0 %v4749
    %5060 = vmatpush.msra.mxu0 %v4745
    %5061 = vmatpush.msra.mxu0 %v4741
    %5062 = vmatpush.msra.mxu0 %v4737
    %5063 = vmatpush.msra.mxu0 %v4733
    %5064 = vmatpush.msra.mxu0 %v4729
    %5065 = vmatpush.msra.mxu0 %v4725
    %5066 = vmatmul.f32.gmra.mxu0 %v4656
    %v5067 = vpop.f32.mrf.mxu0
    %v5068 = vadd.f32 %v5048, %v5067
    %5069 = vdwg.mxu0
    %5070 = vmatpush.msra.mxu0 %v4849
    %5071 = vmatpush.msra.mxu0 %v4845
    %5072 = vmatpush.msra.mxu0 %v4841
    %5073 = vmatpush.msra.mxu0 %v4837
    %5074 = vmatpush.msra.mxu0 %v4833
    %5075 = vmatpush.msra.mxu0 %v4829
    %5076 = vmatpush.msra.mxu0 %v4825
    %5077 = vmatpush.msra.mxu0 %v4821
    %5078 = vmatpush.msra.mxu0 %v4817
    %5079 = vmatpush.msra.mxu0 %v4813
    %5080 = vmatpush.msra.mxu0 %v4809
    %5081 = vmatpush.msra.mxu0 %v4805
    %5082 = vmatpush.msra.mxu0 %v4801
    %5083 = vmatpush.msra.mxu0 %v4797
    %5084 = vmatpush.msra.mxu0 %v4793
    %5085 = vmatpush.msra.mxu0 %v4789
    %5086 = vmatmul.f32.gmra.mxu0 %v4310
    %v5087 = vpop.f32.mrf.mxu0
    %v5088 = vadd.f32 %v5068, %v5087
    %5089 = vdwg.mxu0
    %v5090 = vxor.u32 %v4908, 2147483648
    %v5091 = vmul.f32 %v5090, 1.442695
    %v5092 = vpow.pop %v5091
    %v5093 = vadd.f32 %v5092, 1.0
    %v5094 = vrcp.pop %v5093
    %v5095 = vmul.f32 %v5093, %v5094
    %v5096 = vsub.f32 1.0, %v5095
    %v5097 = vmul.f32 %v5094, %v5096
    %v5098 = vadd.f32 %v5094, %v5097
    %vm5099 = vweird.f32 %v5093
    %vm5100 = vweird.f32 %v5094
    %vm5101 = vmor %vm5099, %vm5100
    %v5102 = vsel %vm5101, %v5094, %v5098
    %v5103 = vand.u32 2147483647, %v5093
    %vm5104 = vcmp.eq.f32.partialorder %v5103, 8.507059e+37
    %v5105 = vand.u32 %v5093, 2147483648
    %v5106 = vor.u32 1.1754944e-38, %v5105
    %v5107 = vsel %vm5104, %v5106, %v5102
    %v5108 = vmul.f32 1.0, %v5107
    %v5109 = vxor.u32 %v4968, 2147483648
    %v5110 = vmul.f32 %v5109, 1.442695
    %v5111 = vpow.pop %v5110
    %v5112 = vadd.f32 %v5111, 1.0
    %v5113 = vrcp.pop %v5112
    %v5114 = vmul.f32 %v5112, %v5113
    %v5115 = vsub.f32 1.0, %v5114
    %v5116 = vmul.f32 %v5113, %v5115
    %v5117 = vadd.f32 %v5113, %v5116
    %vm5118 = vweird.f32 %v5112
    %vm5119 = vweird.f32 %v5113
    %vm5120 = vmor %vm5118, %vm5119
    %v5121 = vsel %vm5120, %v5113, %v5117
    %v5122 = vand.u32 2147483647, %v5112
    %vm5123 = vcmp.eq.f32.partialorder %v5122, 8.507059e+37
    %v5124 = vand.u32 %v5112, 2147483648
    %v5125 = vor.u32 1.1754944e-38, %v5124
    %v5126 = vsel %vm5123, %v5125, %v5121
    %v5127 = vmul.f32 1.0, %v5126
    %v5128 = vtanh.pop %v5028
    %v5129 = vxor.u32 %v5088, 2147483648
    %v5130 = vmul.f32 %v5129, 1.442695
    %v5131 = vpow.pop %v5130
    %v5132 = vadd.f32 %v5131, 1.0
    %v5133 = vrcp.pop %v5132
    %v5134 = vmul.f32 %v5132, %v5133
    %v5135 = vsub.f32 1.0, %v5134
    %v5136 = vmul.f32 %v5133, %v5135
    %v5137 = vadd.f32 %v5133, %v5136
    %vm5138 = vweird.f32 %v5132
    %vm5139 = vweird.f32 %v5133
    %vm5140 = vmor %vm5138, %vm5139
    %v5141 = vsel %vm5140, %v5133, %v5137
    %v5142 = vand.u32 2147483647, %v5132
    %vm5143 = vcmp.eq.f32.partialorder %v5142, 8.507059e+37
    %v5144 = vand.u32 %v5132, 2147483648
    %v5145 = vor.u32 1.1754944e-38, %v5144
    %v5146 = vsel %vm5143, %v5145, %v5141
    %v5147 = vmul.f32 1.0, %v5146
    %v5148 = vmul.f32 %v5127, %v4308
    %v5149 = vmul.f32 %v5108, %v5128
    %v5150 = vadd.f32 %v5148, %v5149
    %v5151 = vtanh.pop %v5150
    %v5152 = vmul.f32 %v5147, %v5151
    %v5153 = vld [vmem:[#allocation11] sm:$0xff]
    %v5154 = vld [vmem:[#allocation11 + $0x8] sm:$0xff]
    %v5155 = vld [vmem:[#allocation11 + $0x10] sm:$0xff]
    %v5156 = vld [vmem:[#allocation11 + $0x18] sm:$0xff]
    %v5157 = vld [vmem:[#allocation11 + $0x20] sm:$0xff]
    %v5158 = vld [vmem:[#allocation11 + $0x28] sm:$0xff]
    %v5159 = vld [vmem:[#allocation11 + $0x30] sm:$0xff]
    %v5160 = vld [vmem:[#allocation11 + $0x38] sm:$0xff]
    %v5161 = vld [vmem:[#allocation11 + $0x40] sm:$0xff]
    %v5162 = vld [vmem:[#allocation11 + $0x48] sm:$0xff]
    %v5163 = vld [vmem:[#allocation11 + $0x50] sm:$0xff]
    %v5164 = vld [vmem:[#allocation11 + $0x58] sm:$0xff]
    %v5165 = vld [vmem:[#allocation11 + $0x60] sm:$0xff]
    %v5166 = vld [vmem:[#allocation11 + $0x68] sm:$0xff]
    %v5167 = vld [vmem:[#allocation11 + $0x70] sm:$0xff]
    %v5168 = vld [vmem:[#allocation11 + $0x78] sm:$0xff]
    %v5169 = vld [vmem:[#allocation11 + $0x80] sm:$0xff]
    %v5170 = vld [vmem:[#allocation11 + $0x88] sm:$0xff]
    %v5171 = vld [vmem:[#allocation11 + $0x90] sm:$0xff]
    %v5172 = vld [vmem:[#allocation11 + $0x98] sm:$0xff]
    %v5173 = vld [vmem:[#allocation11 + $0xa0] sm:$0xff]
    %v5174 = vld [vmem:[#allocation11 + $0xa8] sm:$0xff]
    %v5175 = vld [vmem:[#allocation11 + $0xb0] sm:$0xff]
    %v5176 = vld [vmem:[#allocation11 + $0xb8] sm:$0xff]
    %v5177 = vld [vmem:[#allocation11 + $0xc0] sm:$0xff]
    %v5178 = vld [vmem:[#allocation11 + $0xc8] sm:$0xff]
    %v5179 = vld [vmem:[#allocation11 + $0xd0] sm:$0xff]
    %v5180 = vld [vmem:[#allocation11 + $0xd8] sm:$0xff]
    %v5181 = vld [vmem:[#allocation11 + $0xe0] sm:$0xff]
    %v5182 = vld [vmem:[#allocation11 + $0xe8] sm:$0xff]
    %v5183 = vld [vmem:[#allocation11 + $0xf0] sm:$0xff]
    %v5184 = vld [vmem:[#allocation11 + $0xf8] sm:$0xff]
    %v5185 = vld [vmem:[#allocation11 + $0x100] sm:$0xff]
    %v5186 = vld [vmem:[#allocation11 + $0x108] sm:$0xff]
    %v5187 = vld [vmem:[#allocation11 + $0x110] sm:$0xff]
    %v5188 = vld [vmem:[#allocation11 + $0x118] sm:$0xff]
    %v5189 = vld [vmem:[#allocation11 + $0x120] sm:$0xff]
    %v5190 = vld [vmem:[#allocation11 + $0x128] sm:$0xff]
    %v5191 = vld [vmem:[#allocation11 + $0x130] sm:$0xff]
    %v5192 = vld [vmem:[#allocation11 + $0x138] sm:$0xff]
    %v5193 = vld [vmem:[#allocation11 + $0x140] sm:$0xff]
    %v5194 = vld [vmem:[#allocation11 + $0x148] sm:$0xff]
    %v5195 = vld [vmem:[#allocation11 + $0x150] sm:$0xff]
    %v5196 = vld [vmem:[#allocation11 + $0x158] sm:$0xff]
    %v5197 = vld [vmem:[#allocation11 + $0x160] sm:$0xff]
    %v5198 = vld [vmem:[#allocation11 + $0x168] sm:$0xff]
    %v5199 = vld [vmem:[#allocation11 + $0x170] sm:$0xff]
    %v5200 = vld [vmem:[#allocation11 + $0x178] sm:$0xff]
    %v5201 = vld [vmem:[#allocation11 + $0x180] sm:$0xff]
    %v5202 = vld [vmem:[#allocation11 + $0x188] sm:$0xff]
    %v5203 = vld [vmem:[#allocation11 + $0x190] sm:$0xff]
    %v5204 = vld [vmem:[#allocation11 + $0x198] sm:$0xff]
    %v5205 = vld [vmem:[#allocation11 + $0x1a0] sm:$0xff]
    %v5206 = vld [vmem:[#allocation11 + $0x1a8] sm:$0xff]
    %v5207 = vld [vmem:[#allocation11 + $0x1b0] sm:$0xff]
    %v5208 = vld [vmem:[#allocation11 + $0x1b8] sm:$0xff]
    %v5209 = vld [vmem:[#allocation11 + $0x1c0] sm:$0xff]
    %v5210 = vld [vmem:[#allocation11 + $0x1c8] sm:$0xff]
    %v5211 = vld [vmem:[#allocation11 + $0x1d0] sm:$0xff]
    %v5212 = vld [vmem:[#allocation11 + $0x1d8] sm:$0xff]
    %v5213 = vld [vmem:[#allocation11 + $0x1e0] sm:$0xff]
    %v5214 = vld [vmem:[#allocation11 + $0x1e8] sm:$0xff]
    %v5215 = vld [vmem:[#allocation11 + $0x1f0] sm:$0xff]
    %v5216 = vld [vmem:[#allocation11 + $0x1f8] sm:$0xff]
    %v5217 = vld [vmem:[#allocation11 + $0x200] sm:$0xff]
    %v5218 = vld [vmem:[#allocation11 + $0x208] sm:$0xff]
    %v5219 = vld [vmem:[#allocation11 + $0x210] sm:$0xff]
    %v5220 = vld [vmem:[#allocation11 + $0x218] sm:$0xff]
    %v5221 = vld [vmem:[#allocation11 + $0x220] sm:$0xff]
    %v5222 = vld [vmem:[#allocation11 + $0x228] sm:$0xff]
    %v5223 = vld [vmem:[#allocation11 + $0x230] sm:$0xff]
    %v5224 = vld [vmem:[#allocation11 + $0x238] sm:$0xff]
    %v5225 = vld [vmem:[#allocation11 + $0x240] sm:$0xff]
    %v5226 = vld [vmem:[#allocation11 + $0x248] sm:$0xff]
    %v5227 = vld [vmem:[#allocation11 + $0x250] sm:$0xff]
    %v5228 = vld [vmem:[#allocation11 + $0x258] sm:$0xff]
    %v5229 = vld [vmem:[#allocation11 + $0x260] sm:$0xff]
    %v5230 = vld [vmem:[#allocation11 + $0x268] sm:$0xff]
    %v5231 = vld [vmem:[#allocation11 + $0x270] sm:$0xff]
    %v5232 = vld [vmem:[#allocation11 + $0x278] sm:$0xff]
    %v5233 = vld [vmem:[#allocation11 + $0x280] sm:$0xff]
    %v5234 = vld [vmem:[#allocation11 + $0x288] sm:$0xff]
    %v5235 = vld [vmem:[#allocation11 + $0x290] sm:$0xff]
    %v5236 = vld [vmem:[#allocation11 + $0x298] sm:$0xff]
    %v5237 = vld [vmem:[#allocation11 + $0x2a0] sm:$0xff]
    %v5238 = vld [vmem:[#allocation11 + $0x2a8] sm:$0xff]
    %v5239 = vld [vmem:[#allocation11 + $0x2b0] sm:$0xff]
    %v5240 = vld [vmem:[#allocation11 + $0x2b8] sm:$0xff]
    %v5241 = vld [vmem:[#allocation11 + $0x2c0] sm:$0xff]
    %v5242 = vld [vmem:[#allocation11 + $0x2c8] sm:$0xff]
    %v5243 = vld [vmem:[#allocation11 + $0x2d0] sm:$0xff]
    %v5244 = vld [vmem:[#allocation11 + $0x2d8] sm:$0xff]
    %v5245 = vld [vmem:[#allocation11 + $0x2e0] sm:$0xff]
    %v5246 = vld [vmem:[#allocation11 + $0x2e8] sm:$0xff]
    %v5247 = vld [vmem:[#allocation11 + $0x2f0] sm:$0xff]
    %v5248 = vld [vmem:[#allocation11 + $0x2f8] sm:$0xff]
    %5249 = vmatpush.msra.mxu0 %v5183
    %5250 = vmatpush.msra.mxu0 %v5181
    %5251 = vmatpush.msra.mxu0 %v5179
    %5252 = vmatpush.msra.mxu0 %v5177
    %5253 = vmatpush.msra.mxu0 %v5175
    %5254 = vmatpush.msra.mxu0 %v5173
    %5255 = vmatpush.msra.mxu0 %v5171
    %5256 = vmatpush.msra.mxu0 %v5169
    %5257 = vmatpush.msra.mxu0 %v5167
    %5258 = vmatpush.msra.mxu0 %v5165
    %5259 = vmatpush.msra.mxu0 %v5163
    %5260 = vmatpush.msra.mxu0 %v5161
    %5261 = vmatpush.msra.mxu0 %v5159
    %5262 = vmatpush.msra.mxu0 %v5157
    %5263 = vmatpush.msra.mxu0 %v5155
    %5264 = vmatpush.msra.mxu0 %v5153
    %5265 = vmatmul.f32.gmra.mxu0 %v4656
    %v5266 = vpop.f32.mrf.mxu0
    %v5267 = vadd.f32 %v1035, %v5266
    %5268 = vdwg.mxu0
    %5269 = vmatpush.msra.mxu0 %v5215
    %5270 = vmatpush.msra.mxu0 %v5213
    %5271 = vmatpush.msra.mxu0 %v5211
    %5272 = vmatpush.msra.mxu0 %v5209
    %5273 = vmatpush.msra.mxu0 %v5207
    %5274 = vmatpush.msra.mxu0 %v5205
    %5275 = vmatpush.msra.mxu0 %v5203
    %5276 = vmatpush.msra.mxu0 %v5201
    %5277 = vmatpush.msra.mxu0 %v5199
    %5278 = vmatpush.msra.mxu0 %v5197
    %5279 = vmatpush.msra.mxu0 %v5195
    %5280 = vmatpush.msra.mxu0 %v5193
    %5281 = vmatpush.msra.mxu0 %v5191
    %5282 = vmatpush.msra.mxu0 %v5189
    %5283 = vmatpush.msra.mxu0 %v5187
    %5284 = vmatpush.msra.mxu0 %v5185
    %5285 = vmatmul.f32.gmra.mxu0 %v4528
    %v5286 = vpop.f32.mrf.mxu0
    %v5287 = vadd.f32 %v5267, %v5286
    %5288 = vdwg.mxu0
    %5289 = vmatpush.msra.mxu0 %v5247
    %5290 = vmatpush.msra.mxu0 %v5245
    %5291 = vmatpush.msra.mxu0 %v5243
    %5292 = vmatpush.msra.mxu0 %v5241
    %5293 = vmatpush.msra.mxu0 %v5239
    %5294 = vmatpush.msra.mxu0 %v5237
    %5295 = vmatpush.msra.mxu0 %v5235
    %5296 = vmatpush.msra.mxu0 %v5233
    %5297 = vmatpush.msra.mxu0 %v5231
    %5298 = vmatpush.msra.mxu0 %v5229
    %5299 = vmatpush.msra.mxu0 %v5227
    %5300 = vmatpush.msra.mxu0 %v5225
    %5301 = vmatpush.msra.mxu0 %v5223
    %5302 = vmatpush.msra.mxu0 %v5221
    %5303 = vmatpush.msra.mxu0 %v5219
    %5304 = vmatpush.msra.mxu0 %v5217
    %5305 = vmatmul.f32.gmra.mxu0 %v5152
    %v5306 = vpop.f32.mrf.mxu0
    %v5307 = vadd.f32 %v5287, %v5306
    %5308 = vdwg.mxu0
    %5309 = vmatpush.msra.mxu0 %v5184
    %5310 = vmatpush.msra.mxu0 %v5182
    %5311 = vmatpush.msra.mxu0 %v5180
    %5312 = vmatpush.msra.mxu0 %v5178
    %5313 = vmatpush.msra.mxu0 %v5176
    %5314 = vmatpush.msra.mxu0 %v5174
    %5315 = vmatpush.msra.mxu0 %v5172
    %5316 = vmatpush.msra.mxu0 %v5170
    %5317 = vmatpush.msra.mxu0 %v5168
    %5318 = vmatpush.msra.mxu0 %v5166
    %5319 = vmatpush.msra.mxu0 %v5164
    %5320 = vmatpush.msra.mxu0 %v5162
    %5321 = vmatpush.msra.mxu0 %v5160
    %5322 = vmatpush.msra.mxu0 %v5158
    %5323 = vmatpush.msra.mxu0 %v5156
    %5324 = vmatpush.msra.mxu0 %v5154
    %5325 = vmatmul.f32.gmra.mxu0 %v4656
    %v5326 = vpop.f32.mrf.mxu0
    %v5327 = vadd.f32 %v1036, %v5326
    %5328 = vdwg.mxu0
    %5329 = vmatpush.msra.mxu0 %v5216
    %5330 = vmatpush.msra.mxu0 %v5214
    %5331 = vmatpush.msra.mxu0 %v5212
    %5332 = vmatpush.msra.mxu0 %v5210
    %5333 = vmatpush.msra.mxu0 %v5208
    %5334 = vmatpush.msra.mxu0 %v5206
    %5335 = vmatpush.msra.mxu0 %v5204
    %5336 = vmatpush.msra.mxu0 %v5202
    %5337 = vmatpush.msra.mxu0 %v5200
    %5338 = vmatpush.msra.mxu0 %v5198
    %5339 = vmatpush.msra.mxu0 %v5196
    %5340 = vmatpush.msra.mxu0 %v5194
    %5341 = vmatpush.msra.mxu0 %v5192
    %5342 = vmatpush.msra.mxu0 %v5190
    %5343 = vmatpush.msra.mxu0 %v5188
    %5344 = vmatpush.msra.mxu0 %v5186
    %5345 = vmatmul.f32.gmra.mxu0 %v4528
    %v5346 = vpop.f32.mrf.mxu0
    %v5347 = vadd.f32 %v5327, %v5346
    %5348 = vdwg.mxu0
    %5349 = vmatpush.msra.mxu0 %v5248
    %5350 = vmatpush.msra.mxu0 %v5246
    %5351 = vmatpush.msra.mxu0 %v5244
    %5352 = vmatpush.msra.mxu0 %v5242
    %5353 = vmatpush.msra.mxu0 %v5240
    %5354 = vmatpush.msra.mxu0 %v5238
    %5355 = vmatpush.msra.mxu0 %v5236
    %5356 = vmatpush.msra.mxu0 %v5234
    %5357 = vmatpush.msra.mxu0 %v5232
    %5358 = vmatpush.msra.mxu0 %v5230
    %5359 = vmatpush.msra.mxu0 %v5228
    %5360 = vmatpush.msra.mxu0 %v5226
    %5361 = vmatpush.msra.mxu0 %v5224
    %5362 = vmatpush.msra.mxu0 %v5222
    %5363 = vmatpush.msra.mxu0 %v5220
    %5364 = vmatpush.msra.mxu0 %v5218
    %5365 = vmatmul.f32.gmra.mxu0 %v5152
    %v5366 = vpop.f32.mrf.mxu0
    %v5367 = vadd.f32 %v5347, %v5366
    %5368 = vdwg.mxu0
    %s5369 = scalar_lea.vmem [#allocation5], 12
    %v5370 = vld [vmem:[%s5369] sm:$0x3]
    %v5372 = vrot.slane %v5152, 1
    %5374 = vmatpush.xpose.msra.mxu0 0.0
    %5375 = vmatpush.xpose.msra.mxu0 0.0
    %5376 = vmatpush.xpose.msra.mxu0 0.0
    %5377 = vmatpush.xpose.msra.mxu0 0.0
    %5378 = vmatpush.xpose.msra.mxu0 0.0
    %5379 = vmatpush.xpose.msra.mxu0 0.0
    %5380 = vmatpush.xpose.msra.mxu0 0.0
    %5381 = vmatpush.xpose.msra.mxu0 0.0
    %5382 = vmatpush.xpose.msra.mxu0 0.0
    %5383 = vmatpush.xpose.msra.mxu0 0.0
    %5384 = vmatpush.xpose.msra.mxu0 0.0
    %5385 = vmatpush.xpose.msra.mxu0 0.0
    %5386 = vmatpush.xpose.msra.mxu0 0.0
    %5387 = vmatpush.xpose.msra.mxu0 0.0
    %5388 = vmatpush.xpose.msra.mxu0 %v290
    %5389 = vmatpush.xpose.msra.mxu0 %v287
    %5390 = vmatmul.f32.gmra.mxu0 %v5152
    %v5391 = vpop.f32.mrf.mxu0
    %v5392 = vadd.f32 0.0, %v5391
    %5393 = vdwg.mxu0
    %5394 = vmatpush.xpose.msra.mxu0 0.0
    %5395 = vmatpush.xpose.msra.mxu0 0.0
    %5396 = vmatpush.xpose.msra.mxu0 0.0
    %5397 = vmatpush.xpose.msra.mxu0 0.0
    %5398 = vmatpush.xpose.msra.mxu0 0.0
    %5399 = vmatpush.xpose.msra.mxu0 0.0
    %5400 = vmatpush.xpose.msra.mxu0 0.0
    %5401 = vmatpush.xpose.msra.mxu0 0.0
    %5402 = vmatpush.xpose.msra.mxu0 0.0
    %5403 = vmatpush.xpose.msra.mxu0 0.0
    %5404 = vmatpush.xpose.msra.mxu0 0.0
    %5405 = vmatpush.xpose.msra.mxu0 0.0
    %5406 = vmatpush.xpose.msra.mxu0 0.0
    %5407 = vmatpush.xpose.msra.mxu0 0.0
    %5408 = vmatpush.xpose.msra.mxu0 %v296
    %5409 = vmatpush.xpose.msra.mxu0 %v293
    %5410 = vmatmul.f32.gmra.mxu0 %v5372
    %v5411 = vpop.f32.mrf.mxu0
    %v5412 = vadd.f32 0.0, %v5411
    %5413 = vdwg.mxu0
    %v5414 = vmul.f32 %v5392, 0.088388346
    %v5415 = vmul.f32 %v5412, 0.088388346
    %v5418 = vrot.slane %v5415, 7
    %v5419 = vsel %vm154, %v5418, %v5414
    %v5421 = vsel %vm353, %v5419, -inf
    %5422 = vmax.xlane.f32.xlu0 %v5421
    %v5423 = vpop.xlane.xlu0 %5422
    %v5425 = vrot.slane %v5423, 1
    %v5428 = vsub.f32 %v5414, %v5423
    %v5429 = vsub.f32 %v5415, %v5425
    %v5430 = vmul.f32 %v5428, 1.442695
    %v5431 = vpow.pop %v5430
    %v5432 = vmul.f32 %v5429, 1.442695
    %v5433 = vpow.pop %v5432
    %v5436 = vrot.slane %v5433, 7
    %v5437 = vsel %vm154, %v5436, %v5431
    %v5439 = vsel %vm353, %v5437, 0.0
    %5440 = vadd.xlane.f32.xlu0 %v5439
    %v5441 = vpop.xlane.xlu0 %5440
    %v5442 = vrcp.pop %v5441
    %v5444 = vrot.slane %v5442, 1
    %v5447 = vmul.f32 %v5431, %v5442
    %v5448 = vmul.f32 %v5433, %v5444
    %v5450 = vsel %vm382, %v5447, 0
    %5452 = vmatpush.msra.mxu0 0.0
    %5453 = vmatpush.msra.mxu0 0.0
    %5454 = vmatpush.msra.mxu0 0.0
    %5455 = vmatpush.msra.mxu0 0.0
    %5456 = vmatpush.msra.mxu0 0.0
    %5457 = vmatpush.msra.mxu0 0.0
    %5458 = vmatpush.msra.mxu0 0.0
    %5459 = vmatpush.msra.mxu0 0.0
    %5460 = vmatpush.msra.mxu0 0.0
    %5461 = vmatpush.msra.mxu0 0.0
    %5462 = vmatpush.msra.mxu0 0.0
    %5463 = vmatpush.msra.mxu0 0.0
    %5464 = vmatpush.msra.mxu0 0.0
    %5465 = vmatpush.msra.mxu0 0.0
    %5466 = vmatpush.msra.mxu0 %v126
    %5467 = vmatpush.msra.mxu0 %v125
    %5468 = vmatmul.f32.gmra.mxu0 %v5450
    %v5469 = vpop.f32.mrf.mxu0
    %v5470 = vadd.f32 0.0, %v5469
    %5471 = vdwg.mxu0
    %v5473 = vsel %vm382, %v5448, 0
    %5475 = vmatpush.msra.mxu0 0.0
    %5476 = vmatpush.msra.mxu0 0.0
    %5477 = vmatpush.msra.mxu0 0.0
    %5478 = vmatpush.msra.mxu0 0.0
    %5479 = vmatpush.msra.mxu0 0.0
    %5480 = vmatpush.msra.mxu0 0.0
    %5481 = vmatpush.msra.mxu0 0.0
    %5482 = vmatpush.msra.mxu0 0.0
    %5483 = vmatpush.msra.mxu0 0.0
    %5484 = vmatpush.msra.mxu0 0.0
    %5485 = vmatpush.msra.mxu0 0.0
    %5486 = vmatpush.msra.mxu0 0.0
    %5487 = vmatpush.msra.mxu0 0.0
    %5488 = vmatpush.msra.mxu0 0.0
    %5489 = vmatpush.msra.mxu0 %v128
    %5490 = vmatpush.msra.mxu0 %v127
    %5491 = vmatmul.f32.gmra.mxu0 %v5473
    %v5492 = vpop.f32.mrf.mxu0
    %v5493 = vadd.f32 0.0, %v5492
    %5494 = vdwg.mxu0
    %v5497 = vrot.slane %v5493, 7
    %v5498 = vsel %vm154, %v5497, %v5470
    %v5500 = vld [vmem:[#allocation10] sm:$0xff]
    %v5501 = vld [vmem:[#allocation10 + $0x8] sm:$0xff]
    %v5502 = vld [vmem:[#allocation10 + $0x10] sm:$0xff]
    %v5503 = vld [vmem:[#allocation10 + $0x18] sm:$0xff]
    %v5504 = vld [vmem:[#allocation10 + $0x20] sm:$0xff]
    %v5505 = vld [vmem:[#allocation10 + $0x28] sm:$0xff]
    %v5506 = vld [vmem:[#allocation10 + $0x30] sm:$0xff]
    %v5507 = vld [vmem:[#allocation10 + $0x38] sm:$0xff]
    %v5508 = vld [vmem:[#allocation10 + $0x40] sm:$0xff]
    %v5509 = vld [vmem:[#allocation10 + $0x48] sm:$0xff]
    %v5510 = vld [vmem:[#allocation10 + $0x50] sm:$0xff]
    %v5511 = vld [vmem:[#allocation10 + $0x58] sm:$0xff]
    %v5512 = vld [vmem:[#allocation10 + $0x60] sm:$0xff]
    %v5513 = vld [vmem:[#allocation10 + $0x68] sm:$0xff]
    %v5514 = vld [vmem:[#allocation10 + $0x70] sm:$0xff]
    %v5515 = vld [vmem:[#allocation10 + $0x78] sm:$0xff]
    %v5516 = vld [vmem:[#allocation10 + $0x80] sm:$0xff]
    %v5517 = vld [vmem:[#allocation10 + $0x88] sm:$0xff]
    %v5518 = vld [vmem:[#allocation10 + $0x90] sm:$0xff]
    %v5519 = vld [vmem:[#allocation10 + $0x98] sm:$0xff]
    %v5520 = vld [vmem:[#allocation10 + $0xa0] sm:$0xff]
    %v5521 = vld [vmem:[#allocation10 + $0xa8] sm:$0xff]
    %v5522 = vld [vmem:[#allocation10 + $0xb0] sm:$0xff]
    %v5523 = vld [vmem:[#allocation10 + $0xb8] sm:$0xff]
    %v5524 = vld [vmem:[#allocation10 + $0xc0] sm:$0xff]
    %v5525 = vld [vmem:[#allocation10 + $0xc8] sm:$0xff]
    %v5526 = vld [vmem:[#allocation10 + $0xd0] sm:$0xff]
    %v5527 = vld [vmem:[#allocation10 + $0xd8] sm:$0xff]
    %v5528 = vld [vmem:[#allocation10 + $0xe0] sm:$0xff]
    %v5529 = vld [vmem:[#allocation10 + $0xe8] sm:$0xff]
    %v5530 = vld [vmem:[#allocation10 + $0xf0] sm:$0xff]
    %v5531 = vld [vmem:[#allocation10 + $0xf8] sm:$0xff]
    %v5532 = vld [vmem:[#allocation10 + $0x100] sm:$0xff]
    %v5533 = vld [vmem:[#allocation10 + $0x108] sm:$0xff]
    %v5534 = vld [vmem:[#allocation10 + $0x110] sm:$0xff]
    %v5535 = vld [vmem:[#allocation10 + $0x118] sm:$0xff]
    %v5536 = vld [vmem:[#allocation10 + $0x120] sm:$0xff]
    %v5537 = vld [vmem:[#allocation10 + $0x128] sm:$0xff]
    %v5538 = vld [vmem:[#allocation10 + $0x130] sm:$0xff]
    %v5539 = vld [vmem:[#allocation10 + $0x138] sm:$0xff]
    %v5540 = vld [vmem:[#allocation10 + $0x140] sm:$0xff]
    %v5541 = vld [vmem:[#allocation10 + $0x148] sm:$0xff]
    %v5542 = vld [vmem:[#allocation10 + $0x150] sm:$0xff]
    %v5543 = vld [vmem:[#allocation10 + $0x158] sm:$0xff]
    %v5544 = vld [vmem:[#allocation10 + $0x160] sm:$0xff]
    %v5545 = vld [vmem:[#allocation10 + $0x168] sm:$0xff]
    %v5546 = vld [vmem:[#allocation10 + $0x170] sm:$0xff]
    %v5547 = vld [vmem:[#allocation10 + $0x178] sm:$0xff]
    %v5548 = vld [vmem:[#allocation10 + $0x180] sm:$0xff]
    %v5549 = vld [vmem:[#allocation10 + $0x188] sm:$0xff]
    %v5550 = vld [vmem:[#allocation10 + $0x190] sm:$0xff]
    %v5551 = vld [vmem:[#allocation10 + $0x198] sm:$0xff]
    %v5552 = vld [vmem:[#allocation10 + $0x1a0] sm:$0xff]
    %v5553 = vld [vmem:[#allocation10 + $0x1a8] sm:$0xff]
    %v5554 = vld [vmem:[#allocation10 + $0x1b0] sm:$0xff]
    %v5555 = vld [vmem:[#allocation10 + $0x1b8] sm:$0xff]
    %v5556 = vld [vmem:[#allocation10 + $0x1c0] sm:$0xff]
    %v5557 = vld [vmem:[#allocation10 + $0x1c8] sm:$0xff]
    %v5558 = vld [vmem:[#allocation10 + $0x1d0] sm:$0xff]
    %v5559 = vld [vmem:[#allocation10 + $0x1d8] sm:$0xff]
    %v5560 = vld [vmem:[#allocation10 + $0x1e0] sm:$0xff]
    %v5561 = vld [vmem:[#allocation10 + $0x1e8] sm:$0xff]
    %v5562 = vld [vmem:[#allocation10 + $0x1f0] sm:$0xff]
    %v5563 = vld [vmem:[#allocation10 + $0x1f8] sm:$0xff]
    %v5564 = vld [vmem:[#allocation10 + $0x200] sm:$0xff]
    %v5565 = vld [vmem:[#allocation10 + $0x208] sm:$0xff]
    %v5566 = vld [vmem:[#allocation10 + $0x210] sm:$0xff]
    %v5567 = vld [vmem:[#allocation10 + $0x218] sm:$0xff]
    %v5568 = vld [vmem:[#allocation10 + $0x220] sm:$0xff]
    %v5569 = vld [vmem:[#allocation10 + $0x228] sm:$0xff]
    %v5570 = vld [vmem:[#allocation10 + $0x230] sm:$0xff]
    %v5571 = vld [vmem:[#allocation10 + $0x238] sm:$0xff]
    %v5572 = vld [vmem:[#allocation10 + $0x240] sm:$0xff]
    %v5573 = vld [vmem:[#allocation10 + $0x248] sm:$0xff]
    %v5574 = vld [vmem:[#allocation10 + $0x250] sm:$0xff]
    %v5575 = vld [vmem:[#allocation10 + $0x258] sm:$0xff]
    %v5576 = vld [vmem:[#allocation10 + $0x260] sm:$0xff]
    %v5577 = vld [vmem:[#allocation10 + $0x268] sm:$0xff]
    %v5578 = vld [vmem:[#allocation10 + $0x270] sm:$0xff]
    %v5579 = vld [vmem:[#allocation10 + $0x278] sm:$0xff]
    %v5580 = vld [vmem:[#allocation10 + $0x280] sm:$0xff]
    %v5581 = vld [vmem:[#allocation10 + $0x288] sm:$0xff]
    %v5582 = vld [vmem:[#allocation10 + $0x290] sm:$0xff]
    %v5583 = vld [vmem:[#allocation10 + $0x298] sm:$0xff]
    %v5584 = vld [vmem:[#allocation10 + $0x2a0] sm:$0xff]
    %v5585 = vld [vmem:[#allocation10 + $0x2a8] sm:$0xff]
    %v5586 = vld [vmem:[#allocation10 + $0x2b0] sm:$0xff]
    %v5587 = vld [vmem:[#allocation10 + $0x2b8] sm:$0xff]
    %v5588 = vld [vmem:[#allocation10 + $0x2c0] sm:$0xff]
    %v5589 = vld [vmem:[#allocation10 + $0x2c8] sm:$0xff]
    %v5590 = vld [vmem:[#allocation10 + $0x2d0] sm:$0xff]
    %v5591 = vld [vmem:[#allocation10 + $0x2d8] sm:$0xff]
    %v5592 = vld [vmem:[#allocation10 + $0x2e0] sm:$0xff]
    %v5593 = vld [vmem:[#allocation10 + $0x2e8] sm:$0xff]
    %v5594 = vld [vmem:[#allocation10 + $0x2f0] sm:$0xff]
    %v5595 = vld [vmem:[#allocation10 + $0x2f8] sm:$0xff]
    %v5596 = vld [vmem:[#allocation10 + $0x300] sm:$0xff]
    %v5597 = vld [vmem:[#allocation10 + $0x308] sm:$0xff]
    %v5598 = vld [vmem:[#allocation10 + $0x310] sm:$0xff]
    %v5599 = vld [vmem:[#allocation10 + $0x318] sm:$0xff]
    %v5600 = vld [vmem:[#allocation10 + $0x320] sm:$0xff]
    %v5601 = vld [vmem:[#allocation10 + $0x328] sm:$0xff]
    %v5602 = vld [vmem:[#allocation10 + $0x330] sm:$0xff]
    %v5603 = vld [vmem:[#allocation10 + $0x338] sm:$0xff]
    %v5604 = vld [vmem:[#allocation10 + $0x340] sm:$0xff]
    %v5605 = vld [vmem:[#allocation10 + $0x348] sm:$0xff]
    %v5606 = vld [vmem:[#allocation10 + $0x350] sm:$0xff]
    %v5607 = vld [vmem:[#allocation10 + $0x358] sm:$0xff]
    %v5608 = vld [vmem:[#allocation10 + $0x360] sm:$0xff]
    %v5609 = vld [vmem:[#allocation10 + $0x368] sm:$0xff]
    %v5610 = vld [vmem:[#allocation10 + $0x370] sm:$0xff]
    %v5611 = vld [vmem:[#allocation10 + $0x378] sm:$0xff]
    %v5612 = vld [vmem:[#allocation10 + $0x380] sm:$0xff]
    %v5613 = vld [vmem:[#allocation10 + $0x388] sm:$0xff]
    %v5614 = vld [vmem:[#allocation10 + $0x390] sm:$0xff]
    %v5615 = vld [vmem:[#allocation10 + $0x398] sm:$0xff]
    %v5616 = vld [vmem:[#allocation10 + $0x3a0] sm:$0xff]
    %v5617 = vld [vmem:[#allocation10 + $0x3a8] sm:$0xff]
    %v5618 = vld [vmem:[#allocation10 + $0x3b0] sm:$0xff]
    %v5619 = vld [vmem:[#allocation10 + $0x3b8] sm:$0xff]
    %v5620 = vld [vmem:[#allocation10 + $0x3c0] sm:$0xff]
    %v5621 = vld [vmem:[#allocation10 + $0x3c8] sm:$0xff]
    %v5622 = vld [vmem:[#allocation10 + $0x3d0] sm:$0xff]
    %v5623 = vld [vmem:[#allocation10 + $0x3d8] sm:$0xff]
    %v5624 = vld [vmem:[#allocation10 + $0x3e0] sm:$0xff]
    %v5625 = vld [vmem:[#allocation10 + $0x3e8] sm:$0xff]
    %v5626 = vld [vmem:[#allocation10 + $0x3f0] sm:$0xff]
    %v5627 = vld [vmem:[#allocation10 + $0x3f8] sm:$0xff]
    %v5628 = vld [vmem:[#allocation10 + $0x400] sm:$0xff]
    %v5629 = vld [vmem:[#allocation10 + $0x408] sm:$0xff]
    %v5630 = vld [vmem:[#allocation10 + $0x410] sm:$0xff]
    %v5631 = vld [vmem:[#allocation10 + $0x418] sm:$0xff]
    %v5632 = vld [vmem:[#allocation10 + $0x420] sm:$0xff]
    %v5633 = vld [vmem:[#allocation10 + $0x428] sm:$0xff]
    %v5634 = vld [vmem:[#allocation10 + $0x430] sm:$0xff]
    %v5635 = vld [vmem:[#allocation10 + $0x438] sm:$0xff]
    %v5636 = vld [vmem:[#allocation10 + $0x440] sm:$0xff]
    %v5637 = vld [vmem:[#allocation10 + $0x448] sm:$0xff]
    %v5638 = vld [vmem:[#allocation10 + $0x450] sm:$0xff]
    %v5639 = vld [vmem:[#allocation10 + $0x458] sm:$0xff]
    %v5640 = vld [vmem:[#allocation10 + $0x460] sm:$0xff]
    %v5641 = vld [vmem:[#allocation10 + $0x468] sm:$0xff]
    %v5642 = vld [vmem:[#allocation10 + $0x470] sm:$0xff]
    %v5643 = vld [vmem:[#allocation10 + $0x478] sm:$0xff]
    %v5644 = vld [vmem:[#allocation10 + $0x480] sm:$0xff]
    %v5645 = vld [vmem:[#allocation10 + $0x488] sm:$0xff]
    %v5646 = vld [vmem:[#allocation10 + $0x490] sm:$0xff]
    %v5647 = vld [vmem:[#allocation10 + $0x498] sm:$0xff]
    %v5648 = vld [vmem:[#allocation10 + $0x4a0] sm:$0xff]
    %v5649 = vld [vmem:[#allocation10 + $0x4a8] sm:$0xff]
    %v5650 = vld [vmem:[#allocation10 + $0x4b0] sm:$0xff]
    %v5651 = vld [vmem:[#allocation10 + $0x4b8] sm:$0xff]
    %v5652 = vld [vmem:[#allocation10 + $0x4c0] sm:$0xff]
    %v5653 = vld [vmem:[#allocation10 + $0x4c8] sm:$0xff]
    %v5654 = vld [vmem:[#allocation10 + $0x4d0] sm:$0xff]
    %v5655 = vld [vmem:[#allocation10 + $0x4d8] sm:$0xff]
    %v5656 = vld [vmem:[#allocation10 + $0x4e0] sm:$0xff]
    %v5657 = vld [vmem:[#allocation10 + $0x4e8] sm:$0xff]
    %v5658 = vld [vmem:[#allocation10 + $0x4f0] sm:$0xff]
    %v5659 = vld [vmem:[#allocation10 + $0x4f8] sm:$0xff]
    %v5660 = vld [vmem:[#allocation10 + $0x500] sm:$0xff]
    %v5661 = vld [vmem:[#allocation10 + $0x508] sm:$0xff]
    %v5662 = vld [vmem:[#allocation10 + $0x510] sm:$0xff]
    %v5663 = vld [vmem:[#allocation10 + $0x518] sm:$0xff]
    %v5664 = vld [vmem:[#allocation10 + $0x520] sm:$0xff]
    %v5665 = vld [vmem:[#allocation10 + $0x528] sm:$0xff]
    %v5666 = vld [vmem:[#allocation10 + $0x530] sm:$0xff]
    %v5667 = vld [vmem:[#allocation10 + $0x538] sm:$0xff]
    %v5668 = vld [vmem:[#allocation10 + $0x540] sm:$0xff]
    %v5669 = vld [vmem:[#allocation10 + $0x548] sm:$0xff]
    %v5670 = vld [vmem:[#allocation10 + $0x550] sm:$0xff]
    %v5671 = vld [vmem:[#allocation10 + $0x558] sm:$0xff]
    %v5672 = vld [vmem:[#allocation10 + $0x560] sm:$0xff]
    %v5673 = vld [vmem:[#allocation10 + $0x568] sm:$0xff]
    %v5674 = vld [vmem:[#allocation10 + $0x570] sm:$0xff]
    %v5675 = vld [vmem:[#allocation10 + $0x578] sm:$0xff]
    %v5676 = vld [vmem:[#allocation10 + $0x580] sm:$0xff]
    %v5677 = vld [vmem:[#allocation10 + $0x588] sm:$0xff]
    %v5678 = vld [vmem:[#allocation10 + $0x590] sm:$0xff]
    %v5679 = vld [vmem:[#allocation10 + $0x598] sm:$0xff]
    %v5680 = vld [vmem:[#allocation10 + $0x5a0] sm:$0xff]
    %v5681 = vld [vmem:[#allocation10 + $0x5a8] sm:$0xff]
    %v5682 = vld [vmem:[#allocation10 + $0x5b0] sm:$0xff]
    %v5683 = vld [vmem:[#allocation10 + $0x5b8] sm:$0xff]
    %v5684 = vld [vmem:[#allocation10 + $0x5c0] sm:$0xff]
    %v5685 = vld [vmem:[#allocation10 + $0x5c8] sm:$0xff]
    %v5686 = vld [vmem:[#allocation10 + $0x5d0] sm:$0xff]
    %v5687 = vld [vmem:[#allocation10 + $0x5d8] sm:$0xff]
    %v5688 = vld [vmem:[#allocation10 + $0x5e0] sm:$0xff]
    %v5689 = vld [vmem:[#allocation10 + $0x5e8] sm:$0xff]
    %v5690 = vld [vmem:[#allocation10 + $0x5f0] sm:$0xff]
    %v5691 = vld [vmem:[#allocation10 + $0x5f8] sm:$0xff]
    %5692 = vmatpush.msra.mxu0 %v5560
    %5693 = vmatpush.msra.mxu0 %v5556
    %5694 = vmatpush.msra.mxu0 %v5552
    %5695 = vmatpush.msra.mxu0 %v5548
    %5696 = vmatpush.msra.mxu0 %v5544
    %5697 = vmatpush.msra.mxu0 %v5540
    %5698 = vmatpush.msra.mxu0 %v5536
    %5699 = vmatpush.msra.mxu0 %v5532
    %5700 = vmatpush.msra.mxu0 %v5528
    %5701 = vmatpush.msra.mxu0 %v5524
    %5702 = vmatpush.msra.mxu0 %v5520
    %5703 = vmatpush.msra.mxu0 %v5516
    %5704 = vmatpush.msra.mxu0 %v5512
    %5705 = vmatpush.msra.mxu0 %v5508
    %5706 = vmatpush.msra.mxu0 %v5504
    %5707 = vmatpush.msra.mxu0 %v5500
    %5708 = vmatmul.f32.gmra.mxu0 %v5370
    %v5709 = vpop.f32.mrf.mxu0
    %v5710 = vadd.f32 %v627, %v5709
    %5711 = vdwg.mxu0
    %5712 = vmatpush.msra.mxu0 %v5624
    %5713 = vmatpush.msra.mxu0 %v5620
    %5714 = vmatpush.msra.mxu0 %v5616
    %5715 = vmatpush.msra.mxu0 %v5612
    %5716 = vmatpush.msra.mxu0 %v5608
    %5717 = vmatpush.msra.mxu0 %v5604
    %5718 = vmatpush.msra.mxu0 %v5600
    %5719 = vmatpush.msra.mxu0 %v5596
    %5720 = vmatpush.msra.mxu0 %v5592
    %5721 = vmatpush.msra.mxu0 %v5588
    %5722 = vmatpush.msra.mxu0 %v5584
    %5723 = vmatpush.msra.mxu0 %v5580
    %5724 = vmatpush.msra.mxu0 %v5576
    %5725 = vmatpush.msra.mxu0 %v5572
    %5726 = vmatpush.msra.mxu0 %v5568
    %5727 = vmatpush.msra.mxu0 %v5564
    %5728 = vmatmul.f32.gmra.mxu0 %v5498
    %v5729 = vpop.f32.mrf.mxu0
    %v5730 = vadd.f32 %v5710, %v5729
    %5731 = vdwg.mxu0
    %5732 = vmatpush.msra.mxu0 %v5688
    %5733 = vmatpush.msra.mxu0 %v5684
    %5734 = vmatpush.msra.mxu0 %v5680
    %5735 = vmatpush.msra.mxu0 %v5676
    %5736 = vmatpush.msra.mxu0 %v5672
    %5737 = vmatpush.msra.mxu0 %v5668
    %5738 = vmatpush.msra.mxu0 %v5664
    %5739 = vmatpush.msra.mxu0 %v5660
    %5740 = vmatpush.msra.mxu0 %v5656
    %5741 = vmatpush.msra.mxu0 %v5652
    %5742 = vmatpush.msra.mxu0 %v5648
    %5743 = vmatpush.msra.mxu0 %v5644
    %5744 = vmatpush.msra.mxu0 %v5640
    %5745 = vmatpush.msra.mxu0 %v5636
    %5746 = vmatpush.msra.mxu0 %v5632
    %5747 = vmatpush.msra.mxu0 %v5628
    %5748 = vmatmul.f32.gmra.mxu0 %v5152
    %v5749 = vpop.f32.mrf.mxu0
    %v5750 = vadd.f32 %v5730, %v5749
    %5751 = vdwg.mxu0
    %5752 = vmatpush.msra.mxu0 %v5561
    %5753 = vmatpush.msra.mxu0 %v5557
    %5754 = vmatpush.msra.mxu0 %v5553
    %5755 = vmatpush.msra.mxu0 %v5549
    %5756 = vmatpush.msra.mxu0 %v5545
    %5757 = vmatpush.msra.mxu0 %v5541
    %5758 = vmatpush.msra.mxu0 %v5537
    %5759 = vmatpush.msra.mxu0 %v5533
    %5760 = vmatpush.msra.mxu0 %v5529
    %5761 = vmatpush.msra.mxu0 %v5525
    %5762 = vmatpush.msra.mxu0 %v5521
    %5763 = vmatpush.msra.mxu0 %v5517
    %5764 = vmatpush.msra.mxu0 %v5513
    %5765 = vmatpush.msra.mxu0 %v5509
    %5766 = vmatpush.msra.mxu0 %v5505
    %5767 = vmatpush.msra.mxu0 %v5501
    %5768 = vmatmul.f32.gmra.mxu0 %v5370
    %v5769 = vpop.f32.mrf.mxu0
    %v5770 = vadd.f32 %v628, %v5769
    %5771 = vdwg.mxu0
    %5772 = vmatpush.msra.mxu0 %v5625
    %5773 = vmatpush.msra.mxu0 %v5621
    %5774 = vmatpush.msra.mxu0 %v5617
    %5775 = vmatpush.msra.mxu0 %v5613
    %5776 = vmatpush.msra.mxu0 %v5609
    %5777 = vmatpush.msra.mxu0 %v5605
    %5778 = vmatpush.msra.mxu0 %v5601
    %5779 = vmatpush.msra.mxu0 %v5597
    %5780 = vmatpush.msra.mxu0 %v5593
    %5781 = vmatpush.msra.mxu0 %v5589
    %5782 = vmatpush.msra.mxu0 %v5585
    %5783 = vmatpush.msra.mxu0 %v5581
    %5784 = vmatpush.msra.mxu0 %v5577
    %5785 = vmatpush.msra.mxu0 %v5573
    %5786 = vmatpush.msra.mxu0 %v5569
    %5787 = vmatpush.msra.mxu0 %v5565
    %5788 = vmatmul.f32.gmra.mxu0 %v5498
    %v5789 = vpop.f32.mrf.mxu0
    %v5790 = vadd.f32 %v5770, %v5789
    %5791 = vdwg.mxu0
    %5792 = vmatpush.msra.mxu0 %v5689
    %5793 = vmatpush.msra.mxu0 %v5685
    %5794 = vmatpush.msra.mxu0 %v5681
    %5795 = vmatpush.msra.mxu0 %v5677
    %5796 = vmatpush.msra.mxu0 %v5673
    %5797 = vmatpush.msra.mxu0 %v5669
    %5798 = vmatpush.msra.mxu0 %v5665
    %5799 = vmatpush.msra.mxu0 %v5661
    %5800 = vmatpush.msra.mxu0 %v5657
    %5801 = vmatpush.msra.mxu0 %v5653
    %5802 = vmatpush.msra.mxu0 %v5649
    %5803 = vmatpush.msra.mxu0 %v5645
    %5804 = vmatpush.msra.mxu0 %v5641
    %5805 = vmatpush.msra.mxu0 %v5637
    %5806 = vmatpush.msra.mxu0 %v5633
    %5807 = vmatpush.msra.mxu0 %v5629
    %5808 = vmatmul.f32.gmra.mxu0 %v5152
    %v5809 = vpop.f32.mrf.mxu0
    %v5810 = vadd.f32 %v5790, %v5809
    %5811 = vdwg.mxu0
    %5812 = vmatpush.msra.mxu0 %v5562
    %5813 = vmatpush.msra.mxu0 %v5558
    %5814 = vmatpush.msra.mxu0 %v5554
    %5815 = vmatpush.msra.mxu0 %v5550
    %5816 = vmatpush.msra.mxu0 %v5546
    %5817 = vmatpush.msra.mxu0 %v5542
    %5818 = vmatpush.msra.mxu0 %v5538
    %5819 = vmatpush.msra.mxu0 %v5534
    %5820 = vmatpush.msra.mxu0 %v5530
    %5821 = vmatpush.msra.mxu0 %v5526
    %5822 = vmatpush.msra.mxu0 %v5522
    %5823 = vmatpush.msra.mxu0 %v5518
    %5824 = vmatpush.msra.mxu0 %v5514
    %5825 = vmatpush.msra.mxu0 %v5510
    %5826 = vmatpush.msra.mxu0 %v5506
    %5827 = vmatpush.msra.mxu0 %v5502
    %5828 = vmatmul.f32.gmra.mxu0 %v5370
    %v5829 = vpop.f32.mrf.mxu0
    %v5830 = vadd.f32 %v629, %v5829
    %5831 = vdwg.mxu0
    %5832 = vmatpush.msra.mxu0 %v5626
    %5833 = vmatpush.msra.mxu0 %v5622
    %5834 = vmatpush.msra.mxu0 %v5618
    %5835 = vmatpush.msra.mxu0 %v5614
    %5836 = vmatpush.msra.mxu0 %v5610
    %5837 = vmatpush.msra.mxu0 %v5606
    %5838 = vmatpush.msra.mxu0 %v5602
    %5839 = vmatpush.msra.mxu0 %v5598
    %5840 = vmatpush.msra.mxu0 %v5594
    %5841 = vmatpush.msra.mxu0 %v5590
    %5842 = vmatpush.msra.mxu0 %v5586
    %5843 = vmatpush.msra.mxu0 %v5582
    %5844 = vmatpush.msra.mxu0 %v5578
    %5845 = vmatpush.msra.mxu0 %v5574
    %5846 = vmatpush.msra.mxu0 %v5570
    %5847 = vmatpush.msra.mxu0 %v5566
    %5848 = vmatmul.f32.gmra.mxu0 %v5498
    %v5849 = vpop.f32.mrf.mxu0
    %v5850 = vadd.f32 %v5830, %v5849
    %5851 = vdwg.mxu0
    %5852 = vmatpush.msra.mxu0 %v5690
    %5853 = vmatpush.msra.mxu0 %v5686
    %5854 = vmatpush.msra.mxu0 %v5682
    %5855 = vmatpush.msra.mxu0 %v5678
    %5856 = vmatpush.msra.mxu0 %v5674
    %5857 = vmatpush.msra.mxu0 %v5670
    %5858 = vmatpush.msra.mxu0 %v5666
    %5859 = vmatpush.msra.mxu0 %v5662
    %5860 = vmatpush.msra.mxu0 %v5658
    %5861 = vmatpush.msra.mxu0 %v5654
    %5862 = vmatpush.msra.mxu0 %v5650
    %5863 = vmatpush.msra.mxu0 %v5646
    %5864 = vmatpush.msra.mxu0 %v5642
    %5865 = vmatpush.msra.mxu0 %v5638
    %5866 = vmatpush.msra.mxu0 %v5634
    %5867 = vmatpush.msra.mxu0 %v5630
    %5868 = vmatmul.f32.gmra.mxu0 %v5152
    %v5869 = vpop.f32.mrf.mxu0
    %v5870 = vadd.f32 %v5850, %v5869
    %5871 = vdwg.mxu0
    %5872 = vmatpush.msra.mxu0 %v5563
    %5873 = vmatpush.msra.mxu0 %v5559
    %5874 = vmatpush.msra.mxu0 %v5555
    %5875 = vmatpush.msra.mxu0 %v5551
    %5876 = vmatpush.msra.mxu0 %v5547
    %5877 = vmatpush.msra.mxu0 %v5543
    %5878 = vmatpush.msra.mxu0 %v5539
    %5879 = vmatpush.msra.mxu0 %v5535
    %5880 = vmatpush.msra.mxu0 %v5531
    %5881 = vmatpush.msra.mxu0 %v5527
    %5882 = vmatpush.msra.mxu0 %v5523
    %5883 = vmatpush.msra.mxu0 %v5519
    %5884 = vmatpush.msra.mxu0 %v5515
    %5885 = vmatpush.msra.mxu0 %v5511
    %5886 = vmatpush.msra.mxu0 %v5507
    %5887 = vmatpush.msra.mxu0 %v5503
    %5888 = vmatmul.f32.gmra.mxu0 %v5370
    %v5889 = vpop.f32.mrf.mxu0
    %v5890 = vadd.f32 %v630, %v5889
    %5891 = vdwg.mxu0
    %5892 = vmatpush.msra.mxu0 %v5627
    %5893 = vmatpush.msra.mxu0 %v5623
    %5894 = vmatpush.msra.mxu0 %v5619
    %5895 = vmatpush.msra.mxu0 %v5615
    %5896 = vmatpush.msra.mxu0 %v5611
    %5897 = vmatpush.msra.mxu0 %v5607
    %5898 = vmatpush.msra.mxu0 %v5603
    %5899 = vmatpush.msra.mxu0 %v5599
    %5900 = vmatpush.msra.mxu0 %v5595
    %5901 = vmatpush.msra.mxu0 %v5591
    %5902 = vmatpush.msra.mxu0 %v5587
    %5903 = vmatpush.msra.mxu0 %v5583
    %5904 = vmatpush.msra.mxu0 %v5579
    %5905 = vmatpush.msra.mxu0 %v5575
    %5906 = vmatpush.msra.mxu0 %v5571
    %5907 = vmatpush.msra.mxu0 %v5567
    %5908 = vmatmul.f32.gmra.mxu0 %v5498
    %v5909 = vpop.f32.mrf.mxu0
    %v5910 = vadd.f32 %v5890, %v5909
    %5911 = vdwg.mxu0
    %5912 = vmatpush.msra.mxu0 %v5691
    %5913 = vmatpush.msra.mxu0 %v5687
    %5914 = vmatpush.msra.mxu0 %v5683
    %5915 = vmatpush.msra.mxu0 %v5679
    %5916 = vmatpush.msra.mxu0 %v5675
    %5917 = vmatpush.msra.mxu0 %v5671
    %5918 = vmatpush.msra.mxu0 %v5667
    %5919 = vmatpush.msra.mxu0 %v5663
    %5920 = vmatpush.msra.mxu0 %v5659
    %5921 = vmatpush.msra.mxu0 %v5655
    %5922 = vmatpush.msra.mxu0 %v5651
    %5923 = vmatpush.msra.mxu0 %v5647
    %5924 = vmatpush.msra.mxu0 %v5643
    %5925 = vmatpush.msra.mxu0 %v5639
    %5926 = vmatpush.msra.mxu0 %v5635
    %5927 = vmatpush.msra.mxu0 %v5631
    %5928 = vmatmul.f32.gmra.mxu0 %v5152
    %v5929 = vpop.f32.mrf.mxu0
    %v5930 = vadd.f32 %v5910, %v5929
    %5931 = vdwg.mxu0
    %v5932 = vxor.u32 %v5750, 2147483648
    %v5933 = vmul.f32 %v5932, 1.442695
    %v5934 = vpow.pop %v5933
    %v5935 = vadd.f32 %v5934, 1.0
    %v5936 = vrcp.pop %v5935
    %v5937 = vmul.f32 %v5935, %v5936
    %v5938 = vsub.f32 1.0, %v5937
    %v5939 = vmul.f32 %v5936, %v5938
    %v5940 = vadd.f32 %v5936, %v5939
    %vm5941 = vweird.f32 %v5935
    %vm5942 = vweird.f32 %v5936
    %vm5943 = vmor %vm5941, %vm5942
    %v5944 = vsel %vm5943, %v5936, %v5940
    %v5945 = vand.u32 2147483647, %v5935
    %vm5946 = vcmp.eq.f32.partialorder %v5945, 8.507059e+37
    %v5947 = vand.u32 %v5935, 2147483648
    %v5948 = vor.u32 1.1754944e-38, %v5947
    %v5949 = vsel %vm5946, %v5948, %v5944
    %v5950 = vmul.f32 1.0, %v5949
    %v5951 = vxor.u32 %v5810, 2147483648
    %v5952 = vmul.f32 %v5951, 1.442695
    %v5953 = vpow.pop %v5952
    %v5954 = vadd.f32 %v5953, 1.0
    %v5955 = vrcp.pop %v5954
    %v5956 = vmul.f32 %v5954, %v5955
    %v5957 = vsub.f32 1.0, %v5956
    %v5958 = vmul.f32 %v5955, %v5957
    %v5959 = vadd.f32 %v5955, %v5958
    %vm5960 = vweird.f32 %v5954
    %vm5961 = vweird.f32 %v5955
    %vm5962 = vmor %vm5960, %vm5961
    %v5963 = vsel %vm5962, %v5955, %v5959
    %v5964 = vand.u32 2147483647, %v5954
    %vm5965 = vcmp.eq.f32.partialorder %v5964, 8.507059e+37
    %v5966 = vand.u32 %v5954, 2147483648
    %v5967 = vor.u32 1.1754944e-38, %v5966
    %v5968 = vsel %vm5965, %v5967, %v5963
    %v5969 = vmul.f32 1.0, %v5968
    %v5970 = vtanh.pop %v5870
    %v5971 = vxor.u32 %v5930, 2147483648
    %v5972 = vmul.f32 %v5971, 1.442695
    %v5973 = vpow.pop %v5972
    %v5974 = vadd.f32 %v5973, 1.0
    %v5975 = vrcp.pop %v5974
    %v5976 = vmul.f32 %v5974, %v5975
    %v5977 = vsub.f32 1.0, %v5976
    %v5978 = vmul.f32 %v5975, %v5977
    %v5979 = vadd.f32 %v5975, %v5978
    %vm5980 = vweird.f32 %v5974
    %vm5981 = vweird.f32 %v5975
    %vm5982 = vmor %vm5980, %vm5981
    %v5983 = vsel %vm5982, %v5975, %v5979
    %v5984 = vand.u32 2147483647, %v5974
    %vm5985 = vcmp.eq.f32.partialorder %v5984, 8.507059e+37
    %v5986 = vand.u32 %v5974, 2147483648
    %v5987 = vor.u32 1.1754944e-38, %v5986
    %v5988 = vsel %vm5985, %v5987, %v5983
    %v5989 = vmul.f32 1.0, %v5988
    %v5990 = vmul.f32 %v5969, %v5150
    %v5991 = vmul.f32 %v5950, %v5970
    %v5992 = vadd.f32 %v5990, %v5991
    %v5993 = vtanh.pop %v5992
    %v5994 = vmul.f32 %v5989, %v5993
    %v5995 = vld [vmem:[#allocation11] sm:$0xff]
    %v5996 = vld [vmem:[#allocation11 + $0x8] sm:$0xff]
    %v5997 = vld [vmem:[#allocation11 + $0x10] sm:$0xff]
    %v5998 = vld [vmem:[#allocation11 + $0x18] sm:$0xff]
    %v5999 = vld [vmem:[#allocation11 + $0x20] sm:$0xff]
    %v6000 = vld [vmem:[#allocation11 + $0x28] sm:$0xff]
    %v6001 = vld [vmem:[#allocation11 + $0x30] sm:$0xff]
    %v6002 = vld [vmem:[#allocation11 + $0x38] sm:$0xff]
    %v6003 = vld [vmem:[#allocation11 + $0x40] sm:$0xff]
    %v6004 = vld [vmem:[#allocation11 + $0x48] sm:$0xff]
    %v6005 = vld [vmem:[#allocation11 + $0x50] sm:$0xff]
    %v6006 = vld [vmem:[#allocation11 + $0x58] sm:$0xff]
    %v6007 = vld [vmem:[#allocation11 + $0x60] sm:$0xff]
    %v6008 = vld [vmem:[#allocation11 + $0x68] sm:$0xff]
    %v6009 = vld [vmem:[#allocation11 + $0x70] sm:$0xff]
    %v6010 = vld [vmem:[#allocation11 + $0x78] sm:$0xff]
    %v6011 = vld [vmem:[#allocation11 + $0x80] sm:$0xff]
    %v6012 = vld [vmem:[#allocation11 + $0x88] sm:$0xff]
    %v6013 = vld [vmem:[#allocation11 + $0x90] sm:$0xff]
    %v6014 = vld [vmem:[#allocation11 + $0x98] sm:$0xff]
    %v6015 = vld [vmem:[#allocation11 + $0xa0] sm:$0xff]
    %v6016 = vld [vmem:[#allocation11 + $0xa8] sm:$0xff]
    %v6017 = vld [vmem:[#allocation11 + $0xb0] sm:$0xff]
    %v6018 = vld [vmem:[#allocation11 + $0xb8] sm:$0xff]
    %v6019 = vld [vmem:[#allocation11 + $0xc0] sm:$0xff]
    %v6020 = vld [vmem:[#allocation11 + $0xc8] sm:$0xff]
    %v6021 = vld [vmem:[#allocation11 + $0xd0] sm:$0xff]
    %v6022 = vld [vmem:[#allocation11 + $0xd8] sm:$0xff]
    %v6023 = vld [vmem:[#allocation11 + $0xe0] sm:$0xff]
    %v6024 = vld [vmem:[#allocation11 + $0xe8] sm:$0xff]
    %v6025 = vld [vmem:[#allocation11 + $0xf0] sm:$0xff]
    %v6026 = vld [vmem:[#allocation11 + $0xf8] sm:$0xff]
    %v6027 = vld [vmem:[#allocation11 + $0x100] sm:$0xff]
    %v6028 = vld [vmem:[#allocation11 + $0x108] sm:$0xff]
    %v6029 = vld [vmem:[#allocation11 + $0x110] sm:$0xff]
    %v6030 = vld [vmem:[#allocation11 + $0x118] sm:$0xff]
    %v6031 = vld [vmem:[#allocation11 + $0x120] sm:$0xff]
    %v6032 = vld [vmem:[#allocation11 + $0x128] sm:$0xff]
    %v6033 = vld [vmem:[#allocation11 + $0x130] sm:$0xff]
    %v6034 = vld [vmem:[#allocation11 + $0x138] sm:$0xff]
    %v6035 = vld [vmem:[#allocation11 + $0x140] sm:$0xff]
    %v6036 = vld [vmem:[#allocation11 + $0x148] sm:$0xff]
    %v6037 = vld [vmem:[#allocation11 + $0x150] sm:$0xff]
    %v6038 = vld [vmem:[#allocation11 + $0x158] sm:$0xff]
    %v6039 = vld [vmem:[#allocation11 + $0x160] sm:$0xff]
    %v6040 = vld [vmem:[#allocation11 + $0x168] sm:$0xff]
    %v6041 = vld [vmem:[#allocation11 + $0x170] sm:$0xff]
    %v6042 = vld [vmem:[#allocation11 + $0x178] sm:$0xff]
    %v6043 = vld [vmem:[#allocation11 + $0x180] sm:$0xff]
    %v6044 = vld [vmem:[#allocation11 + $0x188] sm:$0xff]
    %v6045 = vld [vmem:[#allocation11 + $0x190] sm:$0xff]
    %v6046 = vld [vmem:[#allocation11 + $0x198] sm:$0xff]
    %v6047 = vld [vmem:[#allocation11 + $0x1a0] sm:$0xff]
    %v6048 = vld [vmem:[#allocation11 + $0x1a8] sm:$0xff]
    %v6049 = vld [vmem:[#allocation11 + $0x1b0] sm:$0xff]
    %v6050 = vld [vmem:[#allocation11 + $0x1b8] sm:$0xff]
    %v6051 = vld [vmem:[#allocation11 + $0x1c0] sm:$0xff]
    %v6052 = vld [vmem:[#allocation11 + $0x1c8] sm:$0xff]
    %v6053 = vld [vmem:[#allocation11 + $0x1d0] sm:$0xff]
    %v6054 = vld [vmem:[#allocation11 + $0x1d8] sm:$0xff]
    %v6055 = vld [vmem:[#allocation11 + $0x1e0] sm:$0xff]
    %v6056 = vld [vmem:[#allocation11 + $0x1e8] sm:$0xff]
    %v6057 = vld [vmem:[#allocation11 + $0x1f0] sm:$0xff]
    %v6058 = vld [vmem:[#allocation11 + $0x1f8] sm:$0xff]
    %v6059 = vld [vmem:[#allocation11 + $0x200] sm:$0xff]
    %v6060 = vld [vmem:[#allocation11 + $0x208] sm:$0xff]
    %v6061 = vld [vmem:[#allocation11 + $0x210] sm:$0xff]
    %v6062 = vld [vmem:[#allocation11 + $0x218] sm:$0xff]
    %v6063 = vld [vmem:[#allocation11 + $0x220] sm:$0xff]
    %v6064 = vld [vmem:[#allocation11 + $0x228] sm:$0xff]
    %v6065 = vld [vmem:[#allocation11 + $0x230] sm:$0xff]
    %v6066 = vld [vmem:[#allocation11 + $0x238] sm:$0xff]
    %v6067 = vld [vmem:[#allocation11 + $0x240] sm:$0xff]
    %v6068 = vld [vmem:[#allocation11 + $0x248] sm:$0xff]
    %v6069 = vld [vmem:[#allocation11 + $0x250] sm:$0xff]
    %v6070 = vld [vmem:[#allocation11 + $0x258] sm:$0xff]
    %v6071 = vld [vmem:[#allocation11 + $0x260] sm:$0xff]
    %v6072 = vld [vmem:[#allocation11 + $0x268] sm:$0xff]
    %v6073 = vld [vmem:[#allocation11 + $0x270] sm:$0xff]
    %v6074 = vld [vmem:[#allocation11 + $0x278] sm:$0xff]
    %v6075 = vld [vmem:[#allocation11 + $0x280] sm:$0xff]
    %v6076 = vld [vmem:[#allocation11 + $0x288] sm:$0xff]
    %v6077 = vld [vmem:[#allocation11 + $0x290] sm:$0xff]
    %v6078 = vld [vmem:[#allocation11 + $0x298] sm:$0xff]
    %v6079 = vld [vmem:[#allocation11 + $0x2a0] sm:$0xff]
    %v6080 = vld [vmem:[#allocation11 + $0x2a8] sm:$0xff]
    %v6081 = vld [vmem:[#allocation11 + $0x2b0] sm:$0xff]
    %v6082 = vld [vmem:[#allocation11 + $0x2b8] sm:$0xff]
    %v6083 = vld [vmem:[#allocation11 + $0x2c0] sm:$0xff]
    %v6084 = vld [vmem:[#allocation11 + $0x2c8] sm:$0xff]
    %v6085 = vld [vmem:[#allocation11 + $0x2d0] sm:$0xff]
    %v6086 = vld [vmem:[#allocation11 + $0x2d8] sm:$0xff]
    %v6087 = vld [vmem:[#allocation11 + $0x2e0] sm:$0xff]
    %v6088 = vld [vmem:[#allocation11 + $0x2e8] sm:$0xff]
    %v6089 = vld [vmem:[#allocation11 + $0x2f0] sm:$0xff]
    %v6090 = vld [vmem:[#allocation11 + $0x2f8] sm:$0xff]
    %6091 = vmatpush.msra.mxu0 %v6025
    %6092 = vmatpush.msra.mxu0 %v6023
    %6093 = vmatpush.msra.mxu0 %v6021
    %6094 = vmatpush.msra.mxu0 %v6019
    %6095 = vmatpush.msra.mxu0 %v6017
    %6096 = vmatpush.msra.mxu0 %v6015
    %6097 = vmatpush.msra.mxu0 %v6013
    %6098 = vmatpush.msra.mxu0 %v6011
    %6099 = vmatpush.msra.mxu0 %v6009
    %6100 = vmatpush.msra.mxu0 %v6007
    %6101 = vmatpush.msra.mxu0 %v6005
    %6102 = vmatpush.msra.mxu0 %v6003
    %6103 = vmatpush.msra.mxu0 %v6001
    %6104 = vmatpush.msra.mxu0 %v5999
    %6105 = vmatpush.msra.mxu0 %v5997
    %6106 = vmatpush.msra.mxu0 %v5995
    %6107 = vmatmul.f32.gmra.mxu0 %v5498
    %v6108 = vpop.f32.mrf.mxu0
    %v6109 = vadd.f32 %v1035, %v6108
    %6110 = vdwg.mxu0
    %6111 = vmatpush.msra.mxu0 %v6057
    %6112 = vmatpush.msra.mxu0 %v6055
    %6113 = vmatpush.msra.mxu0 %v6053
    %6114 = vmatpush.msra.mxu0 %v6051
    %6115 = vmatpush.msra.mxu0 %v6049
    %6116 = vmatpush.msra.mxu0 %v6047
    %6117 = vmatpush.msra.mxu0 %v6045
    %6118 = vmatpush.msra.mxu0 %v6043
    %6119 = vmatpush.msra.mxu0 %v6041
    %6120 = vmatpush.msra.mxu0 %v6039
    %6121 = vmatpush.msra.mxu0 %v6037
    %6122 = vmatpush.msra.mxu0 %v6035
    %6123 = vmatpush.msra.mxu0 %v6033
    %6124 = vmatpush.msra.mxu0 %v6031
    %6125 = vmatpush.msra.mxu0 %v6029
    %6126 = vmatpush.msra.mxu0 %v6027
    %6127 = vmatmul.f32.gmra.mxu0 %v5370
    %v6128 = vpop.f32.mrf.mxu0
    %v6129 = vadd.f32 %v6109, %v6128
    %6130 = vdwg.mxu0
    %6131 = vmatpush.msra.mxu0 %v6089
    %6132 = vmatpush.msra.mxu0 %v6087
    %6133 = vmatpush.msra.mxu0 %v6085
    %6134 = vmatpush.msra.mxu0 %v6083
    %6135 = vmatpush.msra.mxu0 %v6081
    %6136 = vmatpush.msra.mxu0 %v6079
    %6137 = vmatpush.msra.mxu0 %v6077
    %6138 = vmatpush.msra.mxu0 %v6075
    %6139 = vmatpush.msra.mxu0 %v6073
    %6140 = vmatpush.msra.mxu0 %v6071
    %6141 = vmatpush.msra.mxu0 %v6069
    %6142 = vmatpush.msra.mxu0 %v6067
    %6143 = vmatpush.msra.mxu0 %v6065
    %6144 = vmatpush.msra.mxu0 %v6063
    %6145 = vmatpush.msra.mxu0 %v6061
    %6146 = vmatpush.msra.mxu0 %v6059
    %6147 = vmatmul.f32.gmra.mxu0 %v5994
    %v6148 = vpop.f32.mrf.mxu0
    %v6149 = vadd.f32 %v6129, %v6148
    %6150 = vdwg.mxu0
    %6151 = vmatpush.msra.mxu0 %v6026
    %6152 = vmatpush.msra.mxu0 %v6024
    %6153 = vmatpush.msra.mxu0 %v6022
    %6154 = vmatpush.msra.mxu0 %v6020
    %6155 = vmatpush.msra.mxu0 %v6018
    %6156 = vmatpush.msra.mxu0 %v6016
    %6157 = vmatpush.msra.mxu0 %v6014
    %6158 = vmatpush.msra.mxu0 %v6012
    %6159 = vmatpush.msra.mxu0 %v6010
    %6160 = vmatpush.msra.mxu0 %v6008
    %6161 = vmatpush.msra.mxu0 %v6006
    %6162 = vmatpush.msra.mxu0 %v6004
    %6163 = vmatpush.msra.mxu0 %v6002
    %6164 = vmatpush.msra.mxu0 %v6000
    %6165 = vmatpush.msra.mxu0 %v5998
    %6166 = vmatpush.msra.mxu0 %v5996
    %6167 = vmatmul.f32.gmra.mxu0 %v5498
    %v6168 = vpop.f32.mrf.mxu0
    %v6169 = vadd.f32 %v1036, %v6168
    %6170 = vdwg.mxu0
    %6171 = vmatpush.msra.mxu0 %v6058
    %6172 = vmatpush.msra.mxu0 %v6056
    %6173 = vmatpush.msra.mxu0 %v6054
    %6174 = vmatpush.msra.mxu0 %v6052
    %6175 = vmatpush.msra.mxu0 %v6050
    %6176 = vmatpush.msra.mxu0 %v6048
    %6177 = vmatpush.msra.mxu0 %v6046
    %6178 = vmatpush.msra.mxu0 %v6044
    %6179 = vmatpush.msra.mxu0 %v6042
    %6180 = vmatpush.msra.mxu0 %v6040
    %6181 = vmatpush.msra.mxu0 %v6038
    %6182 = vmatpush.msra.mxu0 %v6036
    %6183 = vmatpush.msra.mxu0 %v6034
    %6184 = vmatpush.msra.mxu0 %v6032
    %6185 = vmatpush.msra.mxu0 %v6030
    %6186 = vmatpush.msra.mxu0 %v6028
    %6187 = vmatmul.f32.gmra.mxu0 %v5370
    %v6188 = vpop.f32.mrf.mxu0
    %v6189 = vadd.f32 %v6169, %v6188
    %6190 = vdwg.mxu0
    %6191 = vmatpush.msra.mxu0 %v6090
    %6192 = vmatpush.msra.mxu0 %v6088
    %6193 = vmatpush.msra.mxu0 %v6086
    %6194 = vmatpush.msra.mxu0 %v6084
    %6195 = vmatpush.msra.mxu0 %v6082
    %6196 = vmatpush.msra.mxu0 %v6080
    %6197 = vmatpush.msra.mxu0 %v6078
    %6198 = vmatpush.msra.mxu0 %v6076
    %6199 = vmatpush.msra.mxu0 %v6074
    %6200 = vmatpush.msra.mxu0 %v6072
    %6201 = vmatpush.msra.mxu0 %v6070
    %6202 = vmatpush.msra.mxu0 %v6068
    %6203 = vmatpush.msra.mxu0 %v6066
    %6204 = vmatpush.msra.mxu0 %v6064
    %6205 = vmatpush.msra.mxu0 %v6062
    %6206 = vmatpush.msra.mxu0 %v6060
    %6207 = vmatmul.f32.gmra.mxu0 %v5994
    %v6208 = vpop.f32.mrf.mxu0
    %v6209 = vadd.f32 %v6189, %v6208
    %6210 = vdwg.mxu0
    %s6211 = scalar_lea.vmem [#allocation5], 14
    %v6212 = vld [vmem:[%s6211] sm:$0x3]
    %v6214 = vrot.slane %v5994, 1
    %6216 = vmatpush.xpose.msra.mxu0 0.0
    %6217 = vmatpush.xpose.msra.mxu0 0.0
    %6218 = vmatpush.xpose.msra.mxu0 0.0
    %6219 = vmatpush.xpose.msra.mxu0 0.0
    %6220 = vmatpush.xpose.msra.mxu0 0.0
    %6221 = vmatpush.xpose.msra.mxu0 0.0
    %6222 = vmatpush.xpose.msra.mxu0 0.0
    %6223 = vmatpush.xpose.msra.mxu0 0.0
    %6224 = vmatpush.xpose.msra.mxu0 0.0
    %6225 = vmatpush.xpose.msra.mxu0 0.0
    %6226 = vmatpush.xpose.msra.mxu0 0.0
    %6227 = vmatpush.xpose.msra.mxu0 0.0
    %6228 = vmatpush.xpose.msra.mxu0 0.0
    %6229 = vmatpush.xpose.msra.mxu0 0.0
    %6230 = vmatpush.xpose.msra.mxu0 %v290
    %6231 = vmatpush.xpose.msra.mxu0 %v287
    %6232 = vmatmul.f32.gmra.mxu0 %v5994
    %v6233 = vpop.f32.mrf.mxu0
    %v6234 = vadd.f32 0.0, %v6233
    %6235 = vdwg.mxu0
    %6236 = vmatpush.xpose.msra.mxu0 0.0
    %6237 = vmatpush.xpose.msra.mxu0 0.0
    %6238 = vmatpush.xpose.msra.mxu0 0.0
    %6239 = vmatpush.xpose.msra.mxu0 0.0
    %6240 = vmatpush.xpose.msra.mxu0 0.0
    %6241 = vmatpush.xpose.msra.mxu0 0.0
    %6242 = vmatpush.xpose.msra.mxu0 0.0
    %6243 = vmatpush.xpose.msra.mxu0 0.0
    %6244 = vmatpush.xpose.msra.mxu0 0.0
    %6245 = vmatpush.xpose.msra.mxu0 0.0
    %6246 = vmatpush.xpose.msra.mxu0 0.0
    %6247 = vmatpush.xpose.msra.mxu0 0.0
    %6248 = vmatpush.xpose.msra.mxu0 0.0
    %6249 = vmatpush.xpose.msra.mxu0 0.0
    %6250 = vmatpush.xpose.msra.mxu0 %v296
    %6251 = vmatpush.xpose.msra.mxu0 %v293
    %6252 = vmatmul.f32.gmra.mxu0 %v6214
    %v6253 = vpop.f32.mrf.mxu0
    %v6254 = vadd.f32 0.0, %v6253
    %6255 = vdwg.mxu0
    %v6256 = vmul.f32 %v6234, 0.088388346
    %v6257 = vmul.f32 %v6254, 0.088388346
    %v6260 = vrot.slane %v6257, 7
    %v6261 = vsel %vm154, %v6260, %v6256
    %v6263 = vsel %vm353, %v6261, -inf
    %6264 = vmax.xlane.f32.xlu0 %v6263
    %v6265 = vpop.xlane.xlu0 %6264
    %v6267 = vrot.slane %v6265, 1
    %v6270 = vsub.f32 %v6256, %v6265
    %v6271 = vsub.f32 %v6257, %v6267
    %v6272 = vmul.f32 %v6270, 1.442695
    %v6273 = vpow.pop %v6272
    %v6274 = vmul.f32 %v6271, 1.442695
    %v6275 = vpow.pop %v6274
    %v6278 = vrot.slane %v6275, 7
    %v6279 = vsel %vm154, %v6278, %v6273
    %v6281 = vsel %vm353, %v6279, 0.0
    %6282 = vadd.xlane.f32.xlu0 %v6281
    %v6283 = vpop.xlane.xlu0 %6282
    %v6284 = vrcp.pop %v6283
    %v6286 = vrot.slane %v6284, 1
    %v6289 = vmul.f32 %v6273, %v6284
    %v6290 = vmul.f32 %v6275, %v6286
    %v6292 = vsel %vm382, %v6289, 0
    %6294 = vmatpush.msra.mxu0 0.0
    %6295 = vmatpush.msra.mxu0 0.0
    %6296 = vmatpush.msra.mxu0 0.0
    %6297 = vmatpush.msra.mxu0 0.0
    %6298 = vmatpush.msra.mxu0 0.0
    %6299 = vmatpush.msra.mxu0 0.0
    %6300 = vmatpush.msra.mxu0 0.0
    %6301 = vmatpush.msra.mxu0 0.0
    %6302 = vmatpush.msra.mxu0 0.0
    %6303 = vmatpush.msra.mxu0 0.0
    %6304 = vmatpush.msra.mxu0 0.0
    %6305 = vmatpush.msra.mxu0 0.0
    %6306 = vmatpush.msra.mxu0 0.0
    %6307 = vmatpush.msra.mxu0 0.0
    %6308 = vmatpush.msra.mxu0 %v126
    %6309 = vmatpush.msra.mxu0 %v125
    %6310 = vmatmul.f32.gmra.mxu0 %v6292
    %v6311 = vpop.f32.mrf.mxu0
    %v6312 = vadd.f32 0.0, %v6311
    %6313 = vdwg.mxu0
    %v6315 = vsel %vm382, %v6290, 0
    %6317 = vmatpush.msra.mxu0 0.0
    %6318 = vmatpush.msra.mxu0 0.0
    %6319 = vmatpush.msra.mxu0 0.0
    %6320 = vmatpush.msra.mxu0 0.0
    %6321 = vmatpush.msra.mxu0 0.0
    %6322 = vmatpush.msra.mxu0 0.0
    %6323 = vmatpush.msra.mxu0 0.0
    %6324 = vmatpush.msra.mxu0 0.0
    %6325 = vmatpush.msra.mxu0 0.0
    %6326 = vmatpush.msra.mxu0 0.0
    %6327 = vmatpush.msra.mxu0 0.0
    %6328 = vmatpush.msra.mxu0 0.0
    %6329 = vmatpush.msra.mxu0 0.0
    %6330 = vmatpush.msra.mxu0 0.0
    %6331 = vmatpush.msra.mxu0 %v128
    %6332 = vmatpush.msra.mxu0 %v127
    %6333 = vmatmul.f32.gmra.mxu0 %v6315
    %v6334 = vpop.f32.mrf.mxu0
    %v6335 = vadd.f32 0.0, %v6334
    %6336 = vdwg.mxu0
    %v6339 = vrot.slane %v6335, 7
    %v6340 = vsel %vm154, %v6339, %v6312
    %v6342 = vld [vmem:[#allocation10] sm:$0xff]
    %v6343 = vld [vmem:[#allocation10 + $0x8] sm:$0xff]
    %v6344 = vld [vmem:[#allocation10 + $0x10] sm:$0xff]
    %v6345 = vld [vmem:[#allocation10 + $0x18] sm:$0xff]
    %v6346 = vld [vmem:[#allocation10 + $0x20] sm:$0xff]
    %v6347 = vld [vmem:[#allocation10 + $0x28] sm:$0xff]
    %v6348 = vld [vmem:[#allocation10 + $0x30] sm:$0xff]
    %v6349 = vld [vmem:[#allocation10 + $0x38] sm:$0xff]
    %v6350 = vld [vmem:[#allocation10 + $0x40] sm:$0xff]
    %v6351 = vld [vmem:[#allocation10 + $0x48] sm:$0xff]
    %v6352 = vld [vmem:[#allocation10 + $0x50] sm:$0xff]
    %v6353 = vld [vmem:[#allocation10 + $0x58] sm:$0xff]
    %v6354 = vld [vmem:[#allocation10 + $0x60] sm:$0xff]
    %v6355 = vld [vmem:[#allocation10 + $0x68] sm:$0xff]
    %v6356 = vld [vmem:[#allocation10 + $0x70] sm:$0xff]
    %v6357 = vld [vmem:[#allocation10 + $0x78] sm:$0xff]
    %v6358 = vld [vmem:[#allocation10 + $0x80] sm:$0xff]
    %v6359 = vld [vmem:[#allocation10 + $0x88] sm:$0xff]
    %v6360 = vld [vmem:[#allocation10 + $0x90] sm:$0xff]
    %v6361 = vld [vmem:[#allocation10 + $0x98] sm:$0xff]
    %v6362 = vld [vmem:[#allocation10 + $0xa0] sm:$0xff]
    %v6363 = vld [vmem:[#allocation10 + $0xa8] sm:$0xff]
    %v6364 = vld [vmem:[#allocation10 + $0xb0] sm:$0xff]
    %v6365 = vld [vmem:[#allocation10 + $0xb8] sm:$0xff]
    %v6366 = vld [vmem:[#allocation10 + $0xc0] sm:$0xff]
    %v6367 = vld [vmem:[#allocation10 + $0xc8] sm:$0xff]
    %v6368 = vld [vmem:[#allocation10 + $0xd0] sm:$0xff]
    %v6369 = vld [vmem:[#allocation10 + $0xd8] sm:$0xff]
    %v6370 = vld [vmem:[#allocation10 + $0xe0] sm:$0xff]
    %v6371 = vld [vmem:[#allocation10 + $0xe8] sm:$0xff]
    %v6372 = vld [vmem:[#allocation10 + $0xf0] sm:$0xff]
    %v6373 = vld [vmem:[#allocation10 + $0xf8] sm:$0xff]
    %v6374 = vld [vmem:[#allocation10 + $0x100] sm:$0xff]
    %v6375 = vld [vmem:[#allocation10 + $0x108] sm:$0xff]
    %v6376 = vld [vmem:[#allocation10 + $0x110] sm:$0xff]
    %v6377 = vld [vmem:[#allocation10 + $0x118] sm:$0xff]
    %v6378 = vld [vmem:[#allocation10 + $0x120] sm:$0xff]
    %v6379 = vld [vmem:[#allocation10 + $0x128] sm:$0xff]
    %v6380 = vld [vmem:[#allocation10 + $0x130] sm:$0xff]
    %v6381 = vld [vmem:[#allocation10 + $0x138] sm:$0xff]
    %v6382 = vld [vmem:[#allocation10 + $0x140] sm:$0xff]
    %v6383 = vld [vmem:[#allocation10 + $0x148] sm:$0xff]
    %v6384 = vld [vmem:[#allocation10 + $0x150] sm:$0xff]
    %v6385 = vld [vmem:[#allocation10 + $0x158] sm:$0xff]
    %v6386 = vld [vmem:[#allocation10 + $0x160] sm:$0xff]
    %v6387 = vld [vmem:[#allocation10 + $0x168] sm:$0xff]
    %v6388 = vld [vmem:[#allocation10 + $0x170] sm:$0xff]
    %v6389 = vld [vmem:[#allocation10 + $0x178] sm:$0xff]
    %v6390 = vld [vmem:[#allocation10 + $0x180] sm:$0xff]
    %v6391 = vld [vmem:[#allocation10 + $0x188] sm:$0xff]
    %v6392 = vld [vmem:[#allocation10 + $0x190] sm:$0xff]
    %v6393 = vld [vmem:[#allocation10 + $0x198] sm:$0xff]
    %v6394 = vld [vmem:[#allocation10 + $0x1a0] sm:$0xff]
    %v6395 = vld [vmem:[#allocation10 + $0x1a8] sm:$0xff]
    %v6396 = vld [vmem:[#allocation10 + $0x1b0] sm:$0xff]
    %v6397 = vld [vmem:[#allocation10 + $0x1b8] sm:$0xff]
    %v6398 = vld [vmem:[#allocation10 + $0x1c0] sm:$0xff]
    %v6399 = vld [vmem:[#allocation10 + $0x1c8] sm:$0xff]
    %v6400 = vld [vmem:[#allocation10 + $0x1d0] sm:$0xff]
    %v6401 = vld [vmem:[#allocation10 + $0x1d8] sm:$0xff]
    %v6402 = vld [vmem:[#allocation10 + $0x1e0] sm:$0xff]
    %v6403 = vld [vmem:[#allocation10 + $0x1e8] sm:$0xff]
    %v6404 = vld [vmem:[#allocation10 + $0x1f0] sm:$0xff]
    %v6405 = vld [vmem:[#allocation10 + $0x1f8] sm:$0xff]
    %v6406 = vld [vmem:[#allocation10 + $0x200] sm:$0xff]
    %v6407 = vld [vmem:[#allocation10 + $0x208] sm:$0xff]
    %v6408 = vld [vmem:[#allocation10 + $0x210] sm:$0xff]
    %v6409 = vld [vmem:[#allocation10 + $0x218] sm:$0xff]
    %v6410 = vld [vmem:[#allocation10 + $0x220] sm:$0xff]
    %v6411 = vld [vmem:[#allocation10 + $0x228] sm:$0xff]
    %v6412 = vld [vmem:[#allocation10 + $0x230] sm:$0xff]
    %v6413 = vld [vmem:[#allocation10 + $0x238] sm:$0xff]
    %v6414 = vld [vmem:[#allocation10 + $0x240] sm:$0xff]
    %v6415 = vld [vmem:[#allocation10 + $0x248] sm:$0xff]
    %v6416 = vld [vmem:[#allocation10 + $0x250] sm:$0xff]
    %v6417 = vld [vmem:[#allocation10 + $0x258] sm:$0xff]
    %v6418 = vld [vmem:[#allocation10 + $0x260] sm:$0xff]
    %v6419 = vld [vmem:[#allocation10 + $0x268] sm:$0xff]
    %v6420 = vld [vmem:[#allocation10 + $0x270] sm:$0xff]
    %v6421 = vld [vmem:[#allocation10 + $0x278] sm:$0xff]
    %v6422 = vld [vmem:[#allocation10 + $0x280] sm:$0xff]
    %v6423 = vld [vmem:[#allocation10 + $0x288] sm:$0xff]
    %v6424 = vld [vmem:[#allocation10 + $0x290] sm:$0xff]
    %v6425 = vld [vmem:[#allocation10 + $0x298] sm:$0xff]
    %v6426 = vld [vmem:[#allocation10 + $0x2a0] sm:$0xff]
    %v6427 = vld [vmem:[#allocation10 + $0x2a8] sm:$0xff]
    %v6428 = vld [vmem:[#allocation10 + $0x2b0] sm:$0xff]
    %v6429 = vld [vmem:[#allocation10 + $0x2b8] sm:$0xff]
    %v6430 = vld [vmem:[#allocation10 + $0x2c0] sm:$0xff]
    %v6431 = vld [vmem:[#allocation10 + $0x2c8] sm:$0xff]
    %v6432 = vld [vmem:[#allocation10 + $0x2d0] sm:$0xff]
    %v6433 = vld [vmem:[#allocation10 + $0x2d8] sm:$0xff]
    %v6434 = vld [vmem:[#allocation10 + $0x2e0] sm:$0xff]
    %v6435 = vld [vmem:[#allocation10 + $0x2e8] sm:$0xff]
    %v6436 = vld [vmem:[#allocation10 + $0x2f0] sm:$0xff]
    %v6437 = vld [vmem:[#allocation10 + $0x2f8] sm:$0xff]
    %v6438 = vld [vmem:[#allocation10 + $0x300] sm:$0xff]
    %v6439 = vld [vmem:[#allocation10 + $0x308] sm:$0xff]
    %v6440 = vld [vmem:[#allocation10 + $0x310] sm:$0xff]
    %v6441 = vld [vmem:[#allocation10 + $0x318] sm:$0xff]
    %v6442 = vld [vmem:[#allocation10 + $0x320] sm:$0xff]
    %v6443 = vld [vmem:[#allocation10 + $0x328] sm:$0xff]
    %v6444 = vld [vmem:[#allocation10 + $0x330] sm:$0xff]
    %v6445 = vld [vmem:[#allocation10 + $0x338] sm:$0xff]
    %v6446 = vld [vmem:[#allocation10 + $0x340] sm:$0xff]
    %v6447 = vld [vmem:[#allocation10 + $0x348] sm:$0xff]
    %v6448 = vld [vmem:[#allocation10 + $0x350] sm:$0xff]
    %v6449 = vld [vmem:[#allocation10 + $0x358] sm:$0xff]
    %v6450 = vld [vmem:[#allocation10 + $0x360] sm:$0xff]
    %v6451 = vld [vmem:[#allocation10 + $0x368] sm:$0xff]
    %v6452 = vld [vmem:[#allocation10 + $0x370] sm:$0xff]
    %v6453 = vld [vmem:[#allocation10 + $0x378] sm:$0xff]
    %v6454 = vld [vmem:[#allocation10 + $0x380] sm:$0xff]
    %v6455 = vld [vmem:[#allocation10 + $0x388] sm:$0xff]
    %v6456 = vld [vmem:[#allocation10 + $0x390] sm:$0xff]
    %v6457 = vld [vmem:[#allocation10 + $0x398] sm:$0xff]
    %v6458 = vld [vmem:[#allocation10 + $0x3a0] sm:$0xff]
    %v6459 = vld [vmem:[#allocation10 + $0x3a8] sm:$0xff]
    %v6460 = vld [vmem:[#allocation10 + $0x3b0] sm:$0xff]
    %v6461 = vld [vmem:[#allocation10 + $0x3b8] sm:$0xff]
    %v6462 = vld [vmem:[#allocation10 + $0x3c0] sm:$0xff]
    %v6463 = vld [vmem:[#allocation10 + $0x3c8] sm:$0xff]
    %v6464 = vld [vmem:[#allocation10 + $0x3d0] sm:$0xff]
    %v6465 = vld [vmem:[#allocation10 + $0x3d8] sm:$0xff]
    %v6466 = vld [vmem:[#allocation10 + $0x3e0] sm:$0xff]
    %v6467 = vld [vmem:[#allocation10 + $0x3e8] sm:$0xff]
    %v6468 = vld [vmem:[#allocation10 + $0x3f0] sm:$0xff]
    %v6469 = vld [vmem:[#allocation10 + $0x3f8] sm:$0xff]
    %v6470 = vld [vmem:[#allocation10 + $0x400] sm:$0xff]
    %v6471 = vld [vmem:[#allocation10 + $0x408] sm:$0xff]
    %v6472 = vld [vmem:[#allocation10 + $0x410] sm:$0xff]
    %v6473 = vld [vmem:[#allocation10 + $0x418] sm:$0xff]
    %v6474 = vld [vmem:[#allocation10 + $0x420] sm:$0xff]
    %v6475 = vld [vmem:[#allocation10 + $0x428] sm:$0xff]
    %v6476 = vld [vmem:[#allocation10 + $0x430] sm:$0xff]
    %v6477 = vld [vmem:[#allocation10 + $0x438] sm:$0xff]
    %v6478 = vld [vmem:[#allocation10 + $0x440] sm:$0xff]
    %v6479 = vld [vmem:[#allocation10 + $0x448] sm:$0xff]
    %v6480 = vld [vmem:[#allocation10 + $0x450] sm:$0xff]
    %v6481 = vld [vmem:[#allocation10 + $0x458] sm:$0xff]
    %v6482 = vld [vmem:[#allocation10 + $0x460] sm:$0xff]
    %v6483 = vld [vmem:[#allocation10 + $0x468] sm:$0xff]
    %v6484 = vld [vmem:[#allocation10 + $0x470] sm:$0xff]
    %v6485 = vld [vmem:[#allocation10 + $0x478] sm:$0xff]
    %v6486 = vld [vmem:[#allocation10 + $0x480] sm:$0xff]
    %v6487 = vld [vmem:[#allocation10 + $0x488] sm:$0xff]
    %v6488 = vld [vmem:[#allocation10 + $0x490] sm:$0xff]
    %v6489 = vld [vmem:[#allocation10 + $0x498] sm:$0xff]
    %v6490 = vld [vmem:[#allocation10 + $0x4a0] sm:$0xff]
    %v6491 = vld [vmem:[#allocation10 + $0x4a8] sm:$0xff]
    %v6492 = vld [vmem:[#allocation10 + $0x4b0] sm:$0xff]
    %v6493 = vld [vmem:[#allocation10 + $0x4b8] sm:$0xff]
    %v6494 = vld [vmem:[#allocation10 + $0x4c0] sm:$0xff]
    %v6495 = vld [vmem:[#allocation10 + $0x4c8] sm:$0xff]
    %v6496 = vld [vmem:[#allocation10 + $0x4d0] sm:$0xff]
    %v6497 = vld [vmem:[#allocation10 + $0x4d8] sm:$0xff]
    %v6498 = vld [vmem:[#allocation10 + $0x4e0] sm:$0xff]
    %v6499 = vld [vmem:[#allocation10 + $0x4e8] sm:$0xff]
    %v6500 = vld [vmem:[#allocation10 + $0x4f0] sm:$0xff]
    %v6501 = vld [vmem:[#allocation10 + $0x4f8] sm:$0xff]
    %v6502 = vld [vmem:[#allocation10 + $0x500] sm:$0xff]
    %v6503 = vld [vmem:[#allocation10 + $0x508] sm:$0xff]
    %v6504 = vld [vmem:[#allocation10 + $0x510] sm:$0xff]
    %v6505 = vld [vmem:[#allocation10 + $0x518] sm:$0xff]
    %v6506 = vld [vmem:[#allocation10 + $0x520] sm:$0xff]
    %v6507 = vld [vmem:[#allocation10 + $0x528] sm:$0xff]
    %v6508 = vld [vmem:[#allocation10 + $0x530] sm:$0xff]
    %v6509 = vld [vmem:[#allocation10 + $0x538] sm:$0xff]
    %v6510 = vld [vmem:[#allocation10 + $0x540] sm:$0xff]
    %v6511 = vld [vmem:[#allocation10 + $0x548] sm:$0xff]
    %v6512 = vld [vmem:[#allocation10 + $0x550] sm:$0xff]
    %v6513 = vld [vmem:[#allocation10 + $0x558] sm:$0xff]
    %v6514 = vld [vmem:[#allocation10 + $0x560] sm:$0xff]
    %v6515 = vld [vmem:[#allocation10 + $0x568] sm:$0xff]
    %v6516 = vld [vmem:[#allocation10 + $0x570] sm:$0xff]
    %v6517 = vld [vmem:[#allocation10 + $0x578] sm:$0xff]
    %v6518 = vld [vmem:[#allocation10 + $0x580] sm:$0xff]
    %v6519 = vld [vmem:[#allocation10 + $0x588] sm:$0xff]
    %v6520 = vld [vmem:[#allocation10 + $0x590] sm:$0xff]
    %v6521 = vld [vmem:[#allocation10 + $0x598] sm:$0xff]
    %v6522 = vld [vmem:[#allocation10 + $0x5a0] sm:$0xff]
    %v6523 = vld [vmem:[#allocation10 + $0x5a8] sm:$0xff]
    %v6524 = vld [vmem:[#allocation10 + $0x5b0] sm:$0xff]
    %v6525 = vld [vmem:[#allocation10 + $0x5b8] sm:$0xff]
    %v6526 = vld [vmem:[#allocation10 + $0x5c0] sm:$0xff]
    %v6527 = vld [vmem:[#allocation10 + $0x5c8] sm:$0xff]
    %v6528 = vld [vmem:[#allocation10 + $0x5d0] sm:$0xff]
    %v6529 = vld [vmem:[#allocation10 + $0x5d8] sm:$0xff]
    %v6530 = vld [vmem:[#allocation10 + $0x5e0] sm:$0xff]
    %v6531 = vld [vmem:[#allocation10 + $0x5e8] sm:$0xff]
    %v6532 = vld [vmem:[#allocation10 + $0x5f0] sm:$0xff]
    %v6533 = vld [vmem:[#allocation10 + $0x5f8] sm:$0xff]
    %6534 = vmatpush.msra.mxu0 %v6402
    %6535 = vmatpush.msra.mxu0 %v6398
    %6536 = vmatpush.msra.mxu0 %v6394
    %6537 = vmatpush.msra.mxu0 %v6390
    %6538 = vmatpush.msra.mxu0 %v6386
    %6539 = vmatpush.msra.mxu0 %v6382
    %6540 = vmatpush.msra.mxu0 %v6378
    %6541 = vmatpush.msra.mxu0 %v6374
    %6542 = vmatpush.msra.mxu0 %v6370
    %6543 = vmatpush.msra.mxu0 %v6366
    %6544 = vmatpush.msra.mxu0 %v6362
    %6545 = vmatpush.msra.mxu0 %v6358
    %6546 = vmatpush.msra.mxu0 %v6354
    %6547 = vmatpush.msra.mxu0 %v6350
    %6548 = vmatpush.msra.mxu0 %v6346
    %6549 = vmatpush.msra.mxu0 %v6342
    %6550 = vmatmul.f32.gmra.mxu0 %v6212
    %v6551 = vpop.f32.mrf.mxu0
    %v6552 = vadd.f32 %v627, %v6551
    %6553 = vdwg.mxu0
    %6554 = vmatpush.msra.mxu0 %v6466
    %6555 = vmatpush.msra.mxu0 %v6462
    %6556 = vmatpush.msra.mxu0 %v6458
    %6557 = vmatpush.msra.mxu0 %v6454
    %6558 = vmatpush.msra.mxu0 %v6450
    %6559 = vmatpush.msra.mxu0 %v6446
    %6560 = vmatpush.msra.mxu0 %v6442
    %6561 = vmatpush.msra.mxu0 %v6438
    %6562 = vmatpush.msra.mxu0 %v6434
    %6563 = vmatpush.msra.mxu0 %v6430
    %6564 = vmatpush.msra.mxu0 %v6426
    %6565 = vmatpush.msra.mxu0 %v6422
    %6566 = vmatpush.msra.mxu0 %v6418
    %6567 = vmatpush.msra.mxu0 %v6414
    %6568 = vmatpush.msra.mxu0 %v6410
    %6569 = vmatpush.msra.mxu0 %v6406
    %6570 = vmatmul.f32.gmra.mxu0 %v6340
    %v6571 = vpop.f32.mrf.mxu0
    %v6572 = vadd.f32 %v6552, %v6571
    %6573 = vdwg.mxu0
    %6574 = vmatpush.msra.mxu0 %v6530
    %6575 = vmatpush.msra.mxu0 %v6526
    %6576 = vmatpush.msra.mxu0 %v6522
    %6577 = vmatpush.msra.mxu0 %v6518
    %6578 = vmatpush.msra.mxu0 %v6514
    %6579 = vmatpush.msra.mxu0 %v6510
    %6580 = vmatpush.msra.mxu0 %v6506
    %6581 = vmatpush.msra.mxu0 %v6502
    %6582 = vmatpush.msra.mxu0 %v6498
    %6583 = vmatpush.msra.mxu0 %v6494
    %6584 = vmatpush.msra.mxu0 %v6490
    %6585 = vmatpush.msra.mxu0 %v6486
    %6586 = vmatpush.msra.mxu0 %v6482
    %6587 = vmatpush.msra.mxu0 %v6478
    %6588 = vmatpush.msra.mxu0 %v6474
    %6589 = vmatpush.msra.mxu0 %v6470
    %6590 = vmatmul.f32.gmra.mxu0 %v5994
    %v6591 = vpop.f32.mrf.mxu0
    %v6592 = vadd.f32 %v6572, %v6591
    %6593 = vdwg.mxu0
    %6594 = vmatpush.msra.mxu0 %v6403
    %6595 = vmatpush.msra.mxu0 %v6399
    %6596 = vmatpush.msra.mxu0 %v6395
    %6597 = vmatpush.msra.mxu0 %v6391
    %6598 = vmatpush.msra.mxu0 %v6387
    %6599 = vmatpush.msra.mxu0 %v6383
    %6600 = vmatpush.msra.mxu0 %v6379
    %6601 = vmatpush.msra.mxu0 %v6375
    %6602 = vmatpush.msra.mxu0 %v6371
    %6603 = vmatpush.msra.mxu0 %v6367
    %6604 = vmatpush.msra.mxu0 %v6363
    %6605 = vmatpush.msra.mxu0 %v6359
    %6606 = vmatpush.msra.mxu0 %v6355
    %6607 = vmatpush.msra.mxu0 %v6351
    %6608 = vmatpush.msra.mxu0 %v6347
    %6609 = vmatpush.msra.mxu0 %v6343
    %6610 = vmatmul.f32.gmra.mxu0 %v6212
    %v6611 = vpop.f32.mrf.mxu0
    %v6612 = vadd.f32 %v628, %v6611
    %6613 = vdwg.mxu0
    %6614 = vmatpush.msra.mxu0 %v6467
    %6615 = vmatpush.msra.mxu0 %v6463
    %6616 = vmatpush.msra.mxu0 %v6459
    %6617 = vmatpush.msra.mxu0 %v6455
    %6618 = vmatpush.msra.mxu0 %v6451
    %6619 = vmatpush.msra.mxu0 %v6447
    %6620 = vmatpush.msra.mxu0 %v6443
    %6621 = vmatpush.msra.mxu0 %v6439
    %6622 = vmatpush.msra.mxu0 %v6435
    %6623 = vmatpush.msra.mxu0 %v6431
    %6624 = vmatpush.msra.mxu0 %v6427
    %6625 = vmatpush.msra.mxu0 %v6423
    %6626 = vmatpush.msra.mxu0 %v6419
    %6627 = vmatpush.msra.mxu0 %v6415
    %6628 = vmatpush.msra.mxu0 %v6411
    %6629 = vmatpush.msra.mxu0 %v6407
    %6630 = vmatmul.f32.gmra.mxu0 %v6340
    %v6631 = vpop.f32.mrf.mxu0
    %v6632 = vadd.f32 %v6612, %v6631
    %6633 = vdwg.mxu0
    %6634 = vmatpush.msra.mxu0 %v6531
    %6635 = vmatpush.msra.mxu0 %v6527
    %6636 = vmatpush.msra.mxu0 %v6523
    %6637 = vmatpush.msra.mxu0 %v6519
    %6638 = vmatpush.msra.mxu0 %v6515
    %6639 = vmatpush.msra.mxu0 %v6511
    %6640 = vmatpush.msra.mxu0 %v6507
    %6641 = vmatpush.msra.mxu0 %v6503
    %6642 = vmatpush.msra.mxu0 %v6499
    %6643 = vmatpush.msra.mxu0 %v6495
    %6644 = vmatpush.msra.mxu0 %v6491
    %6645 = vmatpush.msra.mxu0 %v6487
    %6646 = vmatpush.msra.mxu0 %v6483
    %6647 = vmatpush.msra.mxu0 %v6479
    %6648 = vmatpush.msra.mxu0 %v6475
    %6649 = vmatpush.msra.mxu0 %v6471
    %6650 = vmatmul.f32.gmra.mxu0 %v5994
    %v6651 = vpop.f32.mrf.mxu0
    %v6652 = vadd.f32 %v6632, %v6651
    %6653 = vdwg.mxu0
    %6654 = vmatpush.msra.mxu0 %v6404
    %6655 = vmatpush.msra.mxu0 %v6400
    %6656 = vmatpush.msra.mxu0 %v6396
    %6657 = vmatpush.msra.mxu0 %v6392
    %6658 = vmatpush.msra.mxu0 %v6388
    %6659 = vmatpush.msra.mxu0 %v6384
    %6660 = vmatpush.msra.mxu0 %v6380
    %6661 = vmatpush.msra.mxu0 %v6376
    %6662 = vmatpush.msra.mxu0 %v6372
    %6663 = vmatpush.msra.mxu0 %v6368
    %6664 = vmatpush.msra.mxu0 %v6364
    %6665 = vmatpush.msra.mxu0 %v6360
    %6666 = vmatpush.msra.mxu0 %v6356
    %6667 = vmatpush.msra.mxu0 %v6352
    %6668 = vmatpush.msra.mxu0 %v6348
    %6669 = vmatpush.msra.mxu0 %v6344
    %6670 = vmatmul.f32.gmra.mxu0 %v6212
    %v6671 = vpop.f32.mrf.mxu0
    %v6672 = vadd.f32 %v629, %v6671
    %6673 = vdwg.mxu0
    %6674 = vmatpush.msra.mxu0 %v6468
    %6675 = vmatpush.msra.mxu0 %v6464
    %6676 = vmatpush.msra.mxu0 %v6460
    %6677 = vmatpush.msra.mxu0 %v6456
    %6678 = vmatpush.msra.mxu0 %v6452
    %6679 = vmatpush.msra.mxu0 %v6448
    %6680 = vmatpush.msra.mxu0 %v6444
    %6681 = vmatpush.msra.mxu0 %v6440
    %6682 = vmatpush.msra.mxu0 %v6436
    %6683 = vmatpush.msra.mxu0 %v6432
    %6684 = vmatpush.msra.mxu0 %v6428
    %6685 = vmatpush.msra.mxu0 %v6424
    %6686 = vmatpush.msra.mxu0 %v6420
    %6687 = vmatpush.msra.mxu0 %v6416
    %6688 = vmatpush.msra.mxu0 %v6412
    %6689 = vmatpush.msra.mxu0 %v6408
    %6690 = vmatmul.f32.gmra.mxu0 %v6340
    %v6691 = vpop.f32.mrf.mxu0
    %v6692 = vadd.f32 %v6672, %v6691
    %6693 = vdwg.mxu0
    %6694 = vmatpush.msra.mxu0 %v6532
    %6695 = vmatpush.msra.mxu0 %v6528
    %6696 = vmatpush.msra.mxu0 %v6524
    %6697 = vmatpush.msra.mxu0 %v6520
    %6698 = vmatpush.msra.mxu0 %v6516
    %6699 = vmatpush.msra.mxu0 %v6512
    %6700 = vmatpush.msra.mxu0 %v6508
    %6701 = vmatpush.msra.mxu0 %v6504
    %6702 = vmatpush.msra.mxu0 %v6500
    %6703 = vmatpush.msra.mxu0 %v6496
    %6704 = vmatpush.msra.mxu0 %v6492
    %6705 = vmatpush.msra.mxu0 %v6488
    %6706 = vmatpush.msra.mxu0 %v6484
    %6707 = vmatpush.msra.mxu0 %v6480
    %6708 = vmatpush.msra.mxu0 %v6476
    %6709 = vmatpush.msra.mxu0 %v6472
    %6710 = vmatmul.f32.gmra.mxu0 %v5994
    %v6711 = vpop.f32.mrf.mxu0
    %v6712 = vadd.f32 %v6692, %v6711
    %6713 = vdwg.mxu0
    %6714 = vmatpush.msra.mxu0 %v6405
    %6715 = vmatpush.msra.mxu0 %v6401
    %6716 = vmatpush.msra.mxu0 %v6397
    %6717 = vmatpush.msra.mxu0 %v6393
    %6718 = vmatpush.msra.mxu0 %v6389
    %6719 = vmatpush.msra.mxu0 %v6385
    %6720 = vmatpush.msra.mxu0 %v6381
    %6721 = vmatpush.msra.mxu0 %v6377
    %6722 = vmatpush.msra.mxu0 %v6373
    %6723 = vmatpush.msra.mxu0 %v6369
    %6724 = vmatpush.msra.mxu0 %v6365
    %6725 = vmatpush.msra.mxu0 %v6361
    %6726 = vmatpush.msra.mxu0 %v6357
    %6727 = vmatpush.msra.mxu0 %v6353
    %6728 = vmatpush.msra.mxu0 %v6349
    %6729 = vmatpush.msra.mxu0 %v6345
    %6730 = vmatmul.f32.gmra.mxu0 %v6212
    %v6731 = vpop.f32.mrf.mxu0
    %v6732 = vadd.f32 %v630, %v6731
    %6733 = vdwg.mxu0
    %6734 = vmatpush.msra.mxu0 %v6469
    %6735 = vmatpush.msra.mxu0 %v6465
    %6736 = vmatpush.msra.mxu0 %v6461
    %6737 = vmatpush.msra.mxu0 %v6457
    %6738 = vmatpush.msra.mxu0 %v6453
    %6739 = vmatpush.msra.mxu0 %v6449
    %6740 = vmatpush.msra.mxu0 %v6445
    %6741 = vmatpush.msra.mxu0 %v6441
    %6742 = vmatpush.msra.mxu0 %v6437
    %6743 = vmatpush.msra.mxu0 %v6433
    %6744 = vmatpush.msra.mxu0 %v6429
    %6745 = vmatpush.msra.mxu0 %v6425
    %6746 = vmatpush.msra.mxu0 %v6421
    %6747 = vmatpush.msra.mxu0 %v6417
    %6748 = vmatpush.msra.mxu0 %v6413
    %6749 = vmatpush.msra.mxu0 %v6409
    %6750 = vmatmul.f32.gmra.mxu0 %v6340
    %v6751 = vpop.f32.mrf.mxu0
    %v6752 = vadd.f32 %v6732, %v6751
    %6753 = vdwg.mxu0
    %6754 = vmatpush.msra.mxu0 %v6533
    %6755 = vmatpush.msra.mxu0 %v6529
    %6756 = vmatpush.msra.mxu0 %v6525
    %6757 = vmatpush.msra.mxu0 %v6521
    %6758 = vmatpush.msra.mxu0 %v6517
    %6759 = vmatpush.msra.mxu0 %v6513
    %6760 = vmatpush.msra.mxu0 %v6509
    %6761 = vmatpush.msra.mxu0 %v6505
    %6762 = vmatpush.msra.mxu0 %v6501
    %6763 = vmatpush.msra.mxu0 %v6497
    %6764 = vmatpush.msra.mxu0 %v6493
    %6765 = vmatpush.msra.mxu0 %v6489
    %6766 = vmatpush.msra.mxu0 %v6485
    %6767 = vmatpush.msra.mxu0 %v6481
    %6768 = vmatpush.msra.mxu0 %v6477
    %6769 = vmatpush.msra.mxu0 %v6473
    %6770 = vmatmul.f32.gmra.mxu0 %v5994
    %v6771 = vpop.f32.mrf.mxu0
    %v6772 = vadd.f32 %v6752, %v6771
    %6773 = vdwg.mxu0
    %v6774 = vxor.u32 %v6592, 2147483648
    %v6775 = vmul.f32 %v6774, 1.442695
    %v6776 = vpow.pop %v6775
    %v6777 = vadd.f32 %v6776, 1.0
    %v6778 = vrcp.pop %v6777
    %v6779 = vmul.f32 %v6777, %v6778
    %v6780 = vsub.f32 1.0, %v6779
    %v6781 = vmul.f32 %v6778, %v6780
    %v6782 = vadd.f32 %v6778, %v6781
    %vm6783 = vweird.f32 %v6777
    %vm6784 = vweird.f32 %v6778
    %vm6785 = vmor %vm6783, %vm6784
    %v6786 = vsel %vm6785, %v6778, %v6782
    %v6787 = vand.u32 2147483647, %v6777
    %vm6788 = vcmp.eq.f32.partialorder %v6787, 8.507059e+37
    %v6789 = vand.u32 %v6777, 2147483648
    %v6790 = vor.u32 1.1754944e-38, %v6789
    %v6791 = vsel %vm6788, %v6790, %v6786
    %v6792 = vmul.f32 1.0, %v6791
    %v6793 = vxor.u32 %v6652, 2147483648
    %v6794 = vmul.f32 %v6793, 1.442695
    %v6795 = vpow.pop %v6794
    %v6796 = vadd.f32 %v6795, 1.0
    %v6797 = vrcp.pop %v6796
    %v6798 = vmul.f32 %v6796, %v6797
    %v6799 = vsub.f32 1.0, %v6798
    %v6800 = vmul.f32 %v6797, %v6799
    %v6801 = vadd.f32 %v6797, %v6800
    %vm6802 = vweird.f32 %v6796
    %vm6803 = vweird.f32 %v6797
    %vm6804 = vmor %vm6802, %vm6803
    %v6805 = vsel %vm6804, %v6797, %v6801
    %v6806 = vand.u32 2147483647, %v6796
    %vm6807 = vcmp.eq.f32.partialorder %v6806, 8.507059e+37
    %v6808 = vand.u32 %v6796, 2147483648
    %v6809 = vor.u32 1.1754944e-38, %v6808
    %v6810 = vsel %vm6807, %v6809, %v6805
    %v6811 = vmul.f32 1.0, %v6810
    %v6812 = vtanh.pop %v6712
    %v6813 = vxor.u32 %v6772, 2147483648
    %v6814 = vmul.f32 %v6813, 1.442695
    %v6815 = vpow.pop %v6814
    %v6816 = vadd.f32 %v6815, 1.0
    %v6817 = vrcp.pop %v6816
    %v6818 = vmul.f32 %v6816, %v6817
    %v6819 = vsub.f32 1.0, %v6818
    %v6820 = vmul.f32 %v6817, %v6819
    %v6821 = vadd.f32 %v6817, %v6820
    %vm6822 = vweird.f32 %v6816
    %vm6823 = vweird.f32 %v6817
    %vm6824 = vmor %vm6822, %vm6823
    %v6825 = vsel %vm6824, %v6817, %v6821
    %v6826 = vand.u32 2147483647, %v6816
    %vm6827 = vcmp.eq.f32.partialorder %v6826, 8.507059e+37
    %v6828 = vand.u32 %v6816, 2147483648
    %v6829 = vor.u32 1.1754944e-38, %v6828
    %v6830 = vsel %vm6827, %v6829, %v6825
    %v6831 = vmul.f32 1.0, %v6830
    %v6832 = vmul.f32 %v6811, %v5992
    %v6833 = vmul.f32 %v6792, %v6812
    %v6834 = vadd.f32 %v6832, %v6833
    %v6835 = vtanh.pop %v6834
    %v6836 = vmul.f32 %v6831, %v6835
    %v6837 = vld [vmem:[#allocation11] sm:$0xff]
    %v6838 = vld [vmem:[#allocation11 + $0x8] sm:$0xff]
    %v6839 = vld [vmem:[#allocation11 + $0x10] sm:$0xff]
    %v6840 = vld [vmem:[#allocation11 + $0x18] sm:$0xff]
    %v6841 = vld [vmem:[#allocation11 + $0x20] sm:$0xff]
    %v6842 = vld [vmem:[#allocation11 + $0x28] sm:$0xff]
    %v6843 = vld [vmem:[#allocation11 + $0x30] sm:$0xff]
    %v6844 = vld [vmem:[#allocation11 + $0x38] sm:$0xff]
    %v6845 = vld [vmem:[#allocation11 + $0x40] sm:$0xff]
    %v6846 = vld [vmem:[#allocation11 + $0x48] sm:$0xff]
    %v6847 = vld [vmem:[#allocation11 + $0x50] sm:$0xff]
    %v6848 = vld [vmem:[#allocation11 + $0x58] sm:$0xff]
    %v6849 = vld [vmem:[#allocation11 + $0x60] sm:$0xff]
    %v6850 = vld [vmem:[#allocation11 + $0x68] sm:$0xff]
    %v6851 = vld [vmem:[#allocation11 + $0x70] sm:$0xff]
    %v6852 = vld [vmem:[#allocation11 + $0x78] sm:$0xff]
    %v6853 = vld [vmem:[#allocation11 + $0x80] sm:$0xff]
    %v6854 = vld [vmem:[#allocation11 + $0x88] sm:$0xff]
    %v6855 = vld [vmem:[#allocation11 + $0x90] sm:$0xff]
    %v6856 = vld [vmem:[#allocation11 + $0x98] sm:$0xff]
    %v6857 = vld [vmem:[#allocation11 + $0xa0] sm:$0xff]
    %v6858 = vld [vmem:[#allocation11 + $0xa8] sm:$0xff]
    %v6859 = vld [vmem:[#allocation11 + $0xb0] sm:$0xff]
    %v6860 = vld [vmem:[#allocation11 + $0xb8] sm:$0xff]
    %v6861 = vld [vmem:[#allocation11 + $0xc0] sm:$0xff]
    %v6862 = vld [vmem:[#allocation11 + $0xc8] sm:$0xff]
    %v6863 = vld [vmem:[#allocation11 + $0xd0] sm:$0xff]
    %v6864 = vld [vmem:[#allocation11 + $0xd8] sm:$0xff]
    %v6865 = vld [vmem:[#allocation11 + $0xe0] sm:$0xff]
    %v6866 = vld [vmem:[#allocation11 + $0xe8] sm:$0xff]
    %v6867 = vld [vmem:[#allocation11 + $0xf0] sm:$0xff]
    %v6868 = vld [vmem:[#allocation11 + $0xf8] sm:$0xff]
    %v6869 = vld [vmem:[#allocation11 + $0x100] sm:$0xff]
    %v6870 = vld [vmem:[#allocation11 + $0x108] sm:$0xff]
    %v6871 = vld [vmem:[#allocation11 + $0x110] sm:$0xff]
    %v6872 = vld [vmem:[#allocation11 + $0x118] sm:$0xff]
    %v6873 = vld [vmem:[#allocation11 + $0x120] sm:$0xff]
    %v6874 = vld [vmem:[#allocation11 + $0x128] sm:$0xff]
    %v6875 = vld [vmem:[#allocation11 + $0x130] sm:$0xff]
    %v6876 = vld [vmem:[#allocation11 + $0x138] sm:$0xff]
    %v6877 = vld [vmem:[#allocation11 + $0x140] sm:$0xff]
    %v6878 = vld [vmem:[#allocation11 + $0x148] sm:$0xff]
    %v6879 = vld [vmem:[#allocation11 + $0x150] sm:$0xff]
    %v6880 = vld [vmem:[#allocation11 + $0x158] sm:$0xff]
    %v6881 = vld [vmem:[#allocation11 + $0x160] sm:$0xff]
    %v6882 = vld [vmem:[#allocation11 + $0x168] sm:$0xff]
    %v6883 = vld [vmem:[#allocation11 + $0x170] sm:$0xff]
    %v6884 = vld [vmem:[#allocation11 + $0x178] sm:$0xff]
    %v6885 = vld [vmem:[#allocation11 + $0x180] sm:$0xff]
    %v6886 = vld [vmem:[#allocation11 + $0x188] sm:$0xff]
    %v6887 = vld [vmem:[#allocation11 + $0x190] sm:$0xff]
    %v6888 = vld [vmem:[#allocation11 + $0x198] sm:$0xff]
    %v6889 = vld [vmem:[#allocation11 + $0x1a0] sm:$0xff]
    %v6890 = vld [vmem:[#allocation11 + $0x1a8] sm:$0xff]
    %v6891 = vld [vmem:[#allocation11 + $0x1b0] sm:$0xff]
    %v6892 = vld [vmem:[#allocation11 + $0x1b8] sm:$0xff]
    %v6893 = vld [vmem:[#allocation11 + $0x1c0] sm:$0xff]
    %v6894 = vld [vmem:[#allocation11 + $0x1c8] sm:$0xff]
    %v6895 = vld [vmem:[#allocation11 + $0x1d0] sm:$0xff]
    %v6896 = vld [vmem:[#allocation11 + $0x1d8] sm:$0xff]
    %v6897 = vld [vmem:[#allocation11 + $0x1e0] sm:$0xff]
    %v6898 = vld [vmem:[#allocation11 + $0x1e8] sm:$0xff]
    %v6899 = vld [vmem:[#allocation11 + $0x1f0] sm:$0xff]
    %v6900 = vld [vmem:[#allocation11 + $0x1f8] sm:$0xff]
    %v6901 = vld [vmem:[#allocation11 + $0x200] sm:$0xff]
    %v6902 = vld [vmem:[#allocation11 + $0x208] sm:$0xff]
    %v6903 = vld [vmem:[#allocation11 + $0x210] sm:$0xff]
    %v6904 = vld [vmem:[#allocation11 + $0x218] sm:$0xff]
    %v6905 = vld [vmem:[#allocation11 + $0x220] sm:$0xff]
    %v6906 = vld [vmem:[#allocation11 + $0x228] sm:$0xff]
    %v6907 = vld [vmem:[#allocation11 + $0x230] sm:$0xff]
    %v6908 = vld [vmem:[#allocation11 + $0x238] sm:$0xff]
    %v6909 = vld [vmem:[#allocation11 + $0x240] sm:$0xff]
    %v6910 = vld [vmem:[#allocation11 + $0x248] sm:$0xff]
    %v6911 = vld [vmem:[#allocation11 + $0x250] sm:$0xff]
    %v6912 = vld [vmem:[#allocation11 + $0x258] sm:$0xff]
    %v6913 = vld [vmem:[#allocation11 + $0x260] sm:$0xff]
    %v6914 = vld [vmem:[#allocation11 + $0x268] sm:$0xff]
    %v6915 = vld [vmem:[#allocation11 + $0x270] sm:$0xff]
    %v6916 = vld [vmem:[#allocation11 + $0x278] sm:$0xff]
    %v6917 = vld [vmem:[#allocation11 + $0x280] sm:$0xff]
    %v6918 = vld [vmem:[#allocation11 + $0x288] sm:$0xff]
    %v6919 = vld [vmem:[#allocation11 + $0x290] sm:$0xff]
    %v6920 = vld [vmem:[#allocation11 + $0x298] sm:$0xff]
    %v6921 = vld [vmem:[#allocation11 + $0x2a0] sm:$0xff]
    %v6922 = vld [vmem:[#allocation11 + $0x2a8] sm:$0xff]
    %v6923 = vld [vmem:[#allocation11 + $0x2b0] sm:$0xff]
    %v6924 = vld [vmem:[#allocation11 + $0x2b8] sm:$0xff]
    %v6925 = vld [vmem:[#allocation11 + $0x2c0] sm:$0xff]
    %v6926 = vld [vmem:[#allocation11 + $0x2c8] sm:$0xff]
    %v6927 = vld [vmem:[#allocation11 + $0x2d0] sm:$0xff]
    %v6928 = vld [vmem:[#allocation11 + $0x2d8] sm:$0xff]
    %v6929 = vld [vmem:[#allocation11 + $0x2e0] sm:$0xff]
    %v6930 = vld [vmem:[#allocation11 + $0x2e8] sm:$0xff]
    %v6931 = vld [vmem:[#allocation11 + $0x2f0] sm:$0xff]
    %v6932 = vld [vmem:[#allocation11 + $0x2f8] sm:$0xff]
    %6933 = vmatpush.msra.mxu0 %v6867
    %6934 = vmatpush.msra.mxu0 %v6865
    %6935 = vmatpush.msra.mxu0 %v6863
    %6936 = vmatpush.msra.mxu0 %v6861
    %6937 = vmatpush.msra.mxu0 %v6859
    %6938 = vmatpush.msra.mxu0 %v6857
    %6939 = vmatpush.msra.mxu0 %v6855
    %6940 = vmatpush.msra.mxu0 %v6853
    %6941 = vmatpush.msra.mxu0 %v6851
    %6942 = vmatpush.msra.mxu0 %v6849
    %6943 = vmatpush.msra.mxu0 %v6847
    %6944 = vmatpush.msra.mxu0 %v6845
    %6945 = vmatpush.msra.mxu0 %v6843
    %6946 = vmatpush.msra.mxu0 %v6841
    %6947 = vmatpush.msra.mxu0 %v6839
    %6948 = vmatpush.msra.mxu0 %v6837
    %6949 = vmatmul.f32.gmra.mxu0 %v6340
    %v6950 = vpop.f32.mrf.mxu0
    %v6951 = vadd.f32 %v1035, %v6950
    %6952 = vdwg.mxu0
    %6953 = vmatpush.msra.mxu0 %v6899
    %6954 = vmatpush.msra.mxu0 %v6897
    %6955 = vmatpush.msra.mxu0 %v6895
    %6956 = vmatpush.msra.mxu0 %v6893
    %6957 = vmatpush.msra.mxu0 %v6891
    %6958 = vmatpush.msra.mxu0 %v6889
    %6959 = vmatpush.msra.mxu0 %v6887
    %6960 = vmatpush.msra.mxu0 %v6885
    %6961 = vmatpush.msra.mxu0 %v6883
    %6962 = vmatpush.msra.mxu0 %v6881
    %6963 = vmatpush.msra.mxu0 %v6879
    %6964 = vmatpush.msra.mxu0 %v6877
    %6965 = vmatpush.msra.mxu0 %v6875
    %6966 = vmatpush.msra.mxu0 %v6873
    %6967 = vmatpush.msra.mxu0 %v6871
    %6968 = vmatpush.msra.mxu0 %v6869
    %6969 = vmatmul.f32.gmra.mxu0 %v6212
    %v6970 = vpop.f32.mrf.mxu0
    %v6971 = vadd.f32 %v6951, %v6970
    %6972 = vdwg.mxu0
    %6973 = vmatpush.msra.mxu0 %v6931
    %6974 = vmatpush.msra.mxu0 %v6929
    %6975 = vmatpush.msra.mxu0 %v6927
    %6976 = vmatpush.msra.mxu0 %v6925
    %6977 = vmatpush.msra.mxu0 %v6923
    %6978 = vmatpush.msra.mxu0 %v6921
    %6979 = vmatpush.msra.mxu0 %v6919
    %6980 = vmatpush.msra.mxu0 %v6917
    %6981 = vmatpush.msra.mxu0 %v6915
    %6982 = vmatpush.msra.mxu0 %v6913
    %6983 = vmatpush.msra.mxu0 %v6911
    %6984 = vmatpush.msra.mxu0 %v6909
    %6985 = vmatpush.msra.mxu0 %v6907
    %6986 = vmatpush.msra.mxu0 %v6905
    %6987 = vmatpush.msra.mxu0 %v6903
    %6988 = vmatpush.msra.mxu0 %v6901
    %6989 = vmatmul.f32.gmra.mxu0 %v6836
    %v6990 = vpop.f32.mrf.mxu0
    %v6991 = vadd.f32 %v6971, %v6990
    %6992 = vdwg.mxu0
    %6993 = vmatpush.msra.mxu0 %v6868
    %6994 = vmatpush.msra.mxu0 %v6866
    %6995 = vmatpush.msra.mxu0 %v6864
    %6996 = vmatpush.msra.mxu0 %v6862
    %6997 = vmatpush.msra.mxu0 %v6860
    %6998 = vmatpush.msra.mxu0 %v6858
    %6999 = vmatpush.msra.mxu0 %v6856
    %7000 = vmatpush.msra.mxu0 %v6854
    %7001 = vmatpush.msra.mxu0 %v6852
    %7002 = vmatpush.msra.mxu0 %v6850
    %7003 = vmatpush.msra.mxu0 %v6848
    %7004 = vmatpush.msra.mxu0 %v6846
    %7005 = vmatpush.msra.mxu0 %v6844
    %7006 = vmatpush.msra.mxu0 %v6842
    %7007 = vmatpush.msra.mxu0 %v6840
    %7008 = vmatpush.msra.mxu0 %v6838
    %7009 = vmatmul.f32.gmra.mxu0 %v6340
    %v7010 = vpop.f32.mrf.mxu0
    %v7011 = vadd.f32 %v1036, %v7010
    %7012 = vdwg.mxu0
    %7013 = vmatpush.msra.mxu0 %v6900
    %7014 = vmatpush.msra.mxu0 %v6898
    %7015 = vmatpush.msra.mxu0 %v6896
    %7016 = vmatpush.msra.mxu0 %v6894
    %7017 = vmatpush.msra.mxu0 %v6892
    %7018 = vmatpush.msra.mxu0 %v6890
    %7019 = vmatpush.msra.mxu0 %v6888
    %7020 = vmatpush.msra.mxu0 %v6886
    %7021 = vmatpush.msra.mxu0 %v6884
    %7022 = vmatpush.msra.mxu0 %v6882
    %7023 = vmatpush.msra.mxu0 %v6880
    %7024 = vmatpush.msra.mxu0 %v6878
    %7025 = vmatpush.msra.mxu0 %v6876
    %7026 = vmatpush.msra.mxu0 %v6874
    %7027 = vmatpush.msra.mxu0 %v6872
    %7028 = vmatpush.msra.mxu0 %v6870
    %7029 = vmatmul.f32.gmra.mxu0 %v6212
    %v7030 = vpop.f32.mrf.mxu0
    %v7031 = vadd.f32 %v7011, %v7030
    %7032 = vdwg.mxu0
    %7033 = vmatpush.msra.mxu0 %v6932
    %7034 = vmatpush.msra.mxu0 %v6930
    %7035 = vmatpush.msra.mxu0 %v6928
    %7036 = vmatpush.msra.mxu0 %v6926
    %7037 = vmatpush.msra.mxu0 %v6924
    %7038 = vmatpush.msra.mxu0 %v6922
    %7039 = vmatpush.msra.mxu0 %v6920
    %7040 = vmatpush.msra.mxu0 %v6918
    %7041 = vmatpush.msra.mxu0 %v6916
    %7042 = vmatpush.msra.mxu0 %v6914
    %7043 = vmatpush.msra.mxu0 %v6912
    %7044 = vmatpush.msra.mxu0 %v6910
    %7045 = vmatpush.msra.mxu0 %v6908
    %7046 = vmatpush.msra.mxu0 %v6906
    %7047 = vmatpush.msra.mxu0 %v6904
    %7048 = vmatpush.msra.mxu0 %v6902
    %7049 = vmatmul.f32.gmra.mxu0 %v6836
    %v7050 = vpop.f32.mrf.mxu0
    %v7051 = vadd.f32 %v7031, %v7050
    %7052 = vdwg.mxu0
    %v7069 = vrot.slane %v1157, 6
    %v7070 = vrot.slane %v1999, 6
    %v7071 = vrot.slane %v2841, 6
    %v7072 = vrot.slane %v3683, 6
    %v7073 = vrot.slane %v4525, 6
    %v7074 = vrot.slane %v5367, 6
    %v7075 = vrot.slane %v6209, 6
    %v7076 = vrot.slane %v7051, 6
    %vm7077 = vcmask 1041408
    %v7078 = vsel %vm7077, %v1097, %v7069
    %v7079 = vsel %vm7077, %v1939, %v7070
    %v7080 = vsel %vm7077, %v2781, %v7071
    %v7081 = vsel %vm7077, %v3623, %v7072
    %v7082 = vsel %vm7077, %v4465, %v7073
    %v7083 = vsel %vm7077, %v5307, %v7074
    %v7084 = vsel %vm7077, %v6149, %v7075
    %v7085 = vsel %vm7077, %v6991, %v7076
    %7094 = vst [vmem:[#allocation13] sm:$0xf] %v7078
    %7095 = vst [vmem:[#allocation13 + $0x4] sm:$0xf] %v7079
    %7096 = vst [vmem:[#allocation13 + $0x8] sm:$0xf] %v7080
    %7097 = vst [vmem:[#allocation13 + $0xc] sm:$0xf] %v7081
    %7098 = vst [vmem:[#allocation13 + $0x10] sm:$0xf] %v7082
    %7099 = vst [vmem:[#allocation13 + $0x14] sm:$0xf] %v7083
    %7100 = vst [vmem:[#allocation13 + $0x18] sm:$0xf] %v7084
    %7101 = vst [vmem:[#allocation13 + $0x1c] sm:$0xf] %v7085
    %v7102 = vrot.slane %v381, 7
    %v7103 = vsel %vm154, %v7102, %v380
    %v7104 = vrot.slane %v1238, 7
    %v7105 = vsel %vm154, %v7104, %v1237
    %v7106 = vrot.slane %v2080, 7
    %v7107 = vsel %vm154, %v7106, %v2079
    %v7108 = vrot.slane %v2922, 7
    %v7109 = vsel %vm154, %v7108, %v2921
    %v7110 = vrot.slane %v3764, 7
    %v7111 = vsel %vm154, %v7110, %v3763
    %v7112 = vrot.slane %v4606, 7
    %v7113 = vsel %vm154, %v7112, %v4605
    %v7114 = vrot.slane %v5448, 7
    %v7115 = vsel %vm154, %v7114, %v5447
    %v7116 = vrot.slane %v6290, 7
    %v7117 = vsel %vm154, %v7116, %v6289
    %7126 = vst.msk [vmem:[#allocation14] sm:$0x3] %vm353, %v7103
    %7127 = vst.msk [vmem:[#allocation14 + $0x2] sm:$0x3] %vm353, %v7105
    %7128 = vst.msk [vmem:[#allocation14 + $0x4] sm:$0x3] %vm353, %v7107
    %7129 = vst.msk [vmem:[#allocation14 + $0x6] sm:$0x3] %vm353, %v7109
    %7130 = vst.msk [vmem:[#allocation14 + $0x8] sm:$0x3] %vm353, %v7111
    %7131 = vst.msk [vmem:[#allocation14 + $0xa] sm:$0x3] %vm353, %v7113
    %7132 = vst.msk [vmem:[#allocation14 + $0xc] sm:$0x3] %vm353, %v7115
    %7133 = vst.msk [vmem:[#allocation14 + $0xe] sm:$0x3] %vm353, %v7117
    // Predicated region
    $region58: #{tpu_custom_call.1} parent=1 // pred_check
      _
    $region59: #{tpu_custom_call.1} parent=1 // pred_check_branch
      %7135 = sbr.rel (0) target = $region61
    $region60: #{tpu_custom_call.1} parent=1 // pred_region
      %7137 = vsyncadd [#allocation4], 0
      %s7138 = sshll.u32 [#allocation13], 4
      %s7139 = int_to_ptr.vmem [resolvable:$true] %s7138
      %s7140 = sshll.u32 %s8, 4
      %s7141 = int_to_ptr.hbm [resolvable:$true] %s7140
      %7146 = dma.vmem_to_hbm [thread:$0]  %s7139, 512, %s7141, [#allocation4], 64, 64, 4
    $region61: #{tpu_custom_call.1} parent=1 // pred_fallthru
      _
    // Predicated region
    $region62: #{tpu_custom_call.1} parent=1 // pred_check
      _
    $region63: #{tpu_custom_call.1} parent=1 // pred_check_branch
      %7148 = sbr.rel (0) target = $region65
    $region64: #{tpu_custom_call.1} parent=1 // pred_region
      %7150 = vsyncadd [#allocation15], 0
      %s7151 = sshll.u32 [#allocation14], 4
      %s7152 = int_to_ptr.vmem [resolvable:$true] %s7151
      %s7153 = sshll.u32 %s9, 4
      %s7154 = int_to_ptr.hbm [resolvable:$true] %s7153
      %7159 = dma.vmem_to_hbm [thread:$0]  %s7152, 256, %s7154, [#allocation15], 32, 32, 2
    $region65: #{tpu_custom_call.1} parent=1 // pred_fallthru
      _
    // Predicated region
    $region66: #{tpu_custom_call.1} parent=1 // pred_check
      _
    $region67: #{tpu_custom_call.1} parent=1 // pred_check_branch
      %7161 = sbr.rel (0) target = $region69
    $region68: #{tpu_custom_call.1} parent=1 // pred_region
      %7163 = dma.done [#allocation4], 512
    $region69: #{tpu_custom_call.1} parent=1 // pred_fallthru
      _
    // Predicated region
    $region70: #{tpu_custom_call.1} parent=1 // pred_check
      _
    $region71: #{tpu_custom_call.1} parent=1 // pred_check_branch
      %7165 = sbr.rel (0) target = $region73
    $region72: #{tpu_custom_call.1} parent=1 // pred_region
      %7167 = dma.done [#allocation15], 256
    $region73: #{tpu_custom_call.1} parent=1 // pred_fallthru
      _
    %7168 = vsyncpa [#allocation3], 1
    %7169 = vsyncpa [#allocation6], 1
    %7170 = vsyncpa [#allocation9], 1
    %7171 = vsyncpa [#allocation12], 1
    %7172 = vsyncpa [#allocation4], 1
    %7173 = vsyncpa [#allocation15], 1

</llo_original>
